<compile_context>
chip_gen: v7x
topology: tpu7x:2x2x1
jax: 0.10.0
libtpu: 0.0.40
codegen_flags: <defaults>
</compile_context>

<pallas_src>
import math
import numpy as np
import jax
import jax.numpy as jnp
from jax.experimental import pallas as pl
from jax.experimental.pallas import tpu as pltpu

D = 784                      # 1 * 28 * 28
H = 1000                     # AutoregressiveConditioner(784, [1000, 1000, 1000], 2)
N_STEPS = 3
LOG_2PI = math.log(2.0 * math.pi)

# Lane-friendly padded sizes (multiples of 128; also multiples of 32 for int8).
DP = 896                     # 784 -> 896
HP = 1024                    # 1000 -> 1024


# ----------------------------------------------------------------------------
# Fused kernel: one grid iteration == one NormalizingFlowStep.
# ----------------------------------------------------------------------------
def _fused_flow_kernel(x_ref, w1_ref, w2_ref, w3_ref, wo_ref, sb_ref,
                       z_ref, ll_ref):
    s = pl.program_id(0)

    @pl.when(s == 0)
    def _init():
        z_ref[...] = x_ref[...]
        ll_ref[...] = jnp.zeros_like(ll_ref)

    x = z_ref[...]                            # current flow state (B, DP), f32
    sb = sb_ref[0]                            # (8, 2*DP) f32: rows 0-3 scales,
                                              #                rows 4-7 biases

    def qlayer(inp, w_q, row, width):
        # int8 weight -> bf16 (exact, |q| <= 127); MXU matmul with f32
        # accumulation; per-output-column dequant scale + bias applied to the
        # tiny (B, width) result, never to the big weight tile.
        y = jnp.dot(inp.astype(jnp.bfloat16), w_q.astype(jnp.bfloat16),
                    preferred_element_type=jnp.float32)
        return y * sb[row:row + 1, :width] + sb[row + 4:row + 5, :width]

    # MADE conditioner (weights pre-masked + pre-folded, int8 + per-col scale).
    h = jnp.maximum(qlayer(x, w1_ref[0], 0, HP), 0.0)
    h = jnp.maximum(qlayer(h, w2_ref[0], 1, HP), 0.0)
    h = jnp.maximum(qlayer(h, w3_ref[0], 2, HP), 0.0)

    # Fused output projection: columns [:DP] -> mu, [DP:] -> log-sigma.
    out = jnp.clip(qlayer(h, wo_ref[0], 3, 2 * DP), -5.0, 2.0)  # AffineNormalizer clamp_
    mu = out[:, :DP]
    ls = out[:, DP:]
    sigma = jnp.exp(ls)

    z = x * sigma + mu
    z_ref[...] = z
    # log|J| of this step = sum(log sigma) = sum(ls); padded lanes contribute 0.
    ll_ref[...] = ll_ref[...] + jnp.sum(ls, axis=1, keepdims=True)

    @pl.when(s == pl.num_programs(0) - 1)
    def _finalize():
        # NormalLogDensity over the REAL 784 dims (padded lanes of z are 0).
        ll_ref[...] = (ll_ref[...]
                       - 0.5 * jnp.sum(z * z, axis=1, keepdims=True)
                       - 0.5 * D * LOG_2PI)


# ----------------------------------------------------------------------------
# Host-side parameter preparation: quantize, fold reversal, merge, pad, stack.
# ----------------------------------------------------------------------------
def _quant_cols(w):
    """Symmetric per-output-column int8 quantization of a masked f32 weight.
    Zero columns (masked-out / padded) get scale 1.0 and q == 0 so they stay
    exactly inert after dequantization."""
    amax = jnp.max(jnp.abs(w), axis=0)
    scale = jnp.where(amax > 0, amax / 127.0, 1.0).astype(jnp.float32)
    q = jnp.clip(jnp.round(w / scale[None, :]), -127, 127).astype(jnp.int8)
    return q, scale


def prepare_fused_params(params):
    """Quantize every layer to int8 (per-output-column scales), fold the
    FCNormalizingFlow inter-step reversal into the weights of every 2nd step
    (row-reverse W1, column-reverse the output projection + its scales/biases;
    per-column quantization commutes with the fold, so it is exact), merge
    wmu/wls into one projection, pad to lane-friendly sizes and stack along a
    leading step axis.  Scales + biases are packed into one (N_STEPS, 8, 2*DP)
    f32 slab: rows 0-3 = scales of layers 1-3 and output, rows 4-7 = biases.

    Returns (fused_arrays, dequantized_f32_params) — the latter is the exact
    effective network the kernel computes (original orientation), used by the
    pure-JAX reference."""
    W1s, W2s, W3s, WOs, SBs = [], [], [], [], []
    deq_params = []
    for s, p in enumerate(params):
        # --- per-output-column int8 quantization (original orientation) -----
        q1, s1 = _quant_cols(p["w1"])
        q2, s2 = _quant_cols(p["w2"])
        q3, s3 = _quant_cols(p["w3"])
        qmu, smu = _quant_cols(p["wmu"])
        qls, sls = _quant_cols(p["wls"])

        deq = lambda q, sc: q.astype(jnp.float32) * sc[None, :]
        deq_params.append(dict(
            w1=deq(q1, s1), b1=p["b1"], w2=deq(q2, s2), b2=p["b2"],
            w3=deq(q3, s3), b3=p["b3"],
            wmu=deq(qmu, smu), bmu=p["bmu"], wls=deq(qls, sls), bls=p["bls"]))

        # --- fold the inter-step reversal into this step's weights ----------
        b1, b2, b3 = p["b1"], p["b2"], p["b3"]
        bmu, bls = p["bmu"], p["bls"]
        if s % 2 == 1:                     # this step consumes a reversed state
            q1 = q1[::-1, :]
            qmu, smu, bmu = qmu[:, ::-1], smu[::-1], bmu[:, ::-1]
            qls, sls, bls = qls[:, ::-1], sls[::-1], bls[:, ::-1]

        # --- pad to lane-friendly sizes ------------------------------------
        W1s.append(jnp.pad(q1, ((0, DP - D), (0, HP - H))))
        W2s.append(jnp.pad(q2, ((0, HP - H), (0, HP - H))))
        W3s.append(jnp.pad(q3, ((0, HP - H), (0, HP - H))))
        WOs.append(jnp.concatenate(
            [jnp.pad(qmu, ((0, HP - H), (0, DP - D))),
             jnp.pad(qls, ((0, HP - H), (0, DP - D)))], axis=1))

        # --- one packed scale/bias slab per step ----------------------------
        sb = jnp.zeros((8, 2 * DP), jnp.float32)
        sb = sb.at[0, :H].set(s1).at[1, :H].set(s2).at[2, :H].set(s3)
        sb = sb.at[3, :D].set(smu).at[3, DP:DP + D].set(sls)
        sb = sb.at[4, :H].set(b1[0]).at[5, :H].set(b2[0]).at[6, :H].set(b3[0])
        sb = sb.at[7, :D].set(bmu[0]).at[7, DP:DP + D].set(bls[0])
        SBs.append(sb)

    stk = lambda xs, dt: jnp.stack(xs).astype(dt)
    fused = dict(W1=stk(W1s, jnp.int8), W2=stk(W2s, jnp.int8),
                 W3=stk(W3s, jnp.int8), WO=stk(WOs, jnp.int8),
                 SB=stk(SBs, jnp.float32))
    return fused, deq_params


# ----------------------------------------------------------------------------
# Pallas wrapper: MNISTBaseline.forward == compute_ll
# ----------------------------------------------------------------------------
def mnist_baseline_forward(x, fused):
    b = x.shape[0]
    xf = x.reshape(b, -1).astype(jnp.float32)
    xp = jnp.pad(xf, ((0, 0), (0, DP - D)))

    wspec = lambda shape: pl.BlockSpec(shape, lambda s: (s, 0, 0))
    state_spec = lambda shape: pl.BlockSpec(shape, lambda s: (0, 0))

    z_pad, ll = pl.pallas_call(
        _fused_flow_kernel,
        grid=(N_STEPS,),
        in_specs=[
            state_spec((b, DP)),
            wspec((1, DP, HP)),        # W1  int8
            wspec((1, HP, HP)),        # W2  int8
            wspec((1, HP, HP)),        # W3  int8
            wspec((1, HP, 2 * DP)),    # WO  int8  (mu | log-sigma)
            wspec((1, 8, 2 * DP)),     # packed scales + biases, f32
        ],
        out_specs=[state_spec((b, DP)), state_spec((b, 1))],
        out_shape=[jax.ShapeDtypeStruct((b, DP), jnp.float32),
                   jax.ShapeDtypeStruct((b, 1), jnp.float32)],
        compiler_params=pltpu.CompilerParams(
            # Step axis MUST stay "arbitrary": z_ref / ll_ref are revisited
            # resident VMEM accumulators across the step axis.
            dimension_semantics=("arbitrary",),
            vmem_limit_bytes=40 * 1024 * 1024),  # ~19 MiB peak; fits v5e/v6e/v7x
    )(xp, fused["W1"], fused["W2"], fused["W3"], fused["WO"], fused["SB"])

    z = z_pad[:, :D]
    if N_STEPS % 2 == 0:        # even step count would leave the state reversed
        z = z[:, ::-1]
    return ll[:, 0], z


# ----------------------------------------------------------------------------
# Deterministic synthetic parameters (MADE masks, natural ordering), f32.
# ----------------------------------------------------------------------------
def _made_masks(d, hiddens):
    m_prev = np.arange(d)
    masks = []
    for li, h in enumerate(hiddens):
        m_h = (np.arange(h) + li) % (d - 1)
        masks.append((m_prev[:, None] <= m_h[None, :]).astype(np.float32))
        m_prev = m_h
    out_mask = (m_prev[:, None] < np.arange(d)[None, :]).astype(np.float32)
    return masks, out_mask


def init_step_params(key, d, hiddens):
    masks, out_mask = _made_masks(d, hiddens)
    sizes = [d] + list(hiddens)
    keys = jax.random.split(key, 2 * len(hiddens) + 4)
    p = {}
    for li in range(len(hiddens)):
        k = 1.0 / math.sqrt(sizes[li])
        w = jax.random.uniform(keys[2 * li], (sizes[li], sizes[li + 1]),
                               jnp.float32, -k, k)
        b = jax.random.uniform(keys[2 * li + 1], (1, sizes[li + 1]),
                               jnp.float32, -k, k)
        p[f"w{li + 1}"] = w * jnp.asarray(masks[li])
        p[f"b{li + 1}"] = b
    k = 1.0 / math.sqrt(sizes[-1])
    om = jnp.asarray(out_mask)
    p["wmu"] = jax.random.uniform(keys[-4], (sizes[-1], d), jnp.float32, -k, k) * om
    p["wls"] = jax.random.uniform(keys[-3], (sizes[-1], d), jnp.float32, -k, k) * om
    p["bmu"] = jax.random.uniform(keys[-2], (1, d), jnp.float32, -k, k)
    p["bls"] = jax.random.uniform(keys[-1], (1, d), jnp.float32, -k, k)
    return p


# ----------------------------------------------------------------------------
# Pure-JAX reference with the ORIGINAL semantics (explicit per-step reversal,
# separate mu / log-sigma projections, f32 math) on the dequantized weights —
# validates the reversal fold, the mu/ls merge, the padding and the in-kernel
# int8 dequantization path.
# ----------------------------------------------------------------------------
def _reference_forward(x, params):
    b = x.shape[0]
    cur = x.reshape(b, -1).astype(jnp.float32)
    jac_tot = jnp.zeros((b,), jnp.float32)
    z = cur
    for p in params:
        h = jnp.maximum(cur @ p["w1"] + p["b1"], 0.0)
        h = jnp.maximum(h @ p["w2"] + p["b2"], 0.0)
        h = jnp.maximum(h @ p["w3"] + p["b3"], 0.0)
        mu = jnp.clip(h @ p["wmu"] + p["bmu"], -5.0, 2.0)
        sigma = jnp.exp(jnp.clip(h @ p["wls"] + p["bls"], -5.0, 2.0))
        z = cur * sigma + mu
        jac_tot = jac_tot + jnp.sum(jnp.log(sigma), axis=1)
        cur = z[:, ::-1]
    ll = jac_tot - 0.5 * jnp.sum(z * z + LOG_2PI, axis=1)
    return ll, z


if __name__ == "__main__":
    key = jax.random.PRNGKey(0)
    kx, kp = jax.random.split(key)

    # NCHW input, exactly what the PyTorch module expects.
    x = jax.random.normal(kx, (2, 1, 28, 28), jnp.float32)

    step_keys = jax.random.split(kp, N_STEPS)
    params = [init_step_params(step_keys[s], D, (H, H, H)) for s in range(N_STEPS)]
    fused, deq_params = prepare_fused_params(params)

    ll, z = mnist_baseline_forward(x, fused)
    (ll, z) = jax.block_until_ready((ll, z))

    ll_ref, z_ref = _reference_forward(x, deq_params)
    np.testing.assert_allclose(np.asarray(z), np.asarray(z_ref), rtol=2e-2, atol=2e-2)
    np.testing.assert_allclose(np.asarray(ll), np.asarray(ll_ref), rtol=2e-2, atol=1.0)

    print("KERNEL_OK")
</pallas_src>

<mosaic_0001>
module attributes {stable_mosaic.version = 11 : i64} {
  func.func @_fused_flow_kernel(%arg0: i32, %arg1: memref<2x896xf32, #tpu.memory_space<vmem>>, %arg2: memref<1x896x1024xi8, #tpu.memory_space<vmem>>, %arg3: memref<1x1024x1024xi8, #tpu.memory_space<vmem>>, %arg4: memref<1x1024x1024xi8, #tpu.memory_space<vmem>>, %arg5: memref<1x1024x1792xi8, #tpu.memory_space<vmem>>, %arg6: memref<1x8x1792xf32, #tpu.memory_space<vmem>>, %arg7: memref<2x896xf32, #tpu.memory_space<vmem>>, %arg8: memref<2x1xf32, #tpu.memory_space<vmem>>) attributes {dimension_semantics = [#tpu.dimension_semantics<arbitrary>], iteration_bounds = array<i64: 3>, scalar_prefetch = 0 : i64, scratch_operands = 0 : i64, tpu.core_type = #tpu.core_type<tc>, window_params = [{pipeline_mode = #tpu.pipeline_mode<synchronous>, transform_indices = @transform_0, window_bounds = array<i64: 2, 896>}, {transform_indices = @transform_1, window_bounds = array<i64: 1, 896, 1024>}, {transform_indices = @transform_2, window_bounds = array<i64: 1, 1024, 1024>}, {transform_indices = @transform_3, window_bounds = array<i64: 1, 1024, 1024>}, {transform_indices = @transform_4, window_bounds = array<i64: 1, 1024, 1792>}, {transform_indices = @transform_5, window_bounds = array<i64: 1, 8, 1792>}, {pipeline_mode = #tpu.pipeline_mode<synchronous>, transform_indices = @transform_6, window_bounds = array<i64: 2, 896>}, {pipeline_mode = #tpu.pipeline_mode<synchronous>, transform_indices = @transform_7, window_bounds = array<i64: 2, 1>}]} {
    %c0_i32 = arith.constant 0 : i32
    %0 = arith.cmpi eq, %arg0, %c0_i32 : i32
    %1 = arith.extui %0 : i1 to i32
    %c0_i32_0 = arith.constant 0 : i32
    %2 = arith.cmpi ne, %1, %c0_i32_0 : i32
    scf.if %2 {
      %c0_33 = arith.constant 0 : index
      %c0_34 = arith.constant 0 : index
      %74 = vector.load %arg1[%c0_33, %c0_34] : memref<2x896xf32, #tpu.memory_space<vmem>>, vector<2x896xf32>
      %c0_35 = arith.constant 0 : index
      %c0_36 = arith.constant 0 : index
      %75 = vector.load %arg7[%c0_35, %c0_36] : memref<2x896xf32, #tpu.memory_space<vmem>>, vector<2x896xf32>
      tpu.vector_store %arg7[%c0_35, %c0_36], %74 {strides = array<i32>} : memref<2x896xf32, #tpu.memory_space<vmem>>, vector<2x896xf32>,
      %cst_37 = arith.constant 0.000000e+00 : f32
      %76 = vector.broadcast %cst_37 : f32 to vector<2x1xf32>
      %c0_38 = arith.constant 0 : index
      %c0_39 = arith.constant 0 : index
      %77 = vector.load %arg8[%c0_38, %c0_39] : memref<2x1xf32, #tpu.memory_space<vmem>>, vector<2x1xf32>
      tpu.vector_store %arg8[%c0_38, %c0_39], %76 {strides = array<i32>} : memref<2x1xf32, #tpu.memory_space<vmem>>, vector<2x1xf32>,
    } else {
    }
    %c0 = arith.constant 0 : index
    %c0_1 = arith.constant 0 : index
    %3 = vector.load %arg7[%c0, %c0_1] : memref<2x896xf32, #tpu.memory_space<vmem>>, vector<2x896xf32>
    %c0_2 = arith.constant 0 : index
    %c0_3 = arith.constant 0 : index
    %c0_4 = arith.constant 0 : index
    %4 = vector.load %arg6[%c0_2, %c0_3, %c0_4] : memref<1x8x1792xf32, #tpu.memory_space<vmem>>, vector<1x8x1792xf32>
    %5 = vector.shape_cast %4 : vector<1x8x1792xf32> to vector<8x1792xf32>
    %c0_5 = arith.constant 0 : index
    %c0_6 = arith.constant 0 : index
    %c0_7 = arith.constant 0 : index
    %6 = vector.load %arg2[%c0_5, %c0_6, %c0_7] : memref<1x896x1024xi8, #tpu.memory_space<vmem>>, vector<1x896x1024xi8>
    %7 = vector.shape_cast %6 : vector<1x896x1024xi8> to vector<896x1024xi8>
    %8 = arith.truncf %3 : vector<2x896xf32> to vector<2x896xbf16>
    %9 = arith.sitofp %7 : vector<896x1024xi8> to vector<896x1024xbf16>
    %cst = arith.constant dense<0.000000e+00> : vector<2x1024xf32>
    %10 = tpu.matmul %8, %9, %cst {dimension_numbers = #tpu.dot_dimension_numbers<[1], [0], [0], [1], [0, 0, 1, 1], [], []>} : vector<2x896xbf16>, vector<896x1024xbf16>, vector<2x1024xf32> -> vector<2x1024xf32>
    %11 = vector.extract_strided_slice %5 {offsets = [0, 0], sizes = [1, 1024], strides = [1, 1]} : vector<8x1792xf32> to vector<1x1024xf32>
    %12 = vector.broadcast %11 : vector<1x1024xf32> to vector<2x1024xf32>
    %13 = arith.mulf %10, %12 : vector<2x1024xf32>
    %14 = vector.extract_strided_slice %5 {offsets = [4, 0], sizes = [1, 1024], strides = [1, 1]} : vector<8x1792xf32> to vector<1x1024xf32>
    %15 = vector.broadcast %14 : vector<1x1024xf32> to vector<2x1024xf32>
    %16 = arith.addf %13, %15 : vector<2x1024xf32>
    %cst_8 = arith.constant 0.000000e+00 : f32
    %17 = vector.broadcast %cst_8 : f32 to vector<2x1024xf32>
    %18 = arith.maximumf %16, %17 : vector<2x1024xf32>
    %c0_9 = arith.constant 0 : index
    %c0_10 = arith.constant 0 : index
    %c0_11 = arith.constant 0 : index
    %19 = vector.load %arg3[%c0_9, %c0_10, %c0_11] : memref<1x1024x1024xi8, #tpu.memory_space<vmem>>, vector<1x1024x1024xi8>
    %20 = vector.shape_cast %19 : vector<1x1024x1024xi8> to vector<1024x1024xi8>
    %21 = arith.truncf %18 : vector<2x1024xf32> to vector<2x1024xbf16>
    %22 = arith.sitofp %20 : vector<1024x1024xi8> to vector<1024x1024xbf16>
    %cst_12 = arith.constant dense<0.000000e+00> : vector<2x1024xf32>
    %23 = tpu.matmul %21, %22, %cst_12 {dimension_numbers = #tpu.dot_dimension_numbers<[1], [0], [0], [1], [0, 0, 1, 1], [], []>} : vector<2x1024xbf16>, vector<1024x1024xbf16>, vector<2x1024xf32> -> vector<2x1024xf32>
    %24 = vector.extract_strided_slice %5 {offsets = [1, 0], sizes = [1, 1024], strides = [1, 1]} : vector<8x1792xf32> to vector<1x1024xf32>
    %25 = vector.broadcast %24 : vector<1x1024xf32> to vector<2x1024xf32>
    %26 = arith.mulf %23, %25 : vector<2x1024xf32>
    %27 = vector.extract_strided_slice %5 {offsets = [5, 0], sizes = [1, 1024], strides = [1, 1]} : vector<8x1792xf32> to vector<1x1024xf32>
    %28 = vector.broadcast %27 : vector<1x1024xf32> to vector<2x1024xf32>
    %29 = arith.addf %26, %28 : vector<2x1024xf32>
    %cst_13 = arith.constant 0.000000e+00 : f32
    %30 = vector.broadcast %cst_13 : f32 to vector<2x1024xf32>
    %31 = arith.maximumf %29, %30 : vector<2x1024xf32>
    %c0_14 = arith.constant 0 : index
    %c0_15 = arith.constant 0 : index
    %c0_16 = arith.constant 0 : index
    %32 = vector.load %arg4[%c0_14, %c0_15, %c0_16] : memref<1x1024x1024xi8, #tpu.memory_space<vmem>>, vector<1x1024x1024xi8>
    %33 = vector.shape_cast %32 : vector<1x1024x1024xi8> to vector<1024x1024xi8>
    %34 = arith.truncf %31 : vector<2x1024xf32> to vector<2x1024xbf16>
    %35 = arith.sitofp %33 : vector<1024x1024xi8> to vector<1024x1024xbf16>
    %cst_17 = arith.constant dense<0.000000e+00> : vector<2x1024xf32>
    %36 = tpu.matmul %34, %35, %cst_17 {dimension_numbers = #tpu.dot_dimension_numbers<[1], [0], [0], [1], [0, 0, 1, 1], [], []>} : vector<2x1024xbf16>, vector<1024x1024xbf16>, vector<2x1024xf32> -> vector<2x1024xf32>
    %37 = vector.extract_strided_slice %5 {offsets = [2, 0], sizes = [1, 1024], strides = [1, 1]} : vector<8x1792xf32> to vector<1x1024xf32>
    %38 = vector.broadcast %37 : vector<1x1024xf32> to vector<2x1024xf32>
    %39 = arith.mulf %36, %38 : vector<2x1024xf32>
    %40 = vector.extract_strided_slice %5 {offsets = [6, 0], sizes = [1, 1024], strides = [1, 1]} : vector<8x1792xf32> to vector<1x1024xf32>
    %41 = vector.broadcast %40 : vector<1x1024xf32> to vector<2x1024xf32>
    %42 = arith.addf %39, %41 : vector<2x1024xf32>
    %cst_18 = arith.constant 0.000000e+00 : f32
    %43 = vector.broadcast %cst_18 : f32 to vector<2x1024xf32>
    %44 = arith.maximumf %42, %43 : vector<2x1024xf32>
    %c0_19 = arith.constant 0 : index
    %c0_20 = arith.constant 0 : index
    %c0_21 = arith.constant 0 : index
    %45 = vector.load %arg5[%c0_19, %c0_20, %c0_21] : memref<1x1024x1792xi8, #tpu.memory_space<vmem>>, vector<1x1024x1792xi8>
    %46 = vector.shape_cast %45 : vector<1x1024x1792xi8> to vector<1024x1792xi8>
    %47 = arith.truncf %44 : vector<2x1024xf32> to vector<2x1024xbf16>
    %48 = arith.sitofp %46 : vector<1024x1792xi8> to vector<1024x1792xbf16>
    %cst_22 = arith.constant dense<0.000000e+00> : vector<2x1792xf32>
    %49 = tpu.matmul %47, %48, %cst_22 {dimension_numbers = #tpu.dot_dimension_numbers<[1], [0], [0], [1], [0, 0, 1, 1], [], []>} : vector<2x1024xbf16>, vector<1024x1792xbf16>, vector<2x1792xf32> -> vector<2x1792xf32>
    %50 = vector.extract_strided_slice %5 {offsets = [3, 0], sizes = [1, 1792], strides = [1, 1]} : vector<8x1792xf32> to vector<1x1792xf32>
    %51 = vector.broadcast %50 : vector<1x1792xf32> to vector<2x1792xf32>
    %52 = arith.mulf %49, %51 : vector<2x1792xf32>
    %53 = vector.extract_strided_slice %5 {offsets = [7, 0], sizes = [1, 1792], strides = [1, 1]} : vector<8x1792xf32> to vector<1x1792xf32>
    %54 = vector.broadcast %53 : vector<1x1792xf32> to vector<2x1792xf32>
    %55 = arith.addf %52, %54 : vector<2x1792xf32>
    %cst_23 = arith.constant -5.000000e+00 : f32
    %cst_24 = arith.constant 2.000000e+00 : f32
    %56 = vector.broadcast %cst_23 : f32 to vector<2x1792xf32>
    %57 = arith.maximumf %56, %55 : vector<2x1792xf32>
    %58 = vector.broadcast %cst_24 : f32 to vector<2x1792xf32>
    %59 = arith.minimumf %58, %57 : vector<2x1792xf32>
    %60 = vector.extract_strided_slice %59 {offsets = [0, 0], sizes = [2, 896], strides = [1, 1]} : vector<2x1792xf32> to vector<2x896xf32>
    %61 = vector.extract_strided_slice %59 {offsets = [0, 896], sizes = [2, 896], strides = [1, 1]} : vector<2x1792xf32> to vector<2x896xf32>
    %62 = math.exp %61 : vector<2x896xf32>
    %63 = arith.mulf %3, %62 : vector<2x896xf32>
    %64 = arith.addf %63, %60 : vector<2x896xf32>
    %c0_25 = arith.constant 0 : index
    %c0_26 = arith.constant 0 : index
    %65 = vector.load %arg7[%c0_25, %c0_26] : memref<2x896xf32, #tpu.memory_space<vmem>>, vector<2x896xf32>
    tpu.vector_store %arg7[%c0_25, %c0_26], %64 {strides = array<i32>} : memref<2x896xf32, #tpu.memory_space<vmem>>, vector<2x896xf32>,
    %c0_27 = arith.constant 0 : index
    %c0_28 = arith.constant 0 : index
    %66 = vector.load %arg8[%c0_27, %c0_28] : memref<2x1xf32, #tpu.memory_space<vmem>>, vector<2x1xf32>
    %cst_29 = arith.constant dense<0.000000e+00> : vector<2xf32>
    %67 = vector.multi_reduction <add>, %61, %cst_29 [1] : vector<2x896xf32> to vector<2xf32>
    %68 = vector.shape_cast %67 : vector<2xf32> to vector<2x1xf32>
    %69 = arith.addf %66, %68 : vector<2x1xf32>
    %c0_30 = arith.constant 0 : index
    %c0_31 = arith.constant 0 : index
    %70 = vector.load %arg8[%c0_30, %c0_31] : memref<2x1xf32, #tpu.memory_space<vmem>>, vector<2x1xf32>
    tpu.vector_store %arg8[%c0_30, %c0_31], %69 {strides = array<i32>} : memref<2x1xf32, #tpu.memory_space<vmem>>, vector<2x1xf32>,
    %c2_i32 = arith.constant 2 : i32
    %71 = arith.cmpi eq, %arg0, %c2_i32 : i32
    %72 = arith.extui %71 : i1 to i32
    %c0_i32_32 = arith.constant 0 : i32
    %73 = arith.cmpi ne, %72, %c0_i32_32 : i32
    scf.if %73 {
      %c0_33 = arith.constant 0 : index
      %c0_34 = arith.constant 0 : index
      %74 = vector.load %arg8[%c0_33, %c0_34] : memref<2x1xf32, #tpu.memory_space<vmem>>, vector<2x1xf32>
      %75 = arith.mulf %64, %64 : vector<2x896xf32>
      %cst_35 = arith.constant dense<0.000000e+00> : vector<2xf32>
      %76 = vector.multi_reduction <add>, %75, %cst_35 [1] : vector<2x896xf32> to vector<2xf32>
      %77 = vector.shape_cast %76 : vector<2xf32> to vector<2x1xf32>
      %cst_36 = arith.constant 5.000000e-01 : f32
      %78 = vector.broadcast %cst_36 : f32 to vector<2x1xf32>
      %79 = arith.mulf %78, %77 : vector<2x1xf32>
      %80 = arith.subf %74, %79 : vector<2x1xf32>
      %cst_37 = arith.constant 720.447815 : f32
      %81 = vector.broadcast %cst_37 : f32 to vector<2x1xf32>
      %82 = arith.subf %80, %81 : vector<2x1xf32>
      %c0_38 = arith.constant 0 : index
      %c0_39 = arith.constant 0 : index
      %83 = vector.load %arg8[%c0_38, %c0_39] : memref<2x1xf32, #tpu.memory_space<vmem>>, vector<2x1xf32>
      tpu.vector_store %arg8[%c0_38, %c0_39], %82 {strides = array<i32>} : memref<2x1xf32, #tpu.memory_space<vmem>>, vector<2x1xf32>,
    } else {
    }
    return
  }
  func.func @transform_0(%arg0: i32) -> (i32, i32) {
    %c0_i32 = arith.constant 0 : i32
    %c0_i32_0 = arith.constant 0 : i32
    %c0_i32_1 = arith.constant 0 : i32
    return %c0_i32, %c0_i32_0 : i32, i32
  }
  func.func @transform_1(%arg0: i32) -> (i32, i32, i32) {
    %c0_i32 = arith.constant 0 : i32
    %c0_i32_0 = arith.constant 0 : i32
    %c0_i32_1 = arith.constant 0 : i32
    return %arg0, %c0_i32, %c0_i32_0 : i32, i32, i32
  }
  func.func @transform_2(%arg0: i32) -> (i32, i32, i32) {
    %c0_i32 = arith.constant 0 : i32
    %c0_i32_0 = arith.constant 0 : i32
    %c0_i32_1 = arith.constant 0 : i32
    return %arg0, %c0_i32, %c0_i32_0 : i32, i32, i32
  }
  func.func @transform_3(%arg0: i32) -> (i32, i32, i32) {
    %c0_i32 = arith.constant 0 : i32
    %c0_i32_0 = arith.constant 0 : i32
    %c0_i32_1 = arith.constant 0 : i32
    return %arg0, %c0_i32, %c0_i32_0 : i32, i32, i32
  }
  func.func @transform_4(%arg0: i32) -> (i32, i32, i32) {
    %c0_i32 = arith.constant 0 : i32
    %c0_i32_0 = arith.constant 0 : i32
    %c0_i32_1 = arith.constant 0 : i32
    return %arg0, %c0_i32, %c0_i32_0 : i32, i32, i32
  }
  func.func @transform_5(%arg0: i32) -> (i32, i32, i32) {
    %c0_i32 = arith.constant 0 : i32
    %c0_i32_0 = arith.constant 0 : i32
    %c0_i32_1 = arith.constant 0 : i32
    return %arg0, %c0_i32, %c0_i32_0 : i32, i32, i32
  }
  func.func @transform_6(%arg0: i32) -> (i32, i32) {
    %c0_i32 = arith.constant 0 : i32
    %c0_i32_0 = arith.constant 0 : i32
    %c0_i32_1 = arith.constant 0 : i32
    return %c0_i32, %c0_i32_0 : i32, i32
  }
  func.func @transform_7(%arg0: i32) -> (i32, i32) {
    %c0_i32 = arith.constant 0 : i32
    %c0_i32_0 = arith.constant 0 : i32
    %c0_i32_1 = arith.constant 0 : i32
    return %c0_i32, %c0_i32_0 : i32, i32
  }
}

</mosaic_0001>

<llo_original>
// kernel: tpu_custom_call.1
$region0: #{tpu_custom_call.1}
  #allocation0 [shape = 'u32[]', space=smem, size = 0x4, offset = 0x4, fixed_abs, tag = 'smem constant byte address 0x4 - core index']
  #allocation1 [shape = 'u32[144,128]{1,0:T(1,128)}', space=vmem, size = 0x12000, scoped, tag = 'internal scratch']
  %s0 = inlined_call_operand.hbm [shape: f32[2,896], index: 0, kind: input, shape index: {}]
  %s1 = inlined_call_operand.hbm [shape: s8[3,896,1024], index: 1, kind: input, shape index: {}]
  %s2 = inlined_call_operand.hbm [shape: s8[3,1024,1024], index: 2, kind: input, shape index: {}]
  %s3 = inlined_call_operand.hbm [shape: s8[3,1024,1024], index: 3, kind: input, shape index: {}]
  %s4 = inlined_call_operand.hbm [shape: s8[3,1024,1792], index: 4, kind: input, shape index: {}]
  %s5 = inlined_call_operand.hbm [shape: f32[3,8,1792], index: 5, kind: input, shape index: {}]
  %s6 = inlined_call_operand.hbm [shape: f32[2,896], index: 6, kind: output, shape index: {0}]
  %s7 = inlined_call_operand.vmem [shape: f32[2,1], index: 7, kind: output, shape index: {1}]
  %8 = xla_tuple %s6, %s7
  %s9 = sld [smem:[#allocation0]]
  $region97: #{tpu_custom_call.1} parent=0
    _
  %s11 = ssub.s32 1, %s9
  %s12 = scalar_select 0, %s11, %s9
  $region1: #{tpu_custom_call.1} parent=0
    #allocation2 [shape = 'u8[7168]{0}', space=vmem, size = 0x1c00, scoped, tag = 'input window, operand 0, single buffered']
    #allocation3 [shape = 's32[2]{0}', space=sflag, size = 0x8, scoped, tag = 'scoped memory for tpu_custom_call.1']
    #allocation4 [shape = 's32[2]{0}', space=sflag, size = 0x8, scoped, tag = 'scoped memory for tpu_custom_call.1']
    #allocation5 [shape = 'u8[1835008]{0}', space=vmem, size = 0x1c0000, scoped, tag = 'input window, operand 1']
    #allocation6 [shape = 's32[2]{0}', space=sflag, size = 0x8, scoped, tag = 'scoped memory for tpu_custom_call.1']
    #allocation7 [shape = 'u8[2097152]{0}', space=vmem, size = 0x200000, scoped, tag = 'input window, operand 2']
    #allocation8 [shape = 'u8[2097152]{0}', space=vmem, size = 0x200000, scoped, tag = 'input window, operand 3']
    #allocation9 [shape = 's32[2]{0}', space=sflag, size = 0x8, scoped, tag = 'scoped memory for tpu_custom_call.1']
    #allocation10 [shape = 'u8[3670016]{0}', space=vmem, size = 0x380000, scoped, tag = 'input window, operand 4']
    #allocation11 [shape = 'u8[114688]{0}', space=vmem, size = 0x1c000, scoped, tag = 'input window, operand 5']
    #allocation12 [shape = 's32[2]{0}', space=sflag, size = 0x8, scoped, tag = 'scoped memory for tpu_custom_call.1']
    #allocation13 [shape = 'u8[7168]{0}', space=vmem, size = 0x1c00, scoped, tag = 'output window, operand 0, single buffered']
    %13 = vsyncpa [#allocation3], 0
    %14 = vsyncpa [#allocation6], 0
    %s15 = scalar_lea.sflag [#allocation6], 1
    %16 = vsyncpa %s15, 0
    %17 = vsyncpa [#allocation9], 0
    %s18 = scalar_lea.sflag [#allocation9], 1
    %19 = vsyncpa %s18, 0
    %20 = vsyncpa [#allocation12], 0
    %s21 = scalar_lea.sflag [#allocation12], 1
    %22 = vsyncpa %s21, 0
    %23 = vsyncpa [#allocation4], 0
    loop: start=0, step=1, limit=5
    $region2: #{tpu_custom_call.1} parent=1 // loop_pre_header
      _
    $region3: #{tpu_custom_call.1} parent=1 // loop_header
      %s25 = sphi 0, %s29
      %p26 = scmp.ge.s32.totalorder %s25, 5
      %s33 = sphi 0, %s33
      %s35 = sphi 0, %s33
      %s36 = sphi 0, %s35
      %s50 = sphi 0, %s36
      %s56 = sphi 0, %s58
      %s59 = sphi 0, %s56
      %s60 = sphi 0, %s59
      %s76 = sphi 0, %s60
      %s82 = sphi 0, %s84
      %s85 = sphi 0, %s82
      %s86 = sphi 0, %s85
      %s102 = sphi 0, %s86
      %s108 = sphi 0, %s110
      %s111 = sphi 0, %s108
      %s112 = sphi 0, %s111
      %s128 = sphi 0, %s112
      %s134 = sphi 0, %s136
      %s137 = sphi 0, %s134
      %s138 = sphi 0, %s137
      %s154 = sphi 0, %s138
      %s160 = sphi 0, %s162
      %s163 = sphi 0, %s160
      %s164 = sphi 0, %s163
      %s180 = sphi 0, %s164
      %s184 = sphi 0, %s184
      %s186 = sphi 0, %s184
      %s187 = sphi 0, %s186
      %s201 = sphi 0, %s187
      %s205 = sphi 0, %s205
      %s207 = sphi 0, %s205
      %s208 = sphi 0, %s207
      %s222 = sphi 0, %s208
    $region4: #{tpu_custom_call.1} parent=1 // loop_header_branch
      %28 = sbr.rel (%p26) target = $region8
    $region5: #{tpu_custom_call.1} parent=1 // loop_body
      %s30 = ssub.s32 %s25, 1
      %s31 = ssub.s32 %s25, 2
      %s32 = sadd.s32 %s25, 1
      %s34 = sadd.s32 %s33, 1
      %p37 = scmp.eq.s32.totalorder %s25, 2
      %p38 = scmp.ne.s32.totalorder %s33, %s35
      %p39 = scmp.eq.s32.totalorder %s25, 0
      %p40 = por %p38, %p39
      %p41 = scmp.ne.s32.totalorder %s33, %s35
      %p42 = scmp.eq.s32.totalorder %s30, 2
      %p43 = por %p41, %p42
      %p44 = scmp.ne.s32.totalorder %s35, %s36
      %p45 = scmp.eq.s32.totalorder %s30, 0
      %p46 = por %p44, %p45
      %p47 = scmp.ne.s32.totalorder %s35, %s36
      %p48 = scmp.eq.s32.totalorder %s31, 2
      %p49 = por %p47, %p48
      %p51 = scmp.ne.s32.totalorder %s36, %s50
      %p52 = scmp.eq.s32.totalorder %s31, 0
      %p53 = por %p51, %p52
      %s54 = ssub.s32 %s25, %s32
      %p55 = scmp.eq.s32.totalorder %s54, 0
      %s57 = sadd.s32 %s56, 1
      %s58 = scalar_select %p55, %s56, %s57
      %p61 = pneg %p55
      %p62 = scmp.eq.s32.totalorder %s25, 2
      %p63 = por %p61, %p62
      %p64 = scmp.ne.s32.totalorder %s56, %s59
      %p65 = scmp.eq.s32.totalorder %s25, 0
      %p66 = por %p64, %p65
      %p67 = scmp.ne.s32.totalorder %s56, %s59
      %p68 = scmp.eq.s32.totalorder %s30, 2
      %p69 = por %p67, %p68
      %p70 = scmp.ne.s32.totalorder %s59, %s60
      %p71 = scmp.eq.s32.totalorder %s30, 0
      %p72 = por %p70, %p71
      %p73 = scmp.ne.s32.totalorder %s59, %s60
      %p74 = scmp.eq.s32.totalorder %s31, 2
      %p75 = por %p73, %p74
      %p77 = scmp.ne.s32.totalorder %s60, %s76
      %p78 = scmp.eq.s32.totalorder %s31, 0
      %p79 = por %p77, %p78
      %s80 = ssub.s32 %s25, %s32
      %p81 = scmp.eq.s32.totalorder %s80, 0
      %s83 = sadd.s32 %s82, 1
      %s84 = scalar_select %p81, %s82, %s83
      %p87 = pneg %p81
      %p88 = scmp.eq.s32.totalorder %s25, 2
      %p89 = por %p87, %p88
      %p90 = scmp.ne.s32.totalorder %s82, %s85
      %p91 = scmp.eq.s32.totalorder %s25, 0
      %p92 = por %p90, %p91
      %p93 = scmp.ne.s32.totalorder %s82, %s85
      %p94 = scmp.eq.s32.totalorder %s30, 2
      %p95 = por %p93, %p94
      %p96 = scmp.ne.s32.totalorder %s85, %s86
      %p97 = scmp.eq.s32.totalorder %s30, 0
      %p98 = por %p96, %p97
      %p99 = scmp.ne.s32.totalorder %s85, %s86
      %p100 = scmp.eq.s32.totalorder %s31, 2
      %p101 = por %p99, %p100
      %p103 = scmp.ne.s32.totalorder %s86, %s102
      %p104 = scmp.eq.s32.totalorder %s31, 0
      %p105 = por %p103, %p104
      %s106 = ssub.s32 %s25, %s32
      %p107 = scmp.eq.s32.totalorder %s106, 0
      %s109 = sadd.s32 %s108, 1
      %s110 = scalar_select %p107, %s108, %s109
      %p113 = pneg %p107
      %p114 = scmp.eq.s32.totalorder %s25, 2
      %p115 = por %p113, %p114
      %p116 = scmp.ne.s32.totalorder %s108, %s111
      %p117 = scmp.eq.s32.totalorder %s25, 0
      %p118 = por %p116, %p117
      %p119 = scmp.ne.s32.totalorder %s108, %s111
      %p120 = scmp.eq.s32.totalorder %s30, 2
      %p121 = por %p119, %p120
      %p122 = scmp.ne.s32.totalorder %s111, %s112
      %p123 = scmp.eq.s32.totalorder %s30, 0
      %p124 = por %p122, %p123
      %p125 = scmp.ne.s32.totalorder %s111, %s112
      %p126 = scmp.eq.s32.totalorder %s31, 2
      %p127 = por %p125, %p126
      %p129 = scmp.ne.s32.totalorder %s112, %s128
      %p130 = scmp.eq.s32.totalorder %s31, 0
      %p131 = por %p129, %p130
      %s132 = ssub.s32 %s25, %s32
      %p133 = scmp.eq.s32.totalorder %s132, 0
      %s135 = sadd.s32 %s134, 1
      %s136 = scalar_select %p133, %s134, %s135
      %p139 = pneg %p133
      %p140 = scmp.eq.s32.totalorder %s25, 2
      %p141 = por %p139, %p140
      %p142 = scmp.ne.s32.totalorder %s134, %s137
      %p143 = scmp.eq.s32.totalorder %s25, 0
      %p144 = por %p142, %p143
      %p145 = scmp.ne.s32.totalorder %s134, %s137
      %p146 = scmp.eq.s32.totalorder %s30, 2
      %p147 = por %p145, %p146
      %p148 = scmp.ne.s32.totalorder %s137, %s138
      %p149 = scmp.eq.s32.totalorder %s30, 0
      %p150 = por %p148, %p149
      %p151 = scmp.ne.s32.totalorder %s137, %s138
      %p152 = scmp.eq.s32.totalorder %s31, 2
      %p153 = por %p151, %p152
      %p155 = scmp.ne.s32.totalorder %s138, %s154
      %p156 = scmp.eq.s32.totalorder %s31, 0
      %p157 = por %p155, %p156
      %s158 = ssub.s32 %s25, %s32
      %p159 = scmp.eq.s32.totalorder %s158, 0
      %s161 = sadd.s32 %s160, 1
      %s162 = scalar_select %p159, %s160, %s161
      %p165 = pneg %p159
      %p166 = scmp.eq.s32.totalorder %s25, 2
      %p167 = por %p165, %p166
      %p168 = scmp.ne.s32.totalorder %s160, %s163
      %p169 = scmp.eq.s32.totalorder %s25, 0
      %p170 = por %p168, %p169
      %p171 = scmp.ne.s32.totalorder %s160, %s163
      %p172 = scmp.eq.s32.totalorder %s30, 2
      %p173 = por %p171, %p172
      %p174 = scmp.ne.s32.totalorder %s163, %s164
      %p175 = scmp.eq.s32.totalorder %s30, 0
      %p176 = por %p174, %p175
      %p177 = scmp.ne.s32.totalorder %s163, %s164
      %p178 = scmp.eq.s32.totalorder %s31, 2
      %p179 = por %p177, %p178
      %p181 = scmp.ne.s32.totalorder %s164, %s180
      %p182 = scmp.eq.s32.totalorder %s31, 0
      %p183 = por %p181, %p182
      %s185 = sadd.s32 %s184, 1
      %p188 = scmp.eq.s32.totalorder %s25, 2
      %p189 = scmp.ne.s32.totalorder %s184, %s186
      %p190 = scmp.eq.s32.totalorder %s25, 0
      %p191 = por %p189, %p190
      %p192 = scmp.ne.s32.totalorder %s184, %s186
      %p193 = scmp.eq.s32.totalorder %s30, 2
      %p194 = por %p192, %p193
      %p195 = scmp.ne.s32.totalorder %s186, %s187
      %p196 = scmp.eq.s32.totalorder %s30, 0
      %p197 = por %p195, %p196
      %p198 = scmp.ne.s32.totalorder %s186, %s187
      %p199 = scmp.eq.s32.totalorder %s31, 2
      %p200 = por %p198, %p199
      %p202 = scmp.ne.s32.totalorder %s187, %s201
      %p203 = scmp.eq.s32.totalorder %s31, 0
      %p204 = por %p202, %p203
      %s206 = sadd.s32 %s205, 1
      %p209 = scmp.eq.s32.totalorder %s25, 2
      %p210 = scmp.ne.s32.totalorder %s205, %s207
      %p211 = scmp.eq.s32.totalorder %s25, 0
      %p212 = por %p210, %p211
      %p213 = scmp.ne.s32.totalorder %s205, %s207
      %p214 = scmp.eq.s32.totalorder %s30, 2
      %p215 = por %p213, %p214
      %p216 = scmp.ne.s32.totalorder %s207, %s208
      %p217 = scmp.eq.s32.totalorder %s30, 0
      %p218 = por %p216, %p217
      %p219 = scmp.ne.s32.totalorder %s207, %s208
      %p220 = scmp.eq.s32.totalorder %s31, 2
      %p221 = por %p219, %p220
      %p223 = scmp.ne.s32.totalorder %s208, %s222
      %p224 = scmp.eq.s32.totalorder %s31, 0
      %p225 = por %p223, %p224
      %p226 = scmp.le.s32.totalorder 1, %s25
      %p227 = scmp.lt.s32.totalorder %s25, 4
      %p228 = pnand %p226, %p227
      %p229 = pneg %p228
      // Predicated region
      $region9: #{tpu_custom_call.1} parent=5 // pred_check
        _
      $region10: #{tpu_custom_call.1} parent=5 // pred_check_branch
        %231 = sbr.rel (%p228) target = $region12
      $region11: #{tpu_custom_call.1} parent=5 // pred_region
        %s232 = ssub.s32 %s25, 1
        // Predicated region
        $region13: #{tpu_custom_call.1} parent=11 // pred_check
          %p233 = pneg %p46
        $region14: #{tpu_custom_call.1} parent=11 // pred_check_branch
          %235 = sbr.rel (%p233) target = $region16
        $region15: #{tpu_custom_call.1} parent=11 // pred_region
          %s237 = ssub.s32 224, 224
          %238 = vsyncadd [#allocation3], %s237
          %s240 = sshll.u32 [#allocation2], 4
          %s241 = int_to_ptr.vmem [resolvable:$true] %s240
          %243 = dma.hbm_to_vmem [thread:$0]  %s0, 224, %s241, [#allocation3]
        $region16: #{tpu_custom_call.1} parent=11 // pred_fallthru
          _
      $region12: #{tpu_custom_call.1} parent=5 // pred_fallthru
        _
      %p244 = scmp.lt.s32.totalorder %s25, 3
      // Predicated region
      $region17: #{tpu_custom_call.1} parent=5 // pred_check
        %p245 = pneg %p244
      $region18: #{tpu_custom_call.1} parent=5 // pred_check_branch
        %247 = sbr.rel (%p245) target = $region20
      $region19: #{tpu_custom_call.1} parent=5 // pred_region
        // Predicated region
        $region21: #{tpu_custom_call.1} parent=19 // pred_check
          %p248 = pneg %p66
        $region22: #{tpu_custom_call.1} parent=19 // pred_check_branch
          %250 = sbr.rel (%p248) target = $region24
        $region23: #{tpu_custom_call.1} parent=19 // pred_region
          %s251 = sand.u32 %s25, 1
          %s252 = scalar_lea.sflag [#allocation6], %s251
          %s253 = sand.u32 %s56, 1
          %s254 = smul.addr %s253, 1792
          %s255 = scalar_lea.vmem [#allocation5], %s254
          %s257 = ssub.s32 28672, 28672
          %258 = vsyncadd %s252, %s257
          %s259 = smul.addr %s25, 224
          %s260 = smul.addr %s259, 128
          %s261 = scalar_lea.hbm %s1, %s260
          %s262 = sshll.u32 %s255, 4
          %s263 = int_to_ptr.vmem [resolvable:$true] %s262
          %268 = dma.hbm_to_vmem [thread:$0]  %s261, 28672, %s263, %s252, 1024, 1024, 64
        $region24: #{tpu_custom_call.1} parent=19 // pred_fallthru
          _
        // Predicated region
        $region25: #{tpu_custom_call.1} parent=19 // pred_check
          %p269 = pneg %p92
        $region26: #{tpu_custom_call.1} parent=19 // pred_check_branch
          %271 = sbr.rel (%p269) target = $region28
        $region27: #{tpu_custom_call.1} parent=19 // pred_region
          %s272 = sand.u32 %s25, 1
          %s273 = scalar_lea.sflag [#allocation6], %s272
          %s274 = sand.u32 %s82, 1
          %s275 = smul.addr %s274, 2048
          %s276 = scalar_lea.vmem [#allocation7], %s275
          %s278 = ssub.s32 32768, 32768
          %279 = vsyncadd %s273, %s278
          %s280 = smul.addr %s25, 256
          %s281 = smul.addr %s280, 128
          %s282 = scalar_lea.hbm %s2, %s281
          %s283 = sshll.u32 %s276, 4
          %s284 = int_to_ptr.vmem [resolvable:$true] %s283
          %289 = dma.hbm_to_vmem [thread:$0]  %s282, 32768, %s284, %s273, 1024, 1024, 64
        $region28: #{tpu_custom_call.1} parent=19 // pred_fallthru
          _
        // Predicated region
        $region29: #{tpu_custom_call.1} parent=19 // pred_check
          %p290 = pneg %p118
        $region30: #{tpu_custom_call.1} parent=19 // pred_check_branch
          %292 = sbr.rel (%p290) target = $region32
        $region31: #{tpu_custom_call.1} parent=19 // pred_region
          %s293 = sand.u32 %s25, 1
          %s294 = scalar_lea.sflag [#allocation9], %s293
          %s295 = sand.u32 %s108, 1
          %s296 = smul.addr %s295, 2048
          %s297 = scalar_lea.vmem [#allocation8], %s296
          %s299 = ssub.s32 32768, 32768
          %300 = vsyncadd %s294, %s299
          %s301 = smul.addr %s25, 256
          %s302 = smul.addr %s301, 128
          %s303 = scalar_lea.hbm %s3, %s302
          %s304 = sshll.u32 %s297, 4
          %s305 = int_to_ptr.vmem [resolvable:$true] %s304
          %310 = dma.hbm_to_vmem [thread:$0]  %s303, 32768, %s305, %s294, 1024, 1024, 64
        $region32: #{tpu_custom_call.1} parent=19 // pred_fallthru
          _
        // Predicated region
        $region33: #{tpu_custom_call.1} parent=19 // pred_check
          %p311 = pneg %p144
        $region34: #{tpu_custom_call.1} parent=19 // pred_check_branch
          %313 = sbr.rel (%p311) target = $region36
        $region35: #{tpu_custom_call.1} parent=19 // pred_region
          %s314 = sand.u32 %s25, 1
          %s315 = scalar_lea.sflag [#allocation9], %s314
          %s316 = sand.u32 %s134, 1
          %s317 = smul.addr %s316, 3584
          %s318 = scalar_lea.vmem [#allocation10], %s317
          %s320 = ssub.s32 57344, 57344
          %321 = vsyncadd %s315, %s320
          %s322 = smul.addr %s25, 448
          %s323 = smul.addr %s322, 128
          %s324 = scalar_lea.hbm %s4, %s323
          %s325 = sshll.u32 %s318, 4
          %s326 = int_to_ptr.vmem [resolvable:$true] %s325
          %331 = dma.hbm_to_vmem [thread:$0]  %s324, 57344, %s326, %s315, 1792, 1792, 112
        $region36: #{tpu_custom_call.1} parent=19 // pred_fallthru
          _
        // Predicated region
        $region37: #{tpu_custom_call.1} parent=19 // pred_check
          %p332 = pneg %p170
        $region38: #{tpu_custom_call.1} parent=19 // pred_check_branch
          %334 = sbr.rel (%p332) target = $region40
        $region39: #{tpu_custom_call.1} parent=19 // pred_region
          %s335 = sand.u32 %s160, 1
          %s336 = scalar_lea.sflag [#allocation12], %s335
          %s337 = sand.u32 %s160, 1
          %s338 = smul.addr %s337, 112
          %s339 = scalar_lea.vmem [#allocation11], %s338
          %s341 = ssub.s32 1792, 1792
          %342 = vsyncadd %s336, %s341
          %s343 = smul.addr %s25, 14
          %s344 = smul.addr %s343, 128
          %s345 = scalar_lea.hbm %s5, %s344
          %s347 = sshll.u32 %s339, 4
          %s348 = int_to_ptr.vmem [resolvable:$true] %s347
          %350 = dma.hbm_to_vmem [thread:$0]  %s345, 1792, %s348, %s336
        $region40: #{tpu_custom_call.1} parent=19 // pred_fallthru
          _
      $region20: #{tpu_custom_call.1} parent=5 // pred_fallthru
        _
      %p351 = scmp.le.s32.totalorder 1, %s25
      %p352 = scmp.lt.s32.totalorder %s25, 4
      %p353 = pnand %p351, %p352
      %p354 = pneg %p353
      // Predicated region
      $region41: #{tpu_custom_call.1} parent=5 // pred_check
        _
      $region42: #{tpu_custom_call.1} parent=5 // pred_check_branch
        %356 = sbr.rel (%p353) target = $region44
      $region43: #{tpu_custom_call.1} parent=5 // pred_region
        %s357 = ssub.s32 %s25, 1
        // Predicated region
        $region45: #{tpu_custom_call.1} parent=43 // pred_check
          %p358 = pneg %p46
        $region46: #{tpu_custom_call.1} parent=43 // pred_check_branch
          %360 = sbr.rel (%p358) target = $region48
        $region47: #{tpu_custom_call.1} parent=43 // pred_region
          %361 = dma.done [#allocation3], 224
        $region48: #{tpu_custom_call.1} parent=43 // pred_fallthru
          _
        %s362 = sand.u32 %s30, 1
        %s363 = scalar_lea.sflag [#allocation6], %s362
        %s364 = sand.u32 %s59, 1
        %s365 = smul.addr %s364, 1792
        %s366 = scalar_lea.vmem [#allocation5], %s365
        // Predicated region
        $region49: #{tpu_custom_call.1} parent=43 // pred_check
          %p367 = pneg %p72
        $region50: #{tpu_custom_call.1} parent=43 // pred_check_branch
          %369 = sbr.rel (%p367) target = $region52
        $region51: #{tpu_custom_call.1} parent=43 // pred_region
          %370 = dma.done %s363, 28672
        $region52: #{tpu_custom_call.1} parent=43 // pred_fallthru
          _
        %s371 = sand.u32 %s30, 1
        %s372 = scalar_lea.sflag [#allocation6], %s371
        %s373 = sand.u32 %s85, 1
        %s374 = smul.addr %s373, 2048
        %s375 = scalar_lea.vmem [#allocation7], %s374
        // Predicated region
        $region53: #{tpu_custom_call.1} parent=43 // pred_check
          %p376 = pneg %p98
        $region54: #{tpu_custom_call.1} parent=43 // pred_check_branch
          %378 = sbr.rel (%p376) target = $region56
        $region55: #{tpu_custom_call.1} parent=43 // pred_region
          %379 = dma.done %s372, 32768
        $region56: #{tpu_custom_call.1} parent=43 // pred_fallthru
          _
        %s380 = sand.u32 %s30, 1
        %s381 = scalar_lea.sflag [#allocation9], %s380
        %s382 = sand.u32 %s111, 1
        %s383 = smul.addr %s382, 2048
        %s384 = scalar_lea.vmem [#allocation8], %s383
        // Predicated region
        $region57: #{tpu_custom_call.1} parent=43 // pred_check
          %p385 = pneg %p124
        $region58: #{tpu_custom_call.1} parent=43 // pred_check_branch
          %387 = sbr.rel (%p385) target = $region60
        $region59: #{tpu_custom_call.1} parent=43 // pred_region
          %388 = dma.done %s381, 32768
        $region60: #{tpu_custom_call.1} parent=43 // pred_fallthru
          _
        %s389 = sand.u32 %s30, 1
        %s390 = scalar_lea.sflag [#allocation9], %s389
        %s391 = sand.u32 %s137, 1
        %s392 = smul.addr %s391, 3584
        %s393 = scalar_lea.vmem [#allocation10], %s392
        // Predicated region
        $region61: #{tpu_custom_call.1} parent=43 // pred_check
          %p394 = pneg %p150
        $region62: #{tpu_custom_call.1} parent=43 // pred_check_branch
          %396 = sbr.rel (%p394) target = $region64
        $region63: #{tpu_custom_call.1} parent=43 // pred_region
          %397 = dma.done %s390, 57344
        $region64: #{tpu_custom_call.1} parent=43 // pred_fallthru
          _
        %s398 = sand.u32 %s163, 1
        %s399 = scalar_lea.sflag [#allocation12], %s398
        %s400 = sand.u32 %s163, 1
        %s401 = smul.addr %s400, 112
        %s402 = scalar_lea.vmem [#allocation11], %s401
        // Predicated region
        $region65: #{tpu_custom_call.1} parent=43 // pred_check
          %p403 = pneg %p176
        $region66: #{tpu_custom_call.1} parent=43 // pred_check_branch
          %405 = sbr.rel (%p403) target = $region68
        $region67: #{tpu_custom_call.1} parent=43 // pred_region
          %406 = dma.done %s399, 1792
        $region68: #{tpu_custom_call.1} parent=43 // pred_fallthru
          _
        %p407 = pneg %p46
        %p408 = pneg %p43
        %s409 = sand.u32 %s30, 1
        %s410 = scalar_lea.sflag [#allocation6], %s409
        %s411 = sand.u32 %s59, 1
        %s412 = smul.addr %s411, 1792
        %s413 = scalar_lea.vmem [#allocation5], %s412
        %p414 = pneg %p72
        %p415 = pneg %p69
        %s416 = sand.u32 %s30, 1
        %s417 = scalar_lea.sflag [#allocation6], %s416
        %s418 = sand.u32 %s85, 1
        %s419 = smul.addr %s418, 2048
        %s420 = scalar_lea.vmem [#allocation7], %s419
        %p421 = pneg %p98
        %p422 = pneg %p95
        %s423 = sand.u32 %s30, 1
        %s424 = scalar_lea.sflag [#allocation9], %s423
        %s425 = sand.u32 %s111, 1
        %s426 = smul.addr %s425, 2048
        %s427 = scalar_lea.vmem [#allocation8], %s426
        %p428 = pneg %p124
        %p429 = pneg %p121
        %s430 = sand.u32 %s30, 1
        %s431 = scalar_lea.sflag [#allocation9], %s430
        %s432 = sand.u32 %s137, 1
        %s433 = smul.addr %s432, 3584
        %s434 = scalar_lea.vmem [#allocation10], %s433
        %p435 = pneg %p150
        %p436 = pneg %p147
        %s437 = sand.u32 %s163, 1
        %s438 = scalar_lea.sflag [#allocation12], %s437
        %s439 = sand.u32 %s163, 1
        %s440 = smul.addr %s439, 112
        %s441 = scalar_lea.vmem [#allocation11], %s440
        %p442 = pneg %p176
        %p443 = pneg %p173
        %p444 = pneg %p197
        %p445 = pneg %p194
        %p446 = pneg %p218
        %p447 = pneg %p215
        %p449 = scmp.eq.s32.totalorder %s30, 0
        // Predicated region
        $region69: #{tpu_custom_call.1} parent=43 // pred_check
          %p450 = pneg %p449
        $region70: #{tpu_custom_call.1} parent=43 // pred_check_branch
          %452 = sbr.rel (%p450) target = $region72
        $region71: #{tpu_custom_call.1} parent=43 // pred_region
          %v453 = vld [vmem:[#allocation2] sm:$0xff]
          %v454 = vld [vmem:[#allocation2 + $0x8] sm:$0x3f]
          %455 = vst [vmem:[#allocation13] sm:$0xff] %v453
          %456 = vst [vmem:[#allocation13 + $0x8] sm:$0x3f] %v454
          %vm457 = vcmask 1024
          %458 = vst.msk [vmem:[%s7] sm:$0x3] %vm457, 0.0
        $region72: #{tpu_custom_call.1} parent=43 // pred_fallthru
          _
        %v459 = vld [vmem:[#allocation13] sm:$0xff]
        %v460 = vld [vmem:[#allocation13 + $0x8] sm:$0x3f]
        %v461 = vld [vmem:[%s402] sm:$0xff]
        %v462 = vld [vmem:[%s402 + $0x8] sm:$0xff]
        %v463 = vld [vmem:[%s402 + $0x10] sm:$0xff]
        %v464 = vld [vmem:[%s402 + $0x18] sm:$0xff]
        %v465 = vld [vmem:[%s402 + $0x20] sm:$0xff]
        %v466 = vld [vmem:[%s402 + $0x28] sm:$0xff]
        %v467 = vld [vmem:[%s402 + $0x30] sm:$0xff]
        %v468 = vld [vmem:[%s402 + $0x38] sm:$0xff]
        %v469 = vld [vmem:[%s402 + $0x40] sm:$0xff]
        %v470 = vld [vmem:[%s402 + $0x48] sm:$0xff]
        %v471 = vld [vmem:[%s402 + $0x50] sm:$0xff]
        %v472 = vld [vmem:[%s402 + $0x58] sm:$0xff]
        %v473 = vld [vmem:[%s402 + $0x60] sm:$0xff]
        %v474 = vld [vmem:[%s402 + $0x68] sm:$0xff]
        %v475 = vld [vmem:[%s366] sm:$0xff]
        %v476 = vld [vmem:[%s366 + $0x8] sm:$0xff]
        %v477 = vld [vmem:[%s366 + $0x10] sm:$0xff]
        %v478 = vld [vmem:[%s366 + $0x18] sm:$0xff]
        %v479 = vld [vmem:[%s366 + $0x20] sm:$0xff]
        %v480 = vld [vmem:[%s366 + $0x28] sm:$0xff]
        %v481 = vld [vmem:[%s366 + $0x30] sm:$0xff]
        %v482 = vld [vmem:[%s366 + $0x38] sm:$0xff]
        %v483 = vld [vmem:[%s366 + $0x40] sm:$0xff]
        %v484 = vld [vmem:[%s366 + $0x48] sm:$0xff]
        %v485 = vld [vmem:[%s366 + $0x50] sm:$0xff]
        %v486 = vld [vmem:[%s366 + $0x58] sm:$0xff]
        %v487 = vld [vmem:[%s366 + $0x60] sm:$0xff]
        %v488 = vld [vmem:[%s366 + $0x68] sm:$0xff]
        %v489 = vld [vmem:[%s366 + $0x70] sm:$0xff]
        %v490 = vld [vmem:[%s366 + $0x78] sm:$0xff]
        %v491 = vld [vmem:[%s366 + $0x80] sm:$0xff]
        %v492 = vld [vmem:[%s366 + $0x88] sm:$0xff]
        %v493 = vld [vmem:[%s366 + $0x90] sm:$0xff]
        %v494 = vld [vmem:[%s366 + $0x98] sm:$0xff]
        %v495 = vld [vmem:[%s366 + $0xa0] sm:$0xff]
        %v496 = vld [vmem:[%s366 + $0xa8] sm:$0xff]
        %v497 = vld [vmem:[%s366 + $0xb0] sm:$0xff]
        %v498 = vld [vmem:[%s366 + $0xb8] sm:$0xff]
        %v499 = vld [vmem:[%s366 + $0xc0] sm:$0xff]
        %v500 = vld [vmem:[%s366 + $0xc8] sm:$0xff]
        %v501 = vld [vmem:[%s366 + $0xd0] sm:$0xff]
        %v502 = vld [vmem:[%s366 + $0xd8] sm:$0xff]
        %v503 = vld [vmem:[%s366 + $0xe0] sm:$0xff]
        %v504 = vld [vmem:[%s366 + $0xe8] sm:$0xff]
        %v505 = vld [vmem:[%s366 + $0xf0] sm:$0xff]
        %v506 = vld [vmem:[%s366 + $0xf8] sm:$0xff]
        %v507 = vld [vmem:[%s366 + $0x100] sm:$0xff]
        %v508 = vld [vmem:[%s366 + $0x108] sm:$0xff]
        %v509 = vld [vmem:[%s366 + $0x110] sm:$0xff]
        %v510 = vld [vmem:[%s366 + $0x118] sm:$0xff]
        %v511 = vld [vmem:[%s366 + $0x120] sm:$0xff]
        %v512 = vld [vmem:[%s366 + $0x128] sm:$0xff]
        %v513 = vld [vmem:[%s366 + $0x130] sm:$0xff]
        %v514 = vld [vmem:[%s366 + $0x138] sm:$0xff]
        %v515 = vld [vmem:[%s366 + $0x140] sm:$0xff]
        %v516 = vld [vmem:[%s366 + $0x148] sm:$0xff]
        %v517 = vld [vmem:[%s366 + $0x150] sm:$0xff]
        %v518 = vld [vmem:[%s366 + $0x158] sm:$0xff]
        %v519 = vld [vmem:[%s366 + $0x160] sm:$0xff]
        %v520 = vld [vmem:[%s366 + $0x168] sm:$0xff]
        %v521 = vld [vmem:[%s366 + $0x170] sm:$0xff]
        %v522 = vld [vmem:[%s366 + $0x178] sm:$0xff]
        %v523 = vld [vmem:[%s366 + $0x180] sm:$0xff]
        %v524 = vld [vmem:[%s366 + $0x188] sm:$0xff]
        %v525 = vld [vmem:[%s366 + $0x190] sm:$0xff]
        %v526 = vld [vmem:[%s366 + $0x198] sm:$0xff]
        %v527 = vld [vmem:[%s366 + $0x1a0] sm:$0xff]
        %v528 = vld [vmem:[%s366 + $0x1a8] sm:$0xff]
        %v529 = vld [vmem:[%s366 + $0x1b0] sm:$0xff]
        %v530 = vld [vmem:[%s366 + $0x1b8] sm:$0xff]
        %v531 = vld [vmem:[%s366 + $0x1c0] sm:$0xff]
        %v532 = vld [vmem:[%s366 + $0x1c8] sm:$0xff]
        %v533 = vld [vmem:[%s366 + $0x1d0] sm:$0xff]
        %v534 = vld [vmem:[%s366 + $0x1d8] sm:$0xff]
        %v535 = vld [vmem:[%s366 + $0x1e0] sm:$0xff]
        %v536 = vld [vmem:[%s366 + $0x1e8] sm:$0xff]
        %v537 = vld [vmem:[%s366 + $0x1f0] sm:$0xff]
        %v538 = vld [vmem:[%s366 + $0x1f8] sm:$0xff]
        %v539 = vld [vmem:[%s366 + $0x200] sm:$0xff]
        %v540 = vld [vmem:[%s366 + $0x208] sm:$0xff]
        %v541 = vld [vmem:[%s366 + $0x210] sm:$0xff]
        %v542 = vld [vmem:[%s366 + $0x218] sm:$0xff]
        %v543 = vld [vmem:[%s366 + $0x220] sm:$0xff]
        %v544 = vld [vmem:[%s366 + $0x228] sm:$0xff]
        %v545 = vld [vmem:[%s366 + $0x230] sm:$0xff]
        %v546 = vld [vmem:[%s366 + $0x238] sm:$0xff]
        %v547 = vld [vmem:[%s366 + $0x240] sm:$0xff]
        %v548 = vld [vmem:[%s366 + $0x248] sm:$0xff]
        %v549 = vld [vmem:[%s366 + $0x250] sm:$0xff]
        %v550 = vld [vmem:[%s366 + $0x258] sm:$0xff]
        %v551 = vld [vmem:[%s366 + $0x260] sm:$0xff]
        %v552 = vld [vmem:[%s366 + $0x268] sm:$0xff]
        %v553 = vld [vmem:[%s366 + $0x270] sm:$0xff]
        %v554 = vld [vmem:[%s366 + $0x278] sm:$0xff]
        %v555 = vld [vmem:[%s366 + $0x280] sm:$0xff]
        %v556 = vld [vmem:[%s366 + $0x288] sm:$0xff]
        %v557 = vld [vmem:[%s366 + $0x290] sm:$0xff]
        %v558 = vld [vmem:[%s366 + $0x298] sm:$0xff]
        %v559 = vld [vmem:[%s366 + $0x2a0] sm:$0xff]
        %v560 = vld [vmem:[%s366 + $0x2a8] sm:$0xff]
        %v561 = vld [vmem:[%s366 + $0x2b0] sm:$0xff]
        %v562 = vld [vmem:[%s366 + $0x2b8] sm:$0xff]
        %v563 = vld [vmem:[%s366 + $0x2c0] sm:$0xff]
        %v564 = vld [vmem:[%s366 + $0x2c8] sm:$0xff]
        %v565 = vld [vmem:[%s366 + $0x2d0] sm:$0xff]
        %v566 = vld [vmem:[%s366 + $0x2d8] sm:$0xff]
        %v567 = vld [vmem:[%s366 + $0x2e0] sm:$0xff]
        %v568 = vld [vmem:[%s366 + $0x2e8] sm:$0xff]
        %v569 = vld [vmem:[%s366 + $0x2f0] sm:$0xff]
        %v570 = vld [vmem:[%s366 + $0x2f8] sm:$0xff]
        %v571 = vld [vmem:[%s366 + $0x300] sm:$0xff]
        %v572 = vld [vmem:[%s366 + $0x308] sm:$0xff]
        %v573 = vld [vmem:[%s366 + $0x310] sm:$0xff]
        %v574 = vld [vmem:[%s366 + $0x318] sm:$0xff]
        %v575 = vld [vmem:[%s366 + $0x320] sm:$0xff]
        %v576 = vld [vmem:[%s366 + $0x328] sm:$0xff]
        %v577 = vld [vmem:[%s366 + $0x330] sm:$0xff]
        %v578 = vld [vmem:[%s366 + $0x338] sm:$0xff]
        %v579 = vld [vmem:[%s366 + $0x340] sm:$0xff]
        %v580 = vld [vmem:[%s366 + $0x348] sm:$0xff]
        %v581 = vld [vmem:[%s366 + $0x350] sm:$0xff]
        %v582 = vld [vmem:[%s366 + $0x358] sm:$0xff]
        %v583 = vld [vmem:[%s366 + $0x360] sm:$0xff]
        %v584 = vld [vmem:[%s366 + $0x368] sm:$0xff]
        %v585 = vld [vmem:[%s366 + $0x370] sm:$0xff]
        %v586 = vld [vmem:[%s366 + $0x378] sm:$0xff]
        %v587 = vld [vmem:[%s366 + $0x380] sm:$0xff]
        %v588 = vld [vmem:[%s366 + $0x388] sm:$0xff]
        %v589 = vld [vmem:[%s366 + $0x390] sm:$0xff]
        %v590 = vld [vmem:[%s366 + $0x398] sm:$0xff]
        %v591 = vld [vmem:[%s366 + $0x3a0] sm:$0xff]
        %v592 = vld [vmem:[%s366 + $0x3a8] sm:$0xff]
        %v593 = vld [vmem:[%s366 + $0x3b0] sm:$0xff]
        %v594 = vld [vmem:[%s366 + $0x3b8] sm:$0xff]
        %v595 = vld [vmem:[%s366 + $0x3c0] sm:$0xff]
        %v596 = vld [vmem:[%s366 + $0x3c8] sm:$0xff]
        %v597 = vld [vmem:[%s366 + $0x3d0] sm:$0xff]
        %v598 = vld [vmem:[%s366 + $0x3d8] sm:$0xff]
        %v599 = vld [vmem:[%s366 + $0x3e0] sm:$0xff]
        %v600 = vld [vmem:[%s366 + $0x3e8] sm:$0xff]
        %v601 = vld [vmem:[%s366 + $0x3f0] sm:$0xff]
        %v602 = vld [vmem:[%s366 + $0x3f8] sm:$0xff]
        %v603 = vld [vmem:[%s366 + $0x400] sm:$0xff]
        %v604 = vld [vmem:[%s366 + $0x408] sm:$0xff]
        %v605 = vld [vmem:[%s366 + $0x410] sm:$0xff]
        %v606 = vld [vmem:[%s366 + $0x418] sm:$0xff]
        %v607 = vld [vmem:[%s366 + $0x420] sm:$0xff]
        %v608 = vld [vmem:[%s366 + $0x428] sm:$0xff]
        %v609 = vld [vmem:[%s366 + $0x430] sm:$0xff]
        %v610 = vld [vmem:[%s366 + $0x438] sm:$0xff]
        %v611 = vld [vmem:[%s366 + $0x440] sm:$0xff]
        %v612 = vld [vmem:[%s366 + $0x448] sm:$0xff]
        %v613 = vld [vmem:[%s366 + $0x450] sm:$0xff]
        %v614 = vld [vmem:[%s366 + $0x458] sm:$0xff]
        %v615 = vld [vmem:[%s366 + $0x460] sm:$0xff]
        %v616 = vld [vmem:[%s366 + $0x468] sm:$0xff]
        %v617 = vld [vmem:[%s366 + $0x470] sm:$0xff]
        %v618 = vld [vmem:[%s366 + $0x478] sm:$0xff]
        %v619 = vld [vmem:[%s366 + $0x480] sm:$0xff]
        %v620 = vld [vmem:[%s366 + $0x488] sm:$0xff]
        %v621 = vld [vmem:[%s366 + $0x490] sm:$0xff]
        %v622 = vld [vmem:[%s366 + $0x498] sm:$0xff]
        %v623 = vld [vmem:[%s366 + $0x4a0] sm:$0xff]
        %v624 = vld [vmem:[%s366 + $0x4a8] sm:$0xff]
        %v625 = vld [vmem:[%s366 + $0x4b0] sm:$0xff]
        %v626 = vld [vmem:[%s366 + $0x4b8] sm:$0xff]
        %v627 = vld [vmem:[%s366 + $0x4c0] sm:$0xff]
        %v628 = vld [vmem:[%s366 + $0x4c8] sm:$0xff]
        %v629 = vld [vmem:[%s366 + $0x4d0] sm:$0xff]
        %v630 = vld [vmem:[%s366 + $0x4d8] sm:$0xff]
        %v631 = vld [vmem:[%s366 + $0x4e0] sm:$0xff]
        %v632 = vld [vmem:[%s366 + $0x4e8] sm:$0xff]
        %v633 = vld [vmem:[%s366 + $0x4f0] sm:$0xff]
        %v634 = vld [vmem:[%s366 + $0x4f8] sm:$0xff]
        %v635 = vld [vmem:[%s366 + $0x500] sm:$0xff]
        %v636 = vld [vmem:[%s366 + $0x508] sm:$0xff]
        %v637 = vld [vmem:[%s366 + $0x510] sm:$0xff]
        %v638 = vld [vmem:[%s366 + $0x518] sm:$0xff]
        %v639 = vld [vmem:[%s366 + $0x520] sm:$0xff]
        %v640 = vld [vmem:[%s366 + $0x528] sm:$0xff]
        %v641 = vld [vmem:[%s366 + $0x530] sm:$0xff]
        %v642 = vld [vmem:[%s366 + $0x538] sm:$0xff]
        %v643 = vld [vmem:[%s366 + $0x540] sm:$0xff]
        %v644 = vld [vmem:[%s366 + $0x548] sm:$0xff]
        %v645 = vld [vmem:[%s366 + $0x550] sm:$0xff]
        %v646 = vld [vmem:[%s366 + $0x558] sm:$0xff]
        %v647 = vld [vmem:[%s366 + $0x560] sm:$0xff]
        %v648 = vld [vmem:[%s366 + $0x568] sm:$0xff]
        %v649 = vld [vmem:[%s366 + $0x570] sm:$0xff]
        %v650 = vld [vmem:[%s366 + $0x578] sm:$0xff]
        %v651 = vld [vmem:[%s366 + $0x580] sm:$0xff]
        %v652 = vld [vmem:[%s366 + $0x588] sm:$0xff]
        %v653 = vld [vmem:[%s366 + $0x590] sm:$0xff]
        %v654 = vld [vmem:[%s366 + $0x598] sm:$0xff]
        %v655 = vld [vmem:[%s366 + $0x5a0] sm:$0xff]
        %v656 = vld [vmem:[%s366 + $0x5a8] sm:$0xff]
        %v657 = vld [vmem:[%s366 + $0x5b0] sm:$0xff]
        %v658 = vld [vmem:[%s366 + $0x5b8] sm:$0xff]
        %v659 = vld [vmem:[%s366 + $0x5c0] sm:$0xff]
        %v660 = vld [vmem:[%s366 + $0x5c8] sm:$0xff]
        %v661 = vld [vmem:[%s366 + $0x5d0] sm:$0xff]
        %v662 = vld [vmem:[%s366 + $0x5d8] sm:$0xff]
        %v663 = vld [vmem:[%s366 + $0x5e0] sm:$0xff]
        %v664 = vld [vmem:[%s366 + $0x5e8] sm:$0xff]
        %v665 = vld [vmem:[%s366 + $0x5f0] sm:$0xff]
        %v666 = vld [vmem:[%s366 + $0x5f8] sm:$0xff]
        %v667 = vld [vmem:[%s366 + $0x600] sm:$0xff]
        %v668 = vld [vmem:[%s366 + $0x608] sm:$0xff]
        %v669 = vld [vmem:[%s366 + $0x610] sm:$0xff]
        %v670 = vld [vmem:[%s366 + $0x618] sm:$0xff]
        %v671 = vld [vmem:[%s366 + $0x620] sm:$0xff]
        %v672 = vld [vmem:[%s366 + $0x628] sm:$0xff]
        %v673 = vld [vmem:[%s366 + $0x630] sm:$0xff]
        %v674 = vld [vmem:[%s366 + $0x638] sm:$0xff]
        %v675 = vld [vmem:[%s366 + $0x640] sm:$0xff]
        %v676 = vld [vmem:[%s366 + $0x648] sm:$0xff]
        %v677 = vld [vmem:[%s366 + $0x650] sm:$0xff]
        %v678 = vld [vmem:[%s366 + $0x658] sm:$0xff]
        %v679 = vld [vmem:[%s366 + $0x660] sm:$0xff]
        %v680 = vld [vmem:[%s366 + $0x668] sm:$0xff]
        %v681 = vld [vmem:[%s366 + $0x670] sm:$0xff]
        %v682 = vld [vmem:[%s366 + $0x678] sm:$0xff]
        %v683 = vld [vmem:[%s366 + $0x680] sm:$0xff]
        %v684 = vld [vmem:[%s366 + $0x688] sm:$0xff]
        %v685 = vld [vmem:[%s366 + $0x690] sm:$0xff]
        %v686 = vld [vmem:[%s366 + $0x698] sm:$0xff]
        %v687 = vld [vmem:[%s366 + $0x6a0] sm:$0xff]
        %v688 = vld [vmem:[%s366 + $0x6a8] sm:$0xff]
        %v689 = vld [vmem:[%s366 + $0x6b0] sm:$0xff]
        %v690 = vld [vmem:[%s366 + $0x6b8] sm:$0xff]
        %v691 = vld [vmem:[%s366 + $0x6c0] sm:$0xff]
        %v692 = vld [vmem:[%s366 + $0x6c8] sm:$0xff]
        %v693 = vld [vmem:[%s366 + $0x6d0] sm:$0xff]
        %v694 = vld [vmem:[%s366 + $0x6d8] sm:$0xff]
        %v695 = vld [vmem:[%s366 + $0x6e0] sm:$0xff]
        %v696 = vld [vmem:[%s366 + $0x6e8] sm:$0xff]
        %v697 = vld [vmem:[%s366 + $0x6f0] sm:$0xff]
        %v698 = vld [vmem:[%s366 + $0x6f8] sm:$0xff]
        %v701 = vcombine.high %v459, %v459
        %v703 = vunpack.c.l.s4 1983009808
        %v704 = vunpack.c.0.s8 %v703
        %v705 = vlaneseq
        %v706 = vshrl.u32 %v705, 7
        %v707 = vsub.s32 %v704, %v706
        %v708 = vrot.slane %v459, %v707
        %v710 = vunpack.c.l.s4 1983009808
        %v711 = vunpack.c.0.s8 %v710
        %v712 = vlaneseq
        %v713 = vshrl.u32 %v712, 7
        %v714 = vsub.s32 %v711, %v713
        %v715 = vrot.slane %v701, %v714
        %v716 = vcombine.high %v708, %v708
        %v717 = vcombine.high %v715, %v715
        %v718 = vcombine.high %v460, %v460
        %v720 = vunpack.c.l.s4 1983009808
        %v721 = vunpack.c.0.s8 %v720
        %v722 = vlaneseq
        %v723 = vshrl.u32 %v722, 7
        %v724 = vsub.s32 %v721, %v723
        %v725 = vrot.slane %v460, %v724
        %v727 = vunpack.c.l.s4 1983009808
        %v728 = vunpack.c.0.s8 %v727
        %v729 = vlaneseq
        %v730 = vshrl.u32 %v729, 7
        %v731 = vsub.s32 %v728, %v730
        %v732 = vrot.slane %v718, %v731
        %v733 = vcombine.high %v725, %v725
        %v741 = vpack.c.bf16 %v708, %v708
        %v742 = vpack.c.bf16 %v716, %v716
        %v743 = vpack.c.bf16 %v715, %v715
        %v744 = vpack.c.bf16 %v717, %v717
        %v745 = vpack.c.bf16 %v725, %v725
        %v746 = vpack.c.bf16 %v733, %v733
        %v747 = vpack.c.bf16 %v732, %v732
        %v748 = vunpack.c.l.s8.bf16 %v475
        %v749 = vunpack.c.l.s8.bf16 %v476
        %v750 = vunpack.c.l.s8.bf16 %v477
        %v751 = vunpack.c.l.s8.bf16 %v478
        %v752 = vunpack.c.l.s8.bf16 %v479
        %v753 = vunpack.c.l.s8.bf16 %v480
        %v754 = vunpack.c.l.s8.bf16 %v481
        %v755 = vunpack.c.l.s8.bf16 %v482
        %v756 = vunpack.c.h.s8.bf16 %v475
        %v757 = vunpack.c.h.s8.bf16 %v476
        %v758 = vunpack.c.h.s8.bf16 %v477
        %v759 = vunpack.c.h.s8.bf16 %v478
        %v760 = vunpack.c.h.s8.bf16 %v479
        %v761 = vunpack.c.h.s8.bf16 %v480
        %v762 = vunpack.c.h.s8.bf16 %v481
        %v763 = vunpack.c.h.s8.bf16 %v482
        %v764 = vunpack.c.l.s8.bf16 %v483
        %v765 = vunpack.c.l.s8.bf16 %v484
        %v766 = vunpack.c.l.s8.bf16 %v485
        %v767 = vunpack.c.l.s8.bf16 %v486
        %v768 = vunpack.c.l.s8.bf16 %v487
        %v769 = vunpack.c.l.s8.bf16 %v488
        %v770 = vunpack.c.l.s8.bf16 %v489
        %v771 = vunpack.c.l.s8.bf16 %v490
        %v772 = vunpack.c.h.s8.bf16 %v483
        %v773 = vunpack.c.h.s8.bf16 %v484
        %v774 = vunpack.c.h.s8.bf16 %v485
        %v775 = vunpack.c.h.s8.bf16 %v486
        %v776 = vunpack.c.h.s8.bf16 %v487
        %v777 = vunpack.c.h.s8.bf16 %v488
        %v778 = vunpack.c.h.s8.bf16 %v489
        %v779 = vunpack.c.h.s8.bf16 %v490
        %v780 = vunpack.c.l.s8.bf16 %v491
        %v781 = vunpack.c.l.s8.bf16 %v492
        %v782 = vunpack.c.l.s8.bf16 %v493
        %v783 = vunpack.c.l.s8.bf16 %v494
        %v784 = vunpack.c.l.s8.bf16 %v495
        %v785 = vunpack.c.l.s8.bf16 %v496
        %v786 = vunpack.c.l.s8.bf16 %v497
        %v787 = vunpack.c.l.s8.bf16 %v498
        %v788 = vunpack.c.h.s8.bf16 %v491
        %v789 = vunpack.c.h.s8.bf16 %v492
        %v790 = vunpack.c.h.s8.bf16 %v493
        %v791 = vunpack.c.h.s8.bf16 %v494
        %v792 = vunpack.c.h.s8.bf16 %v495
        %v793 = vunpack.c.h.s8.bf16 %v496
        %v794 = vunpack.c.h.s8.bf16 %v497
        %v795 = vunpack.c.h.s8.bf16 %v498
        %v796 = vunpack.c.l.s8.bf16 %v499
        %v797 = vunpack.c.l.s8.bf16 %v500
        %v798 = vunpack.c.l.s8.bf16 %v501
        %v799 = vunpack.c.l.s8.bf16 %v502
        %v800 = vunpack.c.l.s8.bf16 %v503
        %v801 = vunpack.c.l.s8.bf16 %v504
        %v802 = vunpack.c.l.s8.bf16 %v505
        %v803 = vunpack.c.l.s8.bf16 %v506
        %v804 = vunpack.c.h.s8.bf16 %v499
        %v805 = vunpack.c.h.s8.bf16 %v500
        %v806 = vunpack.c.h.s8.bf16 %v501
        %v807 = vunpack.c.h.s8.bf16 %v502
        %v808 = vunpack.c.h.s8.bf16 %v503
        %v809 = vunpack.c.h.s8.bf16 %v504
        %v810 = vunpack.c.h.s8.bf16 %v505
        %v811 = vunpack.c.h.s8.bf16 %v506
        %v812 = vunpack.c.l.s8.bf16 %v507
        %v813 = vunpack.c.l.s8.bf16 %v508
        %v814 = vunpack.c.l.s8.bf16 %v509
        %v815 = vunpack.c.l.s8.bf16 %v510
        %v816 = vunpack.c.l.s8.bf16 %v511
        %v817 = vunpack.c.l.s8.bf16 %v512
        %v818 = vunpack.c.l.s8.bf16 %v513
        %v819 = vunpack.c.l.s8.bf16 %v514
        %v820 = vunpack.c.h.s8.bf16 %v507
        %v821 = vunpack.c.h.s8.bf16 %v508
        %v822 = vunpack.c.h.s8.bf16 %v509
        %v823 = vunpack.c.h.s8.bf16 %v510
        %v824 = vunpack.c.h.s8.bf16 %v511
        %v825 = vunpack.c.h.s8.bf16 %v512
        %v826 = vunpack.c.h.s8.bf16 %v513
        %v827 = vunpack.c.h.s8.bf16 %v514
        %v828 = vunpack.c.l.s8.bf16 %v515
        %v829 = vunpack.c.l.s8.bf16 %v516
        %v830 = vunpack.c.l.s8.bf16 %v517
        %v831 = vunpack.c.l.s8.bf16 %v518
        %v832 = vunpack.c.l.s8.bf16 %v519
        %v833 = vunpack.c.l.s8.bf16 %v520
        %v834 = vunpack.c.l.s8.bf16 %v521
        %v835 = vunpack.c.l.s8.bf16 %v522
        %v836 = vunpack.c.h.s8.bf16 %v515
        %v837 = vunpack.c.h.s8.bf16 %v516
        %v838 = vunpack.c.h.s8.bf16 %v517
        %v839 = vunpack.c.h.s8.bf16 %v518
        %v840 = vunpack.c.h.s8.bf16 %v519
        %v841 = vunpack.c.h.s8.bf16 %v520
        %v842 = vunpack.c.h.s8.bf16 %v521
        %v843 = vunpack.c.h.s8.bf16 %v522
        %v844 = vunpack.c.l.s8.bf16 %v523
        %v845 = vunpack.c.l.s8.bf16 %v524
        %v846 = vunpack.c.l.s8.bf16 %v525
        %v847 = vunpack.c.l.s8.bf16 %v526
        %v848 = vunpack.c.l.s8.bf16 %v527
        %v849 = vunpack.c.l.s8.bf16 %v528
        %v850 = vunpack.c.l.s8.bf16 %v529
        %v851 = vunpack.c.l.s8.bf16 %v530
        %v852 = vunpack.c.h.s8.bf16 %v523
        %v853 = vunpack.c.h.s8.bf16 %v524
        %v854 = vunpack.c.h.s8.bf16 %v525
        %v855 = vunpack.c.h.s8.bf16 %v526
        %v856 = vunpack.c.h.s8.bf16 %v527
        %v857 = vunpack.c.h.s8.bf16 %v528
        %v858 = vunpack.c.h.s8.bf16 %v529
        %v859 = vunpack.c.h.s8.bf16 %v530
        %v860 = vunpack.c.l.s8.bf16 %v531
        %v861 = vunpack.c.l.s8.bf16 %v532
        %v862 = vunpack.c.l.s8.bf16 %v533
        %v863 = vunpack.c.l.s8.bf16 %v534
        %v864 = vunpack.c.l.s8.bf16 %v535
        %v865 = vunpack.c.l.s8.bf16 %v536
        %v866 = vunpack.c.l.s8.bf16 %v537
        %v867 = vunpack.c.l.s8.bf16 %v538
        %v868 = vunpack.c.h.s8.bf16 %v531
        %v869 = vunpack.c.h.s8.bf16 %v532
        %v870 = vunpack.c.h.s8.bf16 %v533
        %v871 = vunpack.c.h.s8.bf16 %v534
        %v872 = vunpack.c.h.s8.bf16 %v535
        %v873 = vunpack.c.h.s8.bf16 %v536
        %v874 = vunpack.c.h.s8.bf16 %v537
        %v875 = vunpack.c.h.s8.bf16 %v538
        %v876 = vunpack.c.l.s8.bf16 %v539
        %v877 = vunpack.c.l.s8.bf16 %v540
        %v878 = vunpack.c.l.s8.bf16 %v541
        %v879 = vunpack.c.l.s8.bf16 %v542
        %v880 = vunpack.c.l.s8.bf16 %v543
        %v881 = vunpack.c.l.s8.bf16 %v544
        %v882 = vunpack.c.l.s8.bf16 %v545
        %v883 = vunpack.c.l.s8.bf16 %v546
        %v884 = vunpack.c.h.s8.bf16 %v539
        %v885 = vunpack.c.h.s8.bf16 %v540
        %v886 = vunpack.c.h.s8.bf16 %v541
        %v887 = vunpack.c.h.s8.bf16 %v542
        %v888 = vunpack.c.h.s8.bf16 %v543
        %v889 = vunpack.c.h.s8.bf16 %v544
        %v890 = vunpack.c.h.s8.bf16 %v545
        %v891 = vunpack.c.h.s8.bf16 %v546
        %v892 = vunpack.c.l.s8.bf16 %v547
        %v893 = vunpack.c.l.s8.bf16 %v548
        %v894 = vunpack.c.l.s8.bf16 %v549
        %v895 = vunpack.c.l.s8.bf16 %v550
        %v896 = vunpack.c.l.s8.bf16 %v551
        %v897 = vunpack.c.l.s8.bf16 %v552
        %v898 = vunpack.c.l.s8.bf16 %v553
        %v899 = vunpack.c.l.s8.bf16 %v554
        %v900 = vunpack.c.h.s8.bf16 %v547
        %v901 = vunpack.c.h.s8.bf16 %v548
        %v902 = vunpack.c.h.s8.bf16 %v549
        %v903 = vunpack.c.h.s8.bf16 %v550
        %v904 = vunpack.c.h.s8.bf16 %v551
        %v905 = vunpack.c.h.s8.bf16 %v552
        %v906 = vunpack.c.h.s8.bf16 %v553
        %v907 = vunpack.c.h.s8.bf16 %v554
        %v908 = vunpack.c.l.s8.bf16 %v555
        %v909 = vunpack.c.l.s8.bf16 %v556
        %v910 = vunpack.c.l.s8.bf16 %v557
        %v911 = vunpack.c.l.s8.bf16 %v558
        %v912 = vunpack.c.l.s8.bf16 %v559
        %v913 = vunpack.c.l.s8.bf16 %v560
        %v914 = vunpack.c.l.s8.bf16 %v561
        %v915 = vunpack.c.l.s8.bf16 %v562
        %v916 = vunpack.c.h.s8.bf16 %v555
        %v917 = vunpack.c.h.s8.bf16 %v556
        %v918 = vunpack.c.h.s8.bf16 %v557
        %v919 = vunpack.c.h.s8.bf16 %v558
        %v920 = vunpack.c.h.s8.bf16 %v559
        %v921 = vunpack.c.h.s8.bf16 %v560
        %v922 = vunpack.c.h.s8.bf16 %v561
        %v923 = vunpack.c.h.s8.bf16 %v562
        %v924 = vunpack.c.l.s8.bf16 %v563
        %v925 = vunpack.c.l.s8.bf16 %v564
        %v926 = vunpack.c.l.s8.bf16 %v565
        %v927 = vunpack.c.l.s8.bf16 %v566
        %v928 = vunpack.c.l.s8.bf16 %v567
        %v929 = vunpack.c.l.s8.bf16 %v568
        %v930 = vunpack.c.l.s8.bf16 %v569
        %v931 = vunpack.c.l.s8.bf16 %v570
        %v932 = vunpack.c.h.s8.bf16 %v563
        %v933 = vunpack.c.h.s8.bf16 %v564
        %v934 = vunpack.c.h.s8.bf16 %v565
        %v935 = vunpack.c.h.s8.bf16 %v566
        %v936 = vunpack.c.h.s8.bf16 %v567
        %v937 = vunpack.c.h.s8.bf16 %v568
        %v938 = vunpack.c.h.s8.bf16 %v569
        %v939 = vunpack.c.h.s8.bf16 %v570
        %v940 = vunpack.c.l.s8.bf16 %v571
        %v941 = vunpack.c.l.s8.bf16 %v572
        %v942 = vunpack.c.l.s8.bf16 %v573
        %v943 = vunpack.c.l.s8.bf16 %v574
        %v944 = vunpack.c.l.s8.bf16 %v575
        %v945 = vunpack.c.l.s8.bf16 %v576
        %v946 = vunpack.c.l.s8.bf16 %v577
        %v947 = vunpack.c.l.s8.bf16 %v578
        %v948 = vunpack.c.h.s8.bf16 %v571
        %v949 = vunpack.c.h.s8.bf16 %v572
        %v950 = vunpack.c.h.s8.bf16 %v573
        %v951 = vunpack.c.h.s8.bf16 %v574
        %v952 = vunpack.c.h.s8.bf16 %v575
        %v953 = vunpack.c.h.s8.bf16 %v576
        %v954 = vunpack.c.h.s8.bf16 %v577
        %v955 = vunpack.c.h.s8.bf16 %v578
        %v956 = vunpack.c.l.s8.bf16 %v579
        %v957 = vunpack.c.l.s8.bf16 %v580
        %v958 = vunpack.c.l.s8.bf16 %v581
        %v959 = vunpack.c.l.s8.bf16 %v582
        %v960 = vunpack.c.l.s8.bf16 %v583
        %v961 = vunpack.c.l.s8.bf16 %v584
        %v962 = vunpack.c.l.s8.bf16 %v585
        %v963 = vunpack.c.l.s8.bf16 %v586
        %v964 = vunpack.c.h.s8.bf16 %v579
        %v965 = vunpack.c.h.s8.bf16 %v580
        %v966 = vunpack.c.h.s8.bf16 %v581
        %v967 = vunpack.c.h.s8.bf16 %v582
        %v968 = vunpack.c.h.s8.bf16 %v583
        %v969 = vunpack.c.h.s8.bf16 %v584
        %v970 = vunpack.c.h.s8.bf16 %v585
        %v971 = vunpack.c.h.s8.bf16 %v586
        %v972 = vunpack.c.l.s8.bf16 %v587
        %v973 = vunpack.c.l.s8.bf16 %v588
        %v974 = vunpack.c.l.s8.bf16 %v589
        %v975 = vunpack.c.l.s8.bf16 %v590
        %v976 = vunpack.c.l.s8.bf16 %v591
        %v977 = vunpack.c.l.s8.bf16 %v592
        %v978 = vunpack.c.l.s8.bf16 %v593
        %v979 = vunpack.c.l.s8.bf16 %v594
        %v980 = vunpack.c.h.s8.bf16 %v587
        %v981 = vunpack.c.h.s8.bf16 %v588
        %v982 = vunpack.c.h.s8.bf16 %v589
        %v983 = vunpack.c.h.s8.bf16 %v590
        %v984 = vunpack.c.h.s8.bf16 %v591
        %v985 = vunpack.c.h.s8.bf16 %v592
        %v986 = vunpack.c.h.s8.bf16 %v593
        %v987 = vunpack.c.h.s8.bf16 %v594
        %v988 = vunpack.c.l.s8.bf16 %v595
        %v989 = vunpack.c.l.s8.bf16 %v596
        %v990 = vunpack.c.l.s8.bf16 %v597
        %v991 = vunpack.c.l.s8.bf16 %v598
        %v992 = vunpack.c.l.s8.bf16 %v599
        %v993 = vunpack.c.l.s8.bf16 %v600
        %v994 = vunpack.c.l.s8.bf16 %v601
        %v995 = vunpack.c.l.s8.bf16 %v602
        %v996 = vunpack.c.h.s8.bf16 %v595
        %v997 = vunpack.c.h.s8.bf16 %v596
        %v998 = vunpack.c.h.s8.bf16 %v597
        %v999 = vunpack.c.h.s8.bf16 %v598
        %v1000 = vunpack.c.h.s8.bf16 %v599
        %v1001 = vunpack.c.h.s8.bf16 %v600
        %v1002 = vunpack.c.h.s8.bf16 %v601
        %v1003 = vunpack.c.h.s8.bf16 %v602
        %v1004 = vunpack.c.l.s8.bf16 %v603
        %v1005 = vunpack.c.l.s8.bf16 %v604
        %v1006 = vunpack.c.l.s8.bf16 %v605
        %v1007 = vunpack.c.l.s8.bf16 %v606
        %v1008 = vunpack.c.l.s8.bf16 %v607
        %v1009 = vunpack.c.l.s8.bf16 %v608
        %v1010 = vunpack.c.l.s8.bf16 %v609
        %v1011 = vunpack.c.l.s8.bf16 %v610
        %v1012 = vunpack.c.h.s8.bf16 %v603
        %v1013 = vunpack.c.h.s8.bf16 %v604
        %v1014 = vunpack.c.h.s8.bf16 %v605
        %v1015 = vunpack.c.h.s8.bf16 %v606
        %v1016 = vunpack.c.h.s8.bf16 %v607
        %v1017 = vunpack.c.h.s8.bf16 %v608
        %v1018 = vunpack.c.h.s8.bf16 %v609
        %v1019 = vunpack.c.h.s8.bf16 %v610
        %v1020 = vunpack.c.l.s8.bf16 %v611
        %v1021 = vunpack.c.l.s8.bf16 %v612
        %v1022 = vunpack.c.l.s8.bf16 %v613
        %v1023 = vunpack.c.l.s8.bf16 %v614
        %v1024 = vunpack.c.l.s8.bf16 %v615
        %v1025 = vunpack.c.l.s8.bf16 %v616
        %v1026 = vunpack.c.l.s8.bf16 %v617
        %v1027 = vunpack.c.l.s8.bf16 %v618
        %v1028 = vunpack.c.h.s8.bf16 %v611
        %v1029 = vunpack.c.h.s8.bf16 %v612
        %v1030 = vunpack.c.h.s8.bf16 %v613
        %v1031 = vunpack.c.h.s8.bf16 %v614
        %v1032 = vunpack.c.h.s8.bf16 %v615
        %v1033 = vunpack.c.h.s8.bf16 %v616
        %v1034 = vunpack.c.h.s8.bf16 %v617
        %v1035 = vunpack.c.h.s8.bf16 %v618
        %v1036 = vunpack.c.l.s8.bf16 %v619
        %v1037 = vunpack.c.l.s8.bf16 %v620
        %v1038 = vunpack.c.l.s8.bf16 %v621
        %v1039 = vunpack.c.l.s8.bf16 %v622
        %v1040 = vunpack.c.l.s8.bf16 %v623
        %v1041 = vunpack.c.l.s8.bf16 %v624
        %v1042 = vunpack.c.l.s8.bf16 %v625
        %v1043 = vunpack.c.l.s8.bf16 %v626
        %v1044 = vunpack.c.h.s8.bf16 %v619
        %v1045 = vunpack.c.h.s8.bf16 %v620
        %v1046 = vunpack.c.h.s8.bf16 %v621
        %v1047 = vunpack.c.h.s8.bf16 %v622
        %v1048 = vunpack.c.h.s8.bf16 %v623
        %v1049 = vunpack.c.h.s8.bf16 %v624
        %v1050 = vunpack.c.h.s8.bf16 %v625
        %v1051 = vunpack.c.h.s8.bf16 %v626
        %v1052 = vunpack.c.l.s8.bf16 %v627
        %v1053 = vunpack.c.l.s8.bf16 %v628
        %v1054 = vunpack.c.l.s8.bf16 %v629
        %v1055 = vunpack.c.l.s8.bf16 %v630
        %v1056 = vunpack.c.l.s8.bf16 %v631
        %v1057 = vunpack.c.l.s8.bf16 %v632
        %v1058 = vunpack.c.l.s8.bf16 %v633
        %v1059 = vunpack.c.l.s8.bf16 %v634
        %v1060 = vunpack.c.h.s8.bf16 %v627
        %v1061 = vunpack.c.h.s8.bf16 %v628
        %v1062 = vunpack.c.h.s8.bf16 %v629
        %v1063 = vunpack.c.h.s8.bf16 %v630
        %v1064 = vunpack.c.h.s8.bf16 %v631
        %v1065 = vunpack.c.h.s8.bf16 %v632
        %v1066 = vunpack.c.h.s8.bf16 %v633
        %v1067 = vunpack.c.h.s8.bf16 %v634
        %v1068 = vunpack.c.l.s8.bf16 %v635
        %v1069 = vunpack.c.l.s8.bf16 %v636
        %v1070 = vunpack.c.l.s8.bf16 %v637
        %v1071 = vunpack.c.l.s8.bf16 %v638
        %v1072 = vunpack.c.l.s8.bf16 %v639
        %v1073 = vunpack.c.l.s8.bf16 %v640
        %v1074 = vunpack.c.l.s8.bf16 %v641
        %v1075 = vunpack.c.l.s8.bf16 %v642
        %v1076 = vunpack.c.h.s8.bf16 %v635
        %v1077 = vunpack.c.h.s8.bf16 %v636
        %v1078 = vunpack.c.h.s8.bf16 %v637
        %v1079 = vunpack.c.h.s8.bf16 %v638
        %v1080 = vunpack.c.h.s8.bf16 %v639
        %v1081 = vunpack.c.h.s8.bf16 %v640
        %v1082 = vunpack.c.h.s8.bf16 %v641
        %v1083 = vunpack.c.h.s8.bf16 %v642
        %v1084 = vunpack.c.l.s8.bf16 %v643
        %v1085 = vunpack.c.l.s8.bf16 %v644
        %v1086 = vunpack.c.l.s8.bf16 %v645
        %v1087 = vunpack.c.l.s8.bf16 %v646
        %v1088 = vunpack.c.l.s8.bf16 %v647
        %v1089 = vunpack.c.l.s8.bf16 %v648
        %v1090 = vunpack.c.l.s8.bf16 %v649
        %v1091 = vunpack.c.l.s8.bf16 %v650
        %v1092 = vunpack.c.h.s8.bf16 %v643
        %v1093 = vunpack.c.h.s8.bf16 %v644
        %v1094 = vunpack.c.h.s8.bf16 %v645
        %v1095 = vunpack.c.h.s8.bf16 %v646
        %v1096 = vunpack.c.h.s8.bf16 %v647
        %v1097 = vunpack.c.h.s8.bf16 %v648
        %v1098 = vunpack.c.h.s8.bf16 %v649
        %v1099 = vunpack.c.h.s8.bf16 %v650
        %v1100 = vunpack.c.l.s8.bf16 %v651
        %v1101 = vunpack.c.l.s8.bf16 %v652
        %v1102 = vunpack.c.l.s8.bf16 %v653
        %v1103 = vunpack.c.l.s8.bf16 %v654
        %v1104 = vunpack.c.l.s8.bf16 %v655
        %v1105 = vunpack.c.l.s8.bf16 %v656
        %v1106 = vunpack.c.l.s8.bf16 %v657
        %v1107 = vunpack.c.l.s8.bf16 %v658
        %v1108 = vunpack.c.h.s8.bf16 %v651
        %v1109 = vunpack.c.h.s8.bf16 %v652
        %v1110 = vunpack.c.h.s8.bf16 %v653
        %v1111 = vunpack.c.h.s8.bf16 %v654
        %v1112 = vunpack.c.h.s8.bf16 %v655
        %v1113 = vunpack.c.h.s8.bf16 %v656
        %v1114 = vunpack.c.h.s8.bf16 %v657
        %v1115 = vunpack.c.h.s8.bf16 %v658
        %v1116 = vunpack.c.l.s8.bf16 %v659
        %v1117 = vunpack.c.l.s8.bf16 %v660
        %v1118 = vunpack.c.l.s8.bf16 %v661
        %v1119 = vunpack.c.l.s8.bf16 %v662
        %v1120 = vunpack.c.l.s8.bf16 %v663
        %v1121 = vunpack.c.l.s8.bf16 %v664
        %v1122 = vunpack.c.l.s8.bf16 %v665
        %v1123 = vunpack.c.l.s8.bf16 %v666
        %v1124 = vunpack.c.h.s8.bf16 %v659
        %v1125 = vunpack.c.h.s8.bf16 %v660
        %v1126 = vunpack.c.h.s8.bf16 %v661
        %v1127 = vunpack.c.h.s8.bf16 %v662
        %v1128 = vunpack.c.h.s8.bf16 %v663
        %v1129 = vunpack.c.h.s8.bf16 %v664
        %v1130 = vunpack.c.h.s8.bf16 %v665
        %v1131 = vunpack.c.h.s8.bf16 %v666
        %v1132 = vunpack.c.l.s8.bf16 %v667
        %v1133 = vunpack.c.l.s8.bf16 %v668
        %v1134 = vunpack.c.l.s8.bf16 %v669
        %v1135 = vunpack.c.l.s8.bf16 %v670
        %v1136 = vunpack.c.l.s8.bf16 %v671
        %v1137 = vunpack.c.l.s8.bf16 %v672
        %v1138 = vunpack.c.l.s8.bf16 %v673
        %v1139 = vunpack.c.l.s8.bf16 %v674
        %v1140 = vunpack.c.h.s8.bf16 %v667
        %v1141 = vunpack.c.h.s8.bf16 %v668
        %v1142 = vunpack.c.h.s8.bf16 %v669
        %v1143 = vunpack.c.h.s8.bf16 %v670
        %v1144 = vunpack.c.h.s8.bf16 %v671
        %v1145 = vunpack.c.h.s8.bf16 %v672
        %v1146 = vunpack.c.h.s8.bf16 %v673
        %v1147 = vunpack.c.h.s8.bf16 %v674
        %v1148 = vunpack.c.l.s8.bf16 %v675
        %v1149 = vunpack.c.l.s8.bf16 %v676
        %v1150 = vunpack.c.l.s8.bf16 %v677
        %v1151 = vunpack.c.l.s8.bf16 %v678
        %v1152 = vunpack.c.l.s8.bf16 %v679
        %v1153 = vunpack.c.l.s8.bf16 %v680
        %v1154 = vunpack.c.l.s8.bf16 %v681
        %v1155 = vunpack.c.l.s8.bf16 %v682
        %v1156 = vunpack.c.h.s8.bf16 %v675
        %v1157 = vunpack.c.h.s8.bf16 %v676
        %v1158 = vunpack.c.h.s8.bf16 %v677
        %v1159 = vunpack.c.h.s8.bf16 %v678
        %v1160 = vunpack.c.h.s8.bf16 %v679
        %v1161 = vunpack.c.h.s8.bf16 %v680
        %v1162 = vunpack.c.h.s8.bf16 %v681
        %v1163 = vunpack.c.h.s8.bf16 %v682
        %v1164 = vunpack.c.l.s8.bf16 %v683
        %v1165 = vunpack.c.l.s8.bf16 %v684
        %v1166 = vunpack.c.l.s8.bf16 %v685
        %v1167 = vunpack.c.l.s8.bf16 %v686
        %v1168 = vunpack.c.l.s8.bf16 %v687
        %v1169 = vunpack.c.l.s8.bf16 %v688
        %v1170 = vunpack.c.l.s8.bf16 %v689
        %v1171 = vunpack.c.l.s8.bf16 %v690
        %v1172 = vunpack.c.h.s8.bf16 %v683
        %v1173 = vunpack.c.h.s8.bf16 %v684
        %v1174 = vunpack.c.h.s8.bf16 %v685
        %v1175 = vunpack.c.h.s8.bf16 %v686
        %v1176 = vunpack.c.h.s8.bf16 %v687
        %v1177 = vunpack.c.h.s8.bf16 %v688
        %v1178 = vunpack.c.h.s8.bf16 %v689
        %v1179 = vunpack.c.h.s8.bf16 %v690
        %v1180 = vunpack.c.l.s8.bf16 %v691
        %v1181 = vunpack.c.l.s8.bf16 %v692
        %v1182 = vunpack.c.l.s8.bf16 %v693
        %v1183 = vunpack.c.l.s8.bf16 %v694
        %v1184 = vunpack.c.l.s8.bf16 %v695
        %v1185 = vunpack.c.l.s8.bf16 %v696
        %v1186 = vunpack.c.l.s8.bf16 %v697
        %v1187 = vunpack.c.l.s8.bf16 %v698
        %v1188 = vunpack.c.h.s8.bf16 %v691
        %v1189 = vunpack.c.h.s8.bf16 %v692
        %v1190 = vunpack.c.h.s8.bf16 %v693
        %v1191 = vunpack.c.h.s8.bf16 %v694
        %v1192 = vunpack.c.h.s8.bf16 %v695
        %v1193 = vunpack.c.h.s8.bf16 %v696
        %v1194 = vunpack.c.h.s8.bf16 %v697
        %v1195 = vunpack.c.h.s8.bf16 %v698
        %1196 = vmatprep.subr.bf16.mxu0 %v749
        %1197 = vmatpush1.bf16.msra.mxu0 %v748
        %1198 = vmatprep.subr.bf16.mxu0 %v757
        %1199 = vmatpush1.bf16.msra.mxu0 %v756
        %1200 = vmatprep.subr.bf16.mxu0 %v765
        %1201 = vmatpush1.bf16.msra.mxu0 %v764
        %1202 = vmatprep.subr.bf16.mxu0 %v773
        %1203 = vmatpush1.bf16.msra.mxu0 %v772
        %1204 = vmatprep.subr.bf16.mxu0 %v781
        %1205 = vmatpush1.bf16.msra.mxu0 %v780
        %1206 = vmatprep.subr.bf16.mxu0 %v789
        %1207 = vmatpush1.bf16.msra.mxu0 %v788
        %1208 = vmatprep.subr.bf16.mxu0 %v797
        %1209 = vmatpush1.bf16.msra.mxu0 %v796
        %1210 = vmatprep.subr.bf16.mxu0 %v805
        %1211 = vmatpush1.bf16.msra.mxu0 %v804
        %1212 = vmatprep.subr.bf16.mxu0 %v813
        %1213 = vmatpush1.bf16.msra.mxu0 %v812
        %1214 = vmatprep.subr.bf16.mxu0 %v821
        %1215 = vmatpush1.bf16.msra.mxu0 %v820
        %1216 = vmatprep.subr.bf16.mxu0 %v829
        %1217 = vmatpush1.bf16.msra.mxu0 %v828
        %1218 = vmatprep.subr.bf16.mxu0 %v837
        %1219 = vmatpush1.bf16.msra.mxu0 %v836
        %1220 = vmatprep.subr.bf16.mxu0 %v845
        %1221 = vmatpush1.bf16.msra.mxu0 %v844
        %1222 = vmatprep.subr.bf16.mxu0 %v853
        %1223 = vmatpush1.bf16.msra.mxu0 %v852
        %1224 = vmatprep.subr.bf16.mxu0 %v861
        %1225 = vmatpush1.bf16.msra.mxu0 %v860
        %1226 = vmatprep.subr.bf16.mxu0 %v869
        %1227 = vmatpush1.bf16.msra.mxu0 %v868
        %1228 = vmatprep.mubr.bf16.mxu0 %v742
        %1229 = vmatmul.mubr.bf16.gmra.mrb[0].mxu0 %v741
        %v1230 = vpop.f32.mrb[0].mxu0
        %v1231 = vadd.f32 0.0, %v1230
        %v1232 = vpop.f32.mrb[0].mxu0
        %v1233 = vadd.f32 0.0, %v1232
        %v1234 = vpop.f32.mrb[0].mxu0
        %v1235 = vpop.f32.mrb[0].mxu0
        %1236 = vdwg.mxu0
        %1237 = vmatprep.subr.bf16.mxu0 %v877
        %1238 = vmatpush1.bf16.msra.mxu0 %v876
        %1239 = vmatprep.subr.bf16.mxu0 %v885
        %1240 = vmatpush1.bf16.msra.mxu0 %v884
        %1241 = vmatprep.subr.bf16.mxu0 %v893
        %1242 = vmatpush1.bf16.msra.mxu0 %v892
        %1243 = vmatprep.subr.bf16.mxu0 %v901
        %1244 = vmatpush1.bf16.msra.mxu0 %v900
        %1245 = vmatprep.subr.bf16.mxu0 %v909
        %1246 = vmatpush1.bf16.msra.mxu0 %v908
        %1247 = vmatprep.subr.bf16.mxu0 %v917
        %1248 = vmatpush1.bf16.msra.mxu0 %v916
        %1249 = vmatprep.subr.bf16.mxu0 %v925
        %1250 = vmatpush1.bf16.msra.mxu0 %v924
        %1251 = vmatprep.subr.bf16.mxu0 %v933
        %1252 = vmatpush1.bf16.msra.mxu0 %v932
        %1253 = vmatprep.subr.bf16.mxu0 %v941
        %1254 = vmatpush1.bf16.msra.mxu0 %v940
        %1255 = vmatprep.subr.bf16.mxu0 %v949
        %1256 = vmatpush1.bf16.msra.mxu0 %v948
        %1257 = vmatprep.subr.bf16.mxu0 %v957
        %1258 = vmatpush1.bf16.msra.mxu0 %v956
        %1259 = vmatprep.subr.bf16.mxu0 %v965
        %1260 = vmatpush1.bf16.msra.mxu0 %v964
        %1261 = vmatprep.subr.bf16.mxu0 %v973
        %1262 = vmatpush1.bf16.msra.mxu0 %v972
        %1263 = vmatprep.subr.bf16.mxu0 %v981
        %1264 = vmatpush1.bf16.msra.mxu0 %v980
        %1265 = vmatprep.subr.bf16.mxu0 %v989
        %1266 = vmatpush1.bf16.msra.mxu0 %v988
        %1267 = vmatprep.subr.bf16.mxu0 %v997
        %1268 = vmatpush1.bf16.msra.mxu0 %v996
        %1269 = vmatprep.mubr.bf16.mxu0 %v744
        %1270 = vmatmul.mubr.bf16.gmra.mrb[0].mxu0 %v743
        %v1271 = vpop.f32.mrb[0].mxu0
        %v1272 = vadd.f32 %v1231, %v1271
        %v1273 = vpop.f32.mrb[0].mxu0
        %v1274 = vadd.f32 %v1233, %v1273
        %v1275 = vpop.f32.mrb[0].mxu0
        %v1276 = vpop.f32.mrb[0].mxu0
        %1277 = vdwg.mxu0
        %1278 = vmatprep.subr.bf16.mxu0 %v1005
        %1279 = vmatpush1.bf16.msra.mxu0 %v1004
        %1280 = vmatprep.subr.bf16.mxu0 %v1013
        %1281 = vmatpush1.bf16.msra.mxu0 %v1012
        %1282 = vmatprep.subr.bf16.mxu0 %v1021
        %1283 = vmatpush1.bf16.msra.mxu0 %v1020
        %1284 = vmatprep.subr.bf16.mxu0 %v1029
        %1285 = vmatpush1.bf16.msra.mxu0 %v1028
        %1286 = vmatprep.subr.bf16.mxu0 %v1037
        %1287 = vmatpush1.bf16.msra.mxu0 %v1036
        %1288 = vmatprep.subr.bf16.mxu0 %v1045
        %1289 = vmatpush1.bf16.msra.mxu0 %v1044
        %1290 = vmatprep.subr.bf16.mxu0 %v1053
        %1291 = vmatpush1.bf16.msra.mxu0 %v1052
        %1292 = vmatprep.subr.bf16.mxu0 %v1061
        %1293 = vmatpush1.bf16.msra.mxu0 %v1060
        %1294 = vmatprep.subr.bf16.mxu0 %v1069
        %1295 = vmatpush1.bf16.msra.mxu0 %v1068
        %1296 = vmatprep.subr.bf16.mxu0 %v1077
        %1297 = vmatpush1.bf16.msra.mxu0 %v1076
        %1298 = vmatprep.subr.bf16.mxu0 %v1085
        %1299 = vmatpush1.bf16.msra.mxu0 %v1084
        %1300 = vmatprep.subr.bf16.mxu0 %v1093
        %1301 = vmatpush1.bf16.msra.mxu0 %v1092
        %1302 = vmatprep.subr.bf16.mxu0 %v1101
        %1303 = vmatpush1.bf16.msra.mxu0 %v1100
        %1304 = vmatprep.subr.bf16.mxu0 %v1109
        %1305 = vmatpush1.bf16.msra.mxu0 %v1108
        %1306 = vmatprep.subr.bf16.mxu0 %v1117
        %1307 = vmatpush1.bf16.msra.mxu0 %v1116
        %1308 = vmatprep.subr.bf16.mxu0 %v1125
        %1309 = vmatpush1.bf16.msra.mxu0 %v1124
        %1310 = vmatprep.mubr.bf16.mxu0 %v746
        %1311 = vmatmul.mubr.bf16.gmra.mrb[0].mxu0 %v745
        %v1312 = vpop.f32.mrb[0].mxu0
        %v1313 = vadd.f32 %v1272, %v1312
        %v1314 = vpop.f32.mrb[0].mxu0
        %v1315 = vadd.f32 %v1274, %v1314
        %v1316 = vpop.f32.mrb[0].mxu0
        %v1317 = vpop.f32.mrb[0].mxu0
        %1318 = vdwg.mxu0
        %1319 = vmatprep.subr.bf16.mxu0 %v1133
        %1320 = vmatpush1.bf16.msra.mxu0 %v1132
        %1321 = vmatprep.subr.bf16.mxu0 %v1141
        %1322 = vmatpush1.bf16.msra.mxu0 %v1140
        %1323 = vmatprep.subr.bf16.mxu0 %v1149
        %1324 = vmatpush1.bf16.msra.mxu0 %v1148
        %1325 = vmatprep.subr.bf16.mxu0 %v1157
        %1326 = vmatpush1.bf16.msra.mxu0 %v1156
        %1327 = vmatprep.subr.bf16.mxu0 %v1165
        %1328 = vmatpush1.bf16.msra.mxu0 %v1164
        %1329 = vmatprep.subr.bf16.mxu0 %v1173
        %1330 = vmatpush1.bf16.msra.mxu0 %v1172
        %1331 = vmatprep.subr.bf16.mxu0 %v1181
        %1332 = vmatpush1.bf16.msra.mxu0 %v1180
        %1333 = vmatprep.subr.bf16.mxu0 %v1189
        %1334 = vmatpush1.bf16.msra.mxu0 %v1188
        %1335 = vmatprep.subr.bf16.mxu0 0
        %1336 = vmatpush1.bf16.msra.mxu0 0
        %1337 = vmatprep.subr.bf16.mxu0 0
        %1338 = vmatpush1.bf16.msra.mxu0 0
        %1339 = vmatprep.subr.bf16.mxu0 0
        %1340 = vmatpush1.bf16.msra.mxu0 0
        %1341 = vmatprep.subr.bf16.mxu0 0
        %1342 = vmatpush1.bf16.msra.mxu0 0
        %1343 = vmatprep.subr.bf16.mxu0 0
        %1344 = vmatpush1.bf16.msra.mxu0 0
        %1345 = vmatprep.subr.bf16.mxu0 0
        %1346 = vmatpush1.bf16.msra.mxu0 0
        %1347 = vmatprep.subr.bf16.mxu0 0
        %1348 = vmatpush1.bf16.msra.mxu0 0
        %1349 = vmatprep.subr.bf16.mxu0 0
        %1350 = vmatpush1.bf16.msra.mxu0 0
        %1351 = vmatprep.mubr.bf16.mxu0 0
        %1352 = vmatmul.mubr.bf16.gmra.mrb[0].mxu0 %v747
        %v1353 = vpop.f32.mrb[0].mxu0
        %v1354 = vadd.f32 %v1313, %v1353
        %v1355 = vpop.f32.mrb[0].mxu0
        %v1356 = vadd.f32 %v1315, %v1355
        %v1357 = vpop.f32.mrb[0].mxu0
        %v1358 = vpop.f32.mrb[0].mxu0
        %1359 = vdwg.mxu0
        %1360 = vmatprep.subr.bf16.mxu0 %v751
        %1361 = vmatpush1.bf16.msra.mxu0 %v750
        %1362 = vmatprep.subr.bf16.mxu0 %v759
        %1363 = vmatpush1.bf16.msra.mxu0 %v758
        %1364 = vmatprep.subr.bf16.mxu0 %v767
        %1365 = vmatpush1.bf16.msra.mxu0 %v766
        %1366 = vmatprep.subr.bf16.mxu0 %v775
        %1367 = vmatpush1.bf16.msra.mxu0 %v774
        %1368 = vmatprep.subr.bf16.mxu0 %v783
        %1369 = vmatpush1.bf16.msra.mxu0 %v782
        %1370 = vmatprep.subr.bf16.mxu0 %v791
        %1371 = vmatpush1.bf16.msra.mxu0 %v790
        %1372 = vmatprep.subr.bf16.mxu0 %v799
        %1373 = vmatpush1.bf16.msra.mxu0 %v798
        %1374 = vmatprep.subr.bf16.mxu0 %v807
        %1375 = vmatpush1.bf16.msra.mxu0 %v806
        %1376 = vmatprep.subr.bf16.mxu0 %v815
        %1377 = vmatpush1.bf16.msra.mxu0 %v814
        %1378 = vmatprep.subr.bf16.mxu0 %v823
        %1379 = vmatpush1.bf16.msra.mxu0 %v822
        %1380 = vmatprep.subr.bf16.mxu0 %v831
        %1381 = vmatpush1.bf16.msra.mxu0 %v830
        %1382 = vmatprep.subr.bf16.mxu0 %v839
        %1383 = vmatpush1.bf16.msra.mxu0 %v838
        %1384 = vmatprep.subr.bf16.mxu0 %v847
        %1385 = vmatpush1.bf16.msra.mxu0 %v846
        %1386 = vmatprep.subr.bf16.mxu0 %v855
        %1387 = vmatpush1.bf16.msra.mxu0 %v854
        %1388 = vmatprep.subr.bf16.mxu0 %v863
        %1389 = vmatpush1.bf16.msra.mxu0 %v862
        %1390 = vmatprep.subr.bf16.mxu0 %v871
        %1391 = vmatpush1.bf16.msra.mxu0 %v870
        %1392 = vmatprep.mubr.bf16.mxu0 %v742
        %1393 = vmatmul.mubr.bf16.gmra.mrb[0].mxu0 %v741
        %v1394 = vpop.f32.mrb[0].mxu0
        %v1395 = vadd.f32 0.0, %v1394
        %v1396 = vpop.f32.mrb[0].mxu0
        %v1397 = vadd.f32 0.0, %v1396
        %v1398 = vpop.f32.mrb[0].mxu0
        %v1399 = vpop.f32.mrb[0].mxu0
        %1400 = vdwg.mxu0
        %1401 = vmatprep.subr.bf16.mxu0 %v879
        %1402 = vmatpush1.bf16.msra.mxu0 %v878
        %1403 = vmatprep.subr.bf16.mxu0 %v887
        %1404 = vmatpush1.bf16.msra.mxu0 %v886
        %1405 = vmatprep.subr.bf16.mxu0 %v895
        %1406 = vmatpush1.bf16.msra.mxu0 %v894
        %1407 = vmatprep.subr.bf16.mxu0 %v903
        %1408 = vmatpush1.bf16.msra.mxu0 %v902
        %1409 = vmatprep.subr.bf16.mxu0 %v911
        %1410 = vmatpush1.bf16.msra.mxu0 %v910
        %1411 = vmatprep.subr.bf16.mxu0 %v919
        %1412 = vmatpush1.bf16.msra.mxu0 %v918
        %1413 = vmatprep.subr.bf16.mxu0 %v927
        %1414 = vmatpush1.bf16.msra.mxu0 %v926
        %1415 = vmatprep.subr.bf16.mxu0 %v935
        %1416 = vmatpush1.bf16.msra.mxu0 %v934
        %1417 = vmatprep.subr.bf16.mxu0 %v943
        %1418 = vmatpush1.bf16.msra.mxu0 %v942
        %1419 = vmatprep.subr.bf16.mxu0 %v951
        %1420 = vmatpush1.bf16.msra.mxu0 %v950
        %1421 = vmatprep.subr.bf16.mxu0 %v959
        %1422 = vmatpush1.bf16.msra.mxu0 %v958
        %1423 = vmatprep.subr.bf16.mxu0 %v967
        %1424 = vmatpush1.bf16.msra.mxu0 %v966
        %1425 = vmatprep.subr.bf16.mxu0 %v975
        %1426 = vmatpush1.bf16.msra.mxu0 %v974
        %1427 = vmatprep.subr.bf16.mxu0 %v983
        %1428 = vmatpush1.bf16.msra.mxu0 %v982
        %1429 = vmatprep.subr.bf16.mxu0 %v991
        %1430 = vmatpush1.bf16.msra.mxu0 %v990
        %1431 = vmatprep.subr.bf16.mxu0 %v999
        %1432 = vmatpush1.bf16.msra.mxu0 %v998
        %1433 = vmatprep.mubr.bf16.mxu0 %v744
        %1434 = vmatmul.mubr.bf16.gmra.mrb[0].mxu0 %v743
        %v1435 = vpop.f32.mrb[0].mxu0
        %v1436 = vadd.f32 %v1395, %v1435
        %v1437 = vpop.f32.mrb[0].mxu0
        %v1438 = vadd.f32 %v1397, %v1437
        %v1439 = vpop.f32.mrb[0].mxu0
        %v1440 = vpop.f32.mrb[0].mxu0
        %1441 = vdwg.mxu0
        %1442 = vmatprep.subr.bf16.mxu0 %v1007
        %1443 = vmatpush1.bf16.msra.mxu0 %v1006
        %1444 = vmatprep.subr.bf16.mxu0 %v1015
        %1445 = vmatpush1.bf16.msra.mxu0 %v1014
        %1446 = vmatprep.subr.bf16.mxu0 %v1023
        %1447 = vmatpush1.bf16.msra.mxu0 %v1022
        %1448 = vmatprep.subr.bf16.mxu0 %v1031
        %1449 = vmatpush1.bf16.msra.mxu0 %v1030
        %1450 = vmatprep.subr.bf16.mxu0 %v1039
        %1451 = vmatpush1.bf16.msra.mxu0 %v1038
        %1452 = vmatprep.subr.bf16.mxu0 %v1047
        %1453 = vmatpush1.bf16.msra.mxu0 %v1046
        %1454 = vmatprep.subr.bf16.mxu0 %v1055
        %1455 = vmatpush1.bf16.msra.mxu0 %v1054
        %1456 = vmatprep.subr.bf16.mxu0 %v1063
        %1457 = vmatpush1.bf16.msra.mxu0 %v1062
        %1458 = vmatprep.subr.bf16.mxu0 %v1071
        %1459 = vmatpush1.bf16.msra.mxu0 %v1070
        %1460 = vmatprep.subr.bf16.mxu0 %v1079
        %1461 = vmatpush1.bf16.msra.mxu0 %v1078
        %1462 = vmatprep.subr.bf16.mxu0 %v1087
        %1463 = vmatpush1.bf16.msra.mxu0 %v1086
        %1464 = vmatprep.subr.bf16.mxu0 %v1095
        %1465 = vmatpush1.bf16.msra.mxu0 %v1094
        %1466 = vmatprep.subr.bf16.mxu0 %v1103
        %1467 = vmatpush1.bf16.msra.mxu0 %v1102
        %1468 = vmatprep.subr.bf16.mxu0 %v1111
        %1469 = vmatpush1.bf16.msra.mxu0 %v1110
        %1470 = vmatprep.subr.bf16.mxu0 %v1119
        %1471 = vmatpush1.bf16.msra.mxu0 %v1118
        %1472 = vmatprep.subr.bf16.mxu0 %v1127
        %1473 = vmatpush1.bf16.msra.mxu0 %v1126
        %1474 = vmatprep.mubr.bf16.mxu0 %v746
        %1475 = vmatmul.mubr.bf16.gmra.mrb[0].mxu0 %v745
        %v1476 = vpop.f32.mrb[0].mxu0
        %v1477 = vadd.f32 %v1436, %v1476
        %v1478 = vpop.f32.mrb[0].mxu0
        %v1479 = vadd.f32 %v1438, %v1478
        %v1480 = vpop.f32.mrb[0].mxu0
        %v1481 = vpop.f32.mrb[0].mxu0
        %1482 = vdwg.mxu0
        %1483 = vmatprep.subr.bf16.mxu0 %v1135
        %1484 = vmatpush1.bf16.msra.mxu0 %v1134
        %1485 = vmatprep.subr.bf16.mxu0 %v1143
        %1486 = vmatpush1.bf16.msra.mxu0 %v1142
        %1487 = vmatprep.subr.bf16.mxu0 %v1151
        %1488 = vmatpush1.bf16.msra.mxu0 %v1150
        %1489 = vmatprep.subr.bf16.mxu0 %v1159
        %1490 = vmatpush1.bf16.msra.mxu0 %v1158
        %1491 = vmatprep.subr.bf16.mxu0 %v1167
        %1492 = vmatpush1.bf16.msra.mxu0 %v1166
        %1493 = vmatprep.subr.bf16.mxu0 %v1175
        %1494 = vmatpush1.bf16.msra.mxu0 %v1174
        %1495 = vmatprep.subr.bf16.mxu0 %v1183
        %1496 = vmatpush1.bf16.msra.mxu0 %v1182
        %1497 = vmatprep.subr.bf16.mxu0 %v1191
        %1498 = vmatpush1.bf16.msra.mxu0 %v1190
        %1499 = vmatprep.subr.bf16.mxu0 0
        %1500 = vmatpush1.bf16.msra.mxu0 0
        %1501 = vmatprep.subr.bf16.mxu0 0
        %1502 = vmatpush1.bf16.msra.mxu0 0
        %1503 = vmatprep.subr.bf16.mxu0 0
        %1504 = vmatpush1.bf16.msra.mxu0 0
        %1505 = vmatprep.subr.bf16.mxu0 0
        %1506 = vmatpush1.bf16.msra.mxu0 0
        %1507 = vmatprep.subr.bf16.mxu0 0
        %1508 = vmatpush1.bf16.msra.mxu0 0
        %1509 = vmatprep.subr.bf16.mxu0 0
        %1510 = vmatpush1.bf16.msra.mxu0 0
        %1511 = vmatprep.subr.bf16.mxu0 0
        %1512 = vmatpush1.bf16.msra.mxu0 0
        %1513 = vmatprep.subr.bf16.mxu0 0
        %1514 = vmatpush1.bf16.msra.mxu0 0
        %1515 = vmatprep.mubr.bf16.mxu0 0
        %1516 = vmatmul.mubr.bf16.gmra.mrb[0].mxu0 %v747
        %v1517 = vpop.f32.mrb[0].mxu0
        %v1518 = vadd.f32 %v1477, %v1517
        %v1519 = vpop.f32.mrb[0].mxu0
        %v1520 = vadd.f32 %v1479, %v1519
        %v1521 = vpop.f32.mrb[0].mxu0
        %v1522 = vpop.f32.mrb[0].mxu0
        %1523 = vdwg.mxu0
        %1524 = vmatprep.subr.bf16.mxu0 %v753
        %1525 = vmatpush1.bf16.msra.mxu0 %v752
        %1526 = vmatprep.subr.bf16.mxu0 %v761
        %1527 = vmatpush1.bf16.msra.mxu0 %v760
        %1528 = vmatprep.subr.bf16.mxu0 %v769
        %1529 = vmatpush1.bf16.msra.mxu0 %v768
        %1530 = vmatprep.subr.bf16.mxu0 %v777
        %1531 = vmatpush1.bf16.msra.mxu0 %v776
        %1532 = vmatprep.subr.bf16.mxu0 %v785
        %1533 = vmatpush1.bf16.msra.mxu0 %v784
        %1534 = vmatprep.subr.bf16.mxu0 %v793
        %1535 = vmatpush1.bf16.msra.mxu0 %v792
        %1536 = vmatprep.subr.bf16.mxu0 %v801
        %1537 = vmatpush1.bf16.msra.mxu0 %v800
        %1538 = vmatprep.subr.bf16.mxu0 %v809
        %1539 = vmatpush1.bf16.msra.mxu0 %v808
        %1540 = vmatprep.subr.bf16.mxu0 %v817
        %1541 = vmatpush1.bf16.msra.mxu0 %v816
        %1542 = vmatprep.subr.bf16.mxu0 %v825
        %1543 = vmatpush1.bf16.msra.mxu0 %v824
        %1544 = vmatprep.subr.bf16.mxu0 %v833
        %1545 = vmatpush1.bf16.msra.mxu0 %v832
        %1546 = vmatprep.subr.bf16.mxu0 %v841
        %1547 = vmatpush1.bf16.msra.mxu0 %v840
        %1548 = vmatprep.subr.bf16.mxu0 %v849
        %1549 = vmatpush1.bf16.msra.mxu0 %v848
        %1550 = vmatprep.subr.bf16.mxu0 %v857
        %1551 = vmatpush1.bf16.msra.mxu0 %v856
        %1552 = vmatprep.subr.bf16.mxu0 %v865
        %1553 = vmatpush1.bf16.msra.mxu0 %v864
        %1554 = vmatprep.subr.bf16.mxu0 %v873
        %1555 = vmatpush1.bf16.msra.mxu0 %v872
        %1556 = vmatprep.mubr.bf16.mxu0 %v742
        %1557 = vmatmul.mubr.bf16.gmra.mrb[0].mxu0 %v741
        %v1558 = vpop.f32.mrb[0].mxu0
        %v1559 = vadd.f32 0.0, %v1558
        %v1560 = vpop.f32.mrb[0].mxu0
        %v1561 = vadd.f32 0.0, %v1560
        %v1562 = vpop.f32.mrb[0].mxu0
        %v1563 = vpop.f32.mrb[0].mxu0
        %1564 = vdwg.mxu0
        %1565 = vmatprep.subr.bf16.mxu0 %v881
        %1566 = vmatpush1.bf16.msra.mxu0 %v880
        %1567 = vmatprep.subr.bf16.mxu0 %v889
        %1568 = vmatpush1.bf16.msra.mxu0 %v888
        %1569 = vmatprep.subr.bf16.mxu0 %v897
        %1570 = vmatpush1.bf16.msra.mxu0 %v896
        %1571 = vmatprep.subr.bf16.mxu0 %v905
        %1572 = vmatpush1.bf16.msra.mxu0 %v904
        %1573 = vmatprep.subr.bf16.mxu0 %v913
        %1574 = vmatpush1.bf16.msra.mxu0 %v912
        %1575 = vmatprep.subr.bf16.mxu0 %v921
        %1576 = vmatpush1.bf16.msra.mxu0 %v920
        %1577 = vmatprep.subr.bf16.mxu0 %v929
        %1578 = vmatpush1.bf16.msra.mxu0 %v928
        %1579 = vmatprep.subr.bf16.mxu0 %v937
        %1580 = vmatpush1.bf16.msra.mxu0 %v936
        %1581 = vmatprep.subr.bf16.mxu0 %v945
        %1582 = vmatpush1.bf16.msra.mxu0 %v944
        %1583 = vmatprep.subr.bf16.mxu0 %v953
        %1584 = vmatpush1.bf16.msra.mxu0 %v952
        %1585 = vmatprep.subr.bf16.mxu0 %v961
        %1586 = vmatpush1.bf16.msra.mxu0 %v960
        %1587 = vmatprep.subr.bf16.mxu0 %v969
        %1588 = vmatpush1.bf16.msra.mxu0 %v968
        %1589 = vmatprep.subr.bf16.mxu0 %v977
        %1590 = vmatpush1.bf16.msra.mxu0 %v976
        %1591 = vmatprep.subr.bf16.mxu0 %v985
        %1592 = vmatpush1.bf16.msra.mxu0 %v984
        %1593 = vmatprep.subr.bf16.mxu0 %v993
        %1594 = vmatpush1.bf16.msra.mxu0 %v992
        %1595 = vmatprep.subr.bf16.mxu0 %v1001
        %1596 = vmatpush1.bf16.msra.mxu0 %v1000
        %1597 = vmatprep.mubr.bf16.mxu0 %v744
        %1598 = vmatmul.mubr.bf16.gmra.mrb[0].mxu0 %v743
        %v1599 = vpop.f32.mrb[0].mxu0
        %v1600 = vadd.f32 %v1559, %v1599
        %v1601 = vpop.f32.mrb[0].mxu0
        %v1602 = vadd.f32 %v1561, %v1601
        %v1603 = vpop.f32.mrb[0].mxu0
        %v1604 = vpop.f32.mrb[0].mxu0
        %1605 = vdwg.mxu0
        %1606 = vmatprep.subr.bf16.mxu0 %v1009
        %1607 = vmatpush1.bf16.msra.mxu0 %v1008
        %1608 = vmatprep.subr.bf16.mxu0 %v1017
        %1609 = vmatpush1.bf16.msra.mxu0 %v1016
        %1610 = vmatprep.subr.bf16.mxu0 %v1025
        %1611 = vmatpush1.bf16.msra.mxu0 %v1024
        %1612 = vmatprep.subr.bf16.mxu0 %v1033
        %1613 = vmatpush1.bf16.msra.mxu0 %v1032
        %1614 = vmatprep.subr.bf16.mxu0 %v1041
        %1615 = vmatpush1.bf16.msra.mxu0 %v1040
        %1616 = vmatprep.subr.bf16.mxu0 %v1049
        %1617 = vmatpush1.bf16.msra.mxu0 %v1048
        %1618 = vmatprep.subr.bf16.mxu0 %v1057
        %1619 = vmatpush1.bf16.msra.mxu0 %v1056
        %1620 = vmatprep.subr.bf16.mxu0 %v1065
        %1621 = vmatpush1.bf16.msra.mxu0 %v1064
        %1622 = vmatprep.subr.bf16.mxu0 %v1073
        %1623 = vmatpush1.bf16.msra.mxu0 %v1072
        %1624 = vmatprep.subr.bf16.mxu0 %v1081
        %1625 = vmatpush1.bf16.msra.mxu0 %v1080
        %1626 = vmatprep.subr.bf16.mxu0 %v1089
        %1627 = vmatpush1.bf16.msra.mxu0 %v1088
        %1628 = vmatprep.subr.bf16.mxu0 %v1097
        %1629 = vmatpush1.bf16.msra.mxu0 %v1096
        %1630 = vmatprep.subr.bf16.mxu0 %v1105
        %1631 = vmatpush1.bf16.msra.mxu0 %v1104
        %1632 = vmatprep.subr.bf16.mxu0 %v1113
        %1633 = vmatpush1.bf16.msra.mxu0 %v1112
        %1634 = vmatprep.subr.bf16.mxu0 %v1121
        %1635 = vmatpush1.bf16.msra.mxu0 %v1120
        %1636 = vmatprep.subr.bf16.mxu0 %v1129
        %1637 = vmatpush1.bf16.msra.mxu0 %v1128
        %1638 = vmatprep.mubr.bf16.mxu0 %v746
        %1639 = vmatmul.mubr.bf16.gmra.mrb[0].mxu0 %v745
        %v1640 = vpop.f32.mrb[0].mxu0
        %v1641 = vadd.f32 %v1600, %v1640
        %v1642 = vpop.f32.mrb[0].mxu0
        %v1643 = vadd.f32 %v1602, %v1642
        %v1644 = vpop.f32.mrb[0].mxu0
        %v1645 = vpop.f32.mrb[0].mxu0
        %1646 = vdwg.mxu0
        %1647 = vmatprep.subr.bf16.mxu0 %v1137
        %1648 = vmatpush1.bf16.msra.mxu0 %v1136
        %1649 = vmatprep.subr.bf16.mxu0 %v1145
        %1650 = vmatpush1.bf16.msra.mxu0 %v1144
        %1651 = vmatprep.subr.bf16.mxu0 %v1153
        %1652 = vmatpush1.bf16.msra.mxu0 %v1152
        %1653 = vmatprep.subr.bf16.mxu0 %v1161
        %1654 = vmatpush1.bf16.msra.mxu0 %v1160
        %1655 = vmatprep.subr.bf16.mxu0 %v1169
        %1656 = vmatpush1.bf16.msra.mxu0 %v1168
        %1657 = vmatprep.subr.bf16.mxu0 %v1177
        %1658 = vmatpush1.bf16.msra.mxu0 %v1176
        %1659 = vmatprep.subr.bf16.mxu0 %v1185
        %1660 = vmatpush1.bf16.msra.mxu0 %v1184
        %1661 = vmatprep.subr.bf16.mxu0 %v1193
        %1662 = vmatpush1.bf16.msra.mxu0 %v1192
        %1663 = vmatprep.subr.bf16.mxu0 0
        %1664 = vmatpush1.bf16.msra.mxu0 0
        %1665 = vmatprep.subr.bf16.mxu0 0
        %1666 = vmatpush1.bf16.msra.mxu0 0
        %1667 = vmatprep.subr.bf16.mxu0 0
        %1668 = vmatpush1.bf16.msra.mxu0 0
        %1669 = vmatprep.subr.bf16.mxu0 0
        %1670 = vmatpush1.bf16.msra.mxu0 0
        %1671 = vmatprep.subr.bf16.mxu0 0
        %1672 = vmatpush1.bf16.msra.mxu0 0
        %1673 = vmatprep.subr.bf16.mxu0 0
        %1674 = vmatpush1.bf16.msra.mxu0 0
        %1675 = vmatprep.subr.bf16.mxu0 0
        %1676 = vmatpush1.bf16.msra.mxu0 0
        %1677 = vmatprep.subr.bf16.mxu0 0
        %1678 = vmatpush1.bf16.msra.mxu0 0
        %1679 = vmatprep.mubr.bf16.mxu0 0
        %1680 = vmatmul.mubr.bf16.gmra.mrb[0].mxu0 %v747
        %v1681 = vpop.f32.mrb[0].mxu0
        %v1682 = vadd.f32 %v1641, %v1681
        %v1683 = vpop.f32.mrb[0].mxu0
        %v1684 = vadd.f32 %v1643, %v1683
        %v1685 = vpop.f32.mrb[0].mxu0
        %v1686 = vpop.f32.mrb[0].mxu0
        %1687 = vdwg.mxu0
        %1688 = vmatprep.subr.bf16.mxu0 %v755
        %1689 = vmatpush1.bf16.msra.mxu0 %v754
        %1690 = vmatprep.subr.bf16.mxu0 %v763
        %1691 = vmatpush1.bf16.msra.mxu0 %v762
        %1692 = vmatprep.subr.bf16.mxu0 %v771
        %1693 = vmatpush1.bf16.msra.mxu0 %v770
        %1694 = vmatprep.subr.bf16.mxu0 %v779
        %1695 = vmatpush1.bf16.msra.mxu0 %v778
        %1696 = vmatprep.subr.bf16.mxu0 %v787
        %1697 = vmatpush1.bf16.msra.mxu0 %v786
        %1698 = vmatprep.subr.bf16.mxu0 %v795
        %1699 = vmatpush1.bf16.msra.mxu0 %v794
        %1700 = vmatprep.subr.bf16.mxu0 %v803
        %1701 = vmatpush1.bf16.msra.mxu0 %v802
        %1702 = vmatprep.subr.bf16.mxu0 %v811
        %1703 = vmatpush1.bf16.msra.mxu0 %v810
        %1704 = vmatprep.subr.bf16.mxu0 %v819
        %1705 = vmatpush1.bf16.msra.mxu0 %v818
        %1706 = vmatprep.subr.bf16.mxu0 %v827
        %1707 = vmatpush1.bf16.msra.mxu0 %v826
        %1708 = vmatprep.subr.bf16.mxu0 %v835
        %1709 = vmatpush1.bf16.msra.mxu0 %v834
        %1710 = vmatprep.subr.bf16.mxu0 %v843
        %1711 = vmatpush1.bf16.msra.mxu0 %v842
        %1712 = vmatprep.subr.bf16.mxu0 %v851
        %1713 = vmatpush1.bf16.msra.mxu0 %v850
        %1714 = vmatprep.subr.bf16.mxu0 %v859
        %1715 = vmatpush1.bf16.msra.mxu0 %v858
        %1716 = vmatprep.subr.bf16.mxu0 %v867
        %1717 = vmatpush1.bf16.msra.mxu0 %v866
        %1718 = vmatprep.subr.bf16.mxu0 %v875
        %1719 = vmatpush1.bf16.msra.mxu0 %v874
        %1720 = vmatprep.mubr.bf16.mxu0 %v742
        %1721 = vmatmul.mubr.bf16.gmra.mrb[0].mxu0 %v741
        %v1722 = vpop.f32.mrb[0].mxu0
        %v1723 = vadd.f32 0.0, %v1722
        %v1724 = vpop.f32.mrb[0].mxu0
        %v1725 = vadd.f32 0.0, %v1724
        %v1726 = vpop.f32.mrb[0].mxu0
        %v1727 = vpop.f32.mrb[0].mxu0
        %1728 = vdwg.mxu0
        %1729 = vmatprep.subr.bf16.mxu0 %v883
        %1730 = vmatpush1.bf16.msra.mxu0 %v882
        %1731 = vmatprep.subr.bf16.mxu0 %v891
        %1732 = vmatpush1.bf16.msra.mxu0 %v890
        %1733 = vmatprep.subr.bf16.mxu0 %v899
        %1734 = vmatpush1.bf16.msra.mxu0 %v898
        %1735 = vmatprep.subr.bf16.mxu0 %v907
        %1736 = vmatpush1.bf16.msra.mxu0 %v906
        %1737 = vmatprep.subr.bf16.mxu0 %v915
        %1738 = vmatpush1.bf16.msra.mxu0 %v914
        %1739 = vmatprep.subr.bf16.mxu0 %v923
        %1740 = vmatpush1.bf16.msra.mxu0 %v922
        %1741 = vmatprep.subr.bf16.mxu0 %v931
        %1742 = vmatpush1.bf16.msra.mxu0 %v930
        %1743 = vmatprep.subr.bf16.mxu0 %v939
        %1744 = vmatpush1.bf16.msra.mxu0 %v938
        %1745 = vmatprep.subr.bf16.mxu0 %v947
        %1746 = vmatpush1.bf16.msra.mxu0 %v946
        %1747 = vmatprep.subr.bf16.mxu0 %v955
        %1748 = vmatpush1.bf16.msra.mxu0 %v954
        %1749 = vmatprep.subr.bf16.mxu0 %v963
        %1750 = vmatpush1.bf16.msra.mxu0 %v962
        %1751 = vmatprep.subr.bf16.mxu0 %v971
        %1752 = vmatpush1.bf16.msra.mxu0 %v970
        %1753 = vmatprep.subr.bf16.mxu0 %v979
        %1754 = vmatpush1.bf16.msra.mxu0 %v978
        %1755 = vmatprep.subr.bf16.mxu0 %v987
        %1756 = vmatpush1.bf16.msra.mxu0 %v986
        %1757 = vmatprep.subr.bf16.mxu0 %v995
        %1758 = vmatpush1.bf16.msra.mxu0 %v994
        %1759 = vmatprep.subr.bf16.mxu0 %v1003
        %1760 = vmatpush1.bf16.msra.mxu0 %v1002
        %1761 = vmatprep.mubr.bf16.mxu0 %v744
        %1762 = vmatmul.mubr.bf16.gmra.mrb[0].mxu0 %v743
        %v1763 = vpop.f32.mrb[0].mxu0
        %v1764 = vadd.f32 %v1723, %v1763
        %v1765 = vpop.f32.mrb[0].mxu0
        %v1766 = vadd.f32 %v1725, %v1765
        %v1767 = vpop.f32.mrb[0].mxu0
        %v1768 = vpop.f32.mrb[0].mxu0
        %1769 = vdwg.mxu0
        %1770 = vmatprep.subr.bf16.mxu0 %v1011
        %1771 = vmatpush1.bf16.msra.mxu0 %v1010
        %1772 = vmatprep.subr.bf16.mxu0 %v1019
        %1773 = vmatpush1.bf16.msra.mxu0 %v1018
        %1774 = vmatprep.subr.bf16.mxu0 %v1027
        %1775 = vmatpush1.bf16.msra.mxu0 %v1026
        %1776 = vmatprep.subr.bf16.mxu0 %v1035
        %1777 = vmatpush1.bf16.msra.mxu0 %v1034
        %1778 = vmatprep.subr.bf16.mxu0 %v1043
        %1779 = vmatpush1.bf16.msra.mxu0 %v1042
        %1780 = vmatprep.subr.bf16.mxu0 %v1051
        %1781 = vmatpush1.bf16.msra.mxu0 %v1050
        %1782 = vmatprep.subr.bf16.mxu0 %v1059
        %1783 = vmatpush1.bf16.msra.mxu0 %v1058
        %1784 = vmatprep.subr.bf16.mxu0 %v1067
        %1785 = vmatpush1.bf16.msra.mxu0 %v1066
        %1786 = vmatprep.subr.bf16.mxu0 %v1075
        %1787 = vmatpush1.bf16.msra.mxu0 %v1074
        %1788 = vmatprep.subr.bf16.mxu0 %v1083
        %1789 = vmatpush1.bf16.msra.mxu0 %v1082
        %1790 = vmatprep.subr.bf16.mxu0 %v1091
        %1791 = vmatpush1.bf16.msra.mxu0 %v1090
        %1792 = vmatprep.subr.bf16.mxu0 %v1099
        %1793 = vmatpush1.bf16.msra.mxu0 %v1098
        %1794 = vmatprep.subr.bf16.mxu0 %v1107
        %1795 = vmatpush1.bf16.msra.mxu0 %v1106
        %1796 = vmatprep.subr.bf16.mxu0 %v1115
        %1797 = vmatpush1.bf16.msra.mxu0 %v1114
        %1798 = vmatprep.subr.bf16.mxu0 %v1123
        %1799 = vmatpush1.bf16.msra.mxu0 %v1122
        %1800 = vmatprep.subr.bf16.mxu0 %v1131
        %1801 = vmatpush1.bf16.msra.mxu0 %v1130
        %1802 = vmatprep.mubr.bf16.mxu0 %v746
        %1803 = vmatmul.mubr.bf16.gmra.mrb[0].mxu0 %v745
        %v1804 = vpop.f32.mrb[0].mxu0
        %v1805 = vadd.f32 %v1764, %v1804
        %v1806 = vpop.f32.mrb[0].mxu0
        %v1807 = vadd.f32 %v1766, %v1806
        %v1808 = vpop.f32.mrb[0].mxu0
        %v1809 = vpop.f32.mrb[0].mxu0
        %1810 = vdwg.mxu0
        %1811 = vmatprep.subr.bf16.mxu0 %v1139
        %1812 = vmatpush1.bf16.msra.mxu0 %v1138
        %1813 = vmatprep.subr.bf16.mxu0 %v1147
        %1814 = vmatpush1.bf16.msra.mxu0 %v1146
        %1815 = vmatprep.subr.bf16.mxu0 %v1155
        %1816 = vmatpush1.bf16.msra.mxu0 %v1154
        %1817 = vmatprep.subr.bf16.mxu0 %v1163
        %1818 = vmatpush1.bf16.msra.mxu0 %v1162
        %1819 = vmatprep.subr.bf16.mxu0 %v1171
        %1820 = vmatpush1.bf16.msra.mxu0 %v1170
        %1821 = vmatprep.subr.bf16.mxu0 %v1179
        %1822 = vmatpush1.bf16.msra.mxu0 %v1178
        %1823 = vmatprep.subr.bf16.mxu0 %v1187
        %1824 = vmatpush1.bf16.msra.mxu0 %v1186
        %1825 = vmatprep.subr.bf16.mxu0 %v1195
        %1826 = vmatpush1.bf16.msra.mxu0 %v1194
        %1827 = vmatprep.subr.bf16.mxu0 0
        %1828 = vmatpush1.bf16.msra.mxu0 0
        %1829 = vmatprep.subr.bf16.mxu0 0
        %1830 = vmatpush1.bf16.msra.mxu0 0
        %1831 = vmatprep.subr.bf16.mxu0 0
        %1832 = vmatpush1.bf16.msra.mxu0 0
        %1833 = vmatprep.subr.bf16.mxu0 0
        %1834 = vmatpush1.bf16.msra.mxu0 0
        %1835 = vmatprep.subr.bf16.mxu0 0
        %1836 = vmatpush1.bf16.msra.mxu0 0
        %1837 = vmatprep.subr.bf16.mxu0 0
        %1838 = vmatpush1.bf16.msra.mxu0 0
        %1839 = vmatprep.subr.bf16.mxu0 0
        %1840 = vmatpush1.bf16.msra.mxu0 0
        %1841 = vmatprep.subr.bf16.mxu0 0
        %1842 = vmatpush1.bf16.msra.mxu0 0
        %1843 = vmatprep.mubr.bf16.mxu0 0
        %1844 = vmatmul.mubr.bf16.gmra.mrb[0].mxu0 %v747
        %v1845 = vpop.f32.mrb[0].mxu0
        %v1846 = vadd.f32 %v1805, %v1845
        %v1847 = vpop.f32.mrb[0].mxu0
        %v1848 = vadd.f32 %v1807, %v1847
        %v1849 = vpop.f32.mrb[0].mxu0
        %v1850 = vpop.f32.mrb[0].mxu0
        %1851 = vdwg.mxu0
        %v1852 = vlaneseq
        %v1853 = vshrl.u32 %v1852, 7
        %v1854 = vsub.s32 0, %v1853
        %v1855 = vrot.slane %v461, %v1854
        %v1856 = vlaneseq
        %v1857 = vshrl.u32 %v1856, 7
        %v1858 = vsub.s32 0, %v1857
        %v1859 = vrot.slane %v462, %v1858
        %v1860 = vlaneseq
        %v1861 = vshrl.u32 %v1860, 7
        %v1862 = vsub.s32 0, %v1861
        %v1863 = vrot.slane %v463, %v1862
        %v1864 = vlaneseq
        %v1865 = vshrl.u32 %v1864, 7
        %v1866 = vsub.s32 0, %v1865
        %v1867 = vrot.slane %v464, %v1866
        %v1868 = vlaneseq
        %v1869 = vshrl.u32 %v1868, 7
        %v1870 = vsub.s32 0, %v1869
        %v1871 = vrot.slane %v465, %v1870
        %v1872 = vlaneseq
        %v1873 = vshrl.u32 %v1872, 7
        %v1874 = vsub.s32 0, %v1873
        %v1875 = vrot.slane %v466, %v1874
        %v1876 = vlaneseq
        %v1877 = vshrl.u32 %v1876, 7
        %v1878 = vsub.s32 0, %v1877
        %v1879 = vrot.slane %v467, %v1878
        %v1880 = vlaneseq
        %v1881 = vshrl.u32 %v1880, 7
        %v1882 = vsub.s32 0, %v1881
        %v1883 = vrot.slane %v468, %v1882
        %v1884 = vmul.f32 %v1354, %v1855
        %v1885 = vmul.f32 %v1356, %v1859
        %v1886 = vmul.f32 %v1518, %v1863
        %v1887 = vmul.f32 %v1520, %v1867
        %v1888 = vmul.f32 %v1682, %v1871
        %v1889 = vmul.f32 %v1684, %v1875
        %v1890 = vmul.f32 %v1846, %v1879
        %v1891 = vmul.f32 %v1848, %v1883
        %v1892 = vlaneseq
        %v1893 = vshrl.u32 %v1892, 7
        %v1894 = vsub.s32 4, %v1893
        %v1895 = vrot.slane %v461, %v1894
        %v1896 = vlaneseq
        %v1897 = vshrl.u32 %v1896, 7
        %v1898 = vsub.s32 4, %v1897
        %v1899 = vrot.slane %v462, %v1898
        %v1900 = vlaneseq
        %v1901 = vshrl.u32 %v1900, 7
        %v1902 = vsub.s32 4, %v1901
        %v1903 = vrot.slane %v463, %v1902
        %v1904 = vlaneseq
        %v1905 = vshrl.u32 %v1904, 7
        %v1906 = vsub.s32 4, %v1905
        %v1907 = vrot.slane %v464, %v1906
        %v1908 = vlaneseq
        %v1909 = vshrl.u32 %v1908, 7
        %v1910 = vsub.s32 4, %v1909
        %v1911 = vrot.slane %v465, %v1910
        %v1912 = vlaneseq
        %v1913 = vshrl.u32 %v1912, 7
        %v1914 = vsub.s32 4, %v1913
        %v1915 = vrot.slane %v466, %v1914
        %v1916 = vlaneseq
        %v1917 = vshrl.u32 %v1916, 7
        %v1918 = vsub.s32 4, %v1917
        %v1919 = vrot.slane %v467, %v1918
        %v1920 = vlaneseq
        %v1921 = vshrl.u32 %v1920, 7
        %v1922 = vsub.s32 4, %v1921
        %v1923 = vrot.slane %v468, %v1922
        %v1924 = vadd.f32 %v1884, %v1895
        %v1925 = vadd.f32 %v1885, %v1899
        %v1926 = vadd.f32 %v1886, %v1903
        %v1927 = vadd.f32 %v1887, %v1907
        %v1928 = vadd.f32 %v1888, %v1911
        %v1929 = vadd.f32 %v1889, %v1915
        %v1930 = vadd.f32 %v1890, %v1919
        %v1931 = vadd.f32 %v1891, %v1923
        %v1932 = vmax.f32 %v1924, 0.0
        %v1933 = vmax.f32 %v1925, 0.0
        %v1934 = vmax.f32 %v1926, 0.0
        %v1935 = vmax.f32 %v1927, 0.0
        %v1936 = vmax.f32 %v1928, 0.0
        %v1937 = vmax.f32 %v1929, 0.0
        %v1938 = vmax.f32 %v1930, 0.0
        %v1939 = vmax.f32 %v1931, 0.0
        %v1940 = vld [vmem:[%s375] sm:$0xff]
        %v1941 = vld [vmem:[%s375 + $0x8] sm:$0xff]
        %v1942 = vld [vmem:[%s375 + $0x10] sm:$0xff]
        %v1943 = vld [vmem:[%s375 + $0x18] sm:$0xff]
        %v1944 = vld [vmem:[%s375 + $0x20] sm:$0xff]
        %v1945 = vld [vmem:[%s375 + $0x28] sm:$0xff]
        %v1946 = vld [vmem:[%s375 + $0x30] sm:$0xff]
        %v1947 = vld [vmem:[%s375 + $0x38] sm:$0xff]
        %v1948 = vld [vmem:[%s375 + $0x40] sm:$0xff]
        %v1949 = vld [vmem:[%s375 + $0x48] sm:$0xff]
        %v1950 = vld [vmem:[%s375 + $0x50] sm:$0xff]
        %v1951 = vld [vmem:[%s375 + $0x58] sm:$0xff]
        %v1952 = vld [vmem:[%s375 + $0x60] sm:$0xff]
        %v1953 = vld [vmem:[%s375 + $0x68] sm:$0xff]
        %v1954 = vld [vmem:[%s375 + $0x70] sm:$0xff]
        %v1955 = vld [vmem:[%s375 + $0x78] sm:$0xff]
        %v1956 = vld [vmem:[%s375 + $0x80] sm:$0xff]
        %v1957 = vld [vmem:[%s375 + $0x88] sm:$0xff]
        %v1958 = vld [vmem:[%s375 + $0x90] sm:$0xff]
        %v1959 = vld [vmem:[%s375 + $0x98] sm:$0xff]
        %v1960 = vld [vmem:[%s375 + $0xa0] sm:$0xff]
        %v1961 = vld [vmem:[%s375 + $0xa8] sm:$0xff]
        %v1962 = vld [vmem:[%s375 + $0xb0] sm:$0xff]
        %v1963 = vld [vmem:[%s375 + $0xb8] sm:$0xff]
        %v1964 = vld [vmem:[%s375 + $0xc0] sm:$0xff]
        %v1965 = vld [vmem:[%s375 + $0xc8] sm:$0xff]
        %v1966 = vld [vmem:[%s375 + $0xd0] sm:$0xff]
        %v1967 = vld [vmem:[%s375 + $0xd8] sm:$0xff]
        %v1968 = vld [vmem:[%s375 + $0xe0] sm:$0xff]
        %v1969 = vld [vmem:[%s375 + $0xe8] sm:$0xff]
        %v1970 = vld [vmem:[%s375 + $0xf0] sm:$0xff]
        %v1971 = vld [vmem:[%s375 + $0xf8] sm:$0xff]
        %v1972 = vld [vmem:[%s375 + $0x100] sm:$0xff]
        %v1973 = vld [vmem:[%s375 + $0x108] sm:$0xff]
        %v1974 = vld [vmem:[%s375 + $0x110] sm:$0xff]
        %v1975 = vld [vmem:[%s375 + $0x118] sm:$0xff]
        %v1976 = vld [vmem:[%s375 + $0x120] sm:$0xff]
        %v1977 = vld [vmem:[%s375 + $0x128] sm:$0xff]
        %v1978 = vld [vmem:[%s375 + $0x130] sm:$0xff]
        %v1979 = vld [vmem:[%s375 + $0x138] sm:$0xff]
        %v1980 = vld [vmem:[%s375 + $0x140] sm:$0xff]
        %v1981 = vld [vmem:[%s375 + $0x148] sm:$0xff]
        %v1982 = vld [vmem:[%s375 + $0x150] sm:$0xff]
        %v1983 = vld [vmem:[%s375 + $0x158] sm:$0xff]
        %v1984 = vld [vmem:[%s375 + $0x160] sm:$0xff]
        %v1985 = vld [vmem:[%s375 + $0x168] sm:$0xff]
        %v1986 = vld [vmem:[%s375 + $0x170] sm:$0xff]
        %v1987 = vld [vmem:[%s375 + $0x178] sm:$0xff]
        %v1988 = vld [vmem:[%s375 + $0x180] sm:$0xff]
        %v1989 = vld [vmem:[%s375 + $0x188] sm:$0xff]
        %v1990 = vld [vmem:[%s375 + $0x190] sm:$0xff]
        %v1991 = vld [vmem:[%s375 + $0x198] sm:$0xff]
        %v1992 = vld [vmem:[%s375 + $0x1a0] sm:$0xff]
        %v1993 = vld [vmem:[%s375 + $0x1a8] sm:$0xff]
        %v1994 = vld [vmem:[%s375 + $0x1b0] sm:$0xff]
        %v1995 = vld [vmem:[%s375 + $0x1b8] sm:$0xff]
        %v1996 = vld [vmem:[%s375 + $0x1c0] sm:$0xff]
        %v1997 = vld [vmem:[%s375 + $0x1c8] sm:$0xff]
        %v1998 = vld [vmem:[%s375 + $0x1d0] sm:$0xff]
        %v1999 = vld [vmem:[%s375 + $0x1d8] sm:$0xff]
        %v2000 = vld [vmem:[%s375 + $0x1e0] sm:$0xff]
        %v2001 = vld [vmem:[%s375 + $0x1e8] sm:$0xff]
        %v2002 = vld [vmem:[%s375 + $0x1f0] sm:$0xff]
        %v2003 = vld [vmem:[%s375 + $0x1f8] sm:$0xff]
        %v2004 = vld [vmem:[%s375 + $0x200] sm:$0xff]
        %v2005 = vld [vmem:[%s375 + $0x208] sm:$0xff]
        %v2006 = vld [vmem:[%s375 + $0x210] sm:$0xff]
        %v2007 = vld [vmem:[%s375 + $0x218] sm:$0xff]
        %v2008 = vld [vmem:[%s375 + $0x220] sm:$0xff]
        %v2009 = vld [vmem:[%s375 + $0x228] sm:$0xff]
        %v2010 = vld [vmem:[%s375 + $0x230] sm:$0xff]
        %v2011 = vld [vmem:[%s375 + $0x238] sm:$0xff]
        %v2012 = vld [vmem:[%s375 + $0x240] sm:$0xff]
        %v2013 = vld [vmem:[%s375 + $0x248] sm:$0xff]
        %v2014 = vld [vmem:[%s375 + $0x250] sm:$0xff]
        %v2015 = vld [vmem:[%s375 + $0x258] sm:$0xff]
        %v2016 = vld [vmem:[%s375 + $0x260] sm:$0xff]
        %v2017 = vld [vmem:[%s375 + $0x268] sm:$0xff]
        %v2018 = vld [vmem:[%s375 + $0x270] sm:$0xff]
        %v2019 = vld [vmem:[%s375 + $0x278] sm:$0xff]
        %v2020 = vld [vmem:[%s375 + $0x280] sm:$0xff]
        %v2021 = vld [vmem:[%s375 + $0x288] sm:$0xff]
        %v2022 = vld [vmem:[%s375 + $0x290] sm:$0xff]
        %v2023 = vld [vmem:[%s375 + $0x298] sm:$0xff]
        %v2024 = vld [vmem:[%s375 + $0x2a0] sm:$0xff]
        %v2025 = vld [vmem:[%s375 + $0x2a8] sm:$0xff]
        %v2026 = vld [vmem:[%s375 + $0x2b0] sm:$0xff]
        %v2027 = vld [vmem:[%s375 + $0x2b8] sm:$0xff]
        %v2028 = vld [vmem:[%s375 + $0x2c0] sm:$0xff]
        %v2029 = vld [vmem:[%s375 + $0x2c8] sm:$0xff]
        %v2030 = vld [vmem:[%s375 + $0x2d0] sm:$0xff]
        %v2031 = vld [vmem:[%s375 + $0x2d8] sm:$0xff]
        %v2032 = vld [vmem:[%s375 + $0x2e0] sm:$0xff]
        %v2033 = vld [vmem:[%s375 + $0x2e8] sm:$0xff]
        %v2034 = vld [vmem:[%s375 + $0x2f0] sm:$0xff]
        %v2035 = vld [vmem:[%s375 + $0x2f8] sm:$0xff]
        %v2036 = vld [vmem:[%s375 + $0x300] sm:$0xff]
        %v2037 = vld [vmem:[%s375 + $0x308] sm:$0xff]
        %v2038 = vld [vmem:[%s375 + $0x310] sm:$0xff]
        %v2039 = vld [vmem:[%s375 + $0x318] sm:$0xff]
        %v2040 = vld [vmem:[%s375 + $0x320] sm:$0xff]
        %v2041 = vld [vmem:[%s375 + $0x328] sm:$0xff]
        %v2042 = vld [vmem:[%s375 + $0x330] sm:$0xff]
        %v2043 = vld [vmem:[%s375 + $0x338] sm:$0xff]
        %v2044 = vld [vmem:[%s375 + $0x340] sm:$0xff]
        %v2045 = vld [vmem:[%s375 + $0x348] sm:$0xff]
        %v2046 = vld [vmem:[%s375 + $0x350] sm:$0xff]
        %v2047 = vld [vmem:[%s375 + $0x358] sm:$0xff]
        %v2048 = vld [vmem:[%s375 + $0x360] sm:$0xff]
        %v2049 = vld [vmem:[%s375 + $0x368] sm:$0xff]
        %v2050 = vld [vmem:[%s375 + $0x370] sm:$0xff]
        %v2051 = vld [vmem:[%s375 + $0x378] sm:$0xff]
        %v2052 = vld [vmem:[%s375 + $0x380] sm:$0xff]
        %v2053 = vld [vmem:[%s375 + $0x388] sm:$0xff]
        %v2054 = vld [vmem:[%s375 + $0x390] sm:$0xff]
        %v2055 = vld [vmem:[%s375 + $0x398] sm:$0xff]
        %v2056 = vld [vmem:[%s375 + $0x3a0] sm:$0xff]
        %v2057 = vld [vmem:[%s375 + $0x3a8] sm:$0xff]
        %v2058 = vld [vmem:[%s375 + $0x3b0] sm:$0xff]
        %v2059 = vld [vmem:[%s375 + $0x3b8] sm:$0xff]
        %v2060 = vld [vmem:[%s375 + $0x3c0] sm:$0xff]
        %v2061 = vld [vmem:[%s375 + $0x3c8] sm:$0xff]
        %v2062 = vld [vmem:[%s375 + $0x3d0] sm:$0xff]
        %v2063 = vld [vmem:[%s375 + $0x3d8] sm:$0xff]
        %v2064 = vld [vmem:[%s375 + $0x3e0] sm:$0xff]
        %v2065 = vld [vmem:[%s375 + $0x3e8] sm:$0xff]
        %v2066 = vld [vmem:[%s375 + $0x3f0] sm:$0xff]
        %v2067 = vld [vmem:[%s375 + $0x3f8] sm:$0xff]
        %v2068 = vld [vmem:[%s375 + $0x400] sm:$0xff]
        %v2069 = vld [vmem:[%s375 + $0x408] sm:$0xff]
        %v2070 = vld [vmem:[%s375 + $0x410] sm:$0xff]
        %v2071 = vld [vmem:[%s375 + $0x418] sm:$0xff]
        %v2072 = vld [vmem:[%s375 + $0x420] sm:$0xff]
        %v2073 = vld [vmem:[%s375 + $0x428] sm:$0xff]
        %v2074 = vld [vmem:[%s375 + $0x430] sm:$0xff]
        %v2075 = vld [vmem:[%s375 + $0x438] sm:$0xff]
        %v2076 = vld [vmem:[%s375 + $0x440] sm:$0xff]
        %v2077 = vld [vmem:[%s375 + $0x448] sm:$0xff]
        %v2078 = vld [vmem:[%s375 + $0x450] sm:$0xff]
        %v2079 = vld [vmem:[%s375 + $0x458] sm:$0xff]
        %v2080 = vld [vmem:[%s375 + $0x460] sm:$0xff]
        %v2081 = vld [vmem:[%s375 + $0x468] sm:$0xff]
        %v2082 = vld [vmem:[%s375 + $0x470] sm:$0xff]
        %v2083 = vld [vmem:[%s375 + $0x478] sm:$0xff]
        %v2084 = vld [vmem:[%s375 + $0x480] sm:$0xff]
        %v2085 = vld [vmem:[%s375 + $0x488] sm:$0xff]
        %v2086 = vld [vmem:[%s375 + $0x490] sm:$0xff]
        %v2087 = vld [vmem:[%s375 + $0x498] sm:$0xff]
        %v2088 = vld [vmem:[%s375 + $0x4a0] sm:$0xff]
        %v2089 = vld [vmem:[%s375 + $0x4a8] sm:$0xff]
        %v2090 = vld [vmem:[%s375 + $0x4b0] sm:$0xff]
        %v2091 = vld [vmem:[%s375 + $0x4b8] sm:$0xff]
        %v2092 = vld [vmem:[%s375 + $0x4c0] sm:$0xff]
        %v2093 = vld [vmem:[%s375 + $0x4c8] sm:$0xff]
        %v2094 = vld [vmem:[%s375 + $0x4d0] sm:$0xff]
        %v2095 = vld [vmem:[%s375 + $0x4d8] sm:$0xff]
        %v2096 = vld [vmem:[%s375 + $0x4e0] sm:$0xff]
        %v2097 = vld [vmem:[%s375 + $0x4e8] sm:$0xff]
        %v2098 = vld [vmem:[%s375 + $0x4f0] sm:$0xff]
        %v2099 = vld [vmem:[%s375 + $0x4f8] sm:$0xff]
        %v2100 = vld [vmem:[%s375 + $0x500] sm:$0xff]
        %v2101 = vld [vmem:[%s375 + $0x508] sm:$0xff]
        %v2102 = vld [vmem:[%s375 + $0x510] sm:$0xff]
        %v2103 = vld [vmem:[%s375 + $0x518] sm:$0xff]
        %v2104 = vld [vmem:[%s375 + $0x520] sm:$0xff]
        %v2105 = vld [vmem:[%s375 + $0x528] sm:$0xff]
        %v2106 = vld [vmem:[%s375 + $0x530] sm:$0xff]
        %v2107 = vld [vmem:[%s375 + $0x538] sm:$0xff]
        %v2108 = vld [vmem:[%s375 + $0x540] sm:$0xff]
        %v2109 = vld [vmem:[%s375 + $0x548] sm:$0xff]
        %v2110 = vld [vmem:[%s375 + $0x550] sm:$0xff]
        %v2111 = vld [vmem:[%s375 + $0x558] sm:$0xff]
        %v2112 = vld [vmem:[%s375 + $0x560] sm:$0xff]
        %v2113 = vld [vmem:[%s375 + $0x568] sm:$0xff]
        %v2114 = vld [vmem:[%s375 + $0x570] sm:$0xff]
        %v2115 = vld [vmem:[%s375 + $0x578] sm:$0xff]
        %v2116 = vld [vmem:[%s375 + $0x580] sm:$0xff]
        %v2117 = vld [vmem:[%s375 + $0x588] sm:$0xff]
        %v2118 = vld [vmem:[%s375 + $0x590] sm:$0xff]
        %v2119 = vld [vmem:[%s375 + $0x598] sm:$0xff]
        %v2120 = vld [vmem:[%s375 + $0x5a0] sm:$0xff]
        %v2121 = vld [vmem:[%s375 + $0x5a8] sm:$0xff]
        %v2122 = vld [vmem:[%s375 + $0x5b0] sm:$0xff]
        %v2123 = vld [vmem:[%s375 + $0x5b8] sm:$0xff]
        %v2124 = vld [vmem:[%s375 + $0x5c0] sm:$0xff]
        %v2125 = vld [vmem:[%s375 + $0x5c8] sm:$0xff]
        %v2126 = vld [vmem:[%s375 + $0x5d0] sm:$0xff]
        %v2127 = vld [vmem:[%s375 + $0x5d8] sm:$0xff]
        %v2128 = vld [vmem:[%s375 + $0x5e0] sm:$0xff]
        %v2129 = vld [vmem:[%s375 + $0x5e8] sm:$0xff]
        %v2130 = vld [vmem:[%s375 + $0x5f0] sm:$0xff]
        %v2131 = vld [vmem:[%s375 + $0x5f8] sm:$0xff]
        %v2132 = vld [vmem:[%s375 + $0x600] sm:$0xff]
        %v2133 = vld [vmem:[%s375 + $0x608] sm:$0xff]
        %v2134 = vld [vmem:[%s375 + $0x610] sm:$0xff]
        %v2135 = vld [vmem:[%s375 + $0x618] sm:$0xff]
        %v2136 = vld [vmem:[%s375 + $0x620] sm:$0xff]
        %v2137 = vld [vmem:[%s375 + $0x628] sm:$0xff]
        %v2138 = vld [vmem:[%s375 + $0x630] sm:$0xff]
        %v2139 = vld [vmem:[%s375 + $0x638] sm:$0xff]
        %v2140 = vld [vmem:[%s375 + $0x640] sm:$0xff]
        %v2141 = vld [vmem:[%s375 + $0x648] sm:$0xff]
        %v2142 = vld [vmem:[%s375 + $0x650] sm:$0xff]
        %v2143 = vld [vmem:[%s375 + $0x658] sm:$0xff]
        %v2144 = vld [vmem:[%s375 + $0x660] sm:$0xff]
        %v2145 = vld [vmem:[%s375 + $0x668] sm:$0xff]
        %v2146 = vld [vmem:[%s375 + $0x670] sm:$0xff]
        %v2147 = vld [vmem:[%s375 + $0x678] sm:$0xff]
        %v2148 = vld [vmem:[%s375 + $0x680] sm:$0xff]
        %v2149 = vld [vmem:[%s375 + $0x688] sm:$0xff]
        %v2150 = vld [vmem:[%s375 + $0x690] sm:$0xff]
        %v2151 = vld [vmem:[%s375 + $0x698] sm:$0xff]
        %v2152 = vld [vmem:[%s375 + $0x6a0] sm:$0xff]
        %v2153 = vld [vmem:[%s375 + $0x6a8] sm:$0xff]
        %v2154 = vld [vmem:[%s375 + $0x6b0] sm:$0xff]
        %v2155 = vld [vmem:[%s375 + $0x6b8] sm:$0xff]
        %v2156 = vld [vmem:[%s375 + $0x6c0] sm:$0xff]
        %v2157 = vld [vmem:[%s375 + $0x6c8] sm:$0xff]
        %v2158 = vld [vmem:[%s375 + $0x6d0] sm:$0xff]
        %v2159 = vld [vmem:[%s375 + $0x6d8] sm:$0xff]
        %v2160 = vld [vmem:[%s375 + $0x6e0] sm:$0xff]
        %v2161 = vld [vmem:[%s375 + $0x6e8] sm:$0xff]
        %v2162 = vld [vmem:[%s375 + $0x6f0] sm:$0xff]
        %v2163 = vld [vmem:[%s375 + $0x6f8] sm:$0xff]
        %v2164 = vld [vmem:[%s375 + $0x700] sm:$0xff]
        %v2165 = vld [vmem:[%s375 + $0x708] sm:$0xff]
        %v2166 = vld [vmem:[%s375 + $0x710] sm:$0xff]
        %v2167 = vld [vmem:[%s375 + $0x718] sm:$0xff]
        %v2168 = vld [vmem:[%s375 + $0x720] sm:$0xff]
        %v2169 = vld [vmem:[%s375 + $0x728] sm:$0xff]
        %v2170 = vld [vmem:[%s375 + $0x730] sm:$0xff]
        %v2171 = vld [vmem:[%s375 + $0x738] sm:$0xff]
        %v2172 = vld [vmem:[%s375 + $0x740] sm:$0xff]
        %v2173 = vld [vmem:[%s375 + $0x748] sm:$0xff]
        %v2174 = vld [vmem:[%s375 + $0x750] sm:$0xff]
        %v2175 = vld [vmem:[%s375 + $0x758] sm:$0xff]
        %v2176 = vld [vmem:[%s375 + $0x760] sm:$0xff]
        %v2177 = vld [vmem:[%s375 + $0x768] sm:$0xff]
        %v2178 = vld [vmem:[%s375 + $0x770] sm:$0xff]
        %v2179 = vld [vmem:[%s375 + $0x778] sm:$0xff]
        %v2180 = vld [vmem:[%s375 + $0x780] sm:$0xff]
        %v2181 = vld [vmem:[%s375 + $0x788] sm:$0xff]
        %v2182 = vld [vmem:[%s375 + $0x790] sm:$0xff]
        %v2183 = vld [vmem:[%s375 + $0x798] sm:$0xff]
        %v2184 = vld [vmem:[%s375 + $0x7a0] sm:$0xff]
        %v2185 = vld [vmem:[%s375 + $0x7a8] sm:$0xff]
        %v2186 = vld [vmem:[%s375 + $0x7b0] sm:$0xff]
        %v2187 = vld [vmem:[%s375 + $0x7b8] sm:$0xff]
        %v2188 = vld [vmem:[%s375 + $0x7c0] sm:$0xff]
        %v2189 = vld [vmem:[%s375 + $0x7c8] sm:$0xff]
        %v2190 = vld [vmem:[%s375 + $0x7d0] sm:$0xff]
        %v2191 = vld [vmem:[%s375 + $0x7d8] sm:$0xff]
        %v2192 = vld [vmem:[%s375 + $0x7e0] sm:$0xff]
        %v2193 = vld [vmem:[%s375 + $0x7e8] sm:$0xff]
        %v2194 = vld [vmem:[%s375 + $0x7f0] sm:$0xff]
        %v2195 = vld [vmem:[%s375 + $0x7f8] sm:$0xff]
        %v2196 = vpack.c.bf16 %v1932, %v1932
        %v2197 = vpack.c.bf16 %v1933, %v1933
        %v2198 = vpack.c.bf16 %v1934, %v1934
        %v2199 = vpack.c.bf16 %v1935, %v1935
        %v2200 = vpack.c.bf16 %v1936, %v1936
        %v2201 = vpack.c.bf16 %v1937, %v1937
        %v2202 = vpack.c.bf16 %v1938, %v1938
        %v2203 = vpack.c.bf16 %v1939, %v1939
        %v2204 = vunpack.c.l.s8.bf16 %v1940
        %v2205 = vunpack.c.l.s8.bf16 %v1941
        %v2206 = vunpack.c.l.s8.bf16 %v1942
        %v2207 = vunpack.c.l.s8.bf16 %v1943
        %v2208 = vunpack.c.l.s8.bf16 %v1944
        %v2209 = vunpack.c.l.s8.bf16 %v1945
        %v2210 = vunpack.c.l.s8.bf16 %v1946
        %v2211 = vunpack.c.l.s8.bf16 %v1947
        %v2212 = vunpack.c.h.s8.bf16 %v1940
        %v2213 = vunpack.c.h.s8.bf16 %v1941
        %v2214 = vunpack.c.h.s8.bf16 %v1942
        %v2215 = vunpack.c.h.s8.bf16 %v1943
        %v2216 = vunpack.c.h.s8.bf16 %v1944
        %v2217 = vunpack.c.h.s8.bf16 %v1945
        %v2218 = vunpack.c.h.s8.bf16 %v1946
        %v2219 = vunpack.c.h.s8.bf16 %v1947
        %v2220 = vunpack.c.l.s8.bf16 %v1948
        %v2221 = vunpack.c.l.s8.bf16 %v1949
        %v2222 = vunpack.c.l.s8.bf16 %v1950
        %v2223 = vunpack.c.l.s8.bf16 %v1951
        %v2224 = vunpack.c.l.s8.bf16 %v1952
        %v2225 = vunpack.c.l.s8.bf16 %v1953
        %v2226 = vunpack.c.l.s8.bf16 %v1954
        %v2227 = vunpack.c.l.s8.bf16 %v1955
        %v2228 = vunpack.c.h.s8.bf16 %v1948
        %v2229 = vunpack.c.h.s8.bf16 %v1949
        %v2230 = vunpack.c.h.s8.bf16 %v1950
        %v2231 = vunpack.c.h.s8.bf16 %v1951
        %v2232 = vunpack.c.h.s8.bf16 %v1952
        %v2233 = vunpack.c.h.s8.bf16 %v1953
        %v2234 = vunpack.c.h.s8.bf16 %v1954
        %v2235 = vunpack.c.h.s8.bf16 %v1955
        %v2236 = vunpack.c.l.s8.bf16 %v1956
        %v2237 = vunpack.c.l.s8.bf16 %v1957
        %v2238 = vunpack.c.l.s8.bf16 %v1958
        %v2239 = vunpack.c.l.s8.bf16 %v1959
        %v2240 = vunpack.c.l.s8.bf16 %v1960
        %v2241 = vunpack.c.l.s8.bf16 %v1961
        %v2242 = vunpack.c.l.s8.bf16 %v1962
        %v2243 = vunpack.c.l.s8.bf16 %v1963
        %v2244 = vunpack.c.h.s8.bf16 %v1956
        %v2245 = vunpack.c.h.s8.bf16 %v1957
        %v2246 = vunpack.c.h.s8.bf16 %v1958
        %v2247 = vunpack.c.h.s8.bf16 %v1959
        %v2248 = vunpack.c.h.s8.bf16 %v1960
        %v2249 = vunpack.c.h.s8.bf16 %v1961
        %v2250 = vunpack.c.h.s8.bf16 %v1962
        %v2251 = vunpack.c.h.s8.bf16 %v1963
        %v2252 = vunpack.c.l.s8.bf16 %v1964
        %v2253 = vunpack.c.l.s8.bf16 %v1965
        %v2254 = vunpack.c.l.s8.bf16 %v1966
        %v2255 = vunpack.c.l.s8.bf16 %v1967
        %v2256 = vunpack.c.l.s8.bf16 %v1968
        %v2257 = vunpack.c.l.s8.bf16 %v1969
        %v2258 = vunpack.c.l.s8.bf16 %v1970
        %v2259 = vunpack.c.l.s8.bf16 %v1971
        %v2260 = vunpack.c.h.s8.bf16 %v1964
        %v2261 = vunpack.c.h.s8.bf16 %v1965
        %v2262 = vunpack.c.h.s8.bf16 %v1966
        %v2263 = vunpack.c.h.s8.bf16 %v1967
        %v2264 = vunpack.c.h.s8.bf16 %v1968
        %v2265 = vunpack.c.h.s8.bf16 %v1969
        %v2266 = vunpack.c.h.s8.bf16 %v1970
        %v2267 = vunpack.c.h.s8.bf16 %v1971
        %v2268 = vunpack.c.l.s8.bf16 %v1972
        %v2269 = vunpack.c.l.s8.bf16 %v1973
        %v2270 = vunpack.c.l.s8.bf16 %v1974
        %v2271 = vunpack.c.l.s8.bf16 %v1975
        %v2272 = vunpack.c.l.s8.bf16 %v1976
        %v2273 = vunpack.c.l.s8.bf16 %v1977
        %v2274 = vunpack.c.l.s8.bf16 %v1978
        %v2275 = vunpack.c.l.s8.bf16 %v1979
        %v2276 = vunpack.c.h.s8.bf16 %v1972
        %v2277 = vunpack.c.h.s8.bf16 %v1973
        %v2278 = vunpack.c.h.s8.bf16 %v1974
        %v2279 = vunpack.c.h.s8.bf16 %v1975
        %v2280 = vunpack.c.h.s8.bf16 %v1976
        %v2281 = vunpack.c.h.s8.bf16 %v1977
        %v2282 = vunpack.c.h.s8.bf16 %v1978
        %v2283 = vunpack.c.h.s8.bf16 %v1979
        %v2284 = vunpack.c.l.s8.bf16 %v1980
        %v2285 = vunpack.c.l.s8.bf16 %v1981
        %v2286 = vunpack.c.l.s8.bf16 %v1982
        %v2287 = vunpack.c.l.s8.bf16 %v1983
        %v2288 = vunpack.c.l.s8.bf16 %v1984
        %v2289 = vunpack.c.l.s8.bf16 %v1985
        %v2290 = vunpack.c.l.s8.bf16 %v1986
        %v2291 = vunpack.c.l.s8.bf16 %v1987
        %v2292 = vunpack.c.h.s8.bf16 %v1980
        %v2293 = vunpack.c.h.s8.bf16 %v1981
        %v2294 = vunpack.c.h.s8.bf16 %v1982
        %v2295 = vunpack.c.h.s8.bf16 %v1983
        %v2296 = vunpack.c.h.s8.bf16 %v1984
        %v2297 = vunpack.c.h.s8.bf16 %v1985
        %v2298 = vunpack.c.h.s8.bf16 %v1986
        %v2299 = vunpack.c.h.s8.bf16 %v1987
        %v2300 = vunpack.c.l.s8.bf16 %v1988
        %v2301 = vunpack.c.l.s8.bf16 %v1989
        %v2302 = vunpack.c.l.s8.bf16 %v1990
        %v2303 = vunpack.c.l.s8.bf16 %v1991
        %v2304 = vunpack.c.l.s8.bf16 %v1992
        %v2305 = vunpack.c.l.s8.bf16 %v1993
        %v2306 = vunpack.c.l.s8.bf16 %v1994
        %v2307 = vunpack.c.l.s8.bf16 %v1995
        %v2308 = vunpack.c.h.s8.bf16 %v1988
        %v2309 = vunpack.c.h.s8.bf16 %v1989
        %v2310 = vunpack.c.h.s8.bf16 %v1990
        %v2311 = vunpack.c.h.s8.bf16 %v1991
        %v2312 = vunpack.c.h.s8.bf16 %v1992
        %v2313 = vunpack.c.h.s8.bf16 %v1993
        %v2314 = vunpack.c.h.s8.bf16 %v1994
        %v2315 = vunpack.c.h.s8.bf16 %v1995
        %v2316 = vunpack.c.l.s8.bf16 %v1996
        %v2317 = vunpack.c.l.s8.bf16 %v1997
        %v2318 = vunpack.c.l.s8.bf16 %v1998
        %v2319 = vunpack.c.l.s8.bf16 %v1999
        %v2320 = vunpack.c.l.s8.bf16 %v2000
        %v2321 = vunpack.c.l.s8.bf16 %v2001
        %v2322 = vunpack.c.l.s8.bf16 %v2002
        %v2323 = vunpack.c.l.s8.bf16 %v2003
        %v2324 = vunpack.c.h.s8.bf16 %v1996
        %v2325 = vunpack.c.h.s8.bf16 %v1997
        %v2326 = vunpack.c.h.s8.bf16 %v1998
        %v2327 = vunpack.c.h.s8.bf16 %v1999
        %v2328 = vunpack.c.h.s8.bf16 %v2000
        %v2329 = vunpack.c.h.s8.bf16 %v2001
        %v2330 = vunpack.c.h.s8.bf16 %v2002
        %v2331 = vunpack.c.h.s8.bf16 %v2003
        %v2332 = vunpack.c.l.s8.bf16 %v2004
        %v2333 = vunpack.c.l.s8.bf16 %v2005
        %v2334 = vunpack.c.l.s8.bf16 %v2006
        %v2335 = vunpack.c.l.s8.bf16 %v2007
        %v2336 = vunpack.c.l.s8.bf16 %v2008
        %v2337 = vunpack.c.l.s8.bf16 %v2009
        %v2338 = vunpack.c.l.s8.bf16 %v2010
        %v2339 = vunpack.c.l.s8.bf16 %v2011
        %v2340 = vunpack.c.h.s8.bf16 %v2004
        %v2341 = vunpack.c.h.s8.bf16 %v2005
        %v2342 = vunpack.c.h.s8.bf16 %v2006
        %v2343 = vunpack.c.h.s8.bf16 %v2007
        %v2344 = vunpack.c.h.s8.bf16 %v2008
        %v2345 = vunpack.c.h.s8.bf16 %v2009
        %v2346 = vunpack.c.h.s8.bf16 %v2010
        %v2347 = vunpack.c.h.s8.bf16 %v2011
        %v2348 = vunpack.c.l.s8.bf16 %v2012
        %v2349 = vunpack.c.l.s8.bf16 %v2013
        %v2350 = vunpack.c.l.s8.bf16 %v2014
        %v2351 = vunpack.c.l.s8.bf16 %v2015
        %v2352 = vunpack.c.l.s8.bf16 %v2016
        %v2353 = vunpack.c.l.s8.bf16 %v2017
        %v2354 = vunpack.c.l.s8.bf16 %v2018
        %v2355 = vunpack.c.l.s8.bf16 %v2019
        %v2356 = vunpack.c.h.s8.bf16 %v2012
        %v2357 = vunpack.c.h.s8.bf16 %v2013
        %v2358 = vunpack.c.h.s8.bf16 %v2014
        %v2359 = vunpack.c.h.s8.bf16 %v2015
        %v2360 = vunpack.c.h.s8.bf16 %v2016
        %v2361 = vunpack.c.h.s8.bf16 %v2017
        %v2362 = vunpack.c.h.s8.bf16 %v2018
        %v2363 = vunpack.c.h.s8.bf16 %v2019
        %v2364 = vunpack.c.l.s8.bf16 %v2020
        %v2365 = vunpack.c.l.s8.bf16 %v2021
        %v2366 = vunpack.c.l.s8.bf16 %v2022
        %v2367 = vunpack.c.l.s8.bf16 %v2023
        %v2368 = vunpack.c.l.s8.bf16 %v2024
        %v2369 = vunpack.c.l.s8.bf16 %v2025
        %v2370 = vunpack.c.l.s8.bf16 %v2026
        %v2371 = vunpack.c.l.s8.bf16 %v2027
        %v2372 = vunpack.c.h.s8.bf16 %v2020
        %v2373 = vunpack.c.h.s8.bf16 %v2021
        %v2374 = vunpack.c.h.s8.bf16 %v2022
        %v2375 = vunpack.c.h.s8.bf16 %v2023
        %v2376 = vunpack.c.h.s8.bf16 %v2024
        %v2377 = vunpack.c.h.s8.bf16 %v2025
        %v2378 = vunpack.c.h.s8.bf16 %v2026
        %v2379 = vunpack.c.h.s8.bf16 %v2027
        %v2380 = vunpack.c.l.s8.bf16 %v2028
        %v2381 = vunpack.c.l.s8.bf16 %v2029
        %v2382 = vunpack.c.l.s8.bf16 %v2030
        %v2383 = vunpack.c.l.s8.bf16 %v2031
        %v2384 = vunpack.c.l.s8.bf16 %v2032
        %v2385 = vunpack.c.l.s8.bf16 %v2033
        %v2386 = vunpack.c.l.s8.bf16 %v2034
        %v2387 = vunpack.c.l.s8.bf16 %v2035
        %v2388 = vunpack.c.h.s8.bf16 %v2028
        %v2389 = vunpack.c.h.s8.bf16 %v2029
        %v2390 = vunpack.c.h.s8.bf16 %v2030
        %v2391 = vunpack.c.h.s8.bf16 %v2031
        %v2392 = vunpack.c.h.s8.bf16 %v2032
        %v2393 = vunpack.c.h.s8.bf16 %v2033
        %v2394 = vunpack.c.h.s8.bf16 %v2034
        %v2395 = vunpack.c.h.s8.bf16 %v2035
        %v2396 = vunpack.c.l.s8.bf16 %v2036
        %v2397 = vunpack.c.l.s8.bf16 %v2037
        %v2398 = vunpack.c.l.s8.bf16 %v2038
        %v2399 = vunpack.c.l.s8.bf16 %v2039
        %v2400 = vunpack.c.l.s8.bf16 %v2040
        %v2401 = vunpack.c.l.s8.bf16 %v2041
        %v2402 = vunpack.c.l.s8.bf16 %v2042
        %v2403 = vunpack.c.l.s8.bf16 %v2043
        %v2404 = vunpack.c.h.s8.bf16 %v2036
        %v2405 = vunpack.c.h.s8.bf16 %v2037
        %v2406 = vunpack.c.h.s8.bf16 %v2038
        %v2407 = vunpack.c.h.s8.bf16 %v2039
        %v2408 = vunpack.c.h.s8.bf16 %v2040
        %v2409 = vunpack.c.h.s8.bf16 %v2041
        %v2410 = vunpack.c.h.s8.bf16 %v2042
        %v2411 = vunpack.c.h.s8.bf16 %v2043
        %v2412 = vunpack.c.l.s8.bf16 %v2044
        %v2413 = vunpack.c.l.s8.bf16 %v2045
        %v2414 = vunpack.c.l.s8.bf16 %v2046
        %v2415 = vunpack.c.l.s8.bf16 %v2047
        %v2416 = vunpack.c.l.s8.bf16 %v2048
        %v2417 = vunpack.c.l.s8.bf16 %v2049
        %v2418 = vunpack.c.l.s8.bf16 %v2050
        %v2419 = vunpack.c.l.s8.bf16 %v2051
        %v2420 = vunpack.c.h.s8.bf16 %v2044
        %v2421 = vunpack.c.h.s8.bf16 %v2045
        %v2422 = vunpack.c.h.s8.bf16 %v2046
        %v2423 = vunpack.c.h.s8.bf16 %v2047
        %v2424 = vunpack.c.h.s8.bf16 %v2048
        %v2425 = vunpack.c.h.s8.bf16 %v2049
        %v2426 = vunpack.c.h.s8.bf16 %v2050
        %v2427 = vunpack.c.h.s8.bf16 %v2051
        %v2428 = vunpack.c.l.s8.bf16 %v2052
        %v2429 = vunpack.c.l.s8.bf16 %v2053
        %v2430 = vunpack.c.l.s8.bf16 %v2054
        %v2431 = vunpack.c.l.s8.bf16 %v2055
        %v2432 = vunpack.c.l.s8.bf16 %v2056
        %v2433 = vunpack.c.l.s8.bf16 %v2057
        %v2434 = vunpack.c.l.s8.bf16 %v2058
        %v2435 = vunpack.c.l.s8.bf16 %v2059
        %v2436 = vunpack.c.h.s8.bf16 %v2052
        %v2437 = vunpack.c.h.s8.bf16 %v2053
        %v2438 = vunpack.c.h.s8.bf16 %v2054
        %v2439 = vunpack.c.h.s8.bf16 %v2055
        %v2440 = vunpack.c.h.s8.bf16 %v2056
        %v2441 = vunpack.c.h.s8.bf16 %v2057
        %v2442 = vunpack.c.h.s8.bf16 %v2058
        %v2443 = vunpack.c.h.s8.bf16 %v2059
        %v2444 = vunpack.c.l.s8.bf16 %v2060
        %v2445 = vunpack.c.l.s8.bf16 %v2061
        %v2446 = vunpack.c.l.s8.bf16 %v2062
        %v2447 = vunpack.c.l.s8.bf16 %v2063
        %v2448 = vunpack.c.l.s8.bf16 %v2064
        %v2449 = vunpack.c.l.s8.bf16 %v2065
        %v2450 = vunpack.c.l.s8.bf16 %v2066
        %v2451 = vunpack.c.l.s8.bf16 %v2067
        %v2452 = vunpack.c.h.s8.bf16 %v2060
        %v2453 = vunpack.c.h.s8.bf16 %v2061
        %v2454 = vunpack.c.h.s8.bf16 %v2062
        %v2455 = vunpack.c.h.s8.bf16 %v2063
        %v2456 = vunpack.c.h.s8.bf16 %v2064
        %v2457 = vunpack.c.h.s8.bf16 %v2065
        %v2458 = vunpack.c.h.s8.bf16 %v2066
        %v2459 = vunpack.c.h.s8.bf16 %v2067
        %v2460 = vunpack.c.l.s8.bf16 %v2068
        %v2461 = vunpack.c.l.s8.bf16 %v2069
        %v2462 = vunpack.c.l.s8.bf16 %v2070
        %v2463 = vunpack.c.l.s8.bf16 %v2071
        %v2464 = vunpack.c.l.s8.bf16 %v2072
        %v2465 = vunpack.c.l.s8.bf16 %v2073
        %v2466 = vunpack.c.l.s8.bf16 %v2074
        %v2467 = vunpack.c.l.s8.bf16 %v2075
        %v2468 = vunpack.c.h.s8.bf16 %v2068
        %v2469 = vunpack.c.h.s8.bf16 %v2069
        %v2470 = vunpack.c.h.s8.bf16 %v2070
        %v2471 = vunpack.c.h.s8.bf16 %v2071
        %v2472 = vunpack.c.h.s8.bf16 %v2072
        %v2473 = vunpack.c.h.s8.bf16 %v2073
        %v2474 = vunpack.c.h.s8.bf16 %v2074
        %v2475 = vunpack.c.h.s8.bf16 %v2075
        %v2476 = vunpack.c.l.s8.bf16 %v2076
        %v2477 = vunpack.c.l.s8.bf16 %v2077
        %v2478 = vunpack.c.l.s8.bf16 %v2078
        %v2479 = vunpack.c.l.s8.bf16 %v2079
        %v2480 = vunpack.c.l.s8.bf16 %v2080
        %v2481 = vunpack.c.l.s8.bf16 %v2081
        %v2482 = vunpack.c.l.s8.bf16 %v2082
        %v2483 = vunpack.c.l.s8.bf16 %v2083
        %v2484 = vunpack.c.h.s8.bf16 %v2076
        %v2485 = vunpack.c.h.s8.bf16 %v2077
        %v2486 = vunpack.c.h.s8.bf16 %v2078
        %v2487 = vunpack.c.h.s8.bf16 %v2079
        %v2488 = vunpack.c.h.s8.bf16 %v2080
        %v2489 = vunpack.c.h.s8.bf16 %v2081
        %v2490 = vunpack.c.h.s8.bf16 %v2082
        %v2491 = vunpack.c.h.s8.bf16 %v2083
        %v2492 = vunpack.c.l.s8.bf16 %v2084
        %v2493 = vunpack.c.l.s8.bf16 %v2085
        %v2494 = vunpack.c.l.s8.bf16 %v2086
        %v2495 = vunpack.c.l.s8.bf16 %v2087
        %v2496 = vunpack.c.l.s8.bf16 %v2088
        %v2497 = vunpack.c.l.s8.bf16 %v2089
        %v2498 = vunpack.c.l.s8.bf16 %v2090
        %v2499 = vunpack.c.l.s8.bf16 %v2091
        %v2500 = vunpack.c.h.s8.bf16 %v2084
        %v2501 = vunpack.c.h.s8.bf16 %v2085
        %v2502 = vunpack.c.h.s8.bf16 %v2086
        %v2503 = vunpack.c.h.s8.bf16 %v2087
        %v2504 = vunpack.c.h.s8.bf16 %v2088
        %v2505 = vunpack.c.h.s8.bf16 %v2089
        %v2506 = vunpack.c.h.s8.bf16 %v2090
        %v2507 = vunpack.c.h.s8.bf16 %v2091
        %v2508 = vunpack.c.l.s8.bf16 %v2092
        %v2509 = vunpack.c.l.s8.bf16 %v2093
        %v2510 = vunpack.c.l.s8.bf16 %v2094
        %v2511 = vunpack.c.l.s8.bf16 %v2095
        %v2512 = vunpack.c.l.s8.bf16 %v2096
        %v2513 = vunpack.c.l.s8.bf16 %v2097
        %v2514 = vunpack.c.l.s8.bf16 %v2098
        %v2515 = vunpack.c.l.s8.bf16 %v2099
        %v2516 = vunpack.c.h.s8.bf16 %v2092
        %v2517 = vunpack.c.h.s8.bf16 %v2093
        %v2518 = vunpack.c.h.s8.bf16 %v2094
        %v2519 = vunpack.c.h.s8.bf16 %v2095
        %v2520 = vunpack.c.h.s8.bf16 %v2096
        %v2521 = vunpack.c.h.s8.bf16 %v2097
        %v2522 = vunpack.c.h.s8.bf16 %v2098
        %v2523 = vunpack.c.h.s8.bf16 %v2099
        %v2524 = vunpack.c.l.s8.bf16 %v2100
        %v2525 = vunpack.c.l.s8.bf16 %v2101
        %v2526 = vunpack.c.l.s8.bf16 %v2102
        %v2527 = vunpack.c.l.s8.bf16 %v2103
        %v2528 = vunpack.c.l.s8.bf16 %v2104
        %v2529 = vunpack.c.l.s8.bf16 %v2105
        %v2530 = vunpack.c.l.s8.bf16 %v2106
        %v2531 = vunpack.c.l.s8.bf16 %v2107
        %v2532 = vunpack.c.h.s8.bf16 %v2100
        %v2533 = vunpack.c.h.s8.bf16 %v2101
        %v2534 = vunpack.c.h.s8.bf16 %v2102
        %v2535 = vunpack.c.h.s8.bf16 %v2103
        %v2536 = vunpack.c.h.s8.bf16 %v2104
        %v2537 = vunpack.c.h.s8.bf16 %v2105
        %v2538 = vunpack.c.h.s8.bf16 %v2106
        %v2539 = vunpack.c.h.s8.bf16 %v2107
        %v2540 = vunpack.c.l.s8.bf16 %v2108
        %v2541 = vunpack.c.l.s8.bf16 %v2109
        %v2542 = vunpack.c.l.s8.bf16 %v2110
        %v2543 = vunpack.c.l.s8.bf16 %v2111
        %v2544 = vunpack.c.l.s8.bf16 %v2112
        %v2545 = vunpack.c.l.s8.bf16 %v2113
        %v2546 = vunpack.c.l.s8.bf16 %v2114
        %v2547 = vunpack.c.l.s8.bf16 %v2115
        %v2548 = vunpack.c.h.s8.bf16 %v2108
        %v2549 = vunpack.c.h.s8.bf16 %v2109
        %v2550 = vunpack.c.h.s8.bf16 %v2110
        %v2551 = vunpack.c.h.s8.bf16 %v2111
        %v2552 = vunpack.c.h.s8.bf16 %v2112
        %v2553 = vunpack.c.h.s8.bf16 %v2113
        %v2554 = vunpack.c.h.s8.bf16 %v2114
        %v2555 = vunpack.c.h.s8.bf16 %v2115
        %v2556 = vunpack.c.l.s8.bf16 %v2116
        %v2557 = vunpack.c.l.s8.bf16 %v2117
        %v2558 = vunpack.c.l.s8.bf16 %v2118
        %v2559 = vunpack.c.l.s8.bf16 %v2119
        %v2560 = vunpack.c.l.s8.bf16 %v2120
        %v2561 = vunpack.c.l.s8.bf16 %v2121
        %v2562 = vunpack.c.l.s8.bf16 %v2122
        %v2563 = vunpack.c.l.s8.bf16 %v2123
        %v2564 = vunpack.c.h.s8.bf16 %v2116
        %v2565 = vunpack.c.h.s8.bf16 %v2117
        %v2566 = vunpack.c.h.s8.bf16 %v2118
        %v2567 = vunpack.c.h.s8.bf16 %v2119
        %v2568 = vunpack.c.h.s8.bf16 %v2120
        %v2569 = vunpack.c.h.s8.bf16 %v2121
        %v2570 = vunpack.c.h.s8.bf16 %v2122
        %v2571 = vunpack.c.h.s8.bf16 %v2123
        %v2572 = vunpack.c.l.s8.bf16 %v2124
        %v2573 = vunpack.c.l.s8.bf16 %v2125
        %v2574 = vunpack.c.l.s8.bf16 %v2126
        %v2575 = vunpack.c.l.s8.bf16 %v2127
        %v2576 = vunpack.c.l.s8.bf16 %v2128
        %v2577 = vunpack.c.l.s8.bf16 %v2129
        %v2578 = vunpack.c.l.s8.bf16 %v2130
        %v2579 = vunpack.c.l.s8.bf16 %v2131
        %v2580 = vunpack.c.h.s8.bf16 %v2124
        %v2581 = vunpack.c.h.s8.bf16 %v2125
        %v2582 = vunpack.c.h.s8.bf16 %v2126
        %v2583 = vunpack.c.h.s8.bf16 %v2127
        %v2584 = vunpack.c.h.s8.bf16 %v2128
        %v2585 = vunpack.c.h.s8.bf16 %v2129
        %v2586 = vunpack.c.h.s8.bf16 %v2130
        %v2587 = vunpack.c.h.s8.bf16 %v2131
        %v2588 = vunpack.c.l.s8.bf16 %v2132
        %v2589 = vunpack.c.l.s8.bf16 %v2133
        %v2590 = vunpack.c.l.s8.bf16 %v2134
        %v2591 = vunpack.c.l.s8.bf16 %v2135
        %v2592 = vunpack.c.l.s8.bf16 %v2136
        %v2593 = vunpack.c.l.s8.bf16 %v2137
        %v2594 = vunpack.c.l.s8.bf16 %v2138
        %v2595 = vunpack.c.l.s8.bf16 %v2139
        %v2596 = vunpack.c.h.s8.bf16 %v2132
        %v2597 = vunpack.c.h.s8.bf16 %v2133
        %v2598 = vunpack.c.h.s8.bf16 %v2134
        %v2599 = vunpack.c.h.s8.bf16 %v2135
        %v2600 = vunpack.c.h.s8.bf16 %v2136
        %v2601 = vunpack.c.h.s8.bf16 %v2137
        %v2602 = vunpack.c.h.s8.bf16 %v2138
        %v2603 = vunpack.c.h.s8.bf16 %v2139
        %v2604 = vunpack.c.l.s8.bf16 %v2140
        %v2605 = vunpack.c.l.s8.bf16 %v2141
        %v2606 = vunpack.c.l.s8.bf16 %v2142
        %v2607 = vunpack.c.l.s8.bf16 %v2143
        %v2608 = vunpack.c.l.s8.bf16 %v2144
        %v2609 = vunpack.c.l.s8.bf16 %v2145
        %v2610 = vunpack.c.l.s8.bf16 %v2146
        %v2611 = vunpack.c.l.s8.bf16 %v2147
        %v2612 = vunpack.c.h.s8.bf16 %v2140
        %v2613 = vunpack.c.h.s8.bf16 %v2141
        %v2614 = vunpack.c.h.s8.bf16 %v2142
        %v2615 = vunpack.c.h.s8.bf16 %v2143
        %v2616 = vunpack.c.h.s8.bf16 %v2144
        %v2617 = vunpack.c.h.s8.bf16 %v2145
        %v2618 = vunpack.c.h.s8.bf16 %v2146
        %v2619 = vunpack.c.h.s8.bf16 %v2147
        %v2620 = vunpack.c.l.s8.bf16 %v2148
        %v2621 = vunpack.c.l.s8.bf16 %v2149
        %v2622 = vunpack.c.l.s8.bf16 %v2150
        %v2623 = vunpack.c.l.s8.bf16 %v2151
        %v2624 = vunpack.c.l.s8.bf16 %v2152
        %v2625 = vunpack.c.l.s8.bf16 %v2153
        %v2626 = vunpack.c.l.s8.bf16 %v2154
        %v2627 = vunpack.c.l.s8.bf16 %v2155
        %v2628 = vunpack.c.h.s8.bf16 %v2148
        %v2629 = vunpack.c.h.s8.bf16 %v2149
        %v2630 = vunpack.c.h.s8.bf16 %v2150
        %v2631 = vunpack.c.h.s8.bf16 %v2151
        %v2632 = vunpack.c.h.s8.bf16 %v2152
        %v2633 = vunpack.c.h.s8.bf16 %v2153
        %v2634 = vunpack.c.h.s8.bf16 %v2154
        %v2635 = vunpack.c.h.s8.bf16 %v2155
        %v2636 = vunpack.c.l.s8.bf16 %v2156
        %v2637 = vunpack.c.l.s8.bf16 %v2157
        %v2638 = vunpack.c.l.s8.bf16 %v2158
        %v2639 = vunpack.c.l.s8.bf16 %v2159
        %v2640 = vunpack.c.l.s8.bf16 %v2160
        %v2641 = vunpack.c.l.s8.bf16 %v2161
        %v2642 = vunpack.c.l.s8.bf16 %v2162
        %v2643 = vunpack.c.l.s8.bf16 %v2163
        %v2644 = vunpack.c.h.s8.bf16 %v2156
        %v2645 = vunpack.c.h.s8.bf16 %v2157
        %v2646 = vunpack.c.h.s8.bf16 %v2158
        %v2647 = vunpack.c.h.s8.bf16 %v2159
        %v2648 = vunpack.c.h.s8.bf16 %v2160
        %v2649 = vunpack.c.h.s8.bf16 %v2161
        %v2650 = vunpack.c.h.s8.bf16 %v2162
        %v2651 = vunpack.c.h.s8.bf16 %v2163
        %v2652 = vunpack.c.l.s8.bf16 %v2164
        %v2653 = vunpack.c.l.s8.bf16 %v2165
        %v2654 = vunpack.c.l.s8.bf16 %v2166
        %v2655 = vunpack.c.l.s8.bf16 %v2167
        %v2656 = vunpack.c.l.s8.bf16 %v2168
        %v2657 = vunpack.c.l.s8.bf16 %v2169
        %v2658 = vunpack.c.l.s8.bf16 %v2170
        %v2659 = vunpack.c.l.s8.bf16 %v2171
        %v2660 = vunpack.c.h.s8.bf16 %v2164
        %v2661 = vunpack.c.h.s8.bf16 %v2165
        %v2662 = vunpack.c.h.s8.bf16 %v2166
        %v2663 = vunpack.c.h.s8.bf16 %v2167
        %v2664 = vunpack.c.h.s8.bf16 %v2168
        %v2665 = vunpack.c.h.s8.bf16 %v2169
        %v2666 = vunpack.c.h.s8.bf16 %v2170
        %v2667 = vunpack.c.h.s8.bf16 %v2171
        %v2668 = vunpack.c.l.s8.bf16 %v2172
        %v2669 = vunpack.c.l.s8.bf16 %v2173
        %v2670 = vunpack.c.l.s8.bf16 %v2174
        %v2671 = vunpack.c.l.s8.bf16 %v2175
        %v2672 = vunpack.c.l.s8.bf16 %v2176
        %v2673 = vunpack.c.l.s8.bf16 %v2177
        %v2674 = vunpack.c.l.s8.bf16 %v2178
        %v2675 = vunpack.c.l.s8.bf16 %v2179
        %v2676 = vunpack.c.h.s8.bf16 %v2172
        %v2677 = vunpack.c.h.s8.bf16 %v2173
        %v2678 = vunpack.c.h.s8.bf16 %v2174
        %v2679 = vunpack.c.h.s8.bf16 %v2175
        %v2680 = vunpack.c.h.s8.bf16 %v2176
        %v2681 = vunpack.c.h.s8.bf16 %v2177
        %v2682 = vunpack.c.h.s8.bf16 %v2178
        %v2683 = vunpack.c.h.s8.bf16 %v2179
        %v2684 = vunpack.c.l.s8.bf16 %v2180
        %v2685 = vunpack.c.l.s8.bf16 %v2181
        %v2686 = vunpack.c.l.s8.bf16 %v2182
        %v2687 = vunpack.c.l.s8.bf16 %v2183
        %v2688 = vunpack.c.l.s8.bf16 %v2184
        %v2689 = vunpack.c.l.s8.bf16 %v2185
        %v2690 = vunpack.c.l.s8.bf16 %v2186
        %v2691 = vunpack.c.l.s8.bf16 %v2187
        %v2692 = vunpack.c.h.s8.bf16 %v2180
        %v2693 = vunpack.c.h.s8.bf16 %v2181
        %v2694 = vunpack.c.h.s8.bf16 %v2182
        %v2695 = vunpack.c.h.s8.bf16 %v2183
        %v2696 = vunpack.c.h.s8.bf16 %v2184
        %v2697 = vunpack.c.h.s8.bf16 %v2185
        %v2698 = vunpack.c.h.s8.bf16 %v2186
        %v2699 = vunpack.c.h.s8.bf16 %v2187
        %v2700 = vunpack.c.l.s8.bf16 %v2188
        %v2701 = vunpack.c.l.s8.bf16 %v2189
        %v2702 = vunpack.c.l.s8.bf16 %v2190
        %v2703 = vunpack.c.l.s8.bf16 %v2191
        %v2704 = vunpack.c.l.s8.bf16 %v2192
        %v2705 = vunpack.c.l.s8.bf16 %v2193
        %v2706 = vunpack.c.l.s8.bf16 %v2194
        %v2707 = vunpack.c.l.s8.bf16 %v2195
        %v2708 = vunpack.c.h.s8.bf16 %v2188
        %v2709 = vunpack.c.h.s8.bf16 %v2189
        %v2710 = vunpack.c.h.s8.bf16 %v2190
        %v2711 = vunpack.c.h.s8.bf16 %v2191
        %v2712 = vunpack.c.h.s8.bf16 %v2192
        %v2713 = vunpack.c.h.s8.bf16 %v2193
        %v2714 = vunpack.c.h.s8.bf16 %v2194
        %v2715 = vunpack.c.h.s8.bf16 %v2195
        %2716 = vmatprep.subr.bf16.mxu0 %v2205
        %2717 = vmatpush1.bf16.msra.mxu0 %v2204
        %2718 = vmatprep.subr.bf16.mxu0 %v2213
        %2719 = vmatpush1.bf16.msra.mxu0 %v2212
        %2720 = vmatprep.subr.bf16.mxu0 %v2221
        %2721 = vmatpush1.bf16.msra.mxu0 %v2220
        %2722 = vmatprep.subr.bf16.mxu0 %v2229
        %2723 = vmatpush1.bf16.msra.mxu0 %v2228
        %2724 = vmatprep.subr.bf16.mxu0 %v2237
        %2725 = vmatpush1.bf16.msra.mxu0 %v2236
        %2726 = vmatprep.subr.bf16.mxu0 %v2245
        %2727 = vmatpush1.bf16.msra.mxu0 %v2244
        %2728 = vmatprep.subr.bf16.mxu0 %v2253
        %2729 = vmatpush1.bf16.msra.mxu0 %v2252
        %2730 = vmatprep.subr.bf16.mxu0 %v2261
        %2731 = vmatpush1.bf16.msra.mxu0 %v2260
        %2732 = vmatprep.subr.bf16.mxu0 %v2269
        %2733 = vmatpush1.bf16.msra.mxu0 %v2268
        %2734 = vmatprep.subr.bf16.mxu0 %v2277
        %2735 = vmatpush1.bf16.msra.mxu0 %v2276
        %2736 = vmatprep.subr.bf16.mxu0 %v2285
        %2737 = vmatpush1.bf16.msra.mxu0 %v2284
        %2738 = vmatprep.subr.bf16.mxu0 %v2293
        %2739 = vmatpush1.bf16.msra.mxu0 %v2292
        %2740 = vmatprep.subr.bf16.mxu0 %v2301
        %2741 = vmatpush1.bf16.msra.mxu0 %v2300
        %2742 = vmatprep.subr.bf16.mxu0 %v2309
        %2743 = vmatpush1.bf16.msra.mxu0 %v2308
        %2744 = vmatprep.subr.bf16.mxu0 %v2317
        %2745 = vmatpush1.bf16.msra.mxu0 %v2316
        %2746 = vmatprep.subr.bf16.mxu0 %v2325
        %2747 = vmatpush1.bf16.msra.mxu0 %v2324
        %2748 = vmatprep.mubr.bf16.mxu0 %v2197
        %2749 = vmatmul.mubr.bf16.gmra.mrb[0].mxu0 %v2196
        %v2750 = vpop.f32.mrb[0].mxu0
        %v2751 = vadd.f32 0.0, %v2750
        %v2752 = vpop.f32.mrb[0].mxu0
        %v2753 = vadd.f32 0.0, %v2752
        %v2754 = vpop.f32.mrb[0].mxu0
        %v2755 = vpop.f32.mrb[0].mxu0
        %2756 = vdwg.mxu0
        %2757 = vmatprep.subr.bf16.mxu0 %v2333
        %2758 = vmatpush1.bf16.msra.mxu0 %v2332
        %2759 = vmatprep.subr.bf16.mxu0 %v2341
        %2760 = vmatpush1.bf16.msra.mxu0 %v2340
        %2761 = vmatprep.subr.bf16.mxu0 %v2349
        %2762 = vmatpush1.bf16.msra.mxu0 %v2348
        %2763 = vmatprep.subr.bf16.mxu0 %v2357
        %2764 = vmatpush1.bf16.msra.mxu0 %v2356
        %2765 = vmatprep.subr.bf16.mxu0 %v2365
        %2766 = vmatpush1.bf16.msra.mxu0 %v2364
        %2767 = vmatprep.subr.bf16.mxu0 %v2373
        %2768 = vmatpush1.bf16.msra.mxu0 %v2372
        %2769 = vmatprep.subr.bf16.mxu0 %v2381
        %2770 = vmatpush1.bf16.msra.mxu0 %v2380
        %2771 = vmatprep.subr.bf16.mxu0 %v2389
        %2772 = vmatpush1.bf16.msra.mxu0 %v2388
        %2773 = vmatprep.subr.bf16.mxu0 %v2397
        %2774 = vmatpush1.bf16.msra.mxu0 %v2396
        %2775 = vmatprep.subr.bf16.mxu0 %v2405
        %2776 = vmatpush1.bf16.msra.mxu0 %v2404
        %2777 = vmatprep.subr.bf16.mxu0 %v2413
        %2778 = vmatpush1.bf16.msra.mxu0 %v2412
        %2779 = vmatprep.subr.bf16.mxu0 %v2421
        %2780 = vmatpush1.bf16.msra.mxu0 %v2420
        %2781 = vmatprep.subr.bf16.mxu0 %v2429
        %2782 = vmatpush1.bf16.msra.mxu0 %v2428
        %2783 = vmatprep.subr.bf16.mxu0 %v2437
        %2784 = vmatpush1.bf16.msra.mxu0 %v2436
        %2785 = vmatprep.subr.bf16.mxu0 %v2445
        %2786 = vmatpush1.bf16.msra.mxu0 %v2444
        %2787 = vmatprep.subr.bf16.mxu0 %v2453
        %2788 = vmatpush1.bf16.msra.mxu0 %v2452
        %2789 = vmatprep.mubr.bf16.mxu0 %v2199
        %2790 = vmatmul.mubr.bf16.gmra.mrb[0].mxu0 %v2198
        %v2791 = vpop.f32.mrb[0].mxu0
        %v2792 = vadd.f32 %v2751, %v2791
        %v2793 = vpop.f32.mrb[0].mxu0
        %v2794 = vadd.f32 %v2753, %v2793
        %v2795 = vpop.f32.mrb[0].mxu0
        %v2796 = vpop.f32.mrb[0].mxu0
        %2797 = vdwg.mxu0
        %2798 = vmatprep.subr.bf16.mxu0 %v2461
        %2799 = vmatpush1.bf16.msra.mxu0 %v2460
        %2800 = vmatprep.subr.bf16.mxu0 %v2469
        %2801 = vmatpush1.bf16.msra.mxu0 %v2468
        %2802 = vmatprep.subr.bf16.mxu0 %v2477
        %2803 = vmatpush1.bf16.msra.mxu0 %v2476
        %2804 = vmatprep.subr.bf16.mxu0 %v2485
        %2805 = vmatpush1.bf16.msra.mxu0 %v2484
        %2806 = vmatprep.subr.bf16.mxu0 %v2493
        %2807 = vmatpush1.bf16.msra.mxu0 %v2492
        %2808 = vmatprep.subr.bf16.mxu0 %v2501
        %2809 = vmatpush1.bf16.msra.mxu0 %v2500
        %2810 = vmatprep.subr.bf16.mxu0 %v2509
        %2811 = vmatpush1.bf16.msra.mxu0 %v2508
        %2812 = vmatprep.subr.bf16.mxu0 %v2517
        %2813 = vmatpush1.bf16.msra.mxu0 %v2516
        %2814 = vmatprep.subr.bf16.mxu0 %v2525
        %2815 = vmatpush1.bf16.msra.mxu0 %v2524
        %2816 = vmatprep.subr.bf16.mxu0 %v2533
        %2817 = vmatpush1.bf16.msra.mxu0 %v2532
        %2818 = vmatprep.subr.bf16.mxu0 %v2541
        %2819 = vmatpush1.bf16.msra.mxu0 %v2540
        %2820 = vmatprep.subr.bf16.mxu0 %v2549
        %2821 = vmatpush1.bf16.msra.mxu0 %v2548
        %2822 = vmatprep.subr.bf16.mxu0 %v2557
        %2823 = vmatpush1.bf16.msra.mxu0 %v2556
        %2824 = vmatprep.subr.bf16.mxu0 %v2565
        %2825 = vmatpush1.bf16.msra.mxu0 %v2564
        %2826 = vmatprep.subr.bf16.mxu0 %v2573
        %2827 = vmatpush1.bf16.msra.mxu0 %v2572
        %2828 = vmatprep.subr.bf16.mxu0 %v2581
        %2829 = vmatpush1.bf16.msra.mxu0 %v2580
        %2830 = vmatprep.mubr.bf16.mxu0 %v2201
        %2831 = vmatmul.mubr.bf16.gmra.mrb[0].mxu0 %v2200
        %v2832 = vpop.f32.mrb[0].mxu0
        %v2833 = vadd.f32 %v2792, %v2832
        %v2834 = vpop.f32.mrb[0].mxu0
        %v2835 = vadd.f32 %v2794, %v2834
        %v2836 = vpop.f32.mrb[0].mxu0
        %v2837 = vpop.f32.mrb[0].mxu0
        %2838 = vdwg.mxu0
        %2839 = vmatprep.subr.bf16.mxu0 %v2589
        %2840 = vmatpush1.bf16.msra.mxu0 %v2588
        %2841 = vmatprep.subr.bf16.mxu0 %v2597
        %2842 = vmatpush1.bf16.msra.mxu0 %v2596
        %2843 = vmatprep.subr.bf16.mxu0 %v2605
        %2844 = vmatpush1.bf16.msra.mxu0 %v2604
        %2845 = vmatprep.subr.bf16.mxu0 %v2613
        %2846 = vmatpush1.bf16.msra.mxu0 %v2612
        %2847 = vmatprep.subr.bf16.mxu0 %v2621
        %2848 = vmatpush1.bf16.msra.mxu0 %v2620
        %2849 = vmatprep.subr.bf16.mxu0 %v2629
        %2850 = vmatpush1.bf16.msra.mxu0 %v2628
        %2851 = vmatprep.subr.bf16.mxu0 %v2637
        %2852 = vmatpush1.bf16.msra.mxu0 %v2636
        %2853 = vmatprep.subr.bf16.mxu0 %v2645
        %2854 = vmatpush1.bf16.msra.mxu0 %v2644
        %2855 = vmatprep.subr.bf16.mxu0 %v2653
        %2856 = vmatpush1.bf16.msra.mxu0 %v2652
        %2857 = vmatprep.subr.bf16.mxu0 %v2661
        %2858 = vmatpush1.bf16.msra.mxu0 %v2660
        %2859 = vmatprep.subr.bf16.mxu0 %v2669
        %2860 = vmatpush1.bf16.msra.mxu0 %v2668
        %2861 = vmatprep.subr.bf16.mxu0 %v2677
        %2862 = vmatpush1.bf16.msra.mxu0 %v2676
        %2863 = vmatprep.subr.bf16.mxu0 %v2685
        %2864 = vmatpush1.bf16.msra.mxu0 %v2684
        %2865 = vmatprep.subr.bf16.mxu0 %v2693
        %2866 = vmatpush1.bf16.msra.mxu0 %v2692
        %2867 = vmatprep.subr.bf16.mxu0 %v2701
        %2868 = vmatpush1.bf16.msra.mxu0 %v2700
        %2869 = vmatprep.subr.bf16.mxu0 %v2709
        %2870 = vmatpush1.bf16.msra.mxu0 %v2708
        %2871 = vmatprep.mubr.bf16.mxu0 %v2203
        %2872 = vmatmul.mubr.bf16.gmra.mrb[0].mxu0 %v2202
        %v2873 = vpop.f32.mrb[0].mxu0
        %v2874 = vadd.f32 %v2833, %v2873
        %v2875 = vpop.f32.mrb[0].mxu0
        %v2876 = vadd.f32 %v2835, %v2875
        %v2877 = vpop.f32.mrb[0].mxu0
        %v2878 = vpop.f32.mrb[0].mxu0
        %2879 = vdwg.mxu0
        %2880 = vmatprep.subr.bf16.mxu0 %v2207
        %2881 = vmatpush1.bf16.msra.mxu0 %v2206
        %2882 = vmatprep.subr.bf16.mxu0 %v2215
        %2883 = vmatpush1.bf16.msra.mxu0 %v2214
        %2884 = vmatprep.subr.bf16.mxu0 %v2223
        %2885 = vmatpush1.bf16.msra.mxu0 %v2222
        %2886 = vmatprep.subr.bf16.mxu0 %v2231
        %2887 = vmatpush1.bf16.msra.mxu0 %v2230
        %2888 = vmatprep.subr.bf16.mxu0 %v2239
        %2889 = vmatpush1.bf16.msra.mxu0 %v2238
        %2890 = vmatprep.subr.bf16.mxu0 %v2247
        %2891 = vmatpush1.bf16.msra.mxu0 %v2246
        %2892 = vmatprep.subr.bf16.mxu0 %v2255
        %2893 = vmatpush1.bf16.msra.mxu0 %v2254
        %2894 = vmatprep.subr.bf16.mxu0 %v2263
        %2895 = vmatpush1.bf16.msra.mxu0 %v2262
        %2896 = vmatprep.subr.bf16.mxu0 %v2271
        %2897 = vmatpush1.bf16.msra.mxu0 %v2270
        %2898 = vmatprep.subr.bf16.mxu0 %v2279
        %2899 = vmatpush1.bf16.msra.mxu0 %v2278
        %2900 = vmatprep.subr.bf16.mxu0 %v2287
        %2901 = vmatpush1.bf16.msra.mxu0 %v2286
        %2902 = vmatprep.subr.bf16.mxu0 %v2295
        %2903 = vmatpush1.bf16.msra.mxu0 %v2294
        %2904 = vmatprep.subr.bf16.mxu0 %v2303
        %2905 = vmatpush1.bf16.msra.mxu0 %v2302
        %2906 = vmatprep.subr.bf16.mxu0 %v2311
        %2907 = vmatpush1.bf16.msra.mxu0 %v2310
        %2908 = vmatprep.subr.bf16.mxu0 %v2319
        %2909 = vmatpush1.bf16.msra.mxu0 %v2318
        %2910 = vmatprep.subr.bf16.mxu0 %v2327
        %2911 = vmatpush1.bf16.msra.mxu0 %v2326
        %2912 = vmatprep.mubr.bf16.mxu0 %v2197
        %2913 = vmatmul.mubr.bf16.gmra.mrb[0].mxu0 %v2196
        %v2914 = vpop.f32.mrb[0].mxu0
        %v2915 = vadd.f32 0.0, %v2914
        %v2916 = vpop.f32.mrb[0].mxu0
        %v2917 = vadd.f32 0.0, %v2916
        %v2918 = vpop.f32.mrb[0].mxu0
        %v2919 = vpop.f32.mrb[0].mxu0
        %2920 = vdwg.mxu0
        %2921 = vmatprep.subr.bf16.mxu0 %v2335
        %2922 = vmatpush1.bf16.msra.mxu0 %v2334
        %2923 = vmatprep.subr.bf16.mxu0 %v2343
        %2924 = vmatpush1.bf16.msra.mxu0 %v2342
        %2925 = vmatprep.subr.bf16.mxu0 %v2351
        %2926 = vmatpush1.bf16.msra.mxu0 %v2350
        %2927 = vmatprep.subr.bf16.mxu0 %v2359
        %2928 = vmatpush1.bf16.msra.mxu0 %v2358
        %2929 = vmatprep.subr.bf16.mxu0 %v2367
        %2930 = vmatpush1.bf16.msra.mxu0 %v2366
        %2931 = vmatprep.subr.bf16.mxu0 %v2375
        %2932 = vmatpush1.bf16.msra.mxu0 %v2374
        %2933 = vmatprep.subr.bf16.mxu0 %v2383
        %2934 = vmatpush1.bf16.msra.mxu0 %v2382
        %2935 = vmatprep.subr.bf16.mxu0 %v2391
        %2936 = vmatpush1.bf16.msra.mxu0 %v2390
        %2937 = vmatprep.subr.bf16.mxu0 %v2399
        %2938 = vmatpush1.bf16.msra.mxu0 %v2398
        %2939 = vmatprep.subr.bf16.mxu0 %v2407
        %2940 = vmatpush1.bf16.msra.mxu0 %v2406
        %2941 = vmatprep.subr.bf16.mxu0 %v2415
        %2942 = vmatpush1.bf16.msra.mxu0 %v2414
        %2943 = vmatprep.subr.bf16.mxu0 %v2423
        %2944 = vmatpush1.bf16.msra.mxu0 %v2422
        %2945 = vmatprep.subr.bf16.mxu0 %v2431
        %2946 = vmatpush1.bf16.msra.mxu0 %v2430
        %2947 = vmatprep.subr.bf16.mxu0 %v2439
        %2948 = vmatpush1.bf16.msra.mxu0 %v2438
        %2949 = vmatprep.subr.bf16.mxu0 %v2447
        %2950 = vmatpush1.bf16.msra.mxu0 %v2446
        %2951 = vmatprep.subr.bf16.mxu0 %v2455
        %2952 = vmatpush1.bf16.msra.mxu0 %v2454
        %2953 = vmatprep.mubr.bf16.mxu0 %v2199
        %2954 = vmatmul.mubr.bf16.gmra.mrb[0].mxu0 %v2198
        %v2955 = vpop.f32.mrb[0].mxu0
        %v2956 = vadd.f32 %v2915, %v2955
        %v2957 = vpop.f32.mrb[0].mxu0
        %v2958 = vadd.f32 %v2917, %v2957
        %v2959 = vpop.f32.mrb[0].mxu0
        %v2960 = vpop.f32.mrb[0].mxu0
        %2961 = vdwg.mxu0
        %2962 = vmatprep.subr.bf16.mxu0 %v2463
        %2963 = vmatpush1.bf16.msra.mxu0 %v2462
        %2964 = vmatprep.subr.bf16.mxu0 %v2471
        %2965 = vmatpush1.bf16.msra.mxu0 %v2470
        %2966 = vmatprep.subr.bf16.mxu0 %v2479
        %2967 = vmatpush1.bf16.msra.mxu0 %v2478
        %2968 = vmatprep.subr.bf16.mxu0 %v2487
        %2969 = vmatpush1.bf16.msra.mxu0 %v2486
        %2970 = vmatprep.subr.bf16.mxu0 %v2495
        %2971 = vmatpush1.bf16.msra.mxu0 %v2494
        %2972 = vmatprep.subr.bf16.mxu0 %v2503
        %2973 = vmatpush1.bf16.msra.mxu0 %v2502
        %2974 = vmatprep.subr.bf16.mxu0 %v2511
        %2975 = vmatpush1.bf16.msra.mxu0 %v2510
        %2976 = vmatprep.subr.bf16.mxu0 %v2519
        %2977 = vmatpush1.bf16.msra.mxu0 %v2518
        %2978 = vmatprep.subr.bf16.mxu0 %v2527
        %2979 = vmatpush1.bf16.msra.mxu0 %v2526
        %2980 = vmatprep.subr.bf16.mxu0 %v2535
        %2981 = vmatpush1.bf16.msra.mxu0 %v2534
        %2982 = vmatprep.subr.bf16.mxu0 %v2543
        %2983 = vmatpush1.bf16.msra.mxu0 %v2542
        %2984 = vmatprep.subr.bf16.mxu0 %v2551
        %2985 = vmatpush1.bf16.msra.mxu0 %v2550
        %2986 = vmatprep.subr.bf16.mxu0 %v2559
        %2987 = vmatpush1.bf16.msra.mxu0 %v2558
        %2988 = vmatprep.subr.bf16.mxu0 %v2567
        %2989 = vmatpush1.bf16.msra.mxu0 %v2566
        %2990 = vmatprep.subr.bf16.mxu0 %v2575
        %2991 = vmatpush1.bf16.msra.mxu0 %v2574
        %2992 = vmatprep.subr.bf16.mxu0 %v2583
        %2993 = vmatpush1.bf16.msra.mxu0 %v2582
        %2994 = vmatprep.mubr.bf16.mxu0 %v2201
        %2995 = vmatmul.mubr.bf16.gmra.mrb[0].mxu0 %v2200
        %v2996 = vpop.f32.mrb[0].mxu0
        %v2997 = vadd.f32 %v2956, %v2996
        %v2998 = vpop.f32.mrb[0].mxu0
        %v2999 = vadd.f32 %v2958, %v2998
        %v3000 = vpop.f32.mrb[0].mxu0
        %v3001 = vpop.f32.mrb[0].mxu0
        %3002 = vdwg.mxu0
        %3003 = vmatprep.subr.bf16.mxu0 %v2591
        %3004 = vmatpush1.bf16.msra.mxu0 %v2590
        %3005 = vmatprep.subr.bf16.mxu0 %v2599
        %3006 = vmatpush1.bf16.msra.mxu0 %v2598
        %3007 = vmatprep.subr.bf16.mxu0 %v2607
        %3008 = vmatpush1.bf16.msra.mxu0 %v2606
        %3009 = vmatprep.subr.bf16.mxu0 %v2615
        %3010 = vmatpush1.bf16.msra.mxu0 %v2614
        %3011 = vmatprep.subr.bf16.mxu0 %v2623
        %3012 = vmatpush1.bf16.msra.mxu0 %v2622
        %3013 = vmatprep.subr.bf16.mxu0 %v2631
        %3014 = vmatpush1.bf16.msra.mxu0 %v2630
        %3015 = vmatprep.subr.bf16.mxu0 %v2639
        %3016 = vmatpush1.bf16.msra.mxu0 %v2638
        %3017 = vmatprep.subr.bf16.mxu0 %v2647
        %3018 = vmatpush1.bf16.msra.mxu0 %v2646
        %3019 = vmatprep.subr.bf16.mxu0 %v2655
        %3020 = vmatpush1.bf16.msra.mxu0 %v2654
        %3021 = vmatprep.subr.bf16.mxu0 %v2663
        %3022 = vmatpush1.bf16.msra.mxu0 %v2662
        %3023 = vmatprep.subr.bf16.mxu0 %v2671
        %3024 = vmatpush1.bf16.msra.mxu0 %v2670
        %3025 = vmatprep.subr.bf16.mxu0 %v2679
        %3026 = vmatpush1.bf16.msra.mxu0 %v2678
        %3027 = vmatprep.subr.bf16.mxu0 %v2687
        %3028 = vmatpush1.bf16.msra.mxu0 %v2686
        %3029 = vmatprep.subr.bf16.mxu0 %v2695
        %3030 = vmatpush1.bf16.msra.mxu0 %v2694
        %3031 = vmatprep.subr.bf16.mxu0 %v2703
        %3032 = vmatpush1.bf16.msra.mxu0 %v2702
        %3033 = vmatprep.subr.bf16.mxu0 %v2711
        %3034 = vmatpush1.bf16.msra.mxu0 %v2710
        %3035 = vmatprep.mubr.bf16.mxu0 %v2203
        %3036 = vmatmul.mubr.bf16.gmra.mrb[0].mxu0 %v2202
        %v3037 = vpop.f32.mrb[0].mxu0
        %v3038 = vadd.f32 %v2997, %v3037
        %v3039 = vpop.f32.mrb[0].mxu0
        %v3040 = vadd.f32 %v2999, %v3039
        %v3041 = vpop.f32.mrb[0].mxu0
        %v3042 = vpop.f32.mrb[0].mxu0
        %3043 = vdwg.mxu0
        %3044 = vmatprep.subr.bf16.mxu0 %v2209
        %3045 = vmatpush1.bf16.msra.mxu0 %v2208
        %3046 = vmatprep.subr.bf16.mxu0 %v2217
        %3047 = vmatpush1.bf16.msra.mxu0 %v2216
        %3048 = vmatprep.subr.bf16.mxu0 %v2225
        %3049 = vmatpush1.bf16.msra.mxu0 %v2224
        %3050 = vmatprep.subr.bf16.mxu0 %v2233
        %3051 = vmatpush1.bf16.msra.mxu0 %v2232
        %3052 = vmatprep.subr.bf16.mxu0 %v2241
        %3053 = vmatpush1.bf16.msra.mxu0 %v2240
        %3054 = vmatprep.subr.bf16.mxu0 %v2249
        %3055 = vmatpush1.bf16.msra.mxu0 %v2248
        %3056 = vmatprep.subr.bf16.mxu0 %v2257
        %3057 = vmatpush1.bf16.msra.mxu0 %v2256
        %3058 = vmatprep.subr.bf16.mxu0 %v2265
        %3059 = vmatpush1.bf16.msra.mxu0 %v2264
        %3060 = vmatprep.subr.bf16.mxu0 %v2273
        %3061 = vmatpush1.bf16.msra.mxu0 %v2272
        %3062 = vmatprep.subr.bf16.mxu0 %v2281
        %3063 = vmatpush1.bf16.msra.mxu0 %v2280
        %3064 = vmatprep.subr.bf16.mxu0 %v2289
        %3065 = vmatpush1.bf16.msra.mxu0 %v2288
        %3066 = vmatprep.subr.bf16.mxu0 %v2297
        %3067 = vmatpush1.bf16.msra.mxu0 %v2296
        %3068 = vmatprep.subr.bf16.mxu0 %v2305
        %3069 = vmatpush1.bf16.msra.mxu0 %v2304
        %3070 = vmatprep.subr.bf16.mxu0 %v2313
        %3071 = vmatpush1.bf16.msra.mxu0 %v2312
        %3072 = vmatprep.subr.bf16.mxu0 %v2321
        %3073 = vmatpush1.bf16.msra.mxu0 %v2320
        %3074 = vmatprep.subr.bf16.mxu0 %v2329
        %3075 = vmatpush1.bf16.msra.mxu0 %v2328
        %3076 = vmatprep.mubr.bf16.mxu0 %v2197
        %3077 = vmatmul.mubr.bf16.gmra.mrb[0].mxu0 %v2196
        %v3078 = vpop.f32.mrb[0].mxu0
        %v3079 = vadd.f32 0.0, %v3078
        %v3080 = vpop.f32.mrb[0].mxu0
        %v3081 = vadd.f32 0.0, %v3080
        %v3082 = vpop.f32.mrb[0].mxu0
        %v3083 = vpop.f32.mrb[0].mxu0
        %3084 = vdwg.mxu0
        %3085 = vmatprep.subr.bf16.mxu0 %v2337
        %3086 = vmatpush1.bf16.msra.mxu0 %v2336
        %3087 = vmatprep.subr.bf16.mxu0 %v2345
        %3088 = vmatpush1.bf16.msra.mxu0 %v2344
        %3089 = vmatprep.subr.bf16.mxu0 %v2353
        %3090 = vmatpush1.bf16.msra.mxu0 %v2352
        %3091 = vmatprep.subr.bf16.mxu0 %v2361
        %3092 = vmatpush1.bf16.msra.mxu0 %v2360
        %3093 = vmatprep.subr.bf16.mxu0 %v2369
        %3094 = vmatpush1.bf16.msra.mxu0 %v2368
        %3095 = vmatprep.subr.bf16.mxu0 %v2377
        %3096 = vmatpush1.bf16.msra.mxu0 %v2376
        %3097 = vmatprep.subr.bf16.mxu0 %v2385
        %3098 = vmatpush1.bf16.msra.mxu0 %v2384
        %3099 = vmatprep.subr.bf16.mxu0 %v2393
        %3100 = vmatpush1.bf16.msra.mxu0 %v2392
        %3101 = vmatprep.subr.bf16.mxu0 %v2401
        %3102 = vmatpush1.bf16.msra.mxu0 %v2400
        %3103 = vmatprep.subr.bf16.mxu0 %v2409
        %3104 = vmatpush1.bf16.msra.mxu0 %v2408
        %3105 = vmatprep.subr.bf16.mxu0 %v2417
        %3106 = vmatpush1.bf16.msra.mxu0 %v2416
        %3107 = vmatprep.subr.bf16.mxu0 %v2425
        %3108 = vmatpush1.bf16.msra.mxu0 %v2424
        %3109 = vmatprep.subr.bf16.mxu0 %v2433
        %3110 = vmatpush1.bf16.msra.mxu0 %v2432
        %3111 = vmatprep.subr.bf16.mxu0 %v2441
        %3112 = vmatpush1.bf16.msra.mxu0 %v2440
        %3113 = vmatprep.subr.bf16.mxu0 %v2449
        %3114 = vmatpush1.bf16.msra.mxu0 %v2448
        %3115 = vmatprep.subr.bf16.mxu0 %v2457
        %3116 = vmatpush1.bf16.msra.mxu0 %v2456
        %3117 = vmatprep.mubr.bf16.mxu0 %v2199
        %3118 = vmatmul.mubr.bf16.gmra.mrb[0].mxu0 %v2198
        %v3119 = vpop.f32.mrb[0].mxu0
        %v3120 = vadd.f32 %v3079, %v3119
        %v3121 = vpop.f32.mrb[0].mxu0
        %v3122 = vadd.f32 %v3081, %v3121
        %v3123 = vpop.f32.mrb[0].mxu0
        %v3124 = vpop.f32.mrb[0].mxu0
        %3125 = vdwg.mxu0
        %3126 = vmatprep.subr.bf16.mxu0 %v2465
        %3127 = vmatpush1.bf16.msra.mxu0 %v2464
        %3128 = vmatprep.subr.bf16.mxu0 %v2473
        %3129 = vmatpush1.bf16.msra.mxu0 %v2472
        %3130 = vmatprep.subr.bf16.mxu0 %v2481
        %3131 = vmatpush1.bf16.msra.mxu0 %v2480
        %3132 = vmatprep.subr.bf16.mxu0 %v2489
        %3133 = vmatpush1.bf16.msra.mxu0 %v2488
        %3134 = vmatprep.subr.bf16.mxu0 %v2497
        %3135 = vmatpush1.bf16.msra.mxu0 %v2496
        %3136 = vmatprep.subr.bf16.mxu0 %v2505
        %3137 = vmatpush1.bf16.msra.mxu0 %v2504
        %3138 = vmatprep.subr.bf16.mxu0 %v2513
        %3139 = vmatpush1.bf16.msra.mxu0 %v2512
        %3140 = vmatprep.subr.bf16.mxu0 %v2521
        %3141 = vmatpush1.bf16.msra.mxu0 %v2520
        %3142 = vmatprep.subr.bf16.mxu0 %v2529
        %3143 = vmatpush1.bf16.msra.mxu0 %v2528
        %3144 = vmatprep.subr.bf16.mxu0 %v2537
        %3145 = vmatpush1.bf16.msra.mxu0 %v2536
        %3146 = vmatprep.subr.bf16.mxu0 %v2545
        %3147 = vmatpush1.bf16.msra.mxu0 %v2544
        %3148 = vmatprep.subr.bf16.mxu0 %v2553
        %3149 = vmatpush1.bf16.msra.mxu0 %v2552
        %3150 = vmatprep.subr.bf16.mxu0 %v2561
        %3151 = vmatpush1.bf16.msra.mxu0 %v2560
        %3152 = vmatprep.subr.bf16.mxu0 %v2569
        %3153 = vmatpush1.bf16.msra.mxu0 %v2568
        %3154 = vmatprep.subr.bf16.mxu0 %v2577
        %3155 = vmatpush1.bf16.msra.mxu0 %v2576
        %3156 = vmatprep.subr.bf16.mxu0 %v2585
        %3157 = vmatpush1.bf16.msra.mxu0 %v2584
        %3158 = vmatprep.mubr.bf16.mxu0 %v2201
        %3159 = vmatmul.mubr.bf16.gmra.mrb[0].mxu0 %v2200
        %v3160 = vpop.f32.mrb[0].mxu0
        %v3161 = vadd.f32 %v3120, %v3160
        %v3162 = vpop.f32.mrb[0].mxu0
        %v3163 = vadd.f32 %v3122, %v3162
        %v3164 = vpop.f32.mrb[0].mxu0
        %v3165 = vpop.f32.mrb[0].mxu0
        %3166 = vdwg.mxu0
        %3167 = vmatprep.subr.bf16.mxu0 %v2593
        %3168 = vmatpush1.bf16.msra.mxu0 %v2592
        %3169 = vmatprep.subr.bf16.mxu0 %v2601
        %3170 = vmatpush1.bf16.msra.mxu0 %v2600
        %3171 = vmatprep.subr.bf16.mxu0 %v2609
        %3172 = vmatpush1.bf16.msra.mxu0 %v2608
        %3173 = vmatprep.subr.bf16.mxu0 %v2617
        %3174 = vmatpush1.bf16.msra.mxu0 %v2616
        %3175 = vmatprep.subr.bf16.mxu0 %v2625
        %3176 = vmatpush1.bf16.msra.mxu0 %v2624
        %3177 = vmatprep.subr.bf16.mxu0 %v2633
        %3178 = vmatpush1.bf16.msra.mxu0 %v2632
        %3179 = vmatprep.subr.bf16.mxu0 %v2641
        %3180 = vmatpush1.bf16.msra.mxu0 %v2640
        %3181 = vmatprep.subr.bf16.mxu0 %v2649
        %3182 = vmatpush1.bf16.msra.mxu0 %v2648
        %3183 = vmatprep.subr.bf16.mxu0 %v2657
        %3184 = vmatpush1.bf16.msra.mxu0 %v2656
        %3185 = vmatprep.subr.bf16.mxu0 %v2665
        %3186 = vmatpush1.bf16.msra.mxu0 %v2664
        %3187 = vmatprep.subr.bf16.mxu0 %v2673
        %3188 = vmatpush1.bf16.msra.mxu0 %v2672
        %3189 = vmatprep.subr.bf16.mxu0 %v2681
        %3190 = vmatpush1.bf16.msra.mxu0 %v2680
        %3191 = vmatprep.subr.bf16.mxu0 %v2689
        %3192 = vmatpush1.bf16.msra.mxu0 %v2688
        %3193 = vmatprep.subr.bf16.mxu0 %v2697
        %3194 = vmatpush1.bf16.msra.mxu0 %v2696
        %3195 = vmatprep.subr.bf16.mxu0 %v2705
        %3196 = vmatpush1.bf16.msra.mxu0 %v2704
        %3197 = vmatprep.subr.bf16.mxu0 %v2713
        %3198 = vmatpush1.bf16.msra.mxu0 %v2712
        %3199 = vmatprep.mubr.bf16.mxu0 %v2203
        %3200 = vmatmul.mubr.bf16.gmra.mrb[0].mxu0 %v2202
        %v3201 = vpop.f32.mrb[0].mxu0
        %v3202 = vadd.f32 %v3161, %v3201
        %v3203 = vpop.f32.mrb[0].mxu0
        %v3204 = vadd.f32 %v3163, %v3203
        %v3205 = vpop.f32.mrb[0].mxu0
        %v3206 = vpop.f32.mrb[0].mxu0
        %3207 = vdwg.mxu0
        %3208 = vmatprep.subr.bf16.mxu0 %v2211
        %3209 = vmatpush1.bf16.msra.mxu0 %v2210
        %3210 = vmatprep.subr.bf16.mxu0 %v2219
        %3211 = vmatpush1.bf16.msra.mxu0 %v2218
        %3212 = vmatprep.subr.bf16.mxu0 %v2227
        %3213 = vmatpush1.bf16.msra.mxu0 %v2226
        %3214 = vmatprep.subr.bf16.mxu0 %v2235
        %3215 = vmatpush1.bf16.msra.mxu0 %v2234
        %3216 = vmatprep.subr.bf16.mxu0 %v2243
        %3217 = vmatpush1.bf16.msra.mxu0 %v2242
        %3218 = vmatprep.subr.bf16.mxu0 %v2251
        %3219 = vmatpush1.bf16.msra.mxu0 %v2250
        %3220 = vmatprep.subr.bf16.mxu0 %v2259
        %3221 = vmatpush1.bf16.msra.mxu0 %v2258
        %3222 = vmatprep.subr.bf16.mxu0 %v2267
        %3223 = vmatpush1.bf16.msra.mxu0 %v2266
        %3224 = vmatprep.subr.bf16.mxu0 %v2275
        %3225 = vmatpush1.bf16.msra.mxu0 %v2274
        %3226 = vmatprep.subr.bf16.mxu0 %v2283
        %3227 = vmatpush1.bf16.msra.mxu0 %v2282
        %3228 = vmatprep.subr.bf16.mxu0 %v2291
        %3229 = vmatpush1.bf16.msra.mxu0 %v2290
        %3230 = vmatprep.subr.bf16.mxu0 %v2299
        %3231 = vmatpush1.bf16.msra.mxu0 %v2298
        %3232 = vmatprep.subr.bf16.mxu0 %v2307
        %3233 = vmatpush1.bf16.msra.mxu0 %v2306
        %3234 = vmatprep.subr.bf16.mxu0 %v2315
        %3235 = vmatpush1.bf16.msra.mxu0 %v2314
        %3236 = vmatprep.subr.bf16.mxu0 %v2323
        %3237 = vmatpush1.bf16.msra.mxu0 %v2322
        %3238 = vmatprep.subr.bf16.mxu0 %v2331
        %3239 = vmatpush1.bf16.msra.mxu0 %v2330
        %3240 = vmatprep.mubr.bf16.mxu0 %v2197
        %3241 = vmatmul.mubr.bf16.gmra.mrb[0].mxu0 %v2196
        %v3242 = vpop.f32.mrb[0].mxu0
        %v3243 = vadd.f32 0.0, %v3242
        %v3244 = vpop.f32.mrb[0].mxu0
        %v3245 = vadd.f32 0.0, %v3244
        %v3246 = vpop.f32.mrb[0].mxu0
        %v3247 = vpop.f32.mrb[0].mxu0
        %3248 = vdwg.mxu0
        %3249 = vmatprep.subr.bf16.mxu0 %v2339
        %3250 = vmatpush1.bf16.msra.mxu0 %v2338
        %3251 = vmatprep.subr.bf16.mxu0 %v2347
        %3252 = vmatpush1.bf16.msra.mxu0 %v2346
        %3253 = vmatprep.subr.bf16.mxu0 %v2355
        %3254 = vmatpush1.bf16.msra.mxu0 %v2354
        %3255 = vmatprep.subr.bf16.mxu0 %v2363
        %3256 = vmatpush1.bf16.msra.mxu0 %v2362
        %3257 = vmatprep.subr.bf16.mxu0 %v2371
        %3258 = vmatpush1.bf16.msra.mxu0 %v2370
        %3259 = vmatprep.subr.bf16.mxu0 %v2379
        %3260 = vmatpush1.bf16.msra.mxu0 %v2378
        %3261 = vmatprep.subr.bf16.mxu0 %v2387
        %3262 = vmatpush1.bf16.msra.mxu0 %v2386
        %3263 = vmatprep.subr.bf16.mxu0 %v2395
        %3264 = vmatpush1.bf16.msra.mxu0 %v2394
        %3265 = vmatprep.subr.bf16.mxu0 %v2403
        %3266 = vmatpush1.bf16.msra.mxu0 %v2402
        %3267 = vmatprep.subr.bf16.mxu0 %v2411
        %3268 = vmatpush1.bf16.msra.mxu0 %v2410
        %3269 = vmatprep.subr.bf16.mxu0 %v2419
        %3270 = vmatpush1.bf16.msra.mxu0 %v2418
        %3271 = vmatprep.subr.bf16.mxu0 %v2427
        %3272 = vmatpush1.bf16.msra.mxu0 %v2426
        %3273 = vmatprep.subr.bf16.mxu0 %v2435
        %3274 = vmatpush1.bf16.msra.mxu0 %v2434
        %3275 = vmatprep.subr.bf16.mxu0 %v2443
        %3276 = vmatpush1.bf16.msra.mxu0 %v2442
        %3277 = vmatprep.subr.bf16.mxu0 %v2451
        %3278 = vmatpush1.bf16.msra.mxu0 %v2450
        %3279 = vmatprep.subr.bf16.mxu0 %v2459
        %3280 = vmatpush1.bf16.msra.mxu0 %v2458
        %3281 = vmatprep.mubr.bf16.mxu0 %v2199
        %3282 = vmatmul.mubr.bf16.gmra.mrb[0].mxu0 %v2198
        %v3283 = vpop.f32.mrb[0].mxu0
        %v3284 = vadd.f32 %v3243, %v3283
        %v3285 = vpop.f32.mrb[0].mxu0
        %v3286 = vadd.f32 %v3245, %v3285
        %v3287 = vpop.f32.mrb[0].mxu0
        %v3288 = vpop.f32.mrb[0].mxu0
        %3289 = vdwg.mxu0
        %3290 = vmatprep.subr.bf16.mxu0 %v2467
        %3291 = vmatpush1.bf16.msra.mxu0 %v2466
        %3292 = vmatprep.subr.bf16.mxu0 %v2475
        %3293 = vmatpush1.bf16.msra.mxu0 %v2474
        %3294 = vmatprep.subr.bf16.mxu0 %v2483
        %3295 = vmatpush1.bf16.msra.mxu0 %v2482
        %3296 = vmatprep.subr.bf16.mxu0 %v2491
        %3297 = vmatpush1.bf16.msra.mxu0 %v2490
        %3298 = vmatprep.subr.bf16.mxu0 %v2499
        %3299 = vmatpush1.bf16.msra.mxu0 %v2498
        %3300 = vmatprep.subr.bf16.mxu0 %v2507
        %3301 = vmatpush1.bf16.msra.mxu0 %v2506
        %3302 = vmatprep.subr.bf16.mxu0 %v2515
        %3303 = vmatpush1.bf16.msra.mxu0 %v2514
        %3304 = vmatprep.subr.bf16.mxu0 %v2523
        %3305 = vmatpush1.bf16.msra.mxu0 %v2522
        %3306 = vmatprep.subr.bf16.mxu0 %v2531
        %3307 = vmatpush1.bf16.msra.mxu0 %v2530
        %3308 = vmatprep.subr.bf16.mxu0 %v2539
        %3309 = vmatpush1.bf16.msra.mxu0 %v2538
        %3310 = vmatprep.subr.bf16.mxu0 %v2547
        %3311 = vmatpush1.bf16.msra.mxu0 %v2546
        %3312 = vmatprep.subr.bf16.mxu0 %v2555
        %3313 = vmatpush1.bf16.msra.mxu0 %v2554
        %3314 = vmatprep.subr.bf16.mxu0 %v2563
        %3315 = vmatpush1.bf16.msra.mxu0 %v2562
        %3316 = vmatprep.subr.bf16.mxu0 %v2571
        %3317 = vmatpush1.bf16.msra.mxu0 %v2570
        %3318 = vmatprep.subr.bf16.mxu0 %v2579
        %3319 = vmatpush1.bf16.msra.mxu0 %v2578
        %3320 = vmatprep.subr.bf16.mxu0 %v2587
        %3321 = vmatpush1.bf16.msra.mxu0 %v2586
        %3322 = vmatprep.mubr.bf16.mxu0 %v2201
        %3323 = vmatmul.mubr.bf16.gmra.mrb[0].mxu0 %v2200
        %v3324 = vpop.f32.mrb[0].mxu0
        %v3325 = vadd.f32 %v3284, %v3324
        %v3326 = vpop.f32.mrb[0].mxu0
        %v3327 = vadd.f32 %v3286, %v3326
        %v3328 = vpop.f32.mrb[0].mxu0
        %v3329 = vpop.f32.mrb[0].mxu0
        %3330 = vdwg.mxu0
        %3331 = vmatprep.subr.bf16.mxu0 %v2595
        %3332 = vmatpush1.bf16.msra.mxu0 %v2594
        %3333 = vmatprep.subr.bf16.mxu0 %v2603
        %3334 = vmatpush1.bf16.msra.mxu0 %v2602
        %3335 = vmatprep.subr.bf16.mxu0 %v2611
        %3336 = vmatpush1.bf16.msra.mxu0 %v2610
        %3337 = vmatprep.subr.bf16.mxu0 %v2619
        %3338 = vmatpush1.bf16.msra.mxu0 %v2618
        %3339 = vmatprep.subr.bf16.mxu0 %v2627
        %3340 = vmatpush1.bf16.msra.mxu0 %v2626
        %3341 = vmatprep.subr.bf16.mxu0 %v2635
        %3342 = vmatpush1.bf16.msra.mxu0 %v2634
        %3343 = vmatprep.subr.bf16.mxu0 %v2643
        %3344 = vmatpush1.bf16.msra.mxu0 %v2642
        %3345 = vmatprep.subr.bf16.mxu0 %v2651
        %3346 = vmatpush1.bf16.msra.mxu0 %v2650
        %3347 = vmatprep.subr.bf16.mxu0 %v2659
        %3348 = vmatpush1.bf16.msra.mxu0 %v2658
        %3349 = vmatprep.subr.bf16.mxu0 %v2667
        %3350 = vmatpush1.bf16.msra.mxu0 %v2666
        %3351 = vmatprep.subr.bf16.mxu0 %v2675
        %3352 = vmatpush1.bf16.msra.mxu0 %v2674
        %3353 = vmatprep.subr.bf16.mxu0 %v2683
        %3354 = vmatpush1.bf16.msra.mxu0 %v2682
        %3355 = vmatprep.subr.bf16.mxu0 %v2691
        %3356 = vmatpush1.bf16.msra.mxu0 %v2690
        %3357 = vmatprep.subr.bf16.mxu0 %v2699
        %3358 = vmatpush1.bf16.msra.mxu0 %v2698
        %3359 = vmatprep.subr.bf16.mxu0 %v2707
        %3360 = vmatpush1.bf16.msra.mxu0 %v2706
        %3361 = vmatprep.subr.bf16.mxu0 %v2715
        %3362 = vmatpush1.bf16.msra.mxu0 %v2714
        %3363 = vmatprep.mubr.bf16.mxu0 %v2203
        %3364 = vmatmul.mubr.bf16.gmra.mrb[0].mxu0 %v2202
        %v3365 = vpop.f32.mrb[0].mxu0
        %v3366 = vadd.f32 %v3325, %v3365
        %v3367 = vpop.f32.mrb[0].mxu0
        %v3368 = vadd.f32 %v3327, %v3367
        %v3369 = vpop.f32.mrb[0].mxu0
        %v3370 = vpop.f32.mrb[0].mxu0
        %3371 = vdwg.mxu0
        %v3372 = vlaneseq
        %v3373 = vshrl.u32 %v3372, 7
        %v3374 = vsub.s32 1, %v3373
        %v3375 = vrot.slane %v461, %v3374
        %v3376 = vlaneseq
        %v3377 = vshrl.u32 %v3376, 7
        %v3378 = vsub.s32 1, %v3377
        %v3379 = vrot.slane %v462, %v3378
        %v3380 = vlaneseq
        %v3381 = vshrl.u32 %v3380, 7
        %v3382 = vsub.s32 1, %v3381
        %v3383 = vrot.slane %v463, %v3382
        %v3384 = vlaneseq
        %v3385 = vshrl.u32 %v3384, 7
        %v3386 = vsub.s32 1, %v3385
        %v3387 = vrot.slane %v464, %v3386
        %v3388 = vlaneseq
        %v3389 = vshrl.u32 %v3388, 7
        %v3390 = vsub.s32 1, %v3389
        %v3391 = vrot.slane %v465, %v3390
        %v3392 = vlaneseq
        %v3393 = vshrl.u32 %v3392, 7
        %v3394 = vsub.s32 1, %v3393
        %v3395 = vrot.slane %v466, %v3394
        %v3396 = vlaneseq
        %v3397 = vshrl.u32 %v3396, 7
        %v3398 = vsub.s32 1, %v3397
        %v3399 = vrot.slane %v467, %v3398
        %v3400 = vlaneseq
        %v3401 = vshrl.u32 %v3400, 7
        %v3402 = vsub.s32 1, %v3401
        %v3403 = vrot.slane %v468, %v3402
        %v3404 = vmul.f32 %v2874, %v3375
        %v3405 = vmul.f32 %v2876, %v3379
        %v3406 = vmul.f32 %v3038, %v3383
        %v3407 = vmul.f32 %v3040, %v3387
        %v3408 = vmul.f32 %v3202, %v3391
        %v3409 = vmul.f32 %v3204, %v3395
        %v3410 = vmul.f32 %v3366, %v3399
        %v3411 = vmul.f32 %v3368, %v3403
        %v3412 = vlaneseq
        %v3413 = vshrl.u32 %v3412, 7
        %v3414 = vsub.s32 5, %v3413
        %v3415 = vrot.slane %v461, %v3414
        %v3416 = vlaneseq
        %v3417 = vshrl.u32 %v3416, 7
        %v3418 = vsub.s32 5, %v3417
        %v3419 = vrot.slane %v462, %v3418
        %v3420 = vlaneseq
        %v3421 = vshrl.u32 %v3420, 7
        %v3422 = vsub.s32 5, %v3421
        %v3423 = vrot.slane %v463, %v3422
        %v3424 = vlaneseq
        %v3425 = vshrl.u32 %v3424, 7
        %v3426 = vsub.s32 5, %v3425
        %v3427 = vrot.slane %v464, %v3426
        %v3428 = vlaneseq
        %v3429 = vshrl.u32 %v3428, 7
        %v3430 = vsub.s32 5, %v3429
        %v3431 = vrot.slane %v465, %v3430
        %v3432 = vlaneseq
        %v3433 = vshrl.u32 %v3432, 7
        %v3434 = vsub.s32 5, %v3433
        %v3435 = vrot.slane %v466, %v3434
        %v3436 = vlaneseq
        %v3437 = vshrl.u32 %v3436, 7
        %v3438 = vsub.s32 5, %v3437
        %v3439 = vrot.slane %v467, %v3438
        %v3440 = vlaneseq
        %v3441 = vshrl.u32 %v3440, 7
        %v3442 = vsub.s32 5, %v3441
        %v3443 = vrot.slane %v468, %v3442
        %v3444 = vadd.f32 %v3404, %v3415
        %v3445 = vadd.f32 %v3405, %v3419
        %v3446 = vadd.f32 %v3406, %v3423
        %v3447 = vadd.f32 %v3407, %v3427
        %v3448 = vadd.f32 %v3408, %v3431
        %v3449 = vadd.f32 %v3409, %v3435
        %v3450 = vadd.f32 %v3410, %v3439
        %v3451 = vadd.f32 %v3411, %v3443
        %v3452 = vmax.f32 %v3444, 0.0
        %v3453 = vmax.f32 %v3445, 0.0
        %v3454 = vmax.f32 %v3446, 0.0
        %v3455 = vmax.f32 %v3447, 0.0
        %v3456 = vmax.f32 %v3448, 0.0
        %v3457 = vmax.f32 %v3449, 0.0
        %v3458 = vmax.f32 %v3450, 0.0
        %v3459 = vmax.f32 %v3451, 0.0
        %v3460 = vld [vmem:[%s384] sm:$0xff]
        %v3461 = vld [vmem:[%s384 + $0x8] sm:$0xff]
        %v3462 = vld [vmem:[%s384 + $0x10] sm:$0xff]
        %v3463 = vld [vmem:[%s384 + $0x18] sm:$0xff]
        %v3464 = vld [vmem:[%s384 + $0x20] sm:$0xff]
        %v3465 = vld [vmem:[%s384 + $0x28] sm:$0xff]
        %v3466 = vld [vmem:[%s384 + $0x30] sm:$0xff]
        %v3467 = vld [vmem:[%s384 + $0x38] sm:$0xff]
        %v3468 = vld [vmem:[%s384 + $0x40] sm:$0xff]
        %v3469 = vld [vmem:[%s384 + $0x48] sm:$0xff]
        %v3470 = vld [vmem:[%s384 + $0x50] sm:$0xff]
        %v3471 = vld [vmem:[%s384 + $0x58] sm:$0xff]
        %v3472 = vld [vmem:[%s384 + $0x60] sm:$0xff]
        %v3473 = vld [vmem:[%s384 + $0x68] sm:$0xff]
        %v3474 = vld [vmem:[%s384 + $0x70] sm:$0xff]
        %v3475 = vld [vmem:[%s384 + $0x78] sm:$0xff]
        %v3476 = vld [vmem:[%s384 + $0x80] sm:$0xff]
        %v3477 = vld [vmem:[%s384 + $0x88] sm:$0xff]
        %v3478 = vld [vmem:[%s384 + $0x90] sm:$0xff]
        %v3479 = vld [vmem:[%s384 + $0x98] sm:$0xff]
        %v3480 = vld [vmem:[%s384 + $0xa0] sm:$0xff]
        %v3481 = vld [vmem:[%s384 + $0xa8] sm:$0xff]
        %v3482 = vld [vmem:[%s384 + $0xb0] sm:$0xff]
        %v3483 = vld [vmem:[%s384 + $0xb8] sm:$0xff]
        %v3484 = vld [vmem:[%s384 + $0xc0] sm:$0xff]
        %v3485 = vld [vmem:[%s384 + $0xc8] sm:$0xff]
        %v3486 = vld [vmem:[%s384 + $0xd0] sm:$0xff]
        %v3487 = vld [vmem:[%s384 + $0xd8] sm:$0xff]
        %v3488 = vld [vmem:[%s384 + $0xe0] sm:$0xff]
        %v3489 = vld [vmem:[%s384 + $0xe8] sm:$0xff]
        %v3490 = vld [vmem:[%s384 + $0xf0] sm:$0xff]
        %v3491 = vld [vmem:[%s384 + $0xf8] sm:$0xff]
        %v3492 = vld [vmem:[%s384 + $0x100] sm:$0xff]
        %v3493 = vld [vmem:[%s384 + $0x108] sm:$0xff]
        %v3494 = vld [vmem:[%s384 + $0x110] sm:$0xff]
        %v3495 = vld [vmem:[%s384 + $0x118] sm:$0xff]
        %v3496 = vld [vmem:[%s384 + $0x120] sm:$0xff]
        %v3497 = vld [vmem:[%s384 + $0x128] sm:$0xff]
        %v3498 = vld [vmem:[%s384 + $0x130] sm:$0xff]
        %v3499 = vld [vmem:[%s384 + $0x138] sm:$0xff]
        %v3500 = vld [vmem:[%s384 + $0x140] sm:$0xff]
        %v3501 = vld [vmem:[%s384 + $0x148] sm:$0xff]
        %v3502 = vld [vmem:[%s384 + $0x150] sm:$0xff]
        %v3503 = vld [vmem:[%s384 + $0x158] sm:$0xff]
        %v3504 = vld [vmem:[%s384 + $0x160] sm:$0xff]
        %v3505 = vld [vmem:[%s384 + $0x168] sm:$0xff]
        %v3506 = vld [vmem:[%s384 + $0x170] sm:$0xff]
        %v3507 = vld [vmem:[%s384 + $0x178] sm:$0xff]
        %v3508 = vld [vmem:[%s384 + $0x180] sm:$0xff]
        %v3509 = vld [vmem:[%s384 + $0x188] sm:$0xff]
        %v3510 = vld [vmem:[%s384 + $0x190] sm:$0xff]
        %v3511 = vld [vmem:[%s384 + $0x198] sm:$0xff]
        %v3512 = vld [vmem:[%s384 + $0x1a0] sm:$0xff]
        %v3513 = vld [vmem:[%s384 + $0x1a8] sm:$0xff]
        %v3514 = vld [vmem:[%s384 + $0x1b0] sm:$0xff]
        %v3515 = vld [vmem:[%s384 + $0x1b8] sm:$0xff]
        %v3516 = vld [vmem:[%s384 + $0x1c0] sm:$0xff]
        %v3517 = vld [vmem:[%s384 + $0x1c8] sm:$0xff]
        %v3518 = vld [vmem:[%s384 + $0x1d0] sm:$0xff]
        %v3519 = vld [vmem:[%s384 + $0x1d8] sm:$0xff]
        %v3520 = vld [vmem:[%s384 + $0x1e0] sm:$0xff]
        %v3521 = vld [vmem:[%s384 + $0x1e8] sm:$0xff]
        %v3522 = vld [vmem:[%s384 + $0x1f0] sm:$0xff]
        %v3523 = vld [vmem:[%s384 + $0x1f8] sm:$0xff]
        %v3524 = vld [vmem:[%s384 + $0x200] sm:$0xff]
        %v3525 = vld [vmem:[%s384 + $0x208] sm:$0xff]
        %v3526 = vld [vmem:[%s384 + $0x210] sm:$0xff]
        %v3527 = vld [vmem:[%s384 + $0x218] sm:$0xff]
        %v3528 = vld [vmem:[%s384 + $0x220] sm:$0xff]
        %v3529 = vld [vmem:[%s384 + $0x228] sm:$0xff]
        %v3530 = vld [vmem:[%s384 + $0x230] sm:$0xff]
        %v3531 = vld [vmem:[%s384 + $0x238] sm:$0xff]
        %v3532 = vld [vmem:[%s384 + $0x240] sm:$0xff]
        %v3533 = vld [vmem:[%s384 + $0x248] sm:$0xff]
        %v3534 = vld [vmem:[%s384 + $0x250] sm:$0xff]
        %v3535 = vld [vmem:[%s384 + $0x258] sm:$0xff]
        %v3536 = vld [vmem:[%s384 + $0x260] sm:$0xff]
        %v3537 = vld [vmem:[%s384 + $0x268] sm:$0xff]
        %v3538 = vld [vmem:[%s384 + $0x270] sm:$0xff]
        %v3539 = vld [vmem:[%s384 + $0x278] sm:$0xff]
        %v3540 = vld [vmem:[%s384 + $0x280] sm:$0xff]
        %v3541 = vld [vmem:[%s384 + $0x288] sm:$0xff]
        %v3542 = vld [vmem:[%s384 + $0x290] sm:$0xff]
        %v3543 = vld [vmem:[%s384 + $0x298] sm:$0xff]
        %v3544 = vld [vmem:[%s384 + $0x2a0] sm:$0xff]
        %v3545 = vld [vmem:[%s384 + $0x2a8] sm:$0xff]
        %v3546 = vld [vmem:[%s384 + $0x2b0] sm:$0xff]
        %v3547 = vld [vmem:[%s384 + $0x2b8] sm:$0xff]
        %v3548 = vld [vmem:[%s384 + $0x2c0] sm:$0xff]
        %v3549 = vld [vmem:[%s384 + $0x2c8] sm:$0xff]
        %v3550 = vld [vmem:[%s384 + $0x2d0] sm:$0xff]
        %v3551 = vld [vmem:[%s384 + $0x2d8] sm:$0xff]
        %v3552 = vld [vmem:[%s384 + $0x2e0] sm:$0xff]
        %v3553 = vld [vmem:[%s384 + $0x2e8] sm:$0xff]
        %v3554 = vld [vmem:[%s384 + $0x2f0] sm:$0xff]
        %v3555 = vld [vmem:[%s384 + $0x2f8] sm:$0xff]
        %v3556 = vld [vmem:[%s384 + $0x300] sm:$0xff]
        %v3557 = vld [vmem:[%s384 + $0x308] sm:$0xff]
        %v3558 = vld [vmem:[%s384 + $0x310] sm:$0xff]
        %v3559 = vld [vmem:[%s384 + $0x318] sm:$0xff]
        %v3560 = vld [vmem:[%s384 + $0x320] sm:$0xff]
        %v3561 = vld [vmem:[%s384 + $0x328] sm:$0xff]
        %v3562 = vld [vmem:[%s384 + $0x330] sm:$0xff]
        %v3563 = vld [vmem:[%s384 + $0x338] sm:$0xff]
        %v3564 = vld [vmem:[%s384 + $0x340] sm:$0xff]
        %v3565 = vld [vmem:[%s384 + $0x348] sm:$0xff]
        %v3566 = vld [vmem:[%s384 + $0x350] sm:$0xff]
        %v3567 = vld [vmem:[%s384 + $0x358] sm:$0xff]
        %v3568 = vld [vmem:[%s384 + $0x360] sm:$0xff]
        %v3569 = vld [vmem:[%s384 + $0x368] sm:$0xff]
        %v3570 = vld [vmem:[%s384 + $0x370] sm:$0xff]
        %v3571 = vld [vmem:[%s384 + $0x378] sm:$0xff]
        %v3572 = vld [vmem:[%s384 + $0x380] sm:$0xff]
        %v3573 = vld [vmem:[%s384 + $0x388] sm:$0xff]
        %v3574 = vld [vmem:[%s384 + $0x390] sm:$0xff]
        %v3575 = vld [vmem:[%s384 + $0x398] sm:$0xff]
        %v3576 = vld [vmem:[%s384 + $0x3a0] sm:$0xff]
        %v3577 = vld [vmem:[%s384 + $0x3a8] sm:$0xff]
        %v3578 = vld [vmem:[%s384 + $0x3b0] sm:$0xff]
        %v3579 = vld [vmem:[%s384 + $0x3b8] sm:$0xff]
        %v3580 = vld [vmem:[%s384 + $0x3c0] sm:$0xff]
        %v3581 = vld [vmem:[%s384 + $0x3c8] sm:$0xff]
        %v3582 = vld [vmem:[%s384 + $0x3d0] sm:$0xff]
        %v3583 = vld [vmem:[%s384 + $0x3d8] sm:$0xff]
        %v3584 = vld [vmem:[%s384 + $0x3e0] sm:$0xff]
        %v3585 = vld [vmem:[%s384 + $0x3e8] sm:$0xff]
        %v3586 = vld [vmem:[%s384 + $0x3f0] sm:$0xff]
        %v3587 = vld [vmem:[%s384 + $0x3f8] sm:$0xff]
        %v3588 = vld [vmem:[%s384 + $0x400] sm:$0xff]
        %v3589 = vld [vmem:[%s384 + $0x408] sm:$0xff]
        %v3590 = vld [vmem:[%s384 + $0x410] sm:$0xff]
        %v3591 = vld [vmem:[%s384 + $0x418] sm:$0xff]
        %v3592 = vld [vmem:[%s384 + $0x420] sm:$0xff]
        %v3593 = vld [vmem:[%s384 + $0x428] sm:$0xff]
        %v3594 = vld [vmem:[%s384 + $0x430] sm:$0xff]
        %v3595 = vld [vmem:[%s384 + $0x438] sm:$0xff]
        %v3596 = vld [vmem:[%s384 + $0x440] sm:$0xff]
        %v3597 = vld [vmem:[%s384 + $0x448] sm:$0xff]
        %v3598 = vld [vmem:[%s384 + $0x450] sm:$0xff]
        %v3599 = vld [vmem:[%s384 + $0x458] sm:$0xff]
        %v3600 = vld [vmem:[%s384 + $0x460] sm:$0xff]
        %v3601 = vld [vmem:[%s384 + $0x468] sm:$0xff]
        %v3602 = vld [vmem:[%s384 + $0x470] sm:$0xff]
        %v3603 = vld [vmem:[%s384 + $0x478] sm:$0xff]
        %v3604 = vld [vmem:[%s384 + $0x480] sm:$0xff]
        %v3605 = vld [vmem:[%s384 + $0x488] sm:$0xff]
        %v3606 = vld [vmem:[%s384 + $0x490] sm:$0xff]
        %v3607 = vld [vmem:[%s384 + $0x498] sm:$0xff]
        %v3608 = vld [vmem:[%s384 + $0x4a0] sm:$0xff]
        %v3609 = vld [vmem:[%s384 + $0x4a8] sm:$0xff]
        %v3610 = vld [vmem:[%s384 + $0x4b0] sm:$0xff]
        %v3611 = vld [vmem:[%s384 + $0x4b8] sm:$0xff]
        %v3612 = vld [vmem:[%s384 + $0x4c0] sm:$0xff]
        %v3613 = vld [vmem:[%s384 + $0x4c8] sm:$0xff]
        %v3614 = vld [vmem:[%s384 + $0x4d0] sm:$0xff]
        %v3615 = vld [vmem:[%s384 + $0x4d8] sm:$0xff]
        %v3616 = vld [vmem:[%s384 + $0x4e0] sm:$0xff]
        %v3617 = vld [vmem:[%s384 + $0x4e8] sm:$0xff]
        %v3618 = vld [vmem:[%s384 + $0x4f0] sm:$0xff]
        %v3619 = vld [vmem:[%s384 + $0x4f8] sm:$0xff]
        %v3620 = vld [vmem:[%s384 + $0x500] sm:$0xff]
        %v3621 = vld [vmem:[%s384 + $0x508] sm:$0xff]
        %v3622 = vld [vmem:[%s384 + $0x510] sm:$0xff]
        %v3623 = vld [vmem:[%s384 + $0x518] sm:$0xff]
        %v3624 = vld [vmem:[%s384 + $0x520] sm:$0xff]
        %v3625 = vld [vmem:[%s384 + $0x528] sm:$0xff]
        %v3626 = vld [vmem:[%s384 + $0x530] sm:$0xff]
        %v3627 = vld [vmem:[%s384 + $0x538] sm:$0xff]
        %v3628 = vld [vmem:[%s384 + $0x540] sm:$0xff]
        %v3629 = vld [vmem:[%s384 + $0x548] sm:$0xff]
        %v3630 = vld [vmem:[%s384 + $0x550] sm:$0xff]
        %v3631 = vld [vmem:[%s384 + $0x558] sm:$0xff]
        %v3632 = vld [vmem:[%s384 + $0x560] sm:$0xff]
        %v3633 = vld [vmem:[%s384 + $0x568] sm:$0xff]
        %v3634 = vld [vmem:[%s384 + $0x570] sm:$0xff]
        %v3635 = vld [vmem:[%s384 + $0x578] sm:$0xff]
        %v3636 = vld [vmem:[%s384 + $0x580] sm:$0xff]
        %v3637 = vld [vmem:[%s384 + $0x588] sm:$0xff]
        %v3638 = vld [vmem:[%s384 + $0x590] sm:$0xff]
        %v3639 = vld [vmem:[%s384 + $0x598] sm:$0xff]
        %v3640 = vld [vmem:[%s384 + $0x5a0] sm:$0xff]
        %v3641 = vld [vmem:[%s384 + $0x5a8] sm:$0xff]
        %v3642 = vld [vmem:[%s384 + $0x5b0] sm:$0xff]
        %v3643 = vld [vmem:[%s384 + $0x5b8] sm:$0xff]
        %v3644 = vld [vmem:[%s384 + $0x5c0] sm:$0xff]
        %v3645 = vld [vmem:[%s384 + $0x5c8] sm:$0xff]
        %v3646 = vld [vmem:[%s384 + $0x5d0] sm:$0xff]
        %v3647 = vld [vmem:[%s384 + $0x5d8] sm:$0xff]
        %v3648 = vld [vmem:[%s384 + $0x5e0] sm:$0xff]
        %v3649 = vld [vmem:[%s384 + $0x5e8] sm:$0xff]
        %v3650 = vld [vmem:[%s384 + $0x5f0] sm:$0xff]
        %v3651 = vld [vmem:[%s384 + $0x5f8] sm:$0xff]
        %v3652 = vld [vmem:[%s384 + $0x600] sm:$0xff]
        %v3653 = vld [vmem:[%s384 + $0x608] sm:$0xff]
        %v3654 = vld [vmem:[%s384 + $0x610] sm:$0xff]
        %v3655 = vld [vmem:[%s384 + $0x618] sm:$0xff]
        %v3656 = vld [vmem:[%s384 + $0x620] sm:$0xff]
        %v3657 = vld [vmem:[%s384 + $0x628] sm:$0xff]
        %v3658 = vld [vmem:[%s384 + $0x630] sm:$0xff]
        %v3659 = vld [vmem:[%s384 + $0x638] sm:$0xff]
        %v3660 = vld [vmem:[%s384 + $0x640] sm:$0xff]
        %v3661 = vld [vmem:[%s384 + $0x648] sm:$0xff]
        %v3662 = vld [vmem:[%s384 + $0x650] sm:$0xff]
        %v3663 = vld [vmem:[%s384 + $0x658] sm:$0xff]
        %v3664 = vld [vmem:[%s384 + $0x660] sm:$0xff]
        %v3665 = vld [vmem:[%s384 + $0x668] sm:$0xff]
        %v3666 = vld [vmem:[%s384 + $0x670] sm:$0xff]
        %v3667 = vld [vmem:[%s384 + $0x678] sm:$0xff]
        %v3668 = vld [vmem:[%s384 + $0x680] sm:$0xff]
        %v3669 = vld [vmem:[%s384 + $0x688] sm:$0xff]
        %v3670 = vld [vmem:[%s384 + $0x690] sm:$0xff]
        %v3671 = vld [vmem:[%s384 + $0x698] sm:$0xff]
        %v3672 = vld [vmem:[%s384 + $0x6a0] sm:$0xff]
        %v3673 = vld [vmem:[%s384 + $0x6a8] sm:$0xff]
        %v3674 = vld [vmem:[%s384 + $0x6b0] sm:$0xff]
        %v3675 = vld [vmem:[%s384 + $0x6b8] sm:$0xff]
        %v3676 = vld [vmem:[%s384 + $0x6c0] sm:$0xff]
        %v3677 = vld [vmem:[%s384 + $0x6c8] sm:$0xff]
        %v3678 = vld [vmem:[%s384 + $0x6d0] sm:$0xff]
        %v3679 = vld [vmem:[%s384 + $0x6d8] sm:$0xff]
        %v3680 = vld [vmem:[%s384 + $0x6e0] sm:$0xff]
        %v3681 = vld [vmem:[%s384 + $0x6e8] sm:$0xff]
        %v3682 = vld [vmem:[%s384 + $0x6f0] sm:$0xff]
        %v3683 = vld [vmem:[%s384 + $0x6f8] sm:$0xff]
        %v3684 = vld [vmem:[%s384 + $0x700] sm:$0xff]
        %v3685 = vld [vmem:[%s384 + $0x708] sm:$0xff]
        %v3686 = vld [vmem:[%s384 + $0x710] sm:$0xff]
        %v3687 = vld [vmem:[%s384 + $0x718] sm:$0xff]
        %v3688 = vld [vmem:[%s384 + $0x720] sm:$0xff]
        %v3689 = vld [vmem:[%s384 + $0x728] sm:$0xff]
        %v3690 = vld [vmem:[%s384 + $0x730] sm:$0xff]
        %v3691 = vld [vmem:[%s384 + $0x738] sm:$0xff]
        %v3692 = vld [vmem:[%s384 + $0x740] sm:$0xff]
        %v3693 = vld [vmem:[%s384 + $0x748] sm:$0xff]
        %v3694 = vld [vmem:[%s384 + $0x750] sm:$0xff]
        %v3695 = vld [vmem:[%s384 + $0x758] sm:$0xff]
        %v3696 = vld [vmem:[%s384 + $0x760] sm:$0xff]
        %v3697 = vld [vmem:[%s384 + $0x768] sm:$0xff]
        %v3698 = vld [vmem:[%s384 + $0x770] sm:$0xff]
        %v3699 = vld [vmem:[%s384 + $0x778] sm:$0xff]
        %v3700 = vld [vmem:[%s384 + $0x780] sm:$0xff]
        %v3701 = vld [vmem:[%s384 + $0x788] sm:$0xff]
        %v3702 = vld [vmem:[%s384 + $0x790] sm:$0xff]
        %v3703 = vld [vmem:[%s384 + $0x798] sm:$0xff]
        %v3704 = vld [vmem:[%s384 + $0x7a0] sm:$0xff]
        %v3705 = vld [vmem:[%s384 + $0x7a8] sm:$0xff]
        %v3706 = vld [vmem:[%s384 + $0x7b0] sm:$0xff]
        %v3707 = vld [vmem:[%s384 + $0x7b8] sm:$0xff]
        %v3708 = vld [vmem:[%s384 + $0x7c0] sm:$0xff]
        %v3709 = vld [vmem:[%s384 + $0x7c8] sm:$0xff]
        %v3710 = vld [vmem:[%s384 + $0x7d0] sm:$0xff]
        %v3711 = vld [vmem:[%s384 + $0x7d8] sm:$0xff]
        %v3712 = vld [vmem:[%s384 + $0x7e0] sm:$0xff]
        %v3713 = vld [vmem:[%s384 + $0x7e8] sm:$0xff]
        %v3714 = vld [vmem:[%s384 + $0x7f0] sm:$0xff]
        %v3715 = vld [vmem:[%s384 + $0x7f8] sm:$0xff]
        %v3716 = vpack.c.bf16 %v3452, %v3452
        %v3717 = vpack.c.bf16 %v3453, %v3453
        %v3718 = vpack.c.bf16 %v3454, %v3454
        %v3719 = vpack.c.bf16 %v3455, %v3455
        %v3720 = vpack.c.bf16 %v3456, %v3456
        %v3721 = vpack.c.bf16 %v3457, %v3457
        %v3722 = vpack.c.bf16 %v3458, %v3458
        %v3723 = vpack.c.bf16 %v3459, %v3459
        %v3724 = vunpack.c.l.s8.bf16 %v3460
        %v3725 = vunpack.c.l.s8.bf16 %v3461
        %v3726 = vunpack.c.l.s8.bf16 %v3462
        %v3727 = vunpack.c.l.s8.bf16 %v3463
        %v3728 = vunpack.c.l.s8.bf16 %v3464
        %v3729 = vunpack.c.l.s8.bf16 %v3465
        %v3730 = vunpack.c.l.s8.bf16 %v3466
        %v3731 = vunpack.c.l.s8.bf16 %v3467
        %v3732 = vunpack.c.h.s8.bf16 %v3460
        %v3733 = vunpack.c.h.s8.bf16 %v3461
        %v3734 = vunpack.c.h.s8.bf16 %v3462
        %v3735 = vunpack.c.h.s8.bf16 %v3463
        %v3736 = vunpack.c.h.s8.bf16 %v3464
        %v3737 = vunpack.c.h.s8.bf16 %v3465
        %v3738 = vunpack.c.h.s8.bf16 %v3466
        %v3739 = vunpack.c.h.s8.bf16 %v3467
        %v3740 = vunpack.c.l.s8.bf16 %v3468
        %v3741 = vunpack.c.l.s8.bf16 %v3469
        %v3742 = vunpack.c.l.s8.bf16 %v3470
        %v3743 = vunpack.c.l.s8.bf16 %v3471
        %v3744 = vunpack.c.l.s8.bf16 %v3472
        %v3745 = vunpack.c.l.s8.bf16 %v3473
        %v3746 = vunpack.c.l.s8.bf16 %v3474
        %v3747 = vunpack.c.l.s8.bf16 %v3475
        %v3748 = vunpack.c.h.s8.bf16 %v3468
        %v3749 = vunpack.c.h.s8.bf16 %v3469
        %v3750 = vunpack.c.h.s8.bf16 %v3470
        %v3751 = vunpack.c.h.s8.bf16 %v3471
        %v3752 = vunpack.c.h.s8.bf16 %v3472
        %v3753 = vunpack.c.h.s8.bf16 %v3473
        %v3754 = vunpack.c.h.s8.bf16 %v3474
        %v3755 = vunpack.c.h.s8.bf16 %v3475
        %v3756 = vunpack.c.l.s8.bf16 %v3476
        %v3757 = vunpack.c.l.s8.bf16 %v3477
        %v3758 = vunpack.c.l.s8.bf16 %v3478
        %v3759 = vunpack.c.l.s8.bf16 %v3479
        %v3760 = vunpack.c.l.s8.bf16 %v3480
        %v3761 = vunpack.c.l.s8.bf16 %v3481
        %v3762 = vunpack.c.l.s8.bf16 %v3482
        %v3763 = vunpack.c.l.s8.bf16 %v3483
        %v3764 = vunpack.c.h.s8.bf16 %v3476
        %v3765 = vunpack.c.h.s8.bf16 %v3477
        %v3766 = vunpack.c.h.s8.bf16 %v3478
        %v3767 = vunpack.c.h.s8.bf16 %v3479
        %v3768 = vunpack.c.h.s8.bf16 %v3480
        %v3769 = vunpack.c.h.s8.bf16 %v3481
        %v3770 = vunpack.c.h.s8.bf16 %v3482
        %v3771 = vunpack.c.h.s8.bf16 %v3483
        %v3772 = vunpack.c.l.s8.bf16 %v3484
        %v3773 = vunpack.c.l.s8.bf16 %v3485
        %v3774 = vunpack.c.l.s8.bf16 %v3486
        %v3775 = vunpack.c.l.s8.bf16 %v3487
        %v3776 = vunpack.c.l.s8.bf16 %v3488
        %v3777 = vunpack.c.l.s8.bf16 %v3489
        %v3778 = vunpack.c.l.s8.bf16 %v3490
        %v3779 = vunpack.c.l.s8.bf16 %v3491
        %v3780 = vunpack.c.h.s8.bf16 %v3484
        %v3781 = vunpack.c.h.s8.bf16 %v3485
        %v3782 = vunpack.c.h.s8.bf16 %v3486
        %v3783 = vunpack.c.h.s8.bf16 %v3487
        %v3784 = vunpack.c.h.s8.bf16 %v3488
        %v3785 = vunpack.c.h.s8.bf16 %v3489
        %v3786 = vunpack.c.h.s8.bf16 %v3490
        %v3787 = vunpack.c.h.s8.bf16 %v3491
        %v3788 = vunpack.c.l.s8.bf16 %v3492
        %v3789 = vunpack.c.l.s8.bf16 %v3493
        %v3790 = vunpack.c.l.s8.bf16 %v3494
        %v3791 = vunpack.c.l.s8.bf16 %v3495
        %v3792 = vunpack.c.l.s8.bf16 %v3496
        %v3793 = vunpack.c.l.s8.bf16 %v3497
        %v3794 = vunpack.c.l.s8.bf16 %v3498
        %v3795 = vunpack.c.l.s8.bf16 %v3499
        %v3796 = vunpack.c.h.s8.bf16 %v3492
        %v3797 = vunpack.c.h.s8.bf16 %v3493
        %v3798 = vunpack.c.h.s8.bf16 %v3494
        %v3799 = vunpack.c.h.s8.bf16 %v3495
        %v3800 = vunpack.c.h.s8.bf16 %v3496
        %v3801 = vunpack.c.h.s8.bf16 %v3497
        %v3802 = vunpack.c.h.s8.bf16 %v3498
        %v3803 = vunpack.c.h.s8.bf16 %v3499
        %v3804 = vunpack.c.l.s8.bf16 %v3500
        %v3805 = vunpack.c.l.s8.bf16 %v3501
        %v3806 = vunpack.c.l.s8.bf16 %v3502
        %v3807 = vunpack.c.l.s8.bf16 %v3503
        %v3808 = vunpack.c.l.s8.bf16 %v3504
        %v3809 = vunpack.c.l.s8.bf16 %v3505
        %v3810 = vunpack.c.l.s8.bf16 %v3506
        %v3811 = vunpack.c.l.s8.bf16 %v3507
        %v3812 = vunpack.c.h.s8.bf16 %v3500
        %v3813 = vunpack.c.h.s8.bf16 %v3501
        %v3814 = vunpack.c.h.s8.bf16 %v3502
        %v3815 = vunpack.c.h.s8.bf16 %v3503
        %v3816 = vunpack.c.h.s8.bf16 %v3504
        %v3817 = vunpack.c.h.s8.bf16 %v3505
        %v3818 = vunpack.c.h.s8.bf16 %v3506
        %v3819 = vunpack.c.h.s8.bf16 %v3507
        %v3820 = vunpack.c.l.s8.bf16 %v3508
        %v3821 = vunpack.c.l.s8.bf16 %v3509
        %v3822 = vunpack.c.l.s8.bf16 %v3510
        %v3823 = vunpack.c.l.s8.bf16 %v3511
        %v3824 = vunpack.c.l.s8.bf16 %v3512
        %v3825 = vunpack.c.l.s8.bf16 %v3513
        %v3826 = vunpack.c.l.s8.bf16 %v3514
        %v3827 = vunpack.c.l.s8.bf16 %v3515
        %v3828 = vunpack.c.h.s8.bf16 %v3508
        %v3829 = vunpack.c.h.s8.bf16 %v3509
        %v3830 = vunpack.c.h.s8.bf16 %v3510
        %v3831 = vunpack.c.h.s8.bf16 %v3511
        %v3832 = vunpack.c.h.s8.bf16 %v3512
        %v3833 = vunpack.c.h.s8.bf16 %v3513
        %v3834 = vunpack.c.h.s8.bf16 %v3514
        %v3835 = vunpack.c.h.s8.bf16 %v3515
        %v3836 = vunpack.c.l.s8.bf16 %v3516
        %v3837 = vunpack.c.l.s8.bf16 %v3517
        %v3838 = vunpack.c.l.s8.bf16 %v3518
        %v3839 = vunpack.c.l.s8.bf16 %v3519
        %v3840 = vunpack.c.l.s8.bf16 %v3520
        %v3841 = vunpack.c.l.s8.bf16 %v3521
        %v3842 = vunpack.c.l.s8.bf16 %v3522
        %v3843 = vunpack.c.l.s8.bf16 %v3523
        %v3844 = vunpack.c.h.s8.bf16 %v3516
        %v3845 = vunpack.c.h.s8.bf16 %v3517
        %v3846 = vunpack.c.h.s8.bf16 %v3518
        %v3847 = vunpack.c.h.s8.bf16 %v3519
        %v3848 = vunpack.c.h.s8.bf16 %v3520
        %v3849 = vunpack.c.h.s8.bf16 %v3521
        %v3850 = vunpack.c.h.s8.bf16 %v3522
        %v3851 = vunpack.c.h.s8.bf16 %v3523
        %v3852 = vunpack.c.l.s8.bf16 %v3524
        %v3853 = vunpack.c.l.s8.bf16 %v3525
        %v3854 = vunpack.c.l.s8.bf16 %v3526
        %v3855 = vunpack.c.l.s8.bf16 %v3527
        %v3856 = vunpack.c.l.s8.bf16 %v3528
        %v3857 = vunpack.c.l.s8.bf16 %v3529
        %v3858 = vunpack.c.l.s8.bf16 %v3530
        %v3859 = vunpack.c.l.s8.bf16 %v3531
        %v3860 = vunpack.c.h.s8.bf16 %v3524
        %v3861 = vunpack.c.h.s8.bf16 %v3525
        %v3862 = vunpack.c.h.s8.bf16 %v3526
        %v3863 = vunpack.c.h.s8.bf16 %v3527
        %v3864 = vunpack.c.h.s8.bf16 %v3528
        %v3865 = vunpack.c.h.s8.bf16 %v3529
        %v3866 = vunpack.c.h.s8.bf16 %v3530
        %v3867 = vunpack.c.h.s8.bf16 %v3531
        %v3868 = vunpack.c.l.s8.bf16 %v3532
        %v3869 = vunpack.c.l.s8.bf16 %v3533
        %v3870 = vunpack.c.l.s8.bf16 %v3534
        %v3871 = vunpack.c.l.s8.bf16 %v3535
        %v3872 = vunpack.c.l.s8.bf16 %v3536
        %v3873 = vunpack.c.l.s8.bf16 %v3537
        %v3874 = vunpack.c.l.s8.bf16 %v3538
        %v3875 = vunpack.c.l.s8.bf16 %v3539
        %v3876 = vunpack.c.h.s8.bf16 %v3532
        %v3877 = vunpack.c.h.s8.bf16 %v3533
        %v3878 = vunpack.c.h.s8.bf16 %v3534
        %v3879 = vunpack.c.h.s8.bf16 %v3535
        %v3880 = vunpack.c.h.s8.bf16 %v3536
        %v3881 = vunpack.c.h.s8.bf16 %v3537
        %v3882 = vunpack.c.h.s8.bf16 %v3538
        %v3883 = vunpack.c.h.s8.bf16 %v3539
        %v3884 = vunpack.c.l.s8.bf16 %v3540
        %v3885 = vunpack.c.l.s8.bf16 %v3541
        %v3886 = vunpack.c.l.s8.bf16 %v3542
        %v3887 = vunpack.c.l.s8.bf16 %v3543
        %v3888 = vunpack.c.l.s8.bf16 %v3544
        %v3889 = vunpack.c.l.s8.bf16 %v3545
        %v3890 = vunpack.c.l.s8.bf16 %v3546
        %v3891 = vunpack.c.l.s8.bf16 %v3547
        %v3892 = vunpack.c.h.s8.bf16 %v3540
        %v3893 = vunpack.c.h.s8.bf16 %v3541
        %v3894 = vunpack.c.h.s8.bf16 %v3542
        %v3895 = vunpack.c.h.s8.bf16 %v3543
        %v3896 = vunpack.c.h.s8.bf16 %v3544
        %v3897 = vunpack.c.h.s8.bf16 %v3545
        %v3898 = vunpack.c.h.s8.bf16 %v3546
        %v3899 = vunpack.c.h.s8.bf16 %v3547
        %v3900 = vunpack.c.l.s8.bf16 %v3548
        %v3901 = vunpack.c.l.s8.bf16 %v3549
        %v3902 = vunpack.c.l.s8.bf16 %v3550
        %v3903 = vunpack.c.l.s8.bf16 %v3551
        %v3904 = vunpack.c.l.s8.bf16 %v3552
        %v3905 = vunpack.c.l.s8.bf16 %v3553
        %v3906 = vunpack.c.l.s8.bf16 %v3554
        %v3907 = vunpack.c.l.s8.bf16 %v3555
        %v3908 = vunpack.c.h.s8.bf16 %v3548
        %v3909 = vunpack.c.h.s8.bf16 %v3549
        %v3910 = vunpack.c.h.s8.bf16 %v3550
        %v3911 = vunpack.c.h.s8.bf16 %v3551
        %v3912 = vunpack.c.h.s8.bf16 %v3552
        %v3913 = vunpack.c.h.s8.bf16 %v3553
        %v3914 = vunpack.c.h.s8.bf16 %v3554
        %v3915 = vunpack.c.h.s8.bf16 %v3555
        %v3916 = vunpack.c.l.s8.bf16 %v3556
        %v3917 = vunpack.c.l.s8.bf16 %v3557
        %v3918 = vunpack.c.l.s8.bf16 %v3558
        %v3919 = vunpack.c.l.s8.bf16 %v3559
        %v3920 = vunpack.c.l.s8.bf16 %v3560
        %v3921 = vunpack.c.l.s8.bf16 %v3561
        %v3922 = vunpack.c.l.s8.bf16 %v3562
        %v3923 = vunpack.c.l.s8.bf16 %v3563
        %v3924 = vunpack.c.h.s8.bf16 %v3556
        %v3925 = vunpack.c.h.s8.bf16 %v3557
        %v3926 = vunpack.c.h.s8.bf16 %v3558
        %v3927 = vunpack.c.h.s8.bf16 %v3559
        %v3928 = vunpack.c.h.s8.bf16 %v3560
        %v3929 = vunpack.c.h.s8.bf16 %v3561
        %v3930 = vunpack.c.h.s8.bf16 %v3562
        %v3931 = vunpack.c.h.s8.bf16 %v3563
        %v3932 = vunpack.c.l.s8.bf16 %v3564
        %v3933 = vunpack.c.l.s8.bf16 %v3565
        %v3934 = vunpack.c.l.s8.bf16 %v3566
        %v3935 = vunpack.c.l.s8.bf16 %v3567
        %v3936 = vunpack.c.l.s8.bf16 %v3568
        %v3937 = vunpack.c.l.s8.bf16 %v3569
        %v3938 = vunpack.c.l.s8.bf16 %v3570
        %v3939 = vunpack.c.l.s8.bf16 %v3571
        %v3940 = vunpack.c.h.s8.bf16 %v3564
        %v3941 = vunpack.c.h.s8.bf16 %v3565
        %v3942 = vunpack.c.h.s8.bf16 %v3566
        %v3943 = vunpack.c.h.s8.bf16 %v3567
        %v3944 = vunpack.c.h.s8.bf16 %v3568
        %v3945 = vunpack.c.h.s8.bf16 %v3569
        %v3946 = vunpack.c.h.s8.bf16 %v3570
        %v3947 = vunpack.c.h.s8.bf16 %v3571
        %v3948 = vunpack.c.l.s8.bf16 %v3572
        %v3949 = vunpack.c.l.s8.bf16 %v3573
        %v3950 = vunpack.c.l.s8.bf16 %v3574
        %v3951 = vunpack.c.l.s8.bf16 %v3575
        %v3952 = vunpack.c.l.s8.bf16 %v3576
        %v3953 = vunpack.c.l.s8.bf16 %v3577
        %v3954 = vunpack.c.l.s8.bf16 %v3578
        %v3955 = vunpack.c.l.s8.bf16 %v3579
        %v3956 = vunpack.c.h.s8.bf16 %v3572
        %v3957 = vunpack.c.h.s8.bf16 %v3573
        %v3958 = vunpack.c.h.s8.bf16 %v3574
        %v3959 = vunpack.c.h.s8.bf16 %v3575
        %v3960 = vunpack.c.h.s8.bf16 %v3576
        %v3961 = vunpack.c.h.s8.bf16 %v3577
        %v3962 = vunpack.c.h.s8.bf16 %v3578
        %v3963 = vunpack.c.h.s8.bf16 %v3579
        %v3964 = vunpack.c.l.s8.bf16 %v3580
        %v3965 = vunpack.c.l.s8.bf16 %v3581
        %v3966 = vunpack.c.l.s8.bf16 %v3582
        %v3967 = vunpack.c.l.s8.bf16 %v3583
        %v3968 = vunpack.c.l.s8.bf16 %v3584
        %v3969 = vunpack.c.l.s8.bf16 %v3585
        %v3970 = vunpack.c.l.s8.bf16 %v3586
        %v3971 = vunpack.c.l.s8.bf16 %v3587
        %v3972 = vunpack.c.h.s8.bf16 %v3580
        %v3973 = vunpack.c.h.s8.bf16 %v3581
        %v3974 = vunpack.c.h.s8.bf16 %v3582
        %v3975 = vunpack.c.h.s8.bf16 %v3583
        %v3976 = vunpack.c.h.s8.bf16 %v3584
        %v3977 = vunpack.c.h.s8.bf16 %v3585
        %v3978 = vunpack.c.h.s8.bf16 %v3586
        %v3979 = vunpack.c.h.s8.bf16 %v3587
        %v3980 = vunpack.c.l.s8.bf16 %v3588
        %v3981 = vunpack.c.l.s8.bf16 %v3589
        %v3982 = vunpack.c.l.s8.bf16 %v3590
        %v3983 = vunpack.c.l.s8.bf16 %v3591
        %v3984 = vunpack.c.l.s8.bf16 %v3592
        %v3985 = vunpack.c.l.s8.bf16 %v3593
        %v3986 = vunpack.c.l.s8.bf16 %v3594
        %v3987 = vunpack.c.l.s8.bf16 %v3595
        %v3988 = vunpack.c.h.s8.bf16 %v3588
        %v3989 = vunpack.c.h.s8.bf16 %v3589
        %v3990 = vunpack.c.h.s8.bf16 %v3590
        %v3991 = vunpack.c.h.s8.bf16 %v3591
        %v3992 = vunpack.c.h.s8.bf16 %v3592
        %v3993 = vunpack.c.h.s8.bf16 %v3593
        %v3994 = vunpack.c.h.s8.bf16 %v3594
        %v3995 = vunpack.c.h.s8.bf16 %v3595
        %v3996 = vunpack.c.l.s8.bf16 %v3596
        %v3997 = vunpack.c.l.s8.bf16 %v3597
        %v3998 = vunpack.c.l.s8.bf16 %v3598
        %v3999 = vunpack.c.l.s8.bf16 %v3599
        %v4000 = vunpack.c.l.s8.bf16 %v3600
        %v4001 = vunpack.c.l.s8.bf16 %v3601
        %v4002 = vunpack.c.l.s8.bf16 %v3602
        %v4003 = vunpack.c.l.s8.bf16 %v3603
        %v4004 = vunpack.c.h.s8.bf16 %v3596
        %v4005 = vunpack.c.h.s8.bf16 %v3597
        %v4006 = vunpack.c.h.s8.bf16 %v3598
        %v4007 = vunpack.c.h.s8.bf16 %v3599
        %v4008 = vunpack.c.h.s8.bf16 %v3600
        %v4009 = vunpack.c.h.s8.bf16 %v3601
        %v4010 = vunpack.c.h.s8.bf16 %v3602
        %v4011 = vunpack.c.h.s8.bf16 %v3603
        %v4012 = vunpack.c.l.s8.bf16 %v3604
        %v4013 = vunpack.c.l.s8.bf16 %v3605
        %v4014 = vunpack.c.l.s8.bf16 %v3606
        %v4015 = vunpack.c.l.s8.bf16 %v3607
        %v4016 = vunpack.c.l.s8.bf16 %v3608
        %v4017 = vunpack.c.l.s8.bf16 %v3609
        %v4018 = vunpack.c.l.s8.bf16 %v3610
        %v4019 = vunpack.c.l.s8.bf16 %v3611
        %v4020 = vunpack.c.h.s8.bf16 %v3604
        %v4021 = vunpack.c.h.s8.bf16 %v3605
        %v4022 = vunpack.c.h.s8.bf16 %v3606
        %v4023 = vunpack.c.h.s8.bf16 %v3607
        %v4024 = vunpack.c.h.s8.bf16 %v3608
        %v4025 = vunpack.c.h.s8.bf16 %v3609
        %v4026 = vunpack.c.h.s8.bf16 %v3610
        %v4027 = vunpack.c.h.s8.bf16 %v3611
        %v4028 = vunpack.c.l.s8.bf16 %v3612
        %v4029 = vunpack.c.l.s8.bf16 %v3613
        %v4030 = vunpack.c.l.s8.bf16 %v3614
        %v4031 = vunpack.c.l.s8.bf16 %v3615
        %v4032 = vunpack.c.l.s8.bf16 %v3616
        %v4033 = vunpack.c.l.s8.bf16 %v3617
        %v4034 = vunpack.c.l.s8.bf16 %v3618
        %v4035 = vunpack.c.l.s8.bf16 %v3619
        %v4036 = vunpack.c.h.s8.bf16 %v3612
        %v4037 = vunpack.c.h.s8.bf16 %v3613
        %v4038 = vunpack.c.h.s8.bf16 %v3614
        %v4039 = vunpack.c.h.s8.bf16 %v3615
        %v4040 = vunpack.c.h.s8.bf16 %v3616
        %v4041 = vunpack.c.h.s8.bf16 %v3617
        %v4042 = vunpack.c.h.s8.bf16 %v3618
        %v4043 = vunpack.c.h.s8.bf16 %v3619
        %v4044 = vunpack.c.l.s8.bf16 %v3620
        %v4045 = vunpack.c.l.s8.bf16 %v3621
        %v4046 = vunpack.c.l.s8.bf16 %v3622
        %v4047 = vunpack.c.l.s8.bf16 %v3623
        %v4048 = vunpack.c.l.s8.bf16 %v3624
        %v4049 = vunpack.c.l.s8.bf16 %v3625
        %v4050 = vunpack.c.l.s8.bf16 %v3626
        %v4051 = vunpack.c.l.s8.bf16 %v3627
        %v4052 = vunpack.c.h.s8.bf16 %v3620
        %v4053 = vunpack.c.h.s8.bf16 %v3621
        %v4054 = vunpack.c.h.s8.bf16 %v3622
        %v4055 = vunpack.c.h.s8.bf16 %v3623
        %v4056 = vunpack.c.h.s8.bf16 %v3624
        %v4057 = vunpack.c.h.s8.bf16 %v3625
        %v4058 = vunpack.c.h.s8.bf16 %v3626
        %v4059 = vunpack.c.h.s8.bf16 %v3627
        %v4060 = vunpack.c.l.s8.bf16 %v3628
        %v4061 = vunpack.c.l.s8.bf16 %v3629
        %v4062 = vunpack.c.l.s8.bf16 %v3630
        %v4063 = vunpack.c.l.s8.bf16 %v3631
        %v4064 = vunpack.c.l.s8.bf16 %v3632
        %v4065 = vunpack.c.l.s8.bf16 %v3633
        %v4066 = vunpack.c.l.s8.bf16 %v3634
        %v4067 = vunpack.c.l.s8.bf16 %v3635
        %v4068 = vunpack.c.h.s8.bf16 %v3628
        %v4069 = vunpack.c.h.s8.bf16 %v3629
        %v4070 = vunpack.c.h.s8.bf16 %v3630
        %v4071 = vunpack.c.h.s8.bf16 %v3631
        %v4072 = vunpack.c.h.s8.bf16 %v3632
        %v4073 = vunpack.c.h.s8.bf16 %v3633
        %v4074 = vunpack.c.h.s8.bf16 %v3634
        %v4075 = vunpack.c.h.s8.bf16 %v3635
        %v4076 = vunpack.c.l.s8.bf16 %v3636
        %v4077 = vunpack.c.l.s8.bf16 %v3637
        %v4078 = vunpack.c.l.s8.bf16 %v3638
        %v4079 = vunpack.c.l.s8.bf16 %v3639
        %v4080 = vunpack.c.l.s8.bf16 %v3640
        %v4081 = vunpack.c.l.s8.bf16 %v3641
        %v4082 = vunpack.c.l.s8.bf16 %v3642
        %v4083 = vunpack.c.l.s8.bf16 %v3643
        %v4084 = vunpack.c.h.s8.bf16 %v3636
        %v4085 = vunpack.c.h.s8.bf16 %v3637
        %v4086 = vunpack.c.h.s8.bf16 %v3638
        %v4087 = vunpack.c.h.s8.bf16 %v3639
        %v4088 = vunpack.c.h.s8.bf16 %v3640
        %v4089 = vunpack.c.h.s8.bf16 %v3641
        %v4090 = vunpack.c.h.s8.bf16 %v3642
        %v4091 = vunpack.c.h.s8.bf16 %v3643
        %v4092 = vunpack.c.l.s8.bf16 %v3644
        %v4093 = vunpack.c.l.s8.bf16 %v3645
        %v4094 = vunpack.c.l.s8.bf16 %v3646
        %v4095 = vunpack.c.l.s8.bf16 %v3647
        %v4096 = vunpack.c.l.s8.bf16 %v3648
        %v4097 = vunpack.c.l.s8.bf16 %v3649
        %v4098 = vunpack.c.l.s8.bf16 %v3650
        %v4099 = vunpack.c.l.s8.bf16 %v3651
        %v4100 = vunpack.c.h.s8.bf16 %v3644
        %v4101 = vunpack.c.h.s8.bf16 %v3645
        %v4102 = vunpack.c.h.s8.bf16 %v3646
        %v4103 = vunpack.c.h.s8.bf16 %v3647
        %v4104 = vunpack.c.h.s8.bf16 %v3648
        %v4105 = vunpack.c.h.s8.bf16 %v3649
        %v4106 = vunpack.c.h.s8.bf16 %v3650
        %v4107 = vunpack.c.h.s8.bf16 %v3651
        %v4108 = vunpack.c.l.s8.bf16 %v3652
        %v4109 = vunpack.c.l.s8.bf16 %v3653
        %v4110 = vunpack.c.l.s8.bf16 %v3654
        %v4111 = vunpack.c.l.s8.bf16 %v3655
        %v4112 = vunpack.c.l.s8.bf16 %v3656
        %v4113 = vunpack.c.l.s8.bf16 %v3657
        %v4114 = vunpack.c.l.s8.bf16 %v3658
        %v4115 = vunpack.c.l.s8.bf16 %v3659
        %v4116 = vunpack.c.h.s8.bf16 %v3652
        %v4117 = vunpack.c.h.s8.bf16 %v3653
        %v4118 = vunpack.c.h.s8.bf16 %v3654
        %v4119 = vunpack.c.h.s8.bf16 %v3655
        %v4120 = vunpack.c.h.s8.bf16 %v3656
        %v4121 = vunpack.c.h.s8.bf16 %v3657
        %v4122 = vunpack.c.h.s8.bf16 %v3658
        %v4123 = vunpack.c.h.s8.bf16 %v3659
        %v4124 = vunpack.c.l.s8.bf16 %v3660
        %v4125 = vunpack.c.l.s8.bf16 %v3661
        %v4126 = vunpack.c.l.s8.bf16 %v3662
        %v4127 = vunpack.c.l.s8.bf16 %v3663
        %v4128 = vunpack.c.l.s8.bf16 %v3664
        %v4129 = vunpack.c.l.s8.bf16 %v3665
        %v4130 = vunpack.c.l.s8.bf16 %v3666
        %v4131 = vunpack.c.l.s8.bf16 %v3667
        %v4132 = vunpack.c.h.s8.bf16 %v3660
        %v4133 = vunpack.c.h.s8.bf16 %v3661
        %v4134 = vunpack.c.h.s8.bf16 %v3662
        %v4135 = vunpack.c.h.s8.bf16 %v3663
        %v4136 = vunpack.c.h.s8.bf16 %v3664
        %v4137 = vunpack.c.h.s8.bf16 %v3665
        %v4138 = vunpack.c.h.s8.bf16 %v3666
        %v4139 = vunpack.c.h.s8.bf16 %v3667
        %v4140 = vunpack.c.l.s8.bf16 %v3668
        %v4141 = vunpack.c.l.s8.bf16 %v3669
        %v4142 = vunpack.c.l.s8.bf16 %v3670
        %v4143 = vunpack.c.l.s8.bf16 %v3671
        %v4144 = vunpack.c.l.s8.bf16 %v3672
        %v4145 = vunpack.c.l.s8.bf16 %v3673
        %v4146 = vunpack.c.l.s8.bf16 %v3674
        %v4147 = vunpack.c.l.s8.bf16 %v3675
        %v4148 = vunpack.c.h.s8.bf16 %v3668
        %v4149 = vunpack.c.h.s8.bf16 %v3669
        %v4150 = vunpack.c.h.s8.bf16 %v3670
        %v4151 = vunpack.c.h.s8.bf16 %v3671
        %v4152 = vunpack.c.h.s8.bf16 %v3672
        %v4153 = vunpack.c.h.s8.bf16 %v3673
        %v4154 = vunpack.c.h.s8.bf16 %v3674
        %v4155 = vunpack.c.h.s8.bf16 %v3675
        %v4156 = vunpack.c.l.s8.bf16 %v3676
        %v4157 = vunpack.c.l.s8.bf16 %v3677
        %v4158 = vunpack.c.l.s8.bf16 %v3678
        %v4159 = vunpack.c.l.s8.bf16 %v3679
        %v4160 = vunpack.c.l.s8.bf16 %v3680
        %v4161 = vunpack.c.l.s8.bf16 %v3681
        %v4162 = vunpack.c.l.s8.bf16 %v3682
        %v4163 = vunpack.c.l.s8.bf16 %v3683
        %v4164 = vunpack.c.h.s8.bf16 %v3676
        %v4165 = vunpack.c.h.s8.bf16 %v3677
        %v4166 = vunpack.c.h.s8.bf16 %v3678
        %v4167 = vunpack.c.h.s8.bf16 %v3679
        %v4168 = vunpack.c.h.s8.bf16 %v3680
        %v4169 = vunpack.c.h.s8.bf16 %v3681
        %v4170 = vunpack.c.h.s8.bf16 %v3682
        %v4171 = vunpack.c.h.s8.bf16 %v3683
        %v4172 = vunpack.c.l.s8.bf16 %v3684
        %v4173 = vunpack.c.l.s8.bf16 %v3685
        %v4174 = vunpack.c.l.s8.bf16 %v3686
        %v4175 = vunpack.c.l.s8.bf16 %v3687
        %v4176 = vunpack.c.l.s8.bf16 %v3688
        %v4177 = vunpack.c.l.s8.bf16 %v3689
        %v4178 = vunpack.c.l.s8.bf16 %v3690
        %v4179 = vunpack.c.l.s8.bf16 %v3691
        %v4180 = vunpack.c.h.s8.bf16 %v3684
        %v4181 = vunpack.c.h.s8.bf16 %v3685
        %v4182 = vunpack.c.h.s8.bf16 %v3686
        %v4183 = vunpack.c.h.s8.bf16 %v3687
        %v4184 = vunpack.c.h.s8.bf16 %v3688
        %v4185 = vunpack.c.h.s8.bf16 %v3689
        %v4186 = vunpack.c.h.s8.bf16 %v3690
        %v4187 = vunpack.c.h.s8.bf16 %v3691
        %v4188 = vunpack.c.l.s8.bf16 %v3692
        %v4189 = vunpack.c.l.s8.bf16 %v3693
        %v4190 = vunpack.c.l.s8.bf16 %v3694
        %v4191 = vunpack.c.l.s8.bf16 %v3695
        %v4192 = vunpack.c.l.s8.bf16 %v3696
        %v4193 = vunpack.c.l.s8.bf16 %v3697
        %v4194 = vunpack.c.l.s8.bf16 %v3698
        %v4195 = vunpack.c.l.s8.bf16 %v3699
        %v4196 = vunpack.c.h.s8.bf16 %v3692
        %v4197 = vunpack.c.h.s8.bf16 %v3693
        %v4198 = vunpack.c.h.s8.bf16 %v3694
        %v4199 = vunpack.c.h.s8.bf16 %v3695
        %v4200 = vunpack.c.h.s8.bf16 %v3696
        %v4201 = vunpack.c.h.s8.bf16 %v3697
        %v4202 = vunpack.c.h.s8.bf16 %v3698
        %v4203 = vunpack.c.h.s8.bf16 %v3699
        %v4204 = vunpack.c.l.s8.bf16 %v3700
        %v4205 = vunpack.c.l.s8.bf16 %v3701
        %v4206 = vunpack.c.l.s8.bf16 %v3702
        %v4207 = vunpack.c.l.s8.bf16 %v3703
        %v4208 = vunpack.c.l.s8.bf16 %v3704
        %v4209 = vunpack.c.l.s8.bf16 %v3705
        %v4210 = vunpack.c.l.s8.bf16 %v3706
        %v4211 = vunpack.c.l.s8.bf16 %v3707
        %v4212 = vunpack.c.h.s8.bf16 %v3700
        %v4213 = vunpack.c.h.s8.bf16 %v3701
        %v4214 = vunpack.c.h.s8.bf16 %v3702
        %v4215 = vunpack.c.h.s8.bf16 %v3703
        %v4216 = vunpack.c.h.s8.bf16 %v3704
        %v4217 = vunpack.c.h.s8.bf16 %v3705
        %v4218 = vunpack.c.h.s8.bf16 %v3706
        %v4219 = vunpack.c.h.s8.bf16 %v3707
        %v4220 = vunpack.c.l.s8.bf16 %v3708
        %v4221 = vunpack.c.l.s8.bf16 %v3709
        %v4222 = vunpack.c.l.s8.bf16 %v3710
        %v4223 = vunpack.c.l.s8.bf16 %v3711
        %v4224 = vunpack.c.l.s8.bf16 %v3712
        %v4225 = vunpack.c.l.s8.bf16 %v3713
        %v4226 = vunpack.c.l.s8.bf16 %v3714
        %v4227 = vunpack.c.l.s8.bf16 %v3715
        %v4228 = vunpack.c.h.s8.bf16 %v3708
        %v4229 = vunpack.c.h.s8.bf16 %v3709
        %v4230 = vunpack.c.h.s8.bf16 %v3710
        %v4231 = vunpack.c.h.s8.bf16 %v3711
        %v4232 = vunpack.c.h.s8.bf16 %v3712
        %v4233 = vunpack.c.h.s8.bf16 %v3713
        %v4234 = vunpack.c.h.s8.bf16 %v3714
        %v4235 = vunpack.c.h.s8.bf16 %v3715
        %4236 = vmatprep.subr.bf16.mxu0 %v3725
        %4237 = vmatpush1.bf16.msra.mxu0 %v3724
        %4238 = vmatprep.subr.bf16.mxu0 %v3733
        %4239 = vmatpush1.bf16.msra.mxu0 %v3732
        %4240 = vmatprep.subr.bf16.mxu0 %v3741
        %4241 = vmatpush1.bf16.msra.mxu0 %v3740
        %4242 = vmatprep.subr.bf16.mxu0 %v3749
        %4243 = vmatpush1.bf16.msra.mxu0 %v3748
        %4244 = vmatprep.subr.bf16.mxu0 %v3757
        %4245 = vmatpush1.bf16.msra.mxu0 %v3756
        %4246 = vmatprep.subr.bf16.mxu0 %v3765
        %4247 = vmatpush1.bf16.msra.mxu0 %v3764
        %4248 = vmatprep.subr.bf16.mxu0 %v3773
        %4249 = vmatpush1.bf16.msra.mxu0 %v3772
        %4250 = vmatprep.subr.bf16.mxu0 %v3781
        %4251 = vmatpush1.bf16.msra.mxu0 %v3780
        %4252 = vmatprep.subr.bf16.mxu0 %v3789
        %4253 = vmatpush1.bf16.msra.mxu0 %v3788
        %4254 = vmatprep.subr.bf16.mxu0 %v3797
        %4255 = vmatpush1.bf16.msra.mxu0 %v3796
        %4256 = vmatprep.subr.bf16.mxu0 %v3805
        %4257 = vmatpush1.bf16.msra.mxu0 %v3804
        %4258 = vmatprep.subr.bf16.mxu0 %v3813
        %4259 = vmatpush1.bf16.msra.mxu0 %v3812
        %4260 = vmatprep.subr.bf16.mxu0 %v3821
        %4261 = vmatpush1.bf16.msra.mxu0 %v3820
        %4262 = vmatprep.subr.bf16.mxu0 %v3829
        %4263 = vmatpush1.bf16.msra.mxu0 %v3828
        %4264 = vmatprep.subr.bf16.mxu0 %v3837
        %4265 = vmatpush1.bf16.msra.mxu0 %v3836
        %4266 = vmatprep.subr.bf16.mxu0 %v3845
        %4267 = vmatpush1.bf16.msra.mxu0 %v3844
        %4268 = vmatprep.mubr.bf16.mxu0 %v3717
        %4269 = vmatmul.mubr.bf16.gmra.mrb[0].mxu0 %v3716
        %v4270 = vpop.f32.mrb[0].mxu0
        %v4271 = vadd.f32 0.0, %v4270
        %v4272 = vpop.f32.mrb[0].mxu0
        %v4273 = vadd.f32 0.0, %v4272
        %v4274 = vpop.f32.mrb[0].mxu0
        %v4275 = vpop.f32.mrb[0].mxu0
        %4276 = vdwg.mxu0
        %4277 = vmatprep.subr.bf16.mxu0 %v3853
        %4278 = vmatpush1.bf16.msra.mxu0 %v3852
        %4279 = vmatprep.subr.bf16.mxu0 %v3861
        %4280 = vmatpush1.bf16.msra.mxu0 %v3860
        %4281 = vmatprep.subr.bf16.mxu0 %v3869
        %4282 = vmatpush1.bf16.msra.mxu0 %v3868
        %4283 = vmatprep.subr.bf16.mxu0 %v3877
        %4284 = vmatpush1.bf16.msra.mxu0 %v3876
        %4285 = vmatprep.subr.bf16.mxu0 %v3885
        %4286 = vmatpush1.bf16.msra.mxu0 %v3884
        %4287 = vmatprep.subr.bf16.mxu0 %v3893
        %4288 = vmatpush1.bf16.msra.mxu0 %v3892
        %4289 = vmatprep.subr.bf16.mxu0 %v3901
        %4290 = vmatpush1.bf16.msra.mxu0 %v3900
        %4291 = vmatprep.subr.bf16.mxu0 %v3909
        %4292 = vmatpush1.bf16.msra.mxu0 %v3908
        %4293 = vmatprep.subr.bf16.mxu0 %v3917
        %4294 = vmatpush1.bf16.msra.mxu0 %v3916
        %4295 = vmatprep.subr.bf16.mxu0 %v3925
        %4296 = vmatpush1.bf16.msra.mxu0 %v3924
        %4297 = vmatprep.subr.bf16.mxu0 %v3933
        %4298 = vmatpush1.bf16.msra.mxu0 %v3932
        %4299 = vmatprep.subr.bf16.mxu0 %v3941
        %4300 = vmatpush1.bf16.msra.mxu0 %v3940
        %4301 = vmatprep.subr.bf16.mxu0 %v3949
        %4302 = vmatpush1.bf16.msra.mxu0 %v3948
        %4303 = vmatprep.subr.bf16.mxu0 %v3957
        %4304 = vmatpush1.bf16.msra.mxu0 %v3956
        %4305 = vmatprep.subr.bf16.mxu0 %v3965
        %4306 = vmatpush1.bf16.msra.mxu0 %v3964
        %4307 = vmatprep.subr.bf16.mxu0 %v3973
        %4308 = vmatpush1.bf16.msra.mxu0 %v3972
        %4309 = vmatprep.mubr.bf16.mxu0 %v3719
        %4310 = vmatmul.mubr.bf16.gmra.mrb[0].mxu0 %v3718
        %v4311 = vpop.f32.mrb[0].mxu0
        %v4312 = vadd.f32 %v4271, %v4311
        %v4313 = vpop.f32.mrb[0].mxu0
        %v4314 = vadd.f32 %v4273, %v4313
        %v4315 = vpop.f32.mrb[0].mxu0
        %v4316 = vpop.f32.mrb[0].mxu0
        %4317 = vdwg.mxu0
        %4318 = vmatprep.subr.bf16.mxu0 %v3981
        %4319 = vmatpush1.bf16.msra.mxu0 %v3980
        %4320 = vmatprep.subr.bf16.mxu0 %v3989
        %4321 = vmatpush1.bf16.msra.mxu0 %v3988
        %4322 = vmatprep.subr.bf16.mxu0 %v3997
        %4323 = vmatpush1.bf16.msra.mxu0 %v3996
        %4324 = vmatprep.subr.bf16.mxu0 %v4005
        %4325 = vmatpush1.bf16.msra.mxu0 %v4004
        %4326 = vmatprep.subr.bf16.mxu0 %v4013
        %4327 = vmatpush1.bf16.msra.mxu0 %v4012
        %4328 = vmatprep.subr.bf16.mxu0 %v4021
        %4329 = vmatpush1.bf16.msra.mxu0 %v4020
        %4330 = vmatprep.subr.bf16.mxu0 %v4029
        %4331 = vmatpush1.bf16.msra.mxu0 %v4028
        %4332 = vmatprep.subr.bf16.mxu0 %v4037
        %4333 = vmatpush1.bf16.msra.mxu0 %v4036
        %4334 = vmatprep.subr.bf16.mxu0 %v4045
        %4335 = vmatpush1.bf16.msra.mxu0 %v4044
        %4336 = vmatprep.subr.bf16.mxu0 %v4053
        %4337 = vmatpush1.bf16.msra.mxu0 %v4052
        %4338 = vmatprep.subr.bf16.mxu0 %v4061
        %4339 = vmatpush1.bf16.msra.mxu0 %v4060
        %4340 = vmatprep.subr.bf16.mxu0 %v4069
        %4341 = vmatpush1.bf16.msra.mxu0 %v4068
        %4342 = vmatprep.subr.bf16.mxu0 %v4077
        %4343 = vmatpush1.bf16.msra.mxu0 %v4076
        %4344 = vmatprep.subr.bf16.mxu0 %v4085
        %4345 = vmatpush1.bf16.msra.mxu0 %v4084
        %4346 = vmatprep.subr.bf16.mxu0 %v4093
        %4347 = vmatpush1.bf16.msra.mxu0 %v4092
        %4348 = vmatprep.subr.bf16.mxu0 %v4101
        %4349 = vmatpush1.bf16.msra.mxu0 %v4100
        %4350 = vmatprep.mubr.bf16.mxu0 %v3721
        %4351 = vmatmul.mubr.bf16.gmra.mrb[0].mxu0 %v3720
        %v4352 = vpop.f32.mrb[0].mxu0
        %v4353 = vadd.f32 %v4312, %v4352
        %v4354 = vpop.f32.mrb[0].mxu0
        %v4355 = vadd.f32 %v4314, %v4354
        %v4356 = vpop.f32.mrb[0].mxu0
        %v4357 = vpop.f32.mrb[0].mxu0
        %4358 = vdwg.mxu0
        %4359 = vmatprep.subr.bf16.mxu0 %v4109
        %4360 = vmatpush1.bf16.msra.mxu0 %v4108
        %4361 = vmatprep.subr.bf16.mxu0 %v4117
        %4362 = vmatpush1.bf16.msra.mxu0 %v4116
        %4363 = vmatprep.subr.bf16.mxu0 %v4125
        %4364 = vmatpush1.bf16.msra.mxu0 %v4124
        %4365 = vmatprep.subr.bf16.mxu0 %v4133
        %4366 = vmatpush1.bf16.msra.mxu0 %v4132
        %4367 = vmatprep.subr.bf16.mxu0 %v4141
        %4368 = vmatpush1.bf16.msra.mxu0 %v4140
        %4369 = vmatprep.subr.bf16.mxu0 %v4149
        %4370 = vmatpush1.bf16.msra.mxu0 %v4148
        %4371 = vmatprep.subr.bf16.mxu0 %v4157
        %4372 = vmatpush1.bf16.msra.mxu0 %v4156
        %4373 = vmatprep.subr.bf16.mxu0 %v4165
        %4374 = vmatpush1.bf16.msra.mxu0 %v4164
        %4375 = vmatprep.subr.bf16.mxu0 %v4173
        %4376 = vmatpush1.bf16.msra.mxu0 %v4172
        %4377 = vmatprep.subr.bf16.mxu0 %v4181
        %4378 = vmatpush1.bf16.msra.mxu0 %v4180
        %4379 = vmatprep.subr.bf16.mxu0 %v4189
        %4380 = vmatpush1.bf16.msra.mxu0 %v4188
        %4381 = vmatprep.subr.bf16.mxu0 %v4197
        %4382 = vmatpush1.bf16.msra.mxu0 %v4196
        %4383 = vmatprep.subr.bf16.mxu0 %v4205
        %4384 = vmatpush1.bf16.msra.mxu0 %v4204
        %4385 = vmatprep.subr.bf16.mxu0 %v4213
        %4386 = vmatpush1.bf16.msra.mxu0 %v4212
        %4387 = vmatprep.subr.bf16.mxu0 %v4221
        %4388 = vmatpush1.bf16.msra.mxu0 %v4220
        %4389 = vmatprep.subr.bf16.mxu0 %v4229
        %4390 = vmatpush1.bf16.msra.mxu0 %v4228
        %4391 = vmatprep.mubr.bf16.mxu0 %v3723
        %4392 = vmatmul.mubr.bf16.gmra.mrb[0].mxu0 %v3722
        %v4393 = vpop.f32.mrb[0].mxu0
        %v4394 = vadd.f32 %v4353, %v4393
        %v4395 = vpop.f32.mrb[0].mxu0
        %v4396 = vadd.f32 %v4355, %v4395
        %v4397 = vpop.f32.mrb[0].mxu0
        %v4398 = vpop.f32.mrb[0].mxu0
        %4399 = vdwg.mxu0
        %4400 = vmatprep.subr.bf16.mxu0 %v3727
        %4401 = vmatpush1.bf16.msra.mxu0 %v3726
        %4402 = vmatprep.subr.bf16.mxu0 %v3735
        %4403 = vmatpush1.bf16.msra.mxu0 %v3734
        %4404 = vmatprep.subr.bf16.mxu0 %v3743
        %4405 = vmatpush1.bf16.msra.mxu0 %v3742
        %4406 = vmatprep.subr.bf16.mxu0 %v3751
        %4407 = vmatpush1.bf16.msra.mxu0 %v3750
        %4408 = vmatprep.subr.bf16.mxu0 %v3759
        %4409 = vmatpush1.bf16.msra.mxu0 %v3758
        %4410 = vmatprep.subr.bf16.mxu0 %v3767
        %4411 = vmatpush1.bf16.msra.mxu0 %v3766
        %4412 = vmatprep.subr.bf16.mxu0 %v3775
        %4413 = vmatpush1.bf16.msra.mxu0 %v3774
        %4414 = vmatprep.subr.bf16.mxu0 %v3783
        %4415 = vmatpush1.bf16.msra.mxu0 %v3782
        %4416 = vmatprep.subr.bf16.mxu0 %v3791
        %4417 = vmatpush1.bf16.msra.mxu0 %v3790
        %4418 = vmatprep.subr.bf16.mxu0 %v3799
        %4419 = vmatpush1.bf16.msra.mxu0 %v3798
        %4420 = vmatprep.subr.bf16.mxu0 %v3807
        %4421 = vmatpush1.bf16.msra.mxu0 %v3806
        %4422 = vmatprep.subr.bf16.mxu0 %v3815
        %4423 = vmatpush1.bf16.msra.mxu0 %v3814
        %4424 = vmatprep.subr.bf16.mxu0 %v3823
        %4425 = vmatpush1.bf16.msra.mxu0 %v3822
        %4426 = vmatprep.subr.bf16.mxu0 %v3831
        %4427 = vmatpush1.bf16.msra.mxu0 %v3830
        %4428 = vmatprep.subr.bf16.mxu0 %v3839
        %4429 = vmatpush1.bf16.msra.mxu0 %v3838
        %4430 = vmatprep.subr.bf16.mxu0 %v3847
        %4431 = vmatpush1.bf16.msra.mxu0 %v3846
        %4432 = vmatprep.mubr.bf16.mxu0 %v3717
        %4433 = vmatmul.mubr.bf16.gmra.mrb[0].mxu0 %v3716
        %v4434 = vpop.f32.mrb[0].mxu0
        %v4435 = vadd.f32 0.0, %v4434
        %v4436 = vpop.f32.mrb[0].mxu0
        %v4437 = vadd.f32 0.0, %v4436
        %v4438 = vpop.f32.mrb[0].mxu0
        %v4439 = vpop.f32.mrb[0].mxu0
        %4440 = vdwg.mxu0
        %4441 = vmatprep.subr.bf16.mxu0 %v3855
        %4442 = vmatpush1.bf16.msra.mxu0 %v3854
        %4443 = vmatprep.subr.bf16.mxu0 %v3863
        %4444 = vmatpush1.bf16.msra.mxu0 %v3862
        %4445 = vmatprep.subr.bf16.mxu0 %v3871
        %4446 = vmatpush1.bf16.msra.mxu0 %v3870
        %4447 = vmatprep.subr.bf16.mxu0 %v3879
        %4448 = vmatpush1.bf16.msra.mxu0 %v3878
        %4449 = vmatprep.subr.bf16.mxu0 %v3887
        %4450 = vmatpush1.bf16.msra.mxu0 %v3886
        %4451 = vmatprep.subr.bf16.mxu0 %v3895
        %4452 = vmatpush1.bf16.msra.mxu0 %v3894
        %4453 = vmatprep.subr.bf16.mxu0 %v3903
        %4454 = vmatpush1.bf16.msra.mxu0 %v3902
        %4455 = vmatprep.subr.bf16.mxu0 %v3911
        %4456 = vmatpush1.bf16.msra.mxu0 %v3910
        %4457 = vmatprep.subr.bf16.mxu0 %v3919
        %4458 = vmatpush1.bf16.msra.mxu0 %v3918
        %4459 = vmatprep.subr.bf16.mxu0 %v3927
        %4460 = vmatpush1.bf16.msra.mxu0 %v3926
        %4461 = vmatprep.subr.bf16.mxu0 %v3935
        %4462 = vmatpush1.bf16.msra.mxu0 %v3934
        %4463 = vmatprep.subr.bf16.mxu0 %v3943
        %4464 = vmatpush1.bf16.msra.mxu0 %v3942
        %4465 = vmatprep.subr.bf16.mxu0 %v3951
        %4466 = vmatpush1.bf16.msra.mxu0 %v3950
        %4467 = vmatprep.subr.bf16.mxu0 %v3959
        %4468 = vmatpush1.bf16.msra.mxu0 %v3958
        %4469 = vmatprep.subr.bf16.mxu0 %v3967
        %4470 = vmatpush1.bf16.msra.mxu0 %v3966
        %4471 = vmatprep.subr.bf16.mxu0 %v3975
        %4472 = vmatpush1.bf16.msra.mxu0 %v3974
        %4473 = vmatprep.mubr.bf16.mxu0 %v3719
        %4474 = vmatmul.mubr.bf16.gmra.mrb[0].mxu0 %v3718
        %v4475 = vpop.f32.mrb[0].mxu0
        %v4476 = vadd.f32 %v4435, %v4475
        %v4477 = vpop.f32.mrb[0].mxu0
        %v4478 = vadd.f32 %v4437, %v4477
        %v4479 = vpop.f32.mrb[0].mxu0
        %v4480 = vpop.f32.mrb[0].mxu0
        %4481 = vdwg.mxu0
        %4482 = vmatprep.subr.bf16.mxu0 %v3983
        %4483 = vmatpush1.bf16.msra.mxu0 %v3982
        %4484 = vmatprep.subr.bf16.mxu0 %v3991
        %4485 = vmatpush1.bf16.msra.mxu0 %v3990
        %4486 = vmatprep.subr.bf16.mxu0 %v3999
        %4487 = vmatpush1.bf16.msra.mxu0 %v3998
        %4488 = vmatprep.subr.bf16.mxu0 %v4007
        %4489 = vmatpush1.bf16.msra.mxu0 %v4006
        %4490 = vmatprep.subr.bf16.mxu0 %v4015
        %4491 = vmatpush1.bf16.msra.mxu0 %v4014
        %4492 = vmatprep.subr.bf16.mxu0 %v4023
        %4493 = vmatpush1.bf16.msra.mxu0 %v4022
        %4494 = vmatprep.subr.bf16.mxu0 %v4031
        %4495 = vmatpush1.bf16.msra.mxu0 %v4030
        %4496 = vmatprep.subr.bf16.mxu0 %v4039
        %4497 = vmatpush1.bf16.msra.mxu0 %v4038
        %4498 = vmatprep.subr.bf16.mxu0 %v4047
        %4499 = vmatpush1.bf16.msra.mxu0 %v4046
        %4500 = vmatprep.subr.bf16.mxu0 %v4055
        %4501 = vmatpush1.bf16.msra.mxu0 %v4054
        %4502 = vmatprep.subr.bf16.mxu0 %v4063
        %4503 = vmatpush1.bf16.msra.mxu0 %v4062
        %4504 = vmatprep.subr.bf16.mxu0 %v4071
        %4505 = vmatpush1.bf16.msra.mxu0 %v4070
        %4506 = vmatprep.subr.bf16.mxu0 %v4079
        %4507 = vmatpush1.bf16.msra.mxu0 %v4078
        %4508 = vmatprep.subr.bf16.mxu0 %v4087
        %4509 = vmatpush1.bf16.msra.mxu0 %v4086
        %4510 = vmatprep.subr.bf16.mxu0 %v4095
        %4511 = vmatpush1.bf16.msra.mxu0 %v4094
        %4512 = vmatprep.subr.bf16.mxu0 %v4103
        %4513 = vmatpush1.bf16.msra.mxu0 %v4102
        %4514 = vmatprep.mubr.bf16.mxu0 %v3721
        %4515 = vmatmul.mubr.bf16.gmra.mrb[0].mxu0 %v3720
        %v4516 = vpop.f32.mrb[0].mxu0
        %v4517 = vadd.f32 %v4476, %v4516
        %v4518 = vpop.f32.mrb[0].mxu0
        %v4519 = vadd.f32 %v4478, %v4518
        %v4520 = vpop.f32.mrb[0].mxu0
        %v4521 = vpop.f32.mrb[0].mxu0
        %4522 = vdwg.mxu0
        %4523 = vmatprep.subr.bf16.mxu0 %v4111
        %4524 = vmatpush1.bf16.msra.mxu0 %v4110
        %4525 = vmatprep.subr.bf16.mxu0 %v4119
        %4526 = vmatpush1.bf16.msra.mxu0 %v4118
        %4527 = vmatprep.subr.bf16.mxu0 %v4127
        %4528 = vmatpush1.bf16.msra.mxu0 %v4126
        %4529 = vmatprep.subr.bf16.mxu0 %v4135
        %4530 = vmatpush1.bf16.msra.mxu0 %v4134
        %4531 = vmatprep.subr.bf16.mxu0 %v4143
        %4532 = vmatpush1.bf16.msra.mxu0 %v4142
        %4533 = vmatprep.subr.bf16.mxu0 %v4151
        %4534 = vmatpush1.bf16.msra.mxu0 %v4150
        %4535 = vmatprep.subr.bf16.mxu0 %v4159
        %4536 = vmatpush1.bf16.msra.mxu0 %v4158
        %4537 = vmatprep.subr.bf16.mxu0 %v4167
        %4538 = vmatpush1.bf16.msra.mxu0 %v4166
        %4539 = vmatprep.subr.bf16.mxu0 %v4175
        %4540 = vmatpush1.bf16.msra.mxu0 %v4174
        %4541 = vmatprep.subr.bf16.mxu0 %v4183
        %4542 = vmatpush1.bf16.msra.mxu0 %v4182
        %4543 = vmatprep.subr.bf16.mxu0 %v4191
        %4544 = vmatpush1.bf16.msra.mxu0 %v4190
        %4545 = vmatprep.subr.bf16.mxu0 %v4199
        %4546 = vmatpush1.bf16.msra.mxu0 %v4198
        %4547 = vmatprep.subr.bf16.mxu0 %v4207
        %4548 = vmatpush1.bf16.msra.mxu0 %v4206
        %4549 = vmatprep.subr.bf16.mxu0 %v4215
        %4550 = vmatpush1.bf16.msra.mxu0 %v4214
        %4551 = vmatprep.subr.bf16.mxu0 %v4223
        %4552 = vmatpush1.bf16.msra.mxu0 %v4222
        %4553 = vmatprep.subr.bf16.mxu0 %v4231
        %4554 = vmatpush1.bf16.msra.mxu0 %v4230
        %4555 = vmatprep.mubr.bf16.mxu0 %v3723
        %4556 = vmatmul.mubr.bf16.gmra.mrb[0].mxu0 %v3722
        %v4557 = vpop.f32.mrb[0].mxu0
        %v4558 = vadd.f32 %v4517, %v4557
        %v4559 = vpop.f32.mrb[0].mxu0
        %v4560 = vadd.f32 %v4519, %v4559
        %v4561 = vpop.f32.mrb[0].mxu0
        %v4562 = vpop.f32.mrb[0].mxu0
        %4563 = vdwg.mxu0
        %4564 = vmatprep.subr.bf16.mxu0 %v3729
        %4565 = vmatpush1.bf16.msra.mxu0 %v3728
        %4566 = vmatprep.subr.bf16.mxu0 %v3737
        %4567 = vmatpush1.bf16.msra.mxu0 %v3736
        %4568 = vmatprep.subr.bf16.mxu0 %v3745
        %4569 = vmatpush1.bf16.msra.mxu0 %v3744
        %4570 = vmatprep.subr.bf16.mxu0 %v3753
        %4571 = vmatpush1.bf16.msra.mxu0 %v3752
        %4572 = vmatprep.subr.bf16.mxu0 %v3761
        %4573 = vmatpush1.bf16.msra.mxu0 %v3760
        %4574 = vmatprep.subr.bf16.mxu0 %v3769
        %4575 = vmatpush1.bf16.msra.mxu0 %v3768
        %4576 = vmatprep.subr.bf16.mxu0 %v3777
        %4577 = vmatpush1.bf16.msra.mxu0 %v3776
        %4578 = vmatprep.subr.bf16.mxu0 %v3785
        %4579 = vmatpush1.bf16.msra.mxu0 %v3784
        %4580 = vmatprep.subr.bf16.mxu0 %v3793
        %4581 = vmatpush1.bf16.msra.mxu0 %v3792
        %4582 = vmatprep.subr.bf16.mxu0 %v3801
        %4583 = vmatpush1.bf16.msra.mxu0 %v3800
        %4584 = vmatprep.subr.bf16.mxu0 %v3809
        %4585 = vmatpush1.bf16.msra.mxu0 %v3808
        %4586 = vmatprep.subr.bf16.mxu0 %v3817
        %4587 = vmatpush1.bf16.msra.mxu0 %v3816
        %4588 = vmatprep.subr.bf16.mxu0 %v3825
        %4589 = vmatpush1.bf16.msra.mxu0 %v3824
        %4590 = vmatprep.subr.bf16.mxu0 %v3833
        %4591 = vmatpush1.bf16.msra.mxu0 %v3832
        %4592 = vmatprep.subr.bf16.mxu0 %v3841
        %4593 = vmatpush1.bf16.msra.mxu0 %v3840
        %4594 = vmatprep.subr.bf16.mxu0 %v3849
        %4595 = vmatpush1.bf16.msra.mxu0 %v3848
        %4596 = vmatprep.mubr.bf16.mxu0 %v3717
        %4597 = vmatmul.mubr.bf16.gmra.mrb[0].mxu0 %v3716
        %v4598 = vpop.f32.mrb[0].mxu0
        %v4599 = vadd.f32 0.0, %v4598
        %v4600 = vpop.f32.mrb[0].mxu0
        %v4601 = vadd.f32 0.0, %v4600
        %v4602 = vpop.f32.mrb[0].mxu0
        %v4603 = vpop.f32.mrb[0].mxu0
        %4604 = vdwg.mxu0
        %4605 = vmatprep.subr.bf16.mxu0 %v3857
        %4606 = vmatpush1.bf16.msra.mxu0 %v3856
        %4607 = vmatprep.subr.bf16.mxu0 %v3865
        %4608 = vmatpush1.bf16.msra.mxu0 %v3864
        %4609 = vmatprep.subr.bf16.mxu0 %v3873
        %4610 = vmatpush1.bf16.msra.mxu0 %v3872
        %4611 = vmatprep.subr.bf16.mxu0 %v3881
        %4612 = vmatpush1.bf16.msra.mxu0 %v3880
        %4613 = vmatprep.subr.bf16.mxu0 %v3889
        %4614 = vmatpush1.bf16.msra.mxu0 %v3888
        %4615 = vmatprep.subr.bf16.mxu0 %v3897
        %4616 = vmatpush1.bf16.msra.mxu0 %v3896
        %4617 = vmatprep.subr.bf16.mxu0 %v3905
        %4618 = vmatpush1.bf16.msra.mxu0 %v3904
        %4619 = vmatprep.subr.bf16.mxu0 %v3913
        %4620 = vmatpush1.bf16.msra.mxu0 %v3912
        %4621 = vmatprep.subr.bf16.mxu0 %v3921
        %4622 = vmatpush1.bf16.msra.mxu0 %v3920
        %4623 = vmatprep.subr.bf16.mxu0 %v3929
        %4624 = vmatpush1.bf16.msra.mxu0 %v3928
        %4625 = vmatprep.subr.bf16.mxu0 %v3937
        %4626 = vmatpush1.bf16.msra.mxu0 %v3936
        %4627 = vmatprep.subr.bf16.mxu0 %v3945
        %4628 = vmatpush1.bf16.msra.mxu0 %v3944
        %4629 = vmatprep.subr.bf16.mxu0 %v3953
        %4630 = vmatpush1.bf16.msra.mxu0 %v3952
        %4631 = vmatprep.subr.bf16.mxu0 %v3961
        %4632 = vmatpush1.bf16.msra.mxu0 %v3960
        %4633 = vmatprep.subr.bf16.mxu0 %v3969
        %4634 = vmatpush1.bf16.msra.mxu0 %v3968
        %4635 = vmatprep.subr.bf16.mxu0 %v3977
        %4636 = vmatpush1.bf16.msra.mxu0 %v3976
        %4637 = vmatprep.mubr.bf16.mxu0 %v3719
        %4638 = vmatmul.mubr.bf16.gmra.mrb[0].mxu0 %v3718
        %v4639 = vpop.f32.mrb[0].mxu0
        %v4640 = vadd.f32 %v4599, %v4639
        %v4641 = vpop.f32.mrb[0].mxu0
        %v4642 = vadd.f32 %v4601, %v4641
        %v4643 = vpop.f32.mrb[0].mxu0
        %v4644 = vpop.f32.mrb[0].mxu0
        %4645 = vdwg.mxu0
        %4646 = vmatprep.subr.bf16.mxu0 %v3985
        %4647 = vmatpush1.bf16.msra.mxu0 %v3984
        %4648 = vmatprep.subr.bf16.mxu0 %v3993
        %4649 = vmatpush1.bf16.msra.mxu0 %v3992
        %4650 = vmatprep.subr.bf16.mxu0 %v4001
        %4651 = vmatpush1.bf16.msra.mxu0 %v4000
        %4652 = vmatprep.subr.bf16.mxu0 %v4009
        %4653 = vmatpush1.bf16.msra.mxu0 %v4008
        %4654 = vmatprep.subr.bf16.mxu0 %v4017
        %4655 = vmatpush1.bf16.msra.mxu0 %v4016
        %4656 = vmatprep.subr.bf16.mxu0 %v4025
        %4657 = vmatpush1.bf16.msra.mxu0 %v4024
        %4658 = vmatprep.subr.bf16.mxu0 %v4033
        %4659 = vmatpush1.bf16.msra.mxu0 %v4032
        %4660 = vmatprep.subr.bf16.mxu0 %v4041
        %4661 = vmatpush1.bf16.msra.mxu0 %v4040
        %4662 = vmatprep.subr.bf16.mxu0 %v4049
        %4663 = vmatpush1.bf16.msra.mxu0 %v4048
        %4664 = vmatprep.subr.bf16.mxu0 %v4057
        %4665 = vmatpush1.bf16.msra.mxu0 %v4056
        %4666 = vmatprep.subr.bf16.mxu0 %v4065
        %4667 = vmatpush1.bf16.msra.mxu0 %v4064
        %4668 = vmatprep.subr.bf16.mxu0 %v4073
        %4669 = vmatpush1.bf16.msra.mxu0 %v4072
        %4670 = vmatprep.subr.bf16.mxu0 %v4081
        %4671 = vmatpush1.bf16.msra.mxu0 %v4080
        %4672 = vmatprep.subr.bf16.mxu0 %v4089
        %4673 = vmatpush1.bf16.msra.mxu0 %v4088
        %4674 = vmatprep.subr.bf16.mxu0 %v4097
        %4675 = vmatpush1.bf16.msra.mxu0 %v4096
        %4676 = vmatprep.subr.bf16.mxu0 %v4105
        %4677 = vmatpush1.bf16.msra.mxu0 %v4104
        %4678 = vmatprep.mubr.bf16.mxu0 %v3721
        %4679 = vmatmul.mubr.bf16.gmra.mrb[0].mxu0 %v3720
        %v4680 = vpop.f32.mrb[0].mxu0
        %v4681 = vadd.f32 %v4640, %v4680
        %v4682 = vpop.f32.mrb[0].mxu0
        %v4683 = vadd.f32 %v4642, %v4682
        %v4684 = vpop.f32.mrb[0].mxu0
        %v4685 = vpop.f32.mrb[0].mxu0
        %4686 = vdwg.mxu0
        %4687 = vmatprep.subr.bf16.mxu0 %v4113
        %4688 = vmatpush1.bf16.msra.mxu0 %v4112
        %4689 = vmatprep.subr.bf16.mxu0 %v4121
        %4690 = vmatpush1.bf16.msra.mxu0 %v4120
        %4691 = vmatprep.subr.bf16.mxu0 %v4129
        %4692 = vmatpush1.bf16.msra.mxu0 %v4128
        %4693 = vmatprep.subr.bf16.mxu0 %v4137
        %4694 = vmatpush1.bf16.msra.mxu0 %v4136
        %4695 = vmatprep.subr.bf16.mxu0 %v4145
        %4696 = vmatpush1.bf16.msra.mxu0 %v4144
        %4697 = vmatprep.subr.bf16.mxu0 %v4153
        %4698 = vmatpush1.bf16.msra.mxu0 %v4152
        %4699 = vmatprep.subr.bf16.mxu0 %v4161
        %4700 = vmatpush1.bf16.msra.mxu0 %v4160
        %4701 = vmatprep.subr.bf16.mxu0 %v4169
        %4702 = vmatpush1.bf16.msra.mxu0 %v4168
        %4703 = vmatprep.subr.bf16.mxu0 %v4177
        %4704 = vmatpush1.bf16.msra.mxu0 %v4176
        %4705 = vmatprep.subr.bf16.mxu0 %v4185
        %4706 = vmatpush1.bf16.msra.mxu0 %v4184
        %4707 = vmatprep.subr.bf16.mxu0 %v4193
        %4708 = vmatpush1.bf16.msra.mxu0 %v4192
        %4709 = vmatprep.subr.bf16.mxu0 %v4201
        %4710 = vmatpush1.bf16.msra.mxu0 %v4200
        %4711 = vmatprep.subr.bf16.mxu0 %v4209
        %4712 = vmatpush1.bf16.msra.mxu0 %v4208
        %4713 = vmatprep.subr.bf16.mxu0 %v4217
        %4714 = vmatpush1.bf16.msra.mxu0 %v4216
        %4715 = vmatprep.subr.bf16.mxu0 %v4225
        %4716 = vmatpush1.bf16.msra.mxu0 %v4224
        %4717 = vmatprep.subr.bf16.mxu0 %v4233
        %4718 = vmatpush1.bf16.msra.mxu0 %v4232
        %4719 = vmatprep.mubr.bf16.mxu0 %v3723
        %4720 = vmatmul.mubr.bf16.gmra.mrb[0].mxu0 %v3722
        %v4721 = vpop.f32.mrb[0].mxu0
        %v4722 = vadd.f32 %v4681, %v4721
        %v4723 = vpop.f32.mrb[0].mxu0
        %v4724 = vadd.f32 %v4683, %v4723
        %v4725 = vpop.f32.mrb[0].mxu0
        %v4726 = vpop.f32.mrb[0].mxu0
        %4727 = vdwg.mxu0
        %4728 = vmatprep.subr.bf16.mxu0 %v3731
        %4729 = vmatpush1.bf16.msra.mxu0 %v3730
        %4730 = vmatprep.subr.bf16.mxu0 %v3739
        %4731 = vmatpush1.bf16.msra.mxu0 %v3738
        %4732 = vmatprep.subr.bf16.mxu0 %v3747
        %4733 = vmatpush1.bf16.msra.mxu0 %v3746
        %4734 = vmatprep.subr.bf16.mxu0 %v3755
        %4735 = vmatpush1.bf16.msra.mxu0 %v3754
        %4736 = vmatprep.subr.bf16.mxu0 %v3763
        %4737 = vmatpush1.bf16.msra.mxu0 %v3762
        %4738 = vmatprep.subr.bf16.mxu0 %v3771
        %4739 = vmatpush1.bf16.msra.mxu0 %v3770
        %4740 = vmatprep.subr.bf16.mxu0 %v3779
        %4741 = vmatpush1.bf16.msra.mxu0 %v3778
        %4742 = vmatprep.subr.bf16.mxu0 %v3787
        %4743 = vmatpush1.bf16.msra.mxu0 %v3786
        %4744 = vmatprep.subr.bf16.mxu0 %v3795
        %4745 = vmatpush1.bf16.msra.mxu0 %v3794
        %4746 = vmatprep.subr.bf16.mxu0 %v3803
        %4747 = vmatpush1.bf16.msra.mxu0 %v3802
        %4748 = vmatprep.subr.bf16.mxu0 %v3811
        %4749 = vmatpush1.bf16.msra.mxu0 %v3810
        %4750 = vmatprep.subr.bf16.mxu0 %v3819
        %4751 = vmatpush1.bf16.msra.mxu0 %v3818
        %4752 = vmatprep.subr.bf16.mxu0 %v3827
        %4753 = vmatpush1.bf16.msra.mxu0 %v3826
        %4754 = vmatprep.subr.bf16.mxu0 %v3835
        %4755 = vmatpush1.bf16.msra.mxu0 %v3834
        %4756 = vmatprep.subr.bf16.mxu0 %v3843
        %4757 = vmatpush1.bf16.msra.mxu0 %v3842
        %4758 = vmatprep.subr.bf16.mxu0 %v3851
        %4759 = vmatpush1.bf16.msra.mxu0 %v3850
        %4760 = vmatprep.mubr.bf16.mxu0 %v3717
        %4761 = vmatmul.mubr.bf16.gmra.mrb[0].mxu0 %v3716
        %v4762 = vpop.f32.mrb[0].mxu0
        %v4763 = vadd.f32 0.0, %v4762
        %v4764 = vpop.f32.mrb[0].mxu0
        %v4765 = vadd.f32 0.0, %v4764
        %v4766 = vpop.f32.mrb[0].mxu0
        %v4767 = vpop.f32.mrb[0].mxu0
        %4768 = vdwg.mxu0
        %4769 = vmatprep.subr.bf16.mxu0 %v3859
        %4770 = vmatpush1.bf16.msra.mxu0 %v3858
        %4771 = vmatprep.subr.bf16.mxu0 %v3867
        %4772 = vmatpush1.bf16.msra.mxu0 %v3866
        %4773 = vmatprep.subr.bf16.mxu0 %v3875
        %4774 = vmatpush1.bf16.msra.mxu0 %v3874
        %4775 = vmatprep.subr.bf16.mxu0 %v3883
        %4776 = vmatpush1.bf16.msra.mxu0 %v3882
        %4777 = vmatprep.subr.bf16.mxu0 %v3891
        %4778 = vmatpush1.bf16.msra.mxu0 %v3890
        %4779 = vmatprep.subr.bf16.mxu0 %v3899
        %4780 = vmatpush1.bf16.msra.mxu0 %v3898
        %4781 = vmatprep.subr.bf16.mxu0 %v3907
        %4782 = vmatpush1.bf16.msra.mxu0 %v3906
        %4783 = vmatprep.subr.bf16.mxu0 %v3915
        %4784 = vmatpush1.bf16.msra.mxu0 %v3914
        %4785 = vmatprep.subr.bf16.mxu0 %v3923
        %4786 = vmatpush1.bf16.msra.mxu0 %v3922
        %4787 = vmatprep.subr.bf16.mxu0 %v3931
        %4788 = vmatpush1.bf16.msra.mxu0 %v3930
        %4789 = vmatprep.subr.bf16.mxu0 %v3939
        %4790 = vmatpush1.bf16.msra.mxu0 %v3938
        %4791 = vmatprep.subr.bf16.mxu0 %v3947
        %4792 = vmatpush1.bf16.msra.mxu0 %v3946
        %4793 = vmatprep.subr.bf16.mxu0 %v3955
        %4794 = vmatpush1.bf16.msra.mxu0 %v3954
        %4795 = vmatprep.subr.bf16.mxu0 %v3963
        %4796 = vmatpush1.bf16.msra.mxu0 %v3962
        %4797 = vmatprep.subr.bf16.mxu0 %v3971
        %4798 = vmatpush1.bf16.msra.mxu0 %v3970
        %4799 = vmatprep.subr.bf16.mxu0 %v3979
        %4800 = vmatpush1.bf16.msra.mxu0 %v3978
        %4801 = vmatprep.mubr.bf16.mxu0 %v3719
        %4802 = vmatmul.mubr.bf16.gmra.mrb[0].mxu0 %v3718
        %v4803 = vpop.f32.mrb[0].mxu0
        %v4804 = vadd.f32 %v4763, %v4803
        %v4805 = vpop.f32.mrb[0].mxu0
        %v4806 = vadd.f32 %v4765, %v4805
        %v4807 = vpop.f32.mrb[0].mxu0
        %v4808 = vpop.f32.mrb[0].mxu0
        %4809 = vdwg.mxu0
        %4810 = vmatprep.subr.bf16.mxu0 %v3987
        %4811 = vmatpush1.bf16.msra.mxu0 %v3986
        %4812 = vmatprep.subr.bf16.mxu0 %v3995
        %4813 = vmatpush1.bf16.msra.mxu0 %v3994
        %4814 = vmatprep.subr.bf16.mxu0 %v4003
        %4815 = vmatpush1.bf16.msra.mxu0 %v4002
        %4816 = vmatprep.subr.bf16.mxu0 %v4011
        %4817 = vmatpush1.bf16.msra.mxu0 %v4010
        %4818 = vmatprep.subr.bf16.mxu0 %v4019
        %4819 = vmatpush1.bf16.msra.mxu0 %v4018
        %4820 = vmatprep.subr.bf16.mxu0 %v4027
        %4821 = vmatpush1.bf16.msra.mxu0 %v4026
        %4822 = vmatprep.subr.bf16.mxu0 %v4035
        %4823 = vmatpush1.bf16.msra.mxu0 %v4034
        %4824 = vmatprep.subr.bf16.mxu0 %v4043
        %4825 = vmatpush1.bf16.msra.mxu0 %v4042
        %4826 = vmatprep.subr.bf16.mxu0 %v4051
        %4827 = vmatpush1.bf16.msra.mxu0 %v4050
        %4828 = vmatprep.subr.bf16.mxu0 %v4059
        %4829 = vmatpush1.bf16.msra.mxu0 %v4058
        %4830 = vmatprep.subr.bf16.mxu0 %v4067
        %4831 = vmatpush1.bf16.msra.mxu0 %v4066
        %4832 = vmatprep.subr.bf16.mxu0 %v4075
        %4833 = vmatpush1.bf16.msra.mxu0 %v4074
        %4834 = vmatprep.subr.bf16.mxu0 %v4083
        %4835 = vmatpush1.bf16.msra.mxu0 %v4082
        %4836 = vmatprep.subr.bf16.mxu0 %v4091
        %4837 = vmatpush1.bf16.msra.mxu0 %v4090
        %4838 = vmatprep.subr.bf16.mxu0 %v4099
        %4839 = vmatpush1.bf16.msra.mxu0 %v4098
        %4840 = vmatprep.subr.bf16.mxu0 %v4107
        %4841 = vmatpush1.bf16.msra.mxu0 %v4106
        %4842 = vmatprep.mubr.bf16.mxu0 %v3721
        %4843 = vmatmul.mubr.bf16.gmra.mrb[0].mxu0 %v3720
        %v4844 = vpop.f32.mrb[0].mxu0
        %v4845 = vadd.f32 %v4804, %v4844
        %v4846 = vpop.f32.mrb[0].mxu0
        %v4847 = vadd.f32 %v4806, %v4846
        %v4848 = vpop.f32.mrb[0].mxu0
        %v4849 = vpop.f32.mrb[0].mxu0
        %4850 = vdwg.mxu0
        %4851 = vmatprep.subr.bf16.mxu0 %v4115
        %4852 = vmatpush1.bf16.msra.mxu0 %v4114
        %4853 = vmatprep.subr.bf16.mxu0 %v4123
        %4854 = vmatpush1.bf16.msra.mxu0 %v4122
        %4855 = vmatprep.subr.bf16.mxu0 %v4131
        %4856 = vmatpush1.bf16.msra.mxu0 %v4130
        %4857 = vmatprep.subr.bf16.mxu0 %v4139
        %4858 = vmatpush1.bf16.msra.mxu0 %v4138
        %4859 = vmatprep.subr.bf16.mxu0 %v4147
        %4860 = vmatpush1.bf16.msra.mxu0 %v4146
        %4861 = vmatprep.subr.bf16.mxu0 %v4155
        %4862 = vmatpush1.bf16.msra.mxu0 %v4154
        %4863 = vmatprep.subr.bf16.mxu0 %v4163
        %4864 = vmatpush1.bf16.msra.mxu0 %v4162
        %4865 = vmatprep.subr.bf16.mxu0 %v4171
        %4866 = vmatpush1.bf16.msra.mxu0 %v4170
        %4867 = vmatprep.subr.bf16.mxu0 %v4179
        %4868 = vmatpush1.bf16.msra.mxu0 %v4178
        %4869 = vmatprep.subr.bf16.mxu0 %v4187
        %4870 = vmatpush1.bf16.msra.mxu0 %v4186
        %4871 = vmatprep.subr.bf16.mxu0 %v4195
        %4872 = vmatpush1.bf16.msra.mxu0 %v4194
        %4873 = vmatprep.subr.bf16.mxu0 %v4203
        %4874 = vmatpush1.bf16.msra.mxu0 %v4202
        %4875 = vmatprep.subr.bf16.mxu0 %v4211
        %4876 = vmatpush1.bf16.msra.mxu0 %v4210
        %4877 = vmatprep.subr.bf16.mxu0 %v4219
        %4878 = vmatpush1.bf16.msra.mxu0 %v4218
        %4879 = vmatprep.subr.bf16.mxu0 %v4227
        %4880 = vmatpush1.bf16.msra.mxu0 %v4226
        %4881 = vmatprep.subr.bf16.mxu0 %v4235
        %4882 = vmatpush1.bf16.msra.mxu0 %v4234
        %4883 = vmatprep.mubr.bf16.mxu0 %v3723
        %4884 = vmatmul.mubr.bf16.gmra.mrb[0].mxu0 %v3722
        %v4885 = vpop.f32.mrb[0].mxu0
        %v4886 = vadd.f32 %v4845, %v4885
        %v4887 = vpop.f32.mrb[0].mxu0
        %v4888 = vadd.f32 %v4847, %v4887
        %v4889 = vpop.f32.mrb[0].mxu0
        %v4890 = vpop.f32.mrb[0].mxu0
        %4891 = vdwg.mxu0
        %v4892 = vlaneseq
        %v4893 = vshrl.u32 %v4892, 7
        %v4894 = vsub.s32 2, %v4893
        %v4895 = vrot.slane %v461, %v4894
        %v4896 = vlaneseq
        %v4897 = vshrl.u32 %v4896, 7
        %v4898 = vsub.s32 2, %v4897
        %v4899 = vrot.slane %v462, %v4898
        %v4900 = vlaneseq
        %v4901 = vshrl.u32 %v4900, 7
        %v4902 = vsub.s32 2, %v4901
        %v4903 = vrot.slane %v463, %v4902
        %v4904 = vlaneseq
        %v4905 = vshrl.u32 %v4904, 7
        %v4906 = vsub.s32 2, %v4905
        %v4907 = vrot.slane %v464, %v4906
        %v4908 = vlaneseq
        %v4909 = vshrl.u32 %v4908, 7
        %v4910 = vsub.s32 2, %v4909
        %v4911 = vrot.slane %v465, %v4910
        %v4912 = vlaneseq
        %v4913 = vshrl.u32 %v4912, 7
        %v4914 = vsub.s32 2, %v4913
        %v4915 = vrot.slane %v466, %v4914
        %v4916 = vlaneseq
        %v4917 = vshrl.u32 %v4916, 7
        %v4918 = vsub.s32 2, %v4917
        %v4919 = vrot.slane %v467, %v4918
        %v4920 = vlaneseq
        %v4921 = vshrl.u32 %v4920, 7
        %v4922 = vsub.s32 2, %v4921
        %v4923 = vrot.slane %v468, %v4922
        %v4924 = vmul.f32 %v4394, %v4895
        %v4925 = vmul.f32 %v4396, %v4899
        %v4926 = vmul.f32 %v4558, %v4903
        %v4927 = vmul.f32 %v4560, %v4907
        %v4928 = vmul.f32 %v4722, %v4911
        %v4929 = vmul.f32 %v4724, %v4915
        %v4930 = vmul.f32 %v4886, %v4919
        %v4931 = vmul.f32 %v4888, %v4923
        %v4932 = vlaneseq
        %v4933 = vshrl.u32 %v4932, 7
        %v4934 = vsub.s32 6, %v4933
        %v4935 = vrot.slane %v461, %v4934
        %v4936 = vlaneseq
        %v4937 = vshrl.u32 %v4936, 7
        %v4938 = vsub.s32 6, %v4937
        %v4939 = vrot.slane %v462, %v4938
        %v4940 = vlaneseq
        %v4941 = vshrl.u32 %v4940, 7
        %v4942 = vsub.s32 6, %v4941
        %v4943 = vrot.slane %v463, %v4942
        %v4944 = vlaneseq
        %v4945 = vshrl.u32 %v4944, 7
        %v4946 = vsub.s32 6, %v4945
        %v4947 = vrot.slane %v464, %v4946
        %v4948 = vlaneseq
        %v4949 = vshrl.u32 %v4948, 7
        %v4950 = vsub.s32 6, %v4949
        %v4951 = vrot.slane %v465, %v4950
        %v4952 = vlaneseq
        %v4953 = vshrl.u32 %v4952, 7
        %v4954 = vsub.s32 6, %v4953
        %v4955 = vrot.slane %v466, %v4954
        %v4956 = vlaneseq
        %v4957 = vshrl.u32 %v4956, 7
        %v4958 = vsub.s32 6, %v4957
        %v4959 = vrot.slane %v467, %v4958
        %v4960 = vlaneseq
        %v4961 = vshrl.u32 %v4960, 7
        %v4962 = vsub.s32 6, %v4961
        %v4963 = vrot.slane %v468, %v4962
        %v4964 = vadd.f32 %v4924, %v4935
        %v4965 = vadd.f32 %v4925, %v4939
        %v4966 = vadd.f32 %v4926, %v4943
        %v4967 = vadd.f32 %v4927, %v4947
        %v4968 = vadd.f32 %v4928, %v4951
        %v4969 = vadd.f32 %v4929, %v4955
        %v4970 = vadd.f32 %v4930, %v4959
        %v4971 = vadd.f32 %v4931, %v4963
        %v4972 = vmax.f32 %v4964, 0.0
        %v4973 = vmax.f32 %v4965, 0.0
        %v4974 = vmax.f32 %v4966, 0.0
        %v4975 = vmax.f32 %v4967, 0.0
        %v4976 = vmax.f32 %v4968, 0.0
        %v4977 = vmax.f32 %v4969, 0.0
        %v4978 = vmax.f32 %v4970, 0.0
        %v4979 = vmax.f32 %v4971, 0.0
        %v4980 = vld [vmem:[%s393] sm:$0xff]
        %v4981 = vld [vmem:[%s393 + $0x8] sm:$0xff]
        %v4982 = vld [vmem:[%s393 + $0x10] sm:$0xff]
        %v4983 = vld [vmem:[%s393 + $0x18] sm:$0xff]
        %v4984 = vld [vmem:[%s393 + $0x20] sm:$0xff]
        %v4985 = vld [vmem:[%s393 + $0x28] sm:$0xff]
        %v4986 = vld [vmem:[%s393 + $0x30] sm:$0xff]
        %v4987 = vld [vmem:[%s393 + $0x38] sm:$0xff]
        %v4988 = vld [vmem:[%s393 + $0x40] sm:$0xff]
        %v4989 = vld [vmem:[%s393 + $0x48] sm:$0xff]
        %v4990 = vld [vmem:[%s393 + $0x50] sm:$0xff]
        %v4991 = vld [vmem:[%s393 + $0x58] sm:$0xff]
        %v4992 = vld [vmem:[%s393 + $0x60] sm:$0xff]
        %v4993 = vld [vmem:[%s393 + $0x68] sm:$0xff]
        %v4994 = vld [vmem:[%s393 + $0x70] sm:$0xff]
        %v4995 = vld [vmem:[%s393 + $0x78] sm:$0xff]
        %v4996 = vld [vmem:[%s393 + $0x80] sm:$0xff]
        %v4997 = vld [vmem:[%s393 + $0x88] sm:$0xff]
        %v4998 = vld [vmem:[%s393 + $0x90] sm:$0xff]
        %v4999 = vld [vmem:[%s393 + $0x98] sm:$0xff]
        %v5000 = vld [vmem:[%s393 + $0xa0] sm:$0xff]
        %v5001 = vld [vmem:[%s393 + $0xa8] sm:$0xff]
        %v5002 = vld [vmem:[%s393 + $0xb0] sm:$0xff]
        %v5003 = vld [vmem:[%s393 + $0xb8] sm:$0xff]
        %v5004 = vld [vmem:[%s393 + $0xc0] sm:$0xff]
        %v5005 = vld [vmem:[%s393 + $0xc8] sm:$0xff]
        %v5006 = vld [vmem:[%s393 + $0xd0] sm:$0xff]
        %v5007 = vld [vmem:[%s393 + $0xd8] sm:$0xff]
        %v5008 = vld [vmem:[%s393 + $0xe0] sm:$0xff]
        %v5009 = vld [vmem:[%s393 + $0xe8] sm:$0xff]
        %v5010 = vld [vmem:[%s393 + $0xf0] sm:$0xff]
        %v5011 = vld [vmem:[%s393 + $0xf8] sm:$0xff]
        %v5012 = vld [vmem:[%s393 + $0x100] sm:$0xff]
        %v5013 = vld [vmem:[%s393 + $0x108] sm:$0xff]
        %v5014 = vld [vmem:[%s393 + $0x110] sm:$0xff]
        %v5015 = vld [vmem:[%s393 + $0x118] sm:$0xff]
        %v5016 = vld [vmem:[%s393 + $0x120] sm:$0xff]
        %v5017 = vld [vmem:[%s393 + $0x128] sm:$0xff]
        %v5018 = vld [vmem:[%s393 + $0x130] sm:$0xff]
        %v5019 = vld [vmem:[%s393 + $0x138] sm:$0xff]
        %v5020 = vld [vmem:[%s393 + $0x140] sm:$0xff]
        %v5021 = vld [vmem:[%s393 + $0x148] sm:$0xff]
        %v5022 = vld [vmem:[%s393 + $0x150] sm:$0xff]
        %v5023 = vld [vmem:[%s393 + $0x158] sm:$0xff]
        %v5024 = vld [vmem:[%s393 + $0x160] sm:$0xff]
        %v5025 = vld [vmem:[%s393 + $0x168] sm:$0xff]
        %v5026 = vld [vmem:[%s393 + $0x170] sm:$0xff]
        %v5027 = vld [vmem:[%s393 + $0x178] sm:$0xff]
        %v5028 = vld [vmem:[%s393 + $0x180] sm:$0xff]
        %v5029 = vld [vmem:[%s393 + $0x188] sm:$0xff]
        %v5030 = vld [vmem:[%s393 + $0x190] sm:$0xff]
        %v5031 = vld [vmem:[%s393 + $0x198] sm:$0xff]
        %v5032 = vld [vmem:[%s393 + $0x1a0] sm:$0xff]
        %v5033 = vld [vmem:[%s393 + $0x1a8] sm:$0xff]
        %v5034 = vld [vmem:[%s393 + $0x1b0] sm:$0xff]
        %v5035 = vld [vmem:[%s393 + $0x1b8] sm:$0xff]
        %v5036 = vld [vmem:[%s393 + $0x1c0] sm:$0xff]
        %v5037 = vld [vmem:[%s393 + $0x1c8] sm:$0xff]
        %v5038 = vld [vmem:[%s393 + $0x1d0] sm:$0xff]
        %v5039 = vld [vmem:[%s393 + $0x1d8] sm:$0xff]
        %v5040 = vld [vmem:[%s393 + $0x1e0] sm:$0xff]
        %v5041 = vld [vmem:[%s393 + $0x1e8] sm:$0xff]
        %v5042 = vld [vmem:[%s393 + $0x1f0] sm:$0xff]
        %v5043 = vld [vmem:[%s393 + $0x1f8] sm:$0xff]
        %v5044 = vld [vmem:[%s393 + $0x200] sm:$0xff]
        %v5045 = vld [vmem:[%s393 + $0x208] sm:$0xff]
        %v5046 = vld [vmem:[%s393 + $0x210] sm:$0xff]
        %v5047 = vld [vmem:[%s393 + $0x218] sm:$0xff]
        %v5048 = vld [vmem:[%s393 + $0x220] sm:$0xff]
        %v5049 = vld [vmem:[%s393 + $0x228] sm:$0xff]
        %v5050 = vld [vmem:[%s393 + $0x230] sm:$0xff]
        %v5051 = vld [vmem:[%s393 + $0x238] sm:$0xff]
        %v5052 = vld [vmem:[%s393 + $0x240] sm:$0xff]
        %v5053 = vld [vmem:[%s393 + $0x248] sm:$0xff]
        %v5054 = vld [vmem:[%s393 + $0x250] sm:$0xff]
        %v5055 = vld [vmem:[%s393 + $0x258] sm:$0xff]
        %v5056 = vld [vmem:[%s393 + $0x260] sm:$0xff]
        %v5057 = vld [vmem:[%s393 + $0x268] sm:$0xff]
        %v5058 = vld [vmem:[%s393 + $0x270] sm:$0xff]
        %v5059 = vld [vmem:[%s393 + $0x278] sm:$0xff]
        %v5060 = vld [vmem:[%s393 + $0x280] sm:$0xff]
        %v5061 = vld [vmem:[%s393 + $0x288] sm:$0xff]
        %v5062 = vld [vmem:[%s393 + $0x290] sm:$0xff]
        %v5063 = vld [vmem:[%s393 + $0x298] sm:$0xff]
        %v5064 = vld [vmem:[%s393 + $0x2a0] sm:$0xff]
        %v5065 = vld [vmem:[%s393 + $0x2a8] sm:$0xff]
        %v5066 = vld [vmem:[%s393 + $0x2b0] sm:$0xff]
        %v5067 = vld [vmem:[%s393 + $0x2b8] sm:$0xff]
        %v5068 = vld [vmem:[%s393 + $0x2c0] sm:$0xff]
        %v5069 = vld [vmem:[%s393 + $0x2c8] sm:$0xff]
        %v5070 = vld [vmem:[%s393 + $0x2d0] sm:$0xff]
        %v5071 = vld [vmem:[%s393 + $0x2d8] sm:$0xff]
        %v5072 = vld [vmem:[%s393 + $0x2e0] sm:$0xff]
        %v5073 = vld [vmem:[%s393 + $0x2e8] sm:$0xff]
        %v5074 = vld [vmem:[%s393 + $0x2f0] sm:$0xff]
        %v5075 = vld [vmem:[%s393 + $0x2f8] sm:$0xff]
        %v5076 = vld [vmem:[%s393 + $0x300] sm:$0xff]
        %v5077 = vld [vmem:[%s393 + $0x308] sm:$0xff]
        %v5078 = vld [vmem:[%s393 + $0x310] sm:$0xff]
        %v5079 = vld [vmem:[%s393 + $0x318] sm:$0xff]
        %v5080 = vld [vmem:[%s393 + $0x320] sm:$0xff]
        %v5081 = vld [vmem:[%s393 + $0x328] sm:$0xff]
        %v5082 = vld [vmem:[%s393 + $0x330] sm:$0xff]
        %v5083 = vld [vmem:[%s393 + $0x338] sm:$0xff]
        %v5084 = vld [vmem:[%s393 + $0x340] sm:$0xff]
        %v5085 = vld [vmem:[%s393 + $0x348] sm:$0xff]
        %v5086 = vld [vmem:[%s393 + $0x350] sm:$0xff]
        %v5087 = vld [vmem:[%s393 + $0x358] sm:$0xff]
        %v5088 = vld [vmem:[%s393 + $0x360] sm:$0xff]
        %v5089 = vld [vmem:[%s393 + $0x368] sm:$0xff]
        %v5090 = vld [vmem:[%s393 + $0x370] sm:$0xff]
        %v5091 = vld [vmem:[%s393 + $0x378] sm:$0xff]
        %v5092 = vld [vmem:[%s393 + $0x380] sm:$0xff]
        %v5093 = vld [vmem:[%s393 + $0x388] sm:$0xff]
        %v5094 = vld [vmem:[%s393 + $0x390] sm:$0xff]
        %v5095 = vld [vmem:[%s393 + $0x398] sm:$0xff]
        %v5096 = vld [vmem:[%s393 + $0x3a0] sm:$0xff]
        %v5097 = vld [vmem:[%s393 + $0x3a8] sm:$0xff]
        %v5098 = vld [vmem:[%s393 + $0x3b0] sm:$0xff]
        %v5099 = vld [vmem:[%s393 + $0x3b8] sm:$0xff]
        %v5100 = vld [vmem:[%s393 + $0x3c0] sm:$0xff]
        %v5101 = vld [vmem:[%s393 + $0x3c8] sm:$0xff]
        %v5102 = vld [vmem:[%s393 + $0x3d0] sm:$0xff]
        %v5103 = vld [vmem:[%s393 + $0x3d8] sm:$0xff]
        %v5104 = vld [vmem:[%s393 + $0x3e0] sm:$0xff]
        %v5105 = vld [vmem:[%s393 + $0x3e8] sm:$0xff]
        %v5106 = vld [vmem:[%s393 + $0x3f0] sm:$0xff]
        %v5107 = vld [vmem:[%s393 + $0x3f8] sm:$0xff]
        %v5108 = vld [vmem:[%s393 + $0x400] sm:$0xff]
        %v5109 = vld [vmem:[%s393 + $0x408] sm:$0xff]
        %v5110 = vld [vmem:[%s393 + $0x410] sm:$0xff]
        %v5111 = vld [vmem:[%s393 + $0x418] sm:$0xff]
        %v5112 = vld [vmem:[%s393 + $0x420] sm:$0xff]
        %v5113 = vld [vmem:[%s393 + $0x428] sm:$0xff]
        %v5114 = vld [vmem:[%s393 + $0x430] sm:$0xff]
        %v5115 = vld [vmem:[%s393 + $0x438] sm:$0xff]
        %v5116 = vld [vmem:[%s393 + $0x440] sm:$0xff]
        %v5117 = vld [vmem:[%s393 + $0x448] sm:$0xff]
        %v5118 = vld [vmem:[%s393 + $0x450] sm:$0xff]
        %v5119 = vld [vmem:[%s393 + $0x458] sm:$0xff]
        %v5120 = vld [vmem:[%s393 + $0x460] sm:$0xff]
        %v5121 = vld [vmem:[%s393 + $0x468] sm:$0xff]
        %v5122 = vld [vmem:[%s393 + $0x470] sm:$0xff]
        %v5123 = vld [vmem:[%s393 + $0x478] sm:$0xff]
        %v5124 = vld [vmem:[%s393 + $0x480] sm:$0xff]
        %v5125 = vld [vmem:[%s393 + $0x488] sm:$0xff]
        %v5126 = vld [vmem:[%s393 + $0x490] sm:$0xff]
        %v5127 = vld [vmem:[%s393 + $0x498] sm:$0xff]
        %v5128 = vld [vmem:[%s393 + $0x4a0] sm:$0xff]
        %v5129 = vld [vmem:[%s393 + $0x4a8] sm:$0xff]
        %v5130 = vld [vmem:[%s393 + $0x4b0] sm:$0xff]
        %v5131 = vld [vmem:[%s393 + $0x4b8] sm:$0xff]
        %v5132 = vld [vmem:[%s393 + $0x4c0] sm:$0xff]
        %v5133 = vld [vmem:[%s393 + $0x4c8] sm:$0xff]
        %v5134 = vld [vmem:[%s393 + $0x4d0] sm:$0xff]
        %v5135 = vld [vmem:[%s393 + $0x4d8] sm:$0xff]
        %v5136 = vld [vmem:[%s393 + $0x4e0] sm:$0xff]
        %v5137 = vld [vmem:[%s393 + $0x4e8] sm:$0xff]
        %v5138 = vld [vmem:[%s393 + $0x4f0] sm:$0xff]
        %v5139 = vld [vmem:[%s393 + $0x4f8] sm:$0xff]
        %v5140 = vld [vmem:[%s393 + $0x500] sm:$0xff]
        %v5141 = vld [vmem:[%s393 + $0x508] sm:$0xff]
        %v5142 = vld [vmem:[%s393 + $0x510] sm:$0xff]
        %v5143 = vld [vmem:[%s393 + $0x518] sm:$0xff]
        %v5144 = vld [vmem:[%s393 + $0x520] sm:$0xff]
        %v5145 = vld [vmem:[%s393 + $0x528] sm:$0xff]
        %v5146 = vld [vmem:[%s393 + $0x530] sm:$0xff]
        %v5147 = vld [vmem:[%s393 + $0x538] sm:$0xff]
        %v5148 = vld [vmem:[%s393 + $0x540] sm:$0xff]
        %v5149 = vld [vmem:[%s393 + $0x548] sm:$0xff]
        %v5150 = vld [vmem:[%s393 + $0x550] sm:$0xff]
        %v5151 = vld [vmem:[%s393 + $0x558] sm:$0xff]
        %v5152 = vld [vmem:[%s393 + $0x560] sm:$0xff]
        %v5153 = vld [vmem:[%s393 + $0x568] sm:$0xff]
        %v5154 = vld [vmem:[%s393 + $0x570] sm:$0xff]
        %v5155 = vld [vmem:[%s393 + $0x578] sm:$0xff]
        %v5156 = vld [vmem:[%s393 + $0x580] sm:$0xff]
        %v5157 = vld [vmem:[%s393 + $0x588] sm:$0xff]
        %v5158 = vld [vmem:[%s393 + $0x590] sm:$0xff]
        %v5159 = vld [vmem:[%s393 + $0x598] sm:$0xff]
        %v5160 = vld [vmem:[%s393 + $0x5a0] sm:$0xff]
        %v5161 = vld [vmem:[%s393 + $0x5a8] sm:$0xff]
        %v5162 = vld [vmem:[%s393 + $0x5b0] sm:$0xff]
        %v5163 = vld [vmem:[%s393 + $0x5b8] sm:$0xff]
        %v5164 = vld [vmem:[%s393 + $0x5c0] sm:$0xff]
        %v5165 = vld [vmem:[%s393 + $0x5c8] sm:$0xff]
        %v5166 = vld [vmem:[%s393 + $0x5d0] sm:$0xff]
        %v5167 = vld [vmem:[%s393 + $0x5d8] sm:$0xff]
        %v5168 = vld [vmem:[%s393 + $0x5e0] sm:$0xff]
        %v5169 = vld [vmem:[%s393 + $0x5e8] sm:$0xff]
        %v5170 = vld [vmem:[%s393 + $0x5f0] sm:$0xff]
        %v5171 = vld [vmem:[%s393 + $0x5f8] sm:$0xff]
        %v5172 = vld [vmem:[%s393 + $0x600] sm:$0xff]
        %v5173 = vld [vmem:[%s393 + $0x608] sm:$0xff]
        %v5174 = vld [vmem:[%s393 + $0x610] sm:$0xff]
        %v5175 = vld [vmem:[%s393 + $0x618] sm:$0xff]
        %v5176 = vld [vmem:[%s393 + $0x620] sm:$0xff]
        %v5177 = vld [vmem:[%s393 + $0x628] sm:$0xff]
        %v5178 = vld [vmem:[%s393 + $0x630] sm:$0xff]
        %v5179 = vld [vmem:[%s393 + $0x638] sm:$0xff]
        %v5180 = vld [vmem:[%s393 + $0x640] sm:$0xff]
        %v5181 = vld [vmem:[%s393 + $0x648] sm:$0xff]
        %v5182 = vld [vmem:[%s393 + $0x650] sm:$0xff]
        %v5183 = vld [vmem:[%s393 + $0x658] sm:$0xff]
        %v5184 = vld [vmem:[%s393 + $0x660] sm:$0xff]
        %v5185 = vld [vmem:[%s393 + $0x668] sm:$0xff]
        %v5186 = vld [vmem:[%s393 + $0x670] sm:$0xff]
        %v5187 = vld [vmem:[%s393 + $0x678] sm:$0xff]
        %v5188 = vld [vmem:[%s393 + $0x680] sm:$0xff]
        %v5189 = vld [vmem:[%s393 + $0x688] sm:$0xff]
        %v5190 = vld [vmem:[%s393 + $0x690] sm:$0xff]
        %v5191 = vld [vmem:[%s393 + $0x698] sm:$0xff]
        %v5192 = vld [vmem:[%s393 + $0x6a0] sm:$0xff]
        %v5193 = vld [vmem:[%s393 + $0x6a8] sm:$0xff]
        %v5194 = vld [vmem:[%s393 + $0x6b0] sm:$0xff]
        %v5195 = vld [vmem:[%s393 + $0x6b8] sm:$0xff]
        %v5196 = vld [vmem:[%s393 + $0x6c0] sm:$0xff]
        %v5197 = vld [vmem:[%s393 + $0x6c8] sm:$0xff]
        %v5198 = vld [vmem:[%s393 + $0x6d0] sm:$0xff]
        %v5199 = vld [vmem:[%s393 + $0x6d8] sm:$0xff]
        %v5200 = vld [vmem:[%s393 + $0x6e0] sm:$0xff]
        %v5201 = vld [vmem:[%s393 + $0x6e8] sm:$0xff]
        %v5202 = vld [vmem:[%s393 + $0x6f0] sm:$0xff]
        %v5203 = vld [vmem:[%s393 + $0x6f8] sm:$0xff]
        %v5204 = vld [vmem:[%s393 + $0x700] sm:$0xff]
        %v5205 = vld [vmem:[%s393 + $0x708] sm:$0xff]
        %v5206 = vld [vmem:[%s393 + $0x710] sm:$0xff]
        %v5207 = vld [vmem:[%s393 + $0x718] sm:$0xff]
        %v5208 = vld [vmem:[%s393 + $0x720] sm:$0xff]
        %v5209 = vld [vmem:[%s393 + $0x728] sm:$0xff]
        %v5210 = vld [vmem:[%s393 + $0x730] sm:$0xff]
        %v5211 = vld [vmem:[%s393 + $0x738] sm:$0xff]
        %v5212 = vld [vmem:[%s393 + $0x740] sm:$0xff]
        %v5213 = vld [vmem:[%s393 + $0x748] sm:$0xff]
        %v5214 = vld [vmem:[%s393 + $0x750] sm:$0xff]
        %v5215 = vld [vmem:[%s393 + $0x758] sm:$0xff]
        %v5216 = vld [vmem:[%s393 + $0x760] sm:$0xff]
        %v5217 = vld [vmem:[%s393 + $0x768] sm:$0xff]
        %v5218 = vld [vmem:[%s393 + $0x770] sm:$0xff]
        %v5219 = vld [vmem:[%s393 + $0x778] sm:$0xff]
        %v5220 = vld [vmem:[%s393 + $0x780] sm:$0xff]
        %v5221 = vld [vmem:[%s393 + $0x788] sm:$0xff]
        %v5222 = vld [vmem:[%s393 + $0x790] sm:$0xff]
        %v5223 = vld [vmem:[%s393 + $0x798] sm:$0xff]
        %v5224 = vld [vmem:[%s393 + $0x7a0] sm:$0xff]
        %v5225 = vld [vmem:[%s393 + $0x7a8] sm:$0xff]
        %v5226 = vld [vmem:[%s393 + $0x7b0] sm:$0xff]
        %v5227 = vld [vmem:[%s393 + $0x7b8] sm:$0xff]
        %v5228 = vld [vmem:[%s393 + $0x7c0] sm:$0xff]
        %v5229 = vld [vmem:[%s393 + $0x7c8] sm:$0xff]
        %v5230 = vld [vmem:[%s393 + $0x7d0] sm:$0xff]
        %v5231 = vld [vmem:[%s393 + $0x7d8] sm:$0xff]
        %v5232 = vld [vmem:[%s393 + $0x7e0] sm:$0xff]
        %v5233 = vld [vmem:[%s393 + $0x7e8] sm:$0xff]
        %v5234 = vld [vmem:[%s393 + $0x7f0] sm:$0xff]
        %v5235 = vld [vmem:[%s393 + $0x7f8] sm:$0xff]
        %v5236 = vld [vmem:[%s393 + $0x800] sm:$0xff]
        %v5237 = vld [vmem:[%s393 + $0x808] sm:$0xff]
        %v5238 = vld [vmem:[%s393 + $0x810] sm:$0xff]
        %v5239 = vld [vmem:[%s393 + $0x818] sm:$0xff]
        %v5240 = vld [vmem:[%s393 + $0x820] sm:$0xff]
        %v5241 = vld [vmem:[%s393 + $0x828] sm:$0xff]
        %v5242 = vld [vmem:[%s393 + $0x830] sm:$0xff]
        %v5243 = vld [vmem:[%s393 + $0x838] sm:$0xff]
        %v5244 = vld [vmem:[%s393 + $0x840] sm:$0xff]
        %v5245 = vld [vmem:[%s393 + $0x848] sm:$0xff]
        %v5246 = vld [vmem:[%s393 + $0x850] sm:$0xff]
        %v5247 = vld [vmem:[%s393 + $0x858] sm:$0xff]
        %v5248 = vld [vmem:[%s393 + $0x860] sm:$0xff]
        %v5249 = vld [vmem:[%s393 + $0x868] sm:$0xff]
        %v5250 = vld [vmem:[%s393 + $0x870] sm:$0xff]
        %v5251 = vld [vmem:[%s393 + $0x878] sm:$0xff]
        %v5252 = vld [vmem:[%s393 + $0x880] sm:$0xff]
        %v5253 = vld [vmem:[%s393 + $0x888] sm:$0xff]
        %v5254 = vld [vmem:[%s393 + $0x890] sm:$0xff]
        %v5255 = vld [vmem:[%s393 + $0x898] sm:$0xff]
        %v5256 = vld [vmem:[%s393 + $0x8a0] sm:$0xff]
        %v5257 = vld [vmem:[%s393 + $0x8a8] sm:$0xff]
        %v5258 = vld [vmem:[%s393 + $0x8b0] sm:$0xff]
        %v5259 = vld [vmem:[%s393 + $0x8b8] sm:$0xff]
        %v5260 = vld [vmem:[%s393 + $0x8c0] sm:$0xff]
        %v5261 = vld [vmem:[%s393 + $0x8c8] sm:$0xff]
        %v5262 = vld [vmem:[%s393 + $0x8d0] sm:$0xff]
        %v5263 = vld [vmem:[%s393 + $0x8d8] sm:$0xff]
        %v5264 = vld [vmem:[%s393 + $0x8e0] sm:$0xff]
        %v5265 = vld [vmem:[%s393 + $0x8e8] sm:$0xff]
        %v5266 = vld [vmem:[%s393 + $0x8f0] sm:$0xff]
        %v5267 = vld [vmem:[%s393 + $0x8f8] sm:$0xff]
        %v5268 = vld [vmem:[%s393 + $0x900] sm:$0xff]
        %v5269 = vld [vmem:[%s393 + $0x908] sm:$0xff]
        %v5270 = vld [vmem:[%s393 + $0x910] sm:$0xff]
        %v5271 = vld [vmem:[%s393 + $0x918] sm:$0xff]
        %v5272 = vld [vmem:[%s393 + $0x920] sm:$0xff]
        %v5273 = vld [vmem:[%s393 + $0x928] sm:$0xff]
        %v5274 = vld [vmem:[%s393 + $0x930] sm:$0xff]
        %v5275 = vld [vmem:[%s393 + $0x938] sm:$0xff]
        %v5276 = vld [vmem:[%s393 + $0x940] sm:$0xff]
        %v5277 = vld [vmem:[%s393 + $0x948] sm:$0xff]
        %v5278 = vld [vmem:[%s393 + $0x950] sm:$0xff]
        %v5279 = vld [vmem:[%s393 + $0x958] sm:$0xff]
        %v5280 = vld [vmem:[%s393 + $0x960] sm:$0xff]
        %v5281 = vld [vmem:[%s393 + $0x968] sm:$0xff]
        %v5282 = vld [vmem:[%s393 + $0x970] sm:$0xff]
        %v5283 = vld [vmem:[%s393 + $0x978] sm:$0xff]
        %v5284 = vld [vmem:[%s393 + $0x980] sm:$0xff]
        %v5285 = vld [vmem:[%s393 + $0x988] sm:$0xff]
        %v5286 = vld [vmem:[%s393 + $0x990] sm:$0xff]
        %v5287 = vld [vmem:[%s393 + $0x998] sm:$0xff]
        %v5288 = vld [vmem:[%s393 + $0x9a0] sm:$0xff]
        %v5289 = vld [vmem:[%s393 + $0x9a8] sm:$0xff]
        %v5290 = vld [vmem:[%s393 + $0x9b0] sm:$0xff]
        %v5291 = vld [vmem:[%s393 + $0x9b8] sm:$0xff]
        %v5292 = vld [vmem:[%s393 + $0x9c0] sm:$0xff]
        %v5293 = vld [vmem:[%s393 + $0x9c8] sm:$0xff]
        %v5294 = vld [vmem:[%s393 + $0x9d0] sm:$0xff]
        %v5295 = vld [vmem:[%s393 + $0x9d8] sm:$0xff]
        %v5296 = vld [vmem:[%s393 + $0x9e0] sm:$0xff]
        %v5297 = vld [vmem:[%s393 + $0x9e8] sm:$0xff]
        %v5298 = vld [vmem:[%s393 + $0x9f0] sm:$0xff]
        %v5299 = vld [vmem:[%s393 + $0x9f8] sm:$0xff]
        %v5300 = vld [vmem:[%s393 + $0xa00] sm:$0xff]
        %v5301 = vld [vmem:[%s393 + $0xa08] sm:$0xff]
        %v5302 = vld [vmem:[%s393 + $0xa10] sm:$0xff]
        %v5303 = vld [vmem:[%s393 + $0xa18] sm:$0xff]
        %v5304 = vld [vmem:[%s393 + $0xa20] sm:$0xff]
        %v5305 = vld [vmem:[%s393 + $0xa28] sm:$0xff]
        %v5306 = vld [vmem:[%s393 + $0xa30] sm:$0xff]
        %v5307 = vld [vmem:[%s393 + $0xa38] sm:$0xff]
        %v5308 = vld [vmem:[%s393 + $0xa40] sm:$0xff]
        %v5309 = vld [vmem:[%s393 + $0xa48] sm:$0xff]
        %v5310 = vld [vmem:[%s393 + $0xa50] sm:$0xff]
        %v5311 = vld [vmem:[%s393 + $0xa58] sm:$0xff]
        %v5312 = vld [vmem:[%s393 + $0xa60] sm:$0xff]
        %v5313 = vld [vmem:[%s393 + $0xa68] sm:$0xff]
        %v5314 = vld [vmem:[%s393 + $0xa70] sm:$0xff]
        %v5315 = vld [vmem:[%s393 + $0xa78] sm:$0xff]
        %v5316 = vld [vmem:[%s393 + $0xa80] sm:$0xff]
        %v5317 = vld [vmem:[%s393 + $0xa88] sm:$0xff]
        %v5318 = vld [vmem:[%s393 + $0xa90] sm:$0xff]
        %v5319 = vld [vmem:[%s393 + $0xa98] sm:$0xff]
        %v5320 = vld [vmem:[%s393 + $0xaa0] sm:$0xff]
        %v5321 = vld [vmem:[%s393 + $0xaa8] sm:$0xff]
        %v5322 = vld [vmem:[%s393 + $0xab0] sm:$0xff]
        %v5323 = vld [vmem:[%s393 + $0xab8] sm:$0xff]
        %v5324 = vld [vmem:[%s393 + $0xac0] sm:$0xff]
        %v5325 = vld [vmem:[%s393 + $0xac8] sm:$0xff]
        %v5326 = vld [vmem:[%s393 + $0xad0] sm:$0xff]
        %v5327 = vld [vmem:[%s393 + $0xad8] sm:$0xff]
        %v5328 = vld [vmem:[%s393 + $0xae0] sm:$0xff]
        %v5329 = vld [vmem:[%s393 + $0xae8] sm:$0xff]
        %v5330 = vld [vmem:[%s393 + $0xaf0] sm:$0xff]
        %v5331 = vld [vmem:[%s393 + $0xaf8] sm:$0xff]
        %v5332 = vld [vmem:[%s393 + $0xb00] sm:$0xff]
        %v5333 = vld [vmem:[%s393 + $0xb08] sm:$0xff]
        %v5334 = vld [vmem:[%s393 + $0xb10] sm:$0xff]
        %v5335 = vld [vmem:[%s393 + $0xb18] sm:$0xff]
        %v5336 = vld [vmem:[%s393 + $0xb20] sm:$0xff]
        %v5337 = vld [vmem:[%s393 + $0xb28] sm:$0xff]
        %v5338 = vld [vmem:[%s393 + $0xb30] sm:$0xff]
        %v5339 = vld [vmem:[%s393 + $0xb38] sm:$0xff]
        %v5340 = vld [vmem:[%s393 + $0xb40] sm:$0xff]
        %v5341 = vld [vmem:[%s393 + $0xb48] sm:$0xff]
        %v5342 = vld [vmem:[%s393 + $0xb50] sm:$0xff]
        %v5343 = vld [vmem:[%s393 + $0xb58] sm:$0xff]
        %v5344 = vld [vmem:[%s393 + $0xb60] sm:$0xff]
        %v5345 = vld [vmem:[%s393 + $0xb68] sm:$0xff]
        %v5346 = vld [vmem:[%s393 + $0xb70] sm:$0xff]
        %v5347 = vld [vmem:[%s393 + $0xb78] sm:$0xff]
        %v5348 = vld [vmem:[%s393 + $0xb80] sm:$0xff]
        %v5349 = vld [vmem:[%s393 + $0xb88] sm:$0xff]
        %v5350 = vld [vmem:[%s393 + $0xb90] sm:$0xff]
        %v5351 = vld [vmem:[%s393 + $0xb98] sm:$0xff]
        %v5352 = vld [vmem:[%s393 + $0xba0] sm:$0xff]
        %v5353 = vld [vmem:[%s393 + $0xba8] sm:$0xff]
        %v5354 = vld [vmem:[%s393 + $0xbb0] sm:$0xff]
        %v5355 = vld [vmem:[%s393 + $0xbb8] sm:$0xff]
        %v5356 = vld [vmem:[%s393 + $0xbc0] sm:$0xff]
        %v5357 = vld [vmem:[%s393 + $0xbc8] sm:$0xff]
        %v5358 = vld [vmem:[%s393 + $0xbd0] sm:$0xff]
        %v5359 = vld [vmem:[%s393 + $0xbd8] sm:$0xff]
        %v5360 = vld [vmem:[%s393 + $0xbe0] sm:$0xff]
        %v5361 = vld [vmem:[%s393 + $0xbe8] sm:$0xff]
        %v5362 = vld [vmem:[%s393 + $0xbf0] sm:$0xff]
        %v5363 = vld [vmem:[%s393 + $0xbf8] sm:$0xff]
        %v5364 = vld [vmem:[%s393 + $0xc00] sm:$0xff]
        %v5365 = vld [vmem:[%s393 + $0xc08] sm:$0xff]
        %v5366 = vld [vmem:[%s393 + $0xc10] sm:$0xff]
        %v5367 = vld [vmem:[%s393 + $0xc18] sm:$0xff]
        %v5368 = vld [vmem:[%s393 + $0xc20] sm:$0xff]
        %v5369 = vld [vmem:[%s393 + $0xc28] sm:$0xff]
        %v5370 = vld [vmem:[%s393 + $0xc30] sm:$0xff]
        %v5371 = vld [vmem:[%s393 + $0xc38] sm:$0xff]
        %v5372 = vld [vmem:[%s393 + $0xc40] sm:$0xff]
        %v5373 = vld [vmem:[%s393 + $0xc48] sm:$0xff]
        %v5374 = vld [vmem:[%s393 + $0xc50] sm:$0xff]
        %v5375 = vld [vmem:[%s393 + $0xc58] sm:$0xff]
        %v5376 = vld [vmem:[%s393 + $0xc60] sm:$0xff]
        %v5377 = vld [vmem:[%s393 + $0xc68] sm:$0xff]
        %v5378 = vld [vmem:[%s393 + $0xc70] sm:$0xff]
        %v5379 = vld [vmem:[%s393 + $0xc78] sm:$0xff]
        %v5380 = vld [vmem:[%s393 + $0xc80] sm:$0xff]
        %v5381 = vld [vmem:[%s393 + $0xc88] sm:$0xff]
        %v5382 = vld [vmem:[%s393 + $0xc90] sm:$0xff]
        %v5383 = vld [vmem:[%s393 + $0xc98] sm:$0xff]
        %v5384 = vld [vmem:[%s393 + $0xca0] sm:$0xff]
        %v5385 = vld [vmem:[%s393 + $0xca8] sm:$0xff]
        %v5386 = vld [vmem:[%s393 + $0xcb0] sm:$0xff]
        %v5387 = vld [vmem:[%s393 + $0xcb8] sm:$0xff]
        %v5388 = vld [vmem:[%s393 + $0xcc0] sm:$0xff]
        %v5389 = vld [vmem:[%s393 + $0xcc8] sm:$0xff]
        %v5390 = vld [vmem:[%s393 + $0xcd0] sm:$0xff]
        %v5391 = vld [vmem:[%s393 + $0xcd8] sm:$0xff]
        %v5392 = vld [vmem:[%s393 + $0xce0] sm:$0xff]
        %v5393 = vld [vmem:[%s393 + $0xce8] sm:$0xff]
        %v5394 = vld [vmem:[%s393 + $0xcf0] sm:$0xff]
        %v5395 = vld [vmem:[%s393 + $0xcf8] sm:$0xff]
        %v5396 = vld [vmem:[%s393 + $0xd00] sm:$0xff]
        %v5397 = vld [vmem:[%s393 + $0xd08] sm:$0xff]
        %v5398 = vld [vmem:[%s393 + $0xd10] sm:$0xff]
        %v5399 = vld [vmem:[%s393 + $0xd18] sm:$0xff]
        %v5400 = vld [vmem:[%s393 + $0xd20] sm:$0xff]
        %v5401 = vld [vmem:[%s393 + $0xd28] sm:$0xff]
        %v5402 = vld [vmem:[%s393 + $0xd30] sm:$0xff]
        %v5403 = vld [vmem:[%s393 + $0xd38] sm:$0xff]
        %v5404 = vld [vmem:[%s393 + $0xd40] sm:$0xff]
        %v5405 = vld [vmem:[%s393 + $0xd48] sm:$0xff]
        %v5406 = vld [vmem:[%s393 + $0xd50] sm:$0xff]
        %v5407 = vld [vmem:[%s393 + $0xd58] sm:$0xff]
        %v5408 = vld [vmem:[%s393 + $0xd60] sm:$0xff]
        %v5409 = vld [vmem:[%s393 + $0xd68] sm:$0xff]
        %v5410 = vld [vmem:[%s393 + $0xd70] sm:$0xff]
        %v5411 = vld [vmem:[%s393 + $0xd78] sm:$0xff]
        %v5412 = vld [vmem:[%s393 + $0xd80] sm:$0xff]
        %v5413 = vld [vmem:[%s393 + $0xd88] sm:$0xff]
        %v5414 = vld [vmem:[%s393 + $0xd90] sm:$0xff]
        %v5415 = vld [vmem:[%s393 + $0xd98] sm:$0xff]
        %v5416 = vld [vmem:[%s393 + $0xda0] sm:$0xff]
        %v5417 = vld [vmem:[%s393 + $0xda8] sm:$0xff]
        %v5418 = vld [vmem:[%s393 + $0xdb0] sm:$0xff]
        %v5419 = vld [vmem:[%s393 + $0xdb8] sm:$0xff]
        %v5420 = vld [vmem:[%s393 + $0xdc0] sm:$0xff]
        %v5421 = vld [vmem:[%s393 + $0xdc8] sm:$0xff]
        %v5422 = vld [vmem:[%s393 + $0xdd0] sm:$0xff]
        %v5423 = vld [vmem:[%s393 + $0xdd8] sm:$0xff]
        %v5424 = vld [vmem:[%s393 + $0xde0] sm:$0xff]
        %v5425 = vld [vmem:[%s393 + $0xde8] sm:$0xff]
        %v5426 = vld [vmem:[%s393 + $0xdf0] sm:$0xff]
        %v5427 = vld [vmem:[%s393 + $0xdf8] sm:$0xff]
        %v5428 = vpack.c.bf16 %v4972, %v4972
        %v5429 = vpack.c.bf16 %v4973, %v4973
        %v5430 = vpack.c.bf16 %v4974, %v4974
        %v5431 = vpack.c.bf16 %v4975, %v4975
        %v5432 = vpack.c.bf16 %v4976, %v4976
        %v5433 = vpack.c.bf16 %v4977, %v4977
        %v5434 = vpack.c.bf16 %v4978, %v4978
        %v5435 = vpack.c.bf16 %v4979, %v4979
        %v5436 = vunpack.c.l.s8.bf16 %v4980
        %v5437 = vunpack.c.l.s8.bf16 %v4981
        %v5438 = vunpack.c.l.s8.bf16 %v4982
        %v5439 = vunpack.c.l.s8.bf16 %v4983
        %v5440 = vunpack.c.l.s8.bf16 %v4984
        %v5441 = vunpack.c.l.s8.bf16 %v4985
        %v5442 = vunpack.c.l.s8.bf16 %v4986
        %v5443 = vunpack.c.l.s8.bf16 %v4987
        %v5444 = vunpack.c.l.s8.bf16 %v4988
        %v5445 = vunpack.c.l.s8.bf16 %v4989
        %v5446 = vunpack.c.l.s8.bf16 %v4990
        %v5447 = vunpack.c.l.s8.bf16 %v4991
        %v5448 = vunpack.c.l.s8.bf16 %v4992
        %v5449 = vunpack.c.l.s8.bf16 %v4993
        %v5450 = vunpack.c.h.s8.bf16 %v4980
        %v5451 = vunpack.c.h.s8.bf16 %v4981
        %v5452 = vunpack.c.h.s8.bf16 %v4982
        %v5453 = vunpack.c.h.s8.bf16 %v4983
        %v5454 = vunpack.c.h.s8.bf16 %v4984
        %v5455 = vunpack.c.h.s8.bf16 %v4985
        %v5456 = vunpack.c.h.s8.bf16 %v4986
        %v5457 = vunpack.c.h.s8.bf16 %v4987
        %v5458 = vunpack.c.h.s8.bf16 %v4988
        %v5459 = vunpack.c.h.s8.bf16 %v4989
        %v5460 = vunpack.c.h.s8.bf16 %v4990
        %v5461 = vunpack.c.h.s8.bf16 %v4991
        %v5462 = vunpack.c.h.s8.bf16 %v4992
        %v5463 = vunpack.c.h.s8.bf16 %v4993
        %v5464 = vunpack.c.l.s8.bf16 %v4994
        %v5465 = vunpack.c.l.s8.bf16 %v4995
        %v5466 = vunpack.c.l.s8.bf16 %v4996
        %v5467 = vunpack.c.l.s8.bf16 %v4997
        %v5468 = vunpack.c.l.s8.bf16 %v4998
        %v5469 = vunpack.c.l.s8.bf16 %v4999
        %v5470 = vunpack.c.l.s8.bf16 %v5000
        %v5471 = vunpack.c.l.s8.bf16 %v5001
        %v5472 = vunpack.c.l.s8.bf16 %v5002
        %v5473 = vunpack.c.l.s8.bf16 %v5003
        %v5474 = vunpack.c.l.s8.bf16 %v5004
        %v5475 = vunpack.c.l.s8.bf16 %v5005
        %v5476 = vunpack.c.l.s8.bf16 %v5006
        %v5477 = vunpack.c.l.s8.bf16 %v5007
        %v5478 = vunpack.c.h.s8.bf16 %v4994
        %v5479 = vunpack.c.h.s8.bf16 %v4995
        %v5480 = vunpack.c.h.s8.bf16 %v4996
        %v5481 = vunpack.c.h.s8.bf16 %v4997
        %v5482 = vunpack.c.h.s8.bf16 %v4998
        %v5483 = vunpack.c.h.s8.bf16 %v4999
        %v5484 = vunpack.c.h.s8.bf16 %v5000
        %v5485 = vunpack.c.h.s8.bf16 %v5001
        %v5486 = vunpack.c.h.s8.bf16 %v5002
        %v5487 = vunpack.c.h.s8.bf16 %v5003
        %v5488 = vunpack.c.h.s8.bf16 %v5004
        %v5489 = vunpack.c.h.s8.bf16 %v5005
        %v5490 = vunpack.c.h.s8.bf16 %v5006
        %v5491 = vunpack.c.h.s8.bf16 %v5007
        %v5492 = vunpack.c.l.s8.bf16 %v5008
        %v5493 = vunpack.c.l.s8.bf16 %v5009
        %v5494 = vunpack.c.l.s8.bf16 %v5010
        %v5495 = vunpack.c.l.s8.bf16 %v5011
        %v5496 = vunpack.c.l.s8.bf16 %v5012
        %v5497 = vunpack.c.l.s8.bf16 %v5013
        %v5498 = vunpack.c.l.s8.bf16 %v5014
        %v5499 = vunpack.c.l.s8.bf16 %v5015
        %v5500 = vunpack.c.l.s8.bf16 %v5016
        %v5501 = vunpack.c.l.s8.bf16 %v5017
        %v5502 = vunpack.c.l.s8.bf16 %v5018
        %v5503 = vunpack.c.l.s8.bf16 %v5019
        %v5504 = vunpack.c.l.s8.bf16 %v5020
        %v5505 = vunpack.c.l.s8.bf16 %v5021
        %v5506 = vunpack.c.h.s8.bf16 %v5008
        %v5507 = vunpack.c.h.s8.bf16 %v5009
        %v5508 = vunpack.c.h.s8.bf16 %v5010
        %v5509 = vunpack.c.h.s8.bf16 %v5011
        %v5510 = vunpack.c.h.s8.bf16 %v5012
        %v5511 = vunpack.c.h.s8.bf16 %v5013
        %v5512 = vunpack.c.h.s8.bf16 %v5014
        %v5513 = vunpack.c.h.s8.bf16 %v5015
        %v5514 = vunpack.c.h.s8.bf16 %v5016
        %v5515 = vunpack.c.h.s8.bf16 %v5017
        %v5516 = vunpack.c.h.s8.bf16 %v5018
        %v5517 = vunpack.c.h.s8.bf16 %v5019
        %v5518 = vunpack.c.h.s8.bf16 %v5020
        %v5519 = vunpack.c.h.s8.bf16 %v5021
        %v5520 = vunpack.c.l.s8.bf16 %v5022
        %v5521 = vunpack.c.l.s8.bf16 %v5023
        %v5522 = vunpack.c.l.s8.bf16 %v5024
        %v5523 = vunpack.c.l.s8.bf16 %v5025
        %v5524 = vunpack.c.l.s8.bf16 %v5026
        %v5525 = vunpack.c.l.s8.bf16 %v5027
        %v5526 = vunpack.c.l.s8.bf16 %v5028
        %v5527 = vunpack.c.l.s8.bf16 %v5029
        %v5528 = vunpack.c.l.s8.bf16 %v5030
        %v5529 = vunpack.c.l.s8.bf16 %v5031
        %v5530 = vunpack.c.l.s8.bf16 %v5032
        %v5531 = vunpack.c.l.s8.bf16 %v5033
        %v5532 = vunpack.c.l.s8.bf16 %v5034
        %v5533 = vunpack.c.l.s8.bf16 %v5035
        %v5534 = vunpack.c.h.s8.bf16 %v5022
        %v5535 = vunpack.c.h.s8.bf16 %v5023
        %v5536 = vunpack.c.h.s8.bf16 %v5024
        %v5537 = vunpack.c.h.s8.bf16 %v5025
        %v5538 = vunpack.c.h.s8.bf16 %v5026
        %v5539 = vunpack.c.h.s8.bf16 %v5027
        %v5540 = vunpack.c.h.s8.bf16 %v5028
        %v5541 = vunpack.c.h.s8.bf16 %v5029
        %v5542 = vunpack.c.h.s8.bf16 %v5030
        %v5543 = vunpack.c.h.s8.bf16 %v5031
        %v5544 = vunpack.c.h.s8.bf16 %v5032
        %v5545 = vunpack.c.h.s8.bf16 %v5033
        %v5546 = vunpack.c.h.s8.bf16 %v5034
        %v5547 = vunpack.c.h.s8.bf16 %v5035
        %v5548 = vunpack.c.l.s8.bf16 %v5036
        %v5549 = vunpack.c.l.s8.bf16 %v5037
        %v5550 = vunpack.c.l.s8.bf16 %v5038
        %v5551 = vunpack.c.l.s8.bf16 %v5039
        %v5552 = vunpack.c.l.s8.bf16 %v5040
        %v5553 = vunpack.c.l.s8.bf16 %v5041
        %v5554 = vunpack.c.l.s8.bf16 %v5042
        %v5555 = vunpack.c.l.s8.bf16 %v5043
        %v5556 = vunpack.c.l.s8.bf16 %v5044
        %v5557 = vunpack.c.l.s8.bf16 %v5045
        %v5558 = vunpack.c.l.s8.bf16 %v5046
        %v5559 = vunpack.c.l.s8.bf16 %v5047
        %v5560 = vunpack.c.l.s8.bf16 %v5048
        %v5561 = vunpack.c.l.s8.bf16 %v5049
        %v5562 = vunpack.c.h.s8.bf16 %v5036
        %v5563 = vunpack.c.h.s8.bf16 %v5037
        %v5564 = vunpack.c.h.s8.bf16 %v5038
        %v5565 = vunpack.c.h.s8.bf16 %v5039
        %v5566 = vunpack.c.h.s8.bf16 %v5040
        %v5567 = vunpack.c.h.s8.bf16 %v5041
        %v5568 = vunpack.c.h.s8.bf16 %v5042
        %v5569 = vunpack.c.h.s8.bf16 %v5043
        %v5570 = vunpack.c.h.s8.bf16 %v5044
        %v5571 = vunpack.c.h.s8.bf16 %v5045
        %v5572 = vunpack.c.h.s8.bf16 %v5046
        %v5573 = vunpack.c.h.s8.bf16 %v5047
        %v5574 = vunpack.c.h.s8.bf16 %v5048
        %v5575 = vunpack.c.h.s8.bf16 %v5049
        %v5576 = vunpack.c.l.s8.bf16 %v5050
        %v5577 = vunpack.c.l.s8.bf16 %v5051
        %v5578 = vunpack.c.l.s8.bf16 %v5052
        %v5579 = vunpack.c.l.s8.bf16 %v5053
        %v5580 = vunpack.c.l.s8.bf16 %v5054
        %v5581 = vunpack.c.l.s8.bf16 %v5055
        %v5582 = vunpack.c.l.s8.bf16 %v5056
        %v5583 = vunpack.c.l.s8.bf16 %v5057
        %v5584 = vunpack.c.l.s8.bf16 %v5058
        %v5585 = vunpack.c.l.s8.bf16 %v5059
        %v5586 = vunpack.c.l.s8.bf16 %v5060
        %v5587 = vunpack.c.l.s8.bf16 %v5061
        %v5588 = vunpack.c.l.s8.bf16 %v5062
        %v5589 = vunpack.c.l.s8.bf16 %v5063
        %v5590 = vunpack.c.h.s8.bf16 %v5050
        %v5591 = vunpack.c.h.s8.bf16 %v5051
        %v5592 = vunpack.c.h.s8.bf16 %v5052
        %v5593 = vunpack.c.h.s8.bf16 %v5053
        %v5594 = vunpack.c.h.s8.bf16 %v5054
        %v5595 = vunpack.c.h.s8.bf16 %v5055
        %v5596 = vunpack.c.h.s8.bf16 %v5056
        %v5597 = vunpack.c.h.s8.bf16 %v5057
        %v5598 = vunpack.c.h.s8.bf16 %v5058
        %v5599 = vunpack.c.h.s8.bf16 %v5059
        %v5600 = vunpack.c.h.s8.bf16 %v5060
        %v5601 = vunpack.c.h.s8.bf16 %v5061
        %v5602 = vunpack.c.h.s8.bf16 %v5062
        %v5603 = vunpack.c.h.s8.bf16 %v5063
        %v5604 = vunpack.c.l.s8.bf16 %v5064
        %v5605 = vunpack.c.l.s8.bf16 %v5065
        %v5606 = vunpack.c.l.s8.bf16 %v5066
        %v5607 = vunpack.c.l.s8.bf16 %v5067
        %v5608 = vunpack.c.l.s8.bf16 %v5068
        %v5609 = vunpack.c.l.s8.bf16 %v5069
        %v5610 = vunpack.c.l.s8.bf16 %v5070
        %v5611 = vunpack.c.l.s8.bf16 %v5071
        %v5612 = vunpack.c.l.s8.bf16 %v5072
        %v5613 = vunpack.c.l.s8.bf16 %v5073
        %v5614 = vunpack.c.l.s8.bf16 %v5074
        %v5615 = vunpack.c.l.s8.bf16 %v5075
        %v5616 = vunpack.c.l.s8.bf16 %v5076
        %v5617 = vunpack.c.l.s8.bf16 %v5077
        %v5618 = vunpack.c.h.s8.bf16 %v5064
        %v5619 = vunpack.c.h.s8.bf16 %v5065
        %v5620 = vunpack.c.h.s8.bf16 %v5066
        %v5621 = vunpack.c.h.s8.bf16 %v5067
        %v5622 = vunpack.c.h.s8.bf16 %v5068
        %v5623 = vunpack.c.h.s8.bf16 %v5069
        %v5624 = vunpack.c.h.s8.bf16 %v5070
        %v5625 = vunpack.c.h.s8.bf16 %v5071
        %v5626 = vunpack.c.h.s8.bf16 %v5072
        %v5627 = vunpack.c.h.s8.bf16 %v5073
        %v5628 = vunpack.c.h.s8.bf16 %v5074
        %v5629 = vunpack.c.h.s8.bf16 %v5075
        %v5630 = vunpack.c.h.s8.bf16 %v5076
        %v5631 = vunpack.c.h.s8.bf16 %v5077
        %v5632 = vunpack.c.l.s8.bf16 %v5078
        %v5633 = vunpack.c.l.s8.bf16 %v5079
        %v5634 = vunpack.c.l.s8.bf16 %v5080
        %v5635 = vunpack.c.l.s8.bf16 %v5081
        %v5636 = vunpack.c.l.s8.bf16 %v5082
        %v5637 = vunpack.c.l.s8.bf16 %v5083
        %v5638 = vunpack.c.l.s8.bf16 %v5084
        %v5639 = vunpack.c.l.s8.bf16 %v5085
        %v5640 = vunpack.c.l.s8.bf16 %v5086
        %v5641 = vunpack.c.l.s8.bf16 %v5087
        %v5642 = vunpack.c.l.s8.bf16 %v5088
        %v5643 = vunpack.c.l.s8.bf16 %v5089
        %v5644 = vunpack.c.l.s8.bf16 %v5090
        %v5645 = vunpack.c.l.s8.bf16 %v5091
        %v5646 = vunpack.c.h.s8.bf16 %v5078
        %v5647 = vunpack.c.h.s8.bf16 %v5079
        %v5648 = vunpack.c.h.s8.bf16 %v5080
        %v5649 = vunpack.c.h.s8.bf16 %v5081
        %v5650 = vunpack.c.h.s8.bf16 %v5082
        %v5651 = vunpack.c.h.s8.bf16 %v5083
        %v5652 = vunpack.c.h.s8.bf16 %v5084
        %v5653 = vunpack.c.h.s8.bf16 %v5085
        %v5654 = vunpack.c.h.s8.bf16 %v5086
        %v5655 = vunpack.c.h.s8.bf16 %v5087
        %v5656 = vunpack.c.h.s8.bf16 %v5088
        %v5657 = vunpack.c.h.s8.bf16 %v5089
        %v5658 = vunpack.c.h.s8.bf16 %v5090
        %v5659 = vunpack.c.h.s8.bf16 %v5091
        %v5660 = vunpack.c.l.s8.bf16 %v5092
        %v5661 = vunpack.c.l.s8.bf16 %v5093
        %v5662 = vunpack.c.l.s8.bf16 %v5094
        %v5663 = vunpack.c.l.s8.bf16 %v5095
        %v5664 = vunpack.c.l.s8.bf16 %v5096
        %v5665 = vunpack.c.l.s8.bf16 %v5097
        %v5666 = vunpack.c.l.s8.bf16 %v5098
        %v5667 = vunpack.c.l.s8.bf16 %v5099
        %v5668 = vunpack.c.l.s8.bf16 %v5100
        %v5669 = vunpack.c.l.s8.bf16 %v5101
        %v5670 = vunpack.c.l.s8.bf16 %v5102
        %v5671 = vunpack.c.l.s8.bf16 %v5103
        %v5672 = vunpack.c.l.s8.bf16 %v5104
        %v5673 = vunpack.c.l.s8.bf16 %v5105
        %v5674 = vunpack.c.h.s8.bf16 %v5092
        %v5675 = vunpack.c.h.s8.bf16 %v5093
        %v5676 = vunpack.c.h.s8.bf16 %v5094
        %v5677 = vunpack.c.h.s8.bf16 %v5095
        %v5678 = vunpack.c.h.s8.bf16 %v5096
        %v5679 = vunpack.c.h.s8.bf16 %v5097
        %v5680 = vunpack.c.h.s8.bf16 %v5098
        %v5681 = vunpack.c.h.s8.bf16 %v5099
        %v5682 = vunpack.c.h.s8.bf16 %v5100
        %v5683 = vunpack.c.h.s8.bf16 %v5101
        %v5684 = vunpack.c.h.s8.bf16 %v5102
        %v5685 = vunpack.c.h.s8.bf16 %v5103
        %v5686 = vunpack.c.h.s8.bf16 %v5104
        %v5687 = vunpack.c.h.s8.bf16 %v5105
        %v5688 = vunpack.c.l.s8.bf16 %v5106
        %v5689 = vunpack.c.l.s8.bf16 %v5107
        %v5690 = vunpack.c.l.s8.bf16 %v5108
        %v5691 = vunpack.c.l.s8.bf16 %v5109
        %v5692 = vunpack.c.l.s8.bf16 %v5110
        %v5693 = vunpack.c.l.s8.bf16 %v5111
        %v5694 = vunpack.c.l.s8.bf16 %v5112
        %v5695 = vunpack.c.l.s8.bf16 %v5113
        %v5696 = vunpack.c.l.s8.bf16 %v5114
        %v5697 = vunpack.c.l.s8.bf16 %v5115
        %v5698 = vunpack.c.l.s8.bf16 %v5116
        %v5699 = vunpack.c.l.s8.bf16 %v5117
        %v5700 = vunpack.c.l.s8.bf16 %v5118
        %v5701 = vunpack.c.l.s8.bf16 %v5119
        %v5702 = vunpack.c.h.s8.bf16 %v5106
        %v5703 = vunpack.c.h.s8.bf16 %v5107
        %v5704 = vunpack.c.h.s8.bf16 %v5108
        %v5705 = vunpack.c.h.s8.bf16 %v5109
        %v5706 = vunpack.c.h.s8.bf16 %v5110
        %v5707 = vunpack.c.h.s8.bf16 %v5111
        %v5708 = vunpack.c.h.s8.bf16 %v5112
        %v5709 = vunpack.c.h.s8.bf16 %v5113
        %v5710 = vunpack.c.h.s8.bf16 %v5114
        %v5711 = vunpack.c.h.s8.bf16 %v5115
        %v5712 = vunpack.c.h.s8.bf16 %v5116
        %v5713 = vunpack.c.h.s8.bf16 %v5117
        %v5714 = vunpack.c.h.s8.bf16 %v5118
        %v5715 = vunpack.c.h.s8.bf16 %v5119
        %v5716 = vunpack.c.l.s8.bf16 %v5120
        %v5717 = vunpack.c.l.s8.bf16 %v5121
        %v5718 = vunpack.c.l.s8.bf16 %v5122
        %v5719 = vunpack.c.l.s8.bf16 %v5123
        %v5720 = vunpack.c.l.s8.bf16 %v5124
        %v5721 = vunpack.c.l.s8.bf16 %v5125
        %v5722 = vunpack.c.l.s8.bf16 %v5126
        %v5723 = vunpack.c.l.s8.bf16 %v5127
        %v5724 = vunpack.c.l.s8.bf16 %v5128
        %v5725 = vunpack.c.l.s8.bf16 %v5129
        %v5726 = vunpack.c.l.s8.bf16 %v5130
        %v5727 = vunpack.c.l.s8.bf16 %v5131
        %v5728 = vunpack.c.l.s8.bf16 %v5132
        %v5729 = vunpack.c.l.s8.bf16 %v5133
        %v5730 = vunpack.c.h.s8.bf16 %v5120
        %v5731 = vunpack.c.h.s8.bf16 %v5121
        %v5732 = vunpack.c.h.s8.bf16 %v5122
        %v5733 = vunpack.c.h.s8.bf16 %v5123
        %v5734 = vunpack.c.h.s8.bf16 %v5124
        %v5735 = vunpack.c.h.s8.bf16 %v5125
        %v5736 = vunpack.c.h.s8.bf16 %v5126
        %v5737 = vunpack.c.h.s8.bf16 %v5127
        %v5738 = vunpack.c.h.s8.bf16 %v5128
        %v5739 = vunpack.c.h.s8.bf16 %v5129
        %v5740 = vunpack.c.h.s8.bf16 %v5130
        %v5741 = vunpack.c.h.s8.bf16 %v5131
        %v5742 = vunpack.c.h.s8.bf16 %v5132
        %v5743 = vunpack.c.h.s8.bf16 %v5133
        %v5744 = vunpack.c.l.s8.bf16 %v5134
        %v5745 = vunpack.c.l.s8.bf16 %v5135
        %v5746 = vunpack.c.l.s8.bf16 %v5136
        %v5747 = vunpack.c.l.s8.bf16 %v5137
        %v5748 = vunpack.c.l.s8.bf16 %v5138
        %v5749 = vunpack.c.l.s8.bf16 %v5139
        %v5750 = vunpack.c.l.s8.bf16 %v5140
        %v5751 = vunpack.c.l.s8.bf16 %v5141
        %v5752 = vunpack.c.l.s8.bf16 %v5142
        %v5753 = vunpack.c.l.s8.bf16 %v5143
        %v5754 = vunpack.c.l.s8.bf16 %v5144
        %v5755 = vunpack.c.l.s8.bf16 %v5145
        %v5756 = vunpack.c.l.s8.bf16 %v5146
        %v5757 = vunpack.c.l.s8.bf16 %v5147
        %v5758 = vunpack.c.h.s8.bf16 %v5134
        %v5759 = vunpack.c.h.s8.bf16 %v5135
        %v5760 = vunpack.c.h.s8.bf16 %v5136
        %v5761 = vunpack.c.h.s8.bf16 %v5137
        %v5762 = vunpack.c.h.s8.bf16 %v5138
        %v5763 = vunpack.c.h.s8.bf16 %v5139
        %v5764 = vunpack.c.h.s8.bf16 %v5140
        %v5765 = vunpack.c.h.s8.bf16 %v5141
        %v5766 = vunpack.c.h.s8.bf16 %v5142
        %v5767 = vunpack.c.h.s8.bf16 %v5143
        %v5768 = vunpack.c.h.s8.bf16 %v5144
        %v5769 = vunpack.c.h.s8.bf16 %v5145
        %v5770 = vunpack.c.h.s8.bf16 %v5146
        %v5771 = vunpack.c.h.s8.bf16 %v5147
        %v5772 = vunpack.c.l.s8.bf16 %v5148
        %v5773 = vunpack.c.l.s8.bf16 %v5149
        %v5774 = vunpack.c.l.s8.bf16 %v5150
        %v5775 = vunpack.c.l.s8.bf16 %v5151
        %v5776 = vunpack.c.l.s8.bf16 %v5152
        %v5777 = vunpack.c.l.s8.bf16 %v5153
        %v5778 = vunpack.c.l.s8.bf16 %v5154
        %v5779 = vunpack.c.l.s8.bf16 %v5155
        %v5780 = vunpack.c.l.s8.bf16 %v5156
        %v5781 = vunpack.c.l.s8.bf16 %v5157
        %v5782 = vunpack.c.l.s8.bf16 %v5158
        %v5783 = vunpack.c.l.s8.bf16 %v5159
        %v5784 = vunpack.c.l.s8.bf16 %v5160
        %v5785 = vunpack.c.l.s8.bf16 %v5161
        %v5786 = vunpack.c.h.s8.bf16 %v5148
        %v5787 = vunpack.c.h.s8.bf16 %v5149
        %v5788 = vunpack.c.h.s8.bf16 %v5150
        %v5789 = vunpack.c.h.s8.bf16 %v5151
        %v5790 = vunpack.c.h.s8.bf16 %v5152
        %v5791 = vunpack.c.h.s8.bf16 %v5153
        %v5792 = vunpack.c.h.s8.bf16 %v5154
        %v5793 = vunpack.c.h.s8.bf16 %v5155
        %v5794 = vunpack.c.h.s8.bf16 %v5156
        %v5795 = vunpack.c.h.s8.bf16 %v5157
        %v5796 = vunpack.c.h.s8.bf16 %v5158
        %v5797 = vunpack.c.h.s8.bf16 %v5159
        %v5798 = vunpack.c.h.s8.bf16 %v5160
        %v5799 = vunpack.c.h.s8.bf16 %v5161
        %v5800 = vunpack.c.l.s8.bf16 %v5162
        %v5801 = vunpack.c.l.s8.bf16 %v5163
        %v5802 = vunpack.c.l.s8.bf16 %v5164
        %v5803 = vunpack.c.l.s8.bf16 %v5165
        %v5804 = vunpack.c.l.s8.bf16 %v5166
        %v5805 = vunpack.c.l.s8.bf16 %v5167
        %v5806 = vunpack.c.l.s8.bf16 %v5168
        %v5807 = vunpack.c.l.s8.bf16 %v5169
        %v5808 = vunpack.c.l.s8.bf16 %v5170
        %v5809 = vunpack.c.l.s8.bf16 %v5171
        %v5810 = vunpack.c.l.s8.bf16 %v5172
        %v5811 = vunpack.c.l.s8.bf16 %v5173
        %v5812 = vunpack.c.l.s8.bf16 %v5174
        %v5813 = vunpack.c.l.s8.bf16 %v5175
        %v5814 = vunpack.c.h.s8.bf16 %v5162
        %v5815 = vunpack.c.h.s8.bf16 %v5163
        %v5816 = vunpack.c.h.s8.bf16 %v5164
        %v5817 = vunpack.c.h.s8.bf16 %v5165
        %v5818 = vunpack.c.h.s8.bf16 %v5166
        %v5819 = vunpack.c.h.s8.bf16 %v5167
        %v5820 = vunpack.c.h.s8.bf16 %v5168
        %v5821 = vunpack.c.h.s8.bf16 %v5169
        %v5822 = vunpack.c.h.s8.bf16 %v5170
        %v5823 = vunpack.c.h.s8.bf16 %v5171
        %v5824 = vunpack.c.h.s8.bf16 %v5172
        %v5825 = vunpack.c.h.s8.bf16 %v5173
        %v5826 = vunpack.c.h.s8.bf16 %v5174
        %v5827 = vunpack.c.h.s8.bf16 %v5175
        %v5828 = vunpack.c.l.s8.bf16 %v5176
        %v5829 = vunpack.c.l.s8.bf16 %v5177
        %v5830 = vunpack.c.l.s8.bf16 %v5178
        %v5831 = vunpack.c.l.s8.bf16 %v5179
        %v5832 = vunpack.c.l.s8.bf16 %v5180
        %v5833 = vunpack.c.l.s8.bf16 %v5181
        %v5834 = vunpack.c.l.s8.bf16 %v5182
        %v5835 = vunpack.c.l.s8.bf16 %v5183
        %v5836 = vunpack.c.l.s8.bf16 %v5184
        %v5837 = vunpack.c.l.s8.bf16 %v5185
        %v5838 = vunpack.c.l.s8.bf16 %v5186
        %v5839 = vunpack.c.l.s8.bf16 %v5187
        %v5840 = vunpack.c.l.s8.bf16 %v5188
        %v5841 = vunpack.c.l.s8.bf16 %v5189
        %v5842 = vunpack.c.h.s8.bf16 %v5176
        %v5843 = vunpack.c.h.s8.bf16 %v5177
        %v5844 = vunpack.c.h.s8.bf16 %v5178
        %v5845 = vunpack.c.h.s8.bf16 %v5179
        %v5846 = vunpack.c.h.s8.bf16 %v5180
        %v5847 = vunpack.c.h.s8.bf16 %v5181
        %v5848 = vunpack.c.h.s8.bf16 %v5182
        %v5849 = vunpack.c.h.s8.bf16 %v5183
        %v5850 = vunpack.c.h.s8.bf16 %v5184
        %v5851 = vunpack.c.h.s8.bf16 %v5185
        %v5852 = vunpack.c.h.s8.bf16 %v5186
        %v5853 = vunpack.c.h.s8.bf16 %v5187
        %v5854 = vunpack.c.h.s8.bf16 %v5188
        %v5855 = vunpack.c.h.s8.bf16 %v5189
        %v5856 = vunpack.c.l.s8.bf16 %v5190
        %v5857 = vunpack.c.l.s8.bf16 %v5191
        %v5858 = vunpack.c.l.s8.bf16 %v5192
        %v5859 = vunpack.c.l.s8.bf16 %v5193
        %v5860 = vunpack.c.l.s8.bf16 %v5194
        %v5861 = vunpack.c.l.s8.bf16 %v5195
        %v5862 = vunpack.c.l.s8.bf16 %v5196
        %v5863 = vunpack.c.l.s8.bf16 %v5197
        %v5864 = vunpack.c.l.s8.bf16 %v5198
        %v5865 = vunpack.c.l.s8.bf16 %v5199
        %v5866 = vunpack.c.l.s8.bf16 %v5200
        %v5867 = vunpack.c.l.s8.bf16 %v5201
        %v5868 = vunpack.c.l.s8.bf16 %v5202
        %v5869 = vunpack.c.l.s8.bf16 %v5203
        %v5870 = vunpack.c.h.s8.bf16 %v5190
        %v5871 = vunpack.c.h.s8.bf16 %v5191
        %v5872 = vunpack.c.h.s8.bf16 %v5192
        %v5873 = vunpack.c.h.s8.bf16 %v5193
        %v5874 = vunpack.c.h.s8.bf16 %v5194
        %v5875 = vunpack.c.h.s8.bf16 %v5195
        %v5876 = vunpack.c.h.s8.bf16 %v5196
        %v5877 = vunpack.c.h.s8.bf16 %v5197
        %v5878 = vunpack.c.h.s8.bf16 %v5198
        %v5879 = vunpack.c.h.s8.bf16 %v5199
        %v5880 = vunpack.c.h.s8.bf16 %v5200
        %v5881 = vunpack.c.h.s8.bf16 %v5201
        %v5882 = vunpack.c.h.s8.bf16 %v5202
        %v5883 = vunpack.c.h.s8.bf16 %v5203
        %v5884 = vunpack.c.l.s8.bf16 %v5204
        %v5885 = vunpack.c.l.s8.bf16 %v5205
        %v5886 = vunpack.c.l.s8.bf16 %v5206
        %v5887 = vunpack.c.l.s8.bf16 %v5207
        %v5888 = vunpack.c.l.s8.bf16 %v5208
        %v5889 = vunpack.c.l.s8.bf16 %v5209
        %v5890 = vunpack.c.l.s8.bf16 %v5210
        %v5891 = vunpack.c.l.s8.bf16 %v5211
        %v5892 = vunpack.c.l.s8.bf16 %v5212
        %v5893 = vunpack.c.l.s8.bf16 %v5213
        %v5894 = vunpack.c.l.s8.bf16 %v5214
        %v5895 = vunpack.c.l.s8.bf16 %v5215
        %v5896 = vunpack.c.l.s8.bf16 %v5216
        %v5897 = vunpack.c.l.s8.bf16 %v5217
        %v5898 = vunpack.c.h.s8.bf16 %v5204
        %v5899 = vunpack.c.h.s8.bf16 %v5205
        %v5900 = vunpack.c.h.s8.bf16 %v5206
        %v5901 = vunpack.c.h.s8.bf16 %v5207
        %v5902 = vunpack.c.h.s8.bf16 %v5208
        %v5903 = vunpack.c.h.s8.bf16 %v5209
        %v5904 = vunpack.c.h.s8.bf16 %v5210
        %v5905 = vunpack.c.h.s8.bf16 %v5211
        %v5906 = vunpack.c.h.s8.bf16 %v5212
        %v5907 = vunpack.c.h.s8.bf16 %v5213
        %v5908 = vunpack.c.h.s8.bf16 %v5214
        %v5909 = vunpack.c.h.s8.bf16 %v5215
        %v5910 = vunpack.c.h.s8.bf16 %v5216
        %v5911 = vunpack.c.h.s8.bf16 %v5217
        %v5912 = vunpack.c.l.s8.bf16 %v5218
        %v5913 = vunpack.c.l.s8.bf16 %v5219
        %v5914 = vunpack.c.l.s8.bf16 %v5220
        %v5915 = vunpack.c.l.s8.bf16 %v5221
        %v5916 = vunpack.c.l.s8.bf16 %v5222
        %v5917 = vunpack.c.l.s8.bf16 %v5223
        %v5918 = vunpack.c.l.s8.bf16 %v5224
        %v5919 = vunpack.c.l.s8.bf16 %v5225
        %v5920 = vunpack.c.l.s8.bf16 %v5226
        %v5921 = vunpack.c.l.s8.bf16 %v5227
        %v5922 = vunpack.c.l.s8.bf16 %v5228
        %v5923 = vunpack.c.l.s8.bf16 %v5229
        %v5924 = vunpack.c.l.s8.bf16 %v5230
        %v5925 = vunpack.c.l.s8.bf16 %v5231
        %v5926 = vunpack.c.h.s8.bf16 %v5218
        %v5927 = vunpack.c.h.s8.bf16 %v5219
        %v5928 = vunpack.c.h.s8.bf16 %v5220
        %v5929 = vunpack.c.h.s8.bf16 %v5221
        %v5930 = vunpack.c.h.s8.bf16 %v5222
        %v5931 = vunpack.c.h.s8.bf16 %v5223
        %v5932 = vunpack.c.h.s8.bf16 %v5224
        %v5933 = vunpack.c.h.s8.bf16 %v5225
        %v5934 = vunpack.c.h.s8.bf16 %v5226
        %v5935 = vunpack.c.h.s8.bf16 %v5227
        %v5936 = vunpack.c.h.s8.bf16 %v5228
        %v5937 = vunpack.c.h.s8.bf16 %v5229
        %v5938 = vunpack.c.h.s8.bf16 %v5230
        %v5939 = vunpack.c.h.s8.bf16 %v5231
        %v5940 = vunpack.c.l.s8.bf16 %v5232
        %v5941 = vunpack.c.l.s8.bf16 %v5233
        %v5942 = vunpack.c.l.s8.bf16 %v5234
        %v5943 = vunpack.c.l.s8.bf16 %v5235
        %v5944 = vunpack.c.l.s8.bf16 %v5236
        %v5945 = vunpack.c.l.s8.bf16 %v5237
        %v5946 = vunpack.c.l.s8.bf16 %v5238
        %v5947 = vunpack.c.l.s8.bf16 %v5239
        %v5948 = vunpack.c.l.s8.bf16 %v5240
        %v5949 = vunpack.c.l.s8.bf16 %v5241
        %v5950 = vunpack.c.l.s8.bf16 %v5242
        %v5951 = vunpack.c.l.s8.bf16 %v5243
        %v5952 = vunpack.c.l.s8.bf16 %v5244
        %v5953 = vunpack.c.l.s8.bf16 %v5245
        %v5954 = vunpack.c.h.s8.bf16 %v5232
        %v5955 = vunpack.c.h.s8.bf16 %v5233
        %v5956 = vunpack.c.h.s8.bf16 %v5234
        %v5957 = vunpack.c.h.s8.bf16 %v5235
        %v5958 = vunpack.c.h.s8.bf16 %v5236
        %v5959 = vunpack.c.h.s8.bf16 %v5237
        %v5960 = vunpack.c.h.s8.bf16 %v5238
        %v5961 = vunpack.c.h.s8.bf16 %v5239
        %v5962 = vunpack.c.h.s8.bf16 %v5240
        %v5963 = vunpack.c.h.s8.bf16 %v5241
        %v5964 = vunpack.c.h.s8.bf16 %v5242
        %v5965 = vunpack.c.h.s8.bf16 %v5243
        %v5966 = vunpack.c.h.s8.bf16 %v5244
        %v5967 = vunpack.c.h.s8.bf16 %v5245
        %v5968 = vunpack.c.l.s8.bf16 %v5246
        %v5969 = vunpack.c.l.s8.bf16 %v5247
        %v5970 = vunpack.c.l.s8.bf16 %v5248
        %v5971 = vunpack.c.l.s8.bf16 %v5249
        %v5972 = vunpack.c.l.s8.bf16 %v5250
        %v5973 = vunpack.c.l.s8.bf16 %v5251
        %v5974 = vunpack.c.l.s8.bf16 %v5252
        %v5975 = vunpack.c.l.s8.bf16 %v5253
        %v5976 = vunpack.c.l.s8.bf16 %v5254
        %v5977 = vunpack.c.l.s8.bf16 %v5255
        %v5978 = vunpack.c.l.s8.bf16 %v5256
        %v5979 = vunpack.c.l.s8.bf16 %v5257
        %v5980 = vunpack.c.l.s8.bf16 %v5258
        %v5981 = vunpack.c.l.s8.bf16 %v5259
        %v5982 = vunpack.c.h.s8.bf16 %v5246
        %v5983 = vunpack.c.h.s8.bf16 %v5247
        %v5984 = vunpack.c.h.s8.bf16 %v5248
        %v5985 = vunpack.c.h.s8.bf16 %v5249
        %v5986 = vunpack.c.h.s8.bf16 %v5250
        %v5987 = vunpack.c.h.s8.bf16 %v5251
        %v5988 = vunpack.c.h.s8.bf16 %v5252
        %v5989 = vunpack.c.h.s8.bf16 %v5253
        %v5990 = vunpack.c.h.s8.bf16 %v5254
        %v5991 = vunpack.c.h.s8.bf16 %v5255
        %v5992 = vunpack.c.h.s8.bf16 %v5256
        %v5993 = vunpack.c.h.s8.bf16 %v5257
        %v5994 = vunpack.c.h.s8.bf16 %v5258
        %v5995 = vunpack.c.h.s8.bf16 %v5259
        %v5996 = vunpack.c.l.s8.bf16 %v5260
        %v5997 = vunpack.c.l.s8.bf16 %v5261
        %v5998 = vunpack.c.l.s8.bf16 %v5262
        %v5999 = vunpack.c.l.s8.bf16 %v5263
        %v6000 = vunpack.c.l.s8.bf16 %v5264
        %v6001 = vunpack.c.l.s8.bf16 %v5265
        %v6002 = vunpack.c.l.s8.bf16 %v5266
        %v6003 = vunpack.c.l.s8.bf16 %v5267
        %v6004 = vunpack.c.l.s8.bf16 %v5268
        %v6005 = vunpack.c.l.s8.bf16 %v5269
        %v6006 = vunpack.c.l.s8.bf16 %v5270
        %v6007 = vunpack.c.l.s8.bf16 %v5271
        %v6008 = vunpack.c.l.s8.bf16 %v5272
        %v6009 = vunpack.c.l.s8.bf16 %v5273
        %v6010 = vunpack.c.h.s8.bf16 %v5260
        %v6011 = vunpack.c.h.s8.bf16 %v5261
        %v6012 = vunpack.c.h.s8.bf16 %v5262
        %v6013 = vunpack.c.h.s8.bf16 %v5263
        %v6014 = vunpack.c.h.s8.bf16 %v5264
        %v6015 = vunpack.c.h.s8.bf16 %v5265
        %v6016 = vunpack.c.h.s8.bf16 %v5266
        %v6017 = vunpack.c.h.s8.bf16 %v5267
        %v6018 = vunpack.c.h.s8.bf16 %v5268
        %v6019 = vunpack.c.h.s8.bf16 %v5269
        %v6020 = vunpack.c.h.s8.bf16 %v5270
        %v6021 = vunpack.c.h.s8.bf16 %v5271
        %v6022 = vunpack.c.h.s8.bf16 %v5272
        %v6023 = vunpack.c.h.s8.bf16 %v5273
        %v6024 = vunpack.c.l.s8.bf16 %v5274
        %v6025 = vunpack.c.l.s8.bf16 %v5275
        %v6026 = vunpack.c.l.s8.bf16 %v5276
        %v6027 = vunpack.c.l.s8.bf16 %v5277
        %v6028 = vunpack.c.l.s8.bf16 %v5278
        %v6029 = vunpack.c.l.s8.bf16 %v5279
        %v6030 = vunpack.c.l.s8.bf16 %v5280
        %v6031 = vunpack.c.l.s8.bf16 %v5281
        %v6032 = vunpack.c.l.s8.bf16 %v5282
        %v6033 = vunpack.c.l.s8.bf16 %v5283
        %v6034 = vunpack.c.l.s8.bf16 %v5284
        %v6035 = vunpack.c.l.s8.bf16 %v5285
        %v6036 = vunpack.c.l.s8.bf16 %v5286
        %v6037 = vunpack.c.l.s8.bf16 %v5287
        %v6038 = vunpack.c.h.s8.bf16 %v5274
        %v6039 = vunpack.c.h.s8.bf16 %v5275
        %v6040 = vunpack.c.h.s8.bf16 %v5276
        %v6041 = vunpack.c.h.s8.bf16 %v5277
        %v6042 = vunpack.c.h.s8.bf16 %v5278
        %v6043 = vunpack.c.h.s8.bf16 %v5279
        %v6044 = vunpack.c.h.s8.bf16 %v5280
        %v6045 = vunpack.c.h.s8.bf16 %v5281
        %v6046 = vunpack.c.h.s8.bf16 %v5282
        %v6047 = vunpack.c.h.s8.bf16 %v5283
        %v6048 = vunpack.c.h.s8.bf16 %v5284
        %v6049 = vunpack.c.h.s8.bf16 %v5285
        %v6050 = vunpack.c.h.s8.bf16 %v5286
        %v6051 = vunpack.c.h.s8.bf16 %v5287
        %v6052 = vunpack.c.l.s8.bf16 %v5288
        %v6053 = vunpack.c.l.s8.bf16 %v5289
        %v6054 = vunpack.c.l.s8.bf16 %v5290
        %v6055 = vunpack.c.l.s8.bf16 %v5291
        %v6056 = vunpack.c.l.s8.bf16 %v5292
        %v6057 = vunpack.c.l.s8.bf16 %v5293
        %v6058 = vunpack.c.l.s8.bf16 %v5294
        %v6059 = vunpack.c.l.s8.bf16 %v5295
        %v6060 = vunpack.c.l.s8.bf16 %v5296
        %v6061 = vunpack.c.l.s8.bf16 %v5297
        %v6062 = vunpack.c.l.s8.bf16 %v5298
        %v6063 = vunpack.c.l.s8.bf16 %v5299
        %v6064 = vunpack.c.l.s8.bf16 %v5300
        %v6065 = vunpack.c.l.s8.bf16 %v5301
        %v6066 = vunpack.c.h.s8.bf16 %v5288
        %v6067 = vunpack.c.h.s8.bf16 %v5289
        %v6068 = vunpack.c.h.s8.bf16 %v5290
        %v6069 = vunpack.c.h.s8.bf16 %v5291
        %v6070 = vunpack.c.h.s8.bf16 %v5292
        %v6071 = vunpack.c.h.s8.bf16 %v5293
        %v6072 = vunpack.c.h.s8.bf16 %v5294
        %v6073 = vunpack.c.h.s8.bf16 %v5295
        %v6074 = vunpack.c.h.s8.bf16 %v5296
        %v6075 = vunpack.c.h.s8.bf16 %v5297
        %v6076 = vunpack.c.h.s8.bf16 %v5298
        %v6077 = vunpack.c.h.s8.bf16 %v5299
        %v6078 = vunpack.c.h.s8.bf16 %v5300
        %v6079 = vunpack.c.h.s8.bf16 %v5301
        %v6080 = vunpack.c.l.s8.bf16 %v5302
        %v6081 = vunpack.c.l.s8.bf16 %v5303
        %v6082 = vunpack.c.l.s8.bf16 %v5304
        %v6083 = vunpack.c.l.s8.bf16 %v5305
        %v6084 = vunpack.c.l.s8.bf16 %v5306
        %v6085 = vunpack.c.l.s8.bf16 %v5307
        %v6086 = vunpack.c.l.s8.bf16 %v5308
        %v6087 = vunpack.c.l.s8.bf16 %v5309
        %v6088 = vunpack.c.l.s8.bf16 %v5310
        %v6089 = vunpack.c.l.s8.bf16 %v5311
        %v6090 = vunpack.c.l.s8.bf16 %v5312
        %v6091 = vunpack.c.l.s8.bf16 %v5313
        %v6092 = vunpack.c.l.s8.bf16 %v5314
        %v6093 = vunpack.c.l.s8.bf16 %v5315
        %v6094 = vunpack.c.h.s8.bf16 %v5302
        %v6095 = vunpack.c.h.s8.bf16 %v5303
        %v6096 = vunpack.c.h.s8.bf16 %v5304
        %v6097 = vunpack.c.h.s8.bf16 %v5305
        %v6098 = vunpack.c.h.s8.bf16 %v5306
        %v6099 = vunpack.c.h.s8.bf16 %v5307
        %v6100 = vunpack.c.h.s8.bf16 %v5308
        %v6101 = vunpack.c.h.s8.bf16 %v5309
        %v6102 = vunpack.c.h.s8.bf16 %v5310
        %v6103 = vunpack.c.h.s8.bf16 %v5311
        %v6104 = vunpack.c.h.s8.bf16 %v5312
        %v6105 = vunpack.c.h.s8.bf16 %v5313
        %v6106 = vunpack.c.h.s8.bf16 %v5314
        %v6107 = vunpack.c.h.s8.bf16 %v5315
        %v6108 = vunpack.c.l.s8.bf16 %v5316
        %v6109 = vunpack.c.l.s8.bf16 %v5317
        %v6110 = vunpack.c.l.s8.bf16 %v5318
        %v6111 = vunpack.c.l.s8.bf16 %v5319
        %v6112 = vunpack.c.l.s8.bf16 %v5320
        %v6113 = vunpack.c.l.s8.bf16 %v5321
        %v6114 = vunpack.c.l.s8.bf16 %v5322
        %v6115 = vunpack.c.l.s8.bf16 %v5323
        %v6116 = vunpack.c.l.s8.bf16 %v5324
        %v6117 = vunpack.c.l.s8.bf16 %v5325
        %v6118 = vunpack.c.l.s8.bf16 %v5326
        %v6119 = vunpack.c.l.s8.bf16 %v5327
        %v6120 = vunpack.c.l.s8.bf16 %v5328
        %v6121 = vunpack.c.l.s8.bf16 %v5329
        %v6122 = vunpack.c.h.s8.bf16 %v5316
        %v6123 = vunpack.c.h.s8.bf16 %v5317
        %v6124 = vunpack.c.h.s8.bf16 %v5318
        %v6125 = vunpack.c.h.s8.bf16 %v5319
        %v6126 = vunpack.c.h.s8.bf16 %v5320
        %v6127 = vunpack.c.h.s8.bf16 %v5321
        %v6128 = vunpack.c.h.s8.bf16 %v5322
        %v6129 = vunpack.c.h.s8.bf16 %v5323
        %v6130 = vunpack.c.h.s8.bf16 %v5324
        %v6131 = vunpack.c.h.s8.bf16 %v5325
        %v6132 = vunpack.c.h.s8.bf16 %v5326
        %v6133 = vunpack.c.h.s8.bf16 %v5327
        %v6134 = vunpack.c.h.s8.bf16 %v5328
        %v6135 = vunpack.c.h.s8.bf16 %v5329
        %v6136 = vunpack.c.l.s8.bf16 %v5330
        %v6137 = vunpack.c.l.s8.bf16 %v5331
        %v6138 = vunpack.c.l.s8.bf16 %v5332
        %v6139 = vunpack.c.l.s8.bf16 %v5333
        %v6140 = vunpack.c.l.s8.bf16 %v5334
        %v6141 = vunpack.c.l.s8.bf16 %v5335
        %v6142 = vunpack.c.l.s8.bf16 %v5336
        %v6143 = vunpack.c.l.s8.bf16 %v5337
        %v6144 = vunpack.c.l.s8.bf16 %v5338
        %v6145 = vunpack.c.l.s8.bf16 %v5339
        %v6146 = vunpack.c.l.s8.bf16 %v5340
        %v6147 = vunpack.c.l.s8.bf16 %v5341
        %v6148 = vunpack.c.l.s8.bf16 %v5342
        %v6149 = vunpack.c.l.s8.bf16 %v5343
        %v6150 = vunpack.c.h.s8.bf16 %v5330
        %v6151 = vunpack.c.h.s8.bf16 %v5331
        %v6152 = vunpack.c.h.s8.bf16 %v5332
        %v6153 = vunpack.c.h.s8.bf16 %v5333
        %v6154 = vunpack.c.h.s8.bf16 %v5334
        %v6155 = vunpack.c.h.s8.bf16 %v5335
        %v6156 = vunpack.c.h.s8.bf16 %v5336
        %v6157 = vunpack.c.h.s8.bf16 %v5337
        %v6158 = vunpack.c.h.s8.bf16 %v5338
        %v6159 = vunpack.c.h.s8.bf16 %v5339
        %v6160 = vunpack.c.h.s8.bf16 %v5340
        %v6161 = vunpack.c.h.s8.bf16 %v5341
        %v6162 = vunpack.c.h.s8.bf16 %v5342
        %v6163 = vunpack.c.h.s8.bf16 %v5343
        %v6164 = vunpack.c.l.s8.bf16 %v5344
        %v6165 = vunpack.c.l.s8.bf16 %v5345
        %v6166 = vunpack.c.l.s8.bf16 %v5346
        %v6167 = vunpack.c.l.s8.bf16 %v5347
        %v6168 = vunpack.c.l.s8.bf16 %v5348
        %v6169 = vunpack.c.l.s8.bf16 %v5349
        %v6170 = vunpack.c.l.s8.bf16 %v5350
        %v6171 = vunpack.c.l.s8.bf16 %v5351
        %v6172 = vunpack.c.l.s8.bf16 %v5352
        %v6173 = vunpack.c.l.s8.bf16 %v5353
        %v6174 = vunpack.c.l.s8.bf16 %v5354
        %v6175 = vunpack.c.l.s8.bf16 %v5355
        %v6176 = vunpack.c.l.s8.bf16 %v5356
        %v6177 = vunpack.c.l.s8.bf16 %v5357
        %v6178 = vunpack.c.h.s8.bf16 %v5344
        %v6179 = vunpack.c.h.s8.bf16 %v5345
        %v6180 = vunpack.c.h.s8.bf16 %v5346
        %v6181 = vunpack.c.h.s8.bf16 %v5347
        %v6182 = vunpack.c.h.s8.bf16 %v5348
        %v6183 = vunpack.c.h.s8.bf16 %v5349
        %v6184 = vunpack.c.h.s8.bf16 %v5350
        %v6185 = vunpack.c.h.s8.bf16 %v5351
        %v6186 = vunpack.c.h.s8.bf16 %v5352
        %v6187 = vunpack.c.h.s8.bf16 %v5353
        %v6188 = vunpack.c.h.s8.bf16 %v5354
        %v6189 = vunpack.c.h.s8.bf16 %v5355
        %v6190 = vunpack.c.h.s8.bf16 %v5356
        %v6191 = vunpack.c.h.s8.bf16 %v5357
        %v6192 = vunpack.c.l.s8.bf16 %v5358
        %v6193 = vunpack.c.l.s8.bf16 %v5359
        %v6194 = vunpack.c.l.s8.bf16 %v5360
        %v6195 = vunpack.c.l.s8.bf16 %v5361
        %v6196 = vunpack.c.l.s8.bf16 %v5362
        %v6197 = vunpack.c.l.s8.bf16 %v5363
        %v6198 = vunpack.c.l.s8.bf16 %v5364
        %v6199 = vunpack.c.l.s8.bf16 %v5365
        %v6200 = vunpack.c.l.s8.bf16 %v5366
        %v6201 = vunpack.c.l.s8.bf16 %v5367
        %v6202 = vunpack.c.l.s8.bf16 %v5368
        %v6203 = vunpack.c.l.s8.bf16 %v5369
        %v6204 = vunpack.c.l.s8.bf16 %v5370
        %v6205 = vunpack.c.l.s8.bf16 %v5371
        %v6206 = vunpack.c.h.s8.bf16 %v5358
        %v6207 = vunpack.c.h.s8.bf16 %v5359
        %v6208 = vunpack.c.h.s8.bf16 %v5360
        %v6209 = vunpack.c.h.s8.bf16 %v5361
        %v6210 = vunpack.c.h.s8.bf16 %v5362
        %v6211 = vunpack.c.h.s8.bf16 %v5363
        %v6212 = vunpack.c.h.s8.bf16 %v5364
        %v6213 = vunpack.c.h.s8.bf16 %v5365
        %v6214 = vunpack.c.h.s8.bf16 %v5366
        %v6215 = vunpack.c.h.s8.bf16 %v5367
        %v6216 = vunpack.c.h.s8.bf16 %v5368
        %v6217 = vunpack.c.h.s8.bf16 %v5369
        %v6218 = vunpack.c.h.s8.bf16 %v5370
        %v6219 = vunpack.c.h.s8.bf16 %v5371
        %v6220 = vunpack.c.l.s8.bf16 %v5372
        %v6221 = vunpack.c.l.s8.bf16 %v5373
        %v6222 = vunpack.c.l.s8.bf16 %v5374
        %v6223 = vunpack.c.l.s8.bf16 %v5375
        %v6224 = vunpack.c.l.s8.bf16 %v5376
        %v6225 = vunpack.c.l.s8.bf16 %v5377
        %v6226 = vunpack.c.l.s8.bf16 %v5378
        %v6227 = vunpack.c.l.s8.bf16 %v5379
        %v6228 = vunpack.c.l.s8.bf16 %v5380
        %v6229 = vunpack.c.l.s8.bf16 %v5381
        %v6230 = vunpack.c.l.s8.bf16 %v5382
        %v6231 = vunpack.c.l.s8.bf16 %v5383
        %v6232 = vunpack.c.l.s8.bf16 %v5384
        %v6233 = vunpack.c.l.s8.bf16 %v5385
        %v6234 = vunpack.c.h.s8.bf16 %v5372
        %v6235 = vunpack.c.h.s8.bf16 %v5373
        %v6236 = vunpack.c.h.s8.bf16 %v5374
        %v6237 = vunpack.c.h.s8.bf16 %v5375
        %v6238 = vunpack.c.h.s8.bf16 %v5376
        %v6239 = vunpack.c.h.s8.bf16 %v5377
        %v6240 = vunpack.c.h.s8.bf16 %v5378
        %v6241 = vunpack.c.h.s8.bf16 %v5379
        %v6242 = vunpack.c.h.s8.bf16 %v5380
        %v6243 = vunpack.c.h.s8.bf16 %v5381
        %v6244 = vunpack.c.h.s8.bf16 %v5382
        %v6245 = vunpack.c.h.s8.bf16 %v5383
        %v6246 = vunpack.c.h.s8.bf16 %v5384
        %v6247 = vunpack.c.h.s8.bf16 %v5385
        %v6248 = vunpack.c.l.s8.bf16 %v5386
        %v6249 = vunpack.c.l.s8.bf16 %v5387
        %v6250 = vunpack.c.l.s8.bf16 %v5388
        %v6251 = vunpack.c.l.s8.bf16 %v5389
        %v6252 = vunpack.c.l.s8.bf16 %v5390
        %v6253 = vunpack.c.l.s8.bf16 %v5391
        %v6254 = vunpack.c.l.s8.bf16 %v5392
        %v6255 = vunpack.c.l.s8.bf16 %v5393
        %v6256 = vunpack.c.l.s8.bf16 %v5394
        %v6257 = vunpack.c.l.s8.bf16 %v5395
        %v6258 = vunpack.c.l.s8.bf16 %v5396
        %v6259 = vunpack.c.l.s8.bf16 %v5397
        %v6260 = vunpack.c.l.s8.bf16 %v5398
        %v6261 = vunpack.c.l.s8.bf16 %v5399
        %v6262 = vunpack.c.h.s8.bf16 %v5386
        %v6263 = vunpack.c.h.s8.bf16 %v5387
        %v6264 = vunpack.c.h.s8.bf16 %v5388
        %v6265 = vunpack.c.h.s8.bf16 %v5389
        %v6266 = vunpack.c.h.s8.bf16 %v5390
        %v6267 = vunpack.c.h.s8.bf16 %v5391
        %v6268 = vunpack.c.h.s8.bf16 %v5392
        %v6269 = vunpack.c.h.s8.bf16 %v5393
        %v6270 = vunpack.c.h.s8.bf16 %v5394
        %v6271 = vunpack.c.h.s8.bf16 %v5395
        %v6272 = vunpack.c.h.s8.bf16 %v5396
        %v6273 = vunpack.c.h.s8.bf16 %v5397
        %v6274 = vunpack.c.h.s8.bf16 %v5398
        %v6275 = vunpack.c.h.s8.bf16 %v5399
        %v6276 = vunpack.c.l.s8.bf16 %v5400
        %v6277 = vunpack.c.l.s8.bf16 %v5401
        %v6278 = vunpack.c.l.s8.bf16 %v5402
        %v6279 = vunpack.c.l.s8.bf16 %v5403
        %v6280 = vunpack.c.l.s8.bf16 %v5404
        %v6281 = vunpack.c.l.s8.bf16 %v5405
        %v6282 = vunpack.c.l.s8.bf16 %v5406
        %v6283 = vunpack.c.l.s8.bf16 %v5407
        %v6284 = vunpack.c.l.s8.bf16 %v5408
        %v6285 = vunpack.c.l.s8.bf16 %v5409
        %v6286 = vunpack.c.l.s8.bf16 %v5410
        %v6287 = vunpack.c.l.s8.bf16 %v5411
        %v6288 = vunpack.c.l.s8.bf16 %v5412
        %v6289 = vunpack.c.l.s8.bf16 %v5413
        %v6290 = vunpack.c.h.s8.bf16 %v5400
        %v6291 = vunpack.c.h.s8.bf16 %v5401
        %v6292 = vunpack.c.h.s8.bf16 %v5402
        %v6293 = vunpack.c.h.s8.bf16 %v5403
        %v6294 = vunpack.c.h.s8.bf16 %v5404
        %v6295 = vunpack.c.h.s8.bf16 %v5405
        %v6296 = vunpack.c.h.s8.bf16 %v5406
        %v6297 = vunpack.c.h.s8.bf16 %v5407
        %v6298 = vunpack.c.h.s8.bf16 %v5408
        %v6299 = vunpack.c.h.s8.bf16 %v5409
        %v6300 = vunpack.c.h.s8.bf16 %v5410
        %v6301 = vunpack.c.h.s8.bf16 %v5411
        %v6302 = vunpack.c.h.s8.bf16 %v5412
        %v6303 = vunpack.c.h.s8.bf16 %v5413
        %v6304 = vunpack.c.l.s8.bf16 %v5414
        %v6305 = vunpack.c.l.s8.bf16 %v5415
        %v6306 = vunpack.c.l.s8.bf16 %v5416
        %v6307 = vunpack.c.l.s8.bf16 %v5417
        %v6308 = vunpack.c.l.s8.bf16 %v5418
        %v6309 = vunpack.c.l.s8.bf16 %v5419
        %v6310 = vunpack.c.l.s8.bf16 %v5420
        %v6311 = vunpack.c.l.s8.bf16 %v5421
        %v6312 = vunpack.c.l.s8.bf16 %v5422
        %v6313 = vunpack.c.l.s8.bf16 %v5423
        %v6314 = vunpack.c.l.s8.bf16 %v5424
        %v6315 = vunpack.c.l.s8.bf16 %v5425
        %v6316 = vunpack.c.l.s8.bf16 %v5426
        %v6317 = vunpack.c.l.s8.bf16 %v5427
        %v6318 = vunpack.c.h.s8.bf16 %v5414
        %v6319 = vunpack.c.h.s8.bf16 %v5415
        %v6320 = vunpack.c.h.s8.bf16 %v5416
        %v6321 = vunpack.c.h.s8.bf16 %v5417
        %v6322 = vunpack.c.h.s8.bf16 %v5418
        %v6323 = vunpack.c.h.s8.bf16 %v5419
        %v6324 = vunpack.c.h.s8.bf16 %v5420
        %v6325 = vunpack.c.h.s8.bf16 %v5421
        %v6326 = vunpack.c.h.s8.bf16 %v5422
        %v6327 = vunpack.c.h.s8.bf16 %v5423
        %v6328 = vunpack.c.h.s8.bf16 %v5424
        %v6329 = vunpack.c.h.s8.bf16 %v5425
        %v6330 = vunpack.c.h.s8.bf16 %v5426
        %v6331 = vunpack.c.h.s8.bf16 %v5427
        %6332 = vmatprep.subr.bf16.mxu0 %v5437
        %6333 = vmatpush1.bf16.msra.mxu0 %v5436
        %6334 = vmatprep.subr.bf16.mxu0 %v5451
        %6335 = vmatpush1.bf16.msra.mxu0 %v5450
        %6336 = vmatprep.subr.bf16.mxu0 %v5465
        %6337 = vmatpush1.bf16.msra.mxu0 %v5464
        %6338 = vmatprep.subr.bf16.mxu0 %v5479
        %6339 = vmatpush1.bf16.msra.mxu0 %v5478
        %6340 = vmatprep.subr.bf16.mxu0 %v5493
        %6341 = vmatpush1.bf16.msra.mxu0 %v5492
        %6342 = vmatprep.subr.bf16.mxu0 %v5507
        %6343 = vmatpush1.bf16.msra.mxu0 %v5506
        %6344 = vmatprep.subr.bf16.mxu0 %v5521
        %6345 = vmatpush1.bf16.msra.mxu0 %v5520
        %6346 = vmatprep.subr.bf16.mxu0 %v5535
        %6347 = vmatpush1.bf16.msra.mxu0 %v5534
        %6348 = vmatprep.subr.bf16.mxu0 %v5549
        %6349 = vmatpush1.bf16.msra.mxu0 %v5548
        %6350 = vmatprep.subr.bf16.mxu0 %v5563
        %6351 = vmatpush1.bf16.msra.mxu0 %v5562
        %6352 = vmatprep.subr.bf16.mxu0 %v5577
        %6353 = vmatpush1.bf16.msra.mxu0 %v5576
        %6354 = vmatprep.subr.bf16.mxu0 %v5591
        %6355 = vmatpush1.bf16.msra.mxu0 %v5590
        %6356 = vmatprep.subr.bf16.mxu0 %v5605
        %6357 = vmatpush1.bf16.msra.mxu0 %v5604
        %6358 = vmatprep.subr.bf16.mxu0 %v5619
        %6359 = vmatpush1.bf16.msra.mxu0 %v5618
        %6360 = vmatprep.subr.bf16.mxu0 %v5633
        %6361 = vmatpush1.bf16.msra.mxu0 %v5632
        %6362 = vmatprep.subr.bf16.mxu0 %v5647
        %6363 = vmatpush1.bf16.msra.mxu0 %v5646
        %6364 = vmatprep.mubr.bf16.mxu0 %v5429
        %6365 = vmatmul.mubr.bf16.gmra.mrb[0].mxu0 %v5428
        %v6366 = vpop.f32.mrb[0].mxu0
        %v6367 = vadd.f32 0.0, %v6366
        %v6368 = vpop.f32.mrb[0].mxu0
        %v6369 = vadd.f32 0.0, %v6368
        %v6370 = vpop.f32.mrb[0].mxu0
        %v6371 = vpop.f32.mrb[0].mxu0
        %6372 = vdwg.mxu0
        %6373 = vmatprep.subr.bf16.mxu0 %v5661
        %6374 = vmatpush1.bf16.msra.mxu0 %v5660
        %6375 = vmatprep.subr.bf16.mxu0 %v5675
        %6376 = vmatpush1.bf16.msra.mxu0 %v5674
        %6377 = vmatprep.subr.bf16.mxu0 %v5689
        %6378 = vmatpush1.bf16.msra.mxu0 %v5688
        %6379 = vmatprep.subr.bf16.mxu0 %v5703
        %6380 = vmatpush1.bf16.msra.mxu0 %v5702
        %6381 = vmatprep.subr.bf16.mxu0 %v5717
        %6382 = vmatpush1.bf16.msra.mxu0 %v5716
        %6383 = vmatprep.subr.bf16.mxu0 %v5731
        %6384 = vmatpush1.bf16.msra.mxu0 %v5730
        %6385 = vmatprep.subr.bf16.mxu0 %v5745
        %6386 = vmatpush1.bf16.msra.mxu0 %v5744
        %6387 = vmatprep.subr.bf16.mxu0 %v5759
        %6388 = vmatpush1.bf16.msra.mxu0 %v5758
        %6389 = vmatprep.subr.bf16.mxu0 %v5773
        %6390 = vmatpush1.bf16.msra.mxu0 %v5772
        %6391 = vmatprep.subr.bf16.mxu0 %v5787
        %6392 = vmatpush1.bf16.msra.mxu0 %v5786
        %6393 = vmatprep.subr.bf16.mxu0 %v5801
        %6394 = vmatpush1.bf16.msra.mxu0 %v5800
        %6395 = vmatprep.subr.bf16.mxu0 %v5815
        %6396 = vmatpush1.bf16.msra.mxu0 %v5814
        %6397 = vmatprep.subr.bf16.mxu0 %v5829
        %6398 = vmatpush1.bf16.msra.mxu0 %v5828
        %6399 = vmatprep.subr.bf16.mxu0 %v5843
        %6400 = vmatpush1.bf16.msra.mxu0 %v5842
        %6401 = vmatprep.subr.bf16.mxu0 %v5857
        %6402 = vmatpush1.bf16.msra.mxu0 %v5856
        %6403 = vmatprep.subr.bf16.mxu0 %v5871
        %6404 = vmatpush1.bf16.msra.mxu0 %v5870
        %6405 = vmatprep.mubr.bf16.mxu0 %v5431
        %6406 = vmatmul.mubr.bf16.gmra.mrb[0].mxu0 %v5430
        %v6407 = vpop.f32.mrb[0].mxu0
        %v6408 = vadd.f32 %v6367, %v6407
        %v6409 = vpop.f32.mrb[0].mxu0
        %v6410 = vadd.f32 %v6369, %v6409
        %v6411 = vpop.f32.mrb[0].mxu0
        %v6412 = vpop.f32.mrb[0].mxu0
        %6413 = vdwg.mxu0
        %6414 = vmatprep.subr.bf16.mxu0 %v5885
        %6415 = vmatpush1.bf16.msra.mxu0 %v5884
        %6416 = vmatprep.subr.bf16.mxu0 %v5899
        %6417 = vmatpush1.bf16.msra.mxu0 %v5898
        %6418 = vmatprep.subr.bf16.mxu0 %v5913
        %6419 = vmatpush1.bf16.msra.mxu0 %v5912
        %6420 = vmatprep.subr.bf16.mxu0 %v5927
        %6421 = vmatpush1.bf16.msra.mxu0 %v5926
        %6422 = vmatprep.subr.bf16.mxu0 %v5941
        %6423 = vmatpush1.bf16.msra.mxu0 %v5940
        %6424 = vmatprep.subr.bf16.mxu0 %v5955
        %6425 = vmatpush1.bf16.msra.mxu0 %v5954
        %6426 = vmatprep.subr.bf16.mxu0 %v5969
        %6427 = vmatpush1.bf16.msra.mxu0 %v5968
        %6428 = vmatprep.subr.bf16.mxu0 %v5983
        %6429 = vmatpush1.bf16.msra.mxu0 %v5982
        %6430 = vmatprep.subr.bf16.mxu0 %v5997
        %6431 = vmatpush1.bf16.msra.mxu0 %v5996
        %6432 = vmatprep.subr.bf16.mxu0 %v6011
        %6433 = vmatpush1.bf16.msra.mxu0 %v6010
        %6434 = vmatprep.subr.bf16.mxu0 %v6025
        %6435 = vmatpush1.bf16.msra.mxu0 %v6024
        %6436 = vmatprep.subr.bf16.mxu0 %v6039
        %6437 = vmatpush1.bf16.msra.mxu0 %v6038
        %6438 = vmatprep.subr.bf16.mxu0 %v6053
        %6439 = vmatpush1.bf16.msra.mxu0 %v6052
        %6440 = vmatprep.subr.bf16.mxu0 %v6067
        %6441 = vmatpush1.bf16.msra.mxu0 %v6066
        %6442 = vmatprep.subr.bf16.mxu0 %v6081
        %6443 = vmatpush1.bf16.msra.mxu0 %v6080
        %6444 = vmatprep.subr.bf16.mxu0 %v6095
        %6445 = vmatpush1.bf16.msra.mxu0 %v6094
        %6446 = vmatprep.mubr.bf16.mxu0 %v5433
        %6447 = vmatmul.mubr.bf16.gmra.mrb[0].mxu0 %v5432
        %v6448 = vpop.f32.mrb[0].mxu0
        %v6449 = vadd.f32 %v6408, %v6448
        %v6450 = vpop.f32.mrb[0].mxu0
        %v6451 = vadd.f32 %v6410, %v6450
        %v6452 = vpop.f32.mrb[0].mxu0
        %v6453 = vpop.f32.mrb[0].mxu0
        %6454 = vdwg.mxu0
        %6455 = vmatprep.subr.bf16.mxu0 %v6109
        %6456 = vmatpush1.bf16.msra.mxu0 %v6108
        %6457 = vmatprep.subr.bf16.mxu0 %v6123
        %6458 = vmatpush1.bf16.msra.mxu0 %v6122
        %6459 = vmatprep.subr.bf16.mxu0 %v6137
        %6460 = vmatpush1.bf16.msra.mxu0 %v6136
        %6461 = vmatprep.subr.bf16.mxu0 %v6151
        %6462 = vmatpush1.bf16.msra.mxu0 %v6150
        %6463 = vmatprep.subr.bf16.mxu0 %v6165
        %6464 = vmatpush1.bf16.msra.mxu0 %v6164
        %6465 = vmatprep.subr.bf16.mxu0 %v6179
        %6466 = vmatpush1.bf16.msra.mxu0 %v6178
        %6467 = vmatprep.subr.bf16.mxu0 %v6193
        %6468 = vmatpush1.bf16.msra.mxu0 %v6192
        %6469 = vmatprep.subr.bf16.mxu0 %v6207
        %6470 = vmatpush1.bf16.msra.mxu0 %v6206
        %6471 = vmatprep.subr.bf16.mxu0 %v6221
        %6472 = vmatpush1.bf16.msra.mxu0 %v6220
        %6473 = vmatprep.subr.bf16.mxu0 %v6235
        %6474 = vmatpush1.bf16.msra.mxu0 %v6234
        %6475 = vmatprep.subr.bf16.mxu0 %v6249
        %6476 = vmatpush1.bf16.msra.mxu0 %v6248
        %6477 = vmatprep.subr.bf16.mxu0 %v6263
        %6478 = vmatpush1.bf16.msra.mxu0 %v6262
        %6479 = vmatprep.subr.bf16.mxu0 %v6277
        %6480 = vmatpush1.bf16.msra.mxu0 %v6276
        %6481 = vmatprep.subr.bf16.mxu0 %v6291
        %6482 = vmatpush1.bf16.msra.mxu0 %v6290
        %6483 = vmatprep.subr.bf16.mxu0 %v6305
        %6484 = vmatpush1.bf16.msra.mxu0 %v6304
        %6485 = vmatprep.subr.bf16.mxu0 %v6319
        %6486 = vmatpush1.bf16.msra.mxu0 %v6318
        %6487 = vmatprep.mubr.bf16.mxu0 %v5435
        %6488 = vmatmul.mubr.bf16.gmra.mrb[0].mxu0 %v5434
        %v6489 = vpop.f32.mrb[0].mxu0
        %v6490 = vadd.f32 %v6449, %v6489
        %v6491 = vpop.f32.mrb[0].mxu0
        %v6492 = vadd.f32 %v6451, %v6491
        %v6493 = vpop.f32.mrb[0].mxu0
        %v6494 = vpop.f32.mrb[0].mxu0
        %6495 = vdwg.mxu0
        %6496 = vmatprep.subr.bf16.mxu0 %v5439
        %6497 = vmatpush1.bf16.msra.mxu0 %v5438
        %6498 = vmatprep.subr.bf16.mxu0 %v5453
        %6499 = vmatpush1.bf16.msra.mxu0 %v5452
        %6500 = vmatprep.subr.bf16.mxu0 %v5467
        %6501 = vmatpush1.bf16.msra.mxu0 %v5466
        %6502 = vmatprep.subr.bf16.mxu0 %v5481
        %6503 = vmatpush1.bf16.msra.mxu0 %v5480
        %6504 = vmatprep.subr.bf16.mxu0 %v5495
        %6505 = vmatpush1.bf16.msra.mxu0 %v5494
        %6506 = vmatprep.subr.bf16.mxu0 %v5509
        %6507 = vmatpush1.bf16.msra.mxu0 %v5508
        %6508 = vmatprep.subr.bf16.mxu0 %v5523
        %6509 = vmatpush1.bf16.msra.mxu0 %v5522
        %6510 = vmatprep.subr.bf16.mxu0 %v5537
        %6511 = vmatpush1.bf16.msra.mxu0 %v5536
        %6512 = vmatprep.subr.bf16.mxu0 %v5551
        %6513 = vmatpush1.bf16.msra.mxu0 %v5550
        %6514 = vmatprep.subr.bf16.mxu0 %v5565
        %6515 = vmatpush1.bf16.msra.mxu0 %v5564
        %6516 = vmatprep.subr.bf16.mxu0 %v5579
        %6517 = vmatpush1.bf16.msra.mxu0 %v5578
        %6518 = vmatprep.subr.bf16.mxu0 %v5593
        %6519 = vmatpush1.bf16.msra.mxu0 %v5592
        %6520 = vmatprep.subr.bf16.mxu0 %v5607
        %6521 = vmatpush1.bf16.msra.mxu0 %v5606
        %6522 = vmatprep.subr.bf16.mxu0 %v5621
        %6523 = vmatpush1.bf16.msra.mxu0 %v5620
        %6524 = vmatprep.subr.bf16.mxu0 %v5635
        %6525 = vmatpush1.bf16.msra.mxu0 %v5634
        %6526 = vmatprep.subr.bf16.mxu0 %v5649
        %6527 = vmatpush1.bf16.msra.mxu0 %v5648
        %6528 = vmatprep.mubr.bf16.mxu0 %v5429
        %6529 = vmatmul.mubr.bf16.gmra.mrb[0].mxu0 %v5428
        %v6530 = vpop.f32.mrb[0].mxu0
        %v6531 = vadd.f32 0.0, %v6530
        %v6532 = vpop.f32.mrb[0].mxu0
        %v6533 = vadd.f32 0.0, %v6532
        %v6534 = vpop.f32.mrb[0].mxu0
        %v6535 = vpop.f32.mrb[0].mxu0
        %6536 = vdwg.mxu0
        %6537 = vmatprep.subr.bf16.mxu0 %v5663
        %6538 = vmatpush1.bf16.msra.mxu0 %v5662
        %6539 = vmatprep.subr.bf16.mxu0 %v5677
        %6540 = vmatpush1.bf16.msra.mxu0 %v5676
        %6541 = vmatprep.subr.bf16.mxu0 %v5691
        %6542 = vmatpush1.bf16.msra.mxu0 %v5690
        %6543 = vmatprep.subr.bf16.mxu0 %v5705
        %6544 = vmatpush1.bf16.msra.mxu0 %v5704
        %6545 = vmatprep.subr.bf16.mxu0 %v5719
        %6546 = vmatpush1.bf16.msra.mxu0 %v5718
        %6547 = vmatprep.subr.bf16.mxu0 %v5733
        %6548 = vmatpush1.bf16.msra.mxu0 %v5732
        %6549 = vmatprep.subr.bf16.mxu0 %v5747
        %6550 = vmatpush1.bf16.msra.mxu0 %v5746
        %6551 = vmatprep.subr.bf16.mxu0 %v5761
        %6552 = vmatpush1.bf16.msra.mxu0 %v5760
        %6553 = vmatprep.subr.bf16.mxu0 %v5775
        %6554 = vmatpush1.bf16.msra.mxu0 %v5774
        %6555 = vmatprep.subr.bf16.mxu0 %v5789
        %6556 = vmatpush1.bf16.msra.mxu0 %v5788
        %6557 = vmatprep.subr.bf16.mxu0 %v5803
        %6558 = vmatpush1.bf16.msra.mxu0 %v5802
        %6559 = vmatprep.subr.bf16.mxu0 %v5817
        %6560 = vmatpush1.bf16.msra.mxu0 %v5816
        %6561 = vmatprep.subr.bf16.mxu0 %v5831
        %6562 = vmatpush1.bf16.msra.mxu0 %v5830
        %6563 = vmatprep.subr.bf16.mxu0 %v5845
        %6564 = vmatpush1.bf16.msra.mxu0 %v5844
        %6565 = vmatprep.subr.bf16.mxu0 %v5859
        %6566 = vmatpush1.bf16.msra.mxu0 %v5858
        %6567 = vmatprep.subr.bf16.mxu0 %v5873
        %6568 = vmatpush1.bf16.msra.mxu0 %v5872
        %6569 = vmatprep.mubr.bf16.mxu0 %v5431
        %6570 = vmatmul.mubr.bf16.gmra.mrb[0].mxu0 %v5430
        %v6571 = vpop.f32.mrb[0].mxu0
        %v6572 = vadd.f32 %v6531, %v6571
        %v6573 = vpop.f32.mrb[0].mxu0
        %v6574 = vadd.f32 %v6533, %v6573
        %v6575 = vpop.f32.mrb[0].mxu0
        %v6576 = vpop.f32.mrb[0].mxu0
        %6577 = vdwg.mxu0
        %6578 = vmatprep.subr.bf16.mxu0 %v5887
        %6579 = vmatpush1.bf16.msra.mxu0 %v5886
        %6580 = vmatprep.subr.bf16.mxu0 %v5901
        %6581 = vmatpush1.bf16.msra.mxu0 %v5900
        %6582 = vmatprep.subr.bf16.mxu0 %v5915
        %6583 = vmatpush1.bf16.msra.mxu0 %v5914
        %6584 = vmatprep.subr.bf16.mxu0 %v5929
        %6585 = vmatpush1.bf16.msra.mxu0 %v5928
        %6586 = vmatprep.subr.bf16.mxu0 %v5943
        %6587 = vmatpush1.bf16.msra.mxu0 %v5942
        %6588 = vmatprep.subr.bf16.mxu0 %v5957
        %6589 = vmatpush1.bf16.msra.mxu0 %v5956
        %6590 = vmatprep.subr.bf16.mxu0 %v5971
        %6591 = vmatpush1.bf16.msra.mxu0 %v5970
        %6592 = vmatprep.subr.bf16.mxu0 %v5985
        %6593 = vmatpush1.bf16.msra.mxu0 %v5984
        %6594 = vmatprep.subr.bf16.mxu0 %v5999
        %6595 = vmatpush1.bf16.msra.mxu0 %v5998
        %6596 = vmatprep.subr.bf16.mxu0 %v6013
        %6597 = vmatpush1.bf16.msra.mxu0 %v6012
        %6598 = vmatprep.subr.bf16.mxu0 %v6027
        %6599 = vmatpush1.bf16.msra.mxu0 %v6026
        %6600 = vmatprep.subr.bf16.mxu0 %v6041
        %6601 = vmatpush1.bf16.msra.mxu0 %v6040
        %6602 = vmatprep.subr.bf16.mxu0 %v6055
        %6603 = vmatpush1.bf16.msra.mxu0 %v6054
        %6604 = vmatprep.subr.bf16.mxu0 %v6069
        %6605 = vmatpush1.bf16.msra.mxu0 %v6068
        %6606 = vmatprep.subr.bf16.mxu0 %v6083
        %6607 = vmatpush1.bf16.msra.mxu0 %v6082
        %6608 = vmatprep.subr.bf16.mxu0 %v6097
        %6609 = vmatpush1.bf16.msra.mxu0 %v6096
        %6610 = vmatprep.mubr.bf16.mxu0 %v5433
        %6611 = vmatmul.mubr.bf16.gmra.mrb[0].mxu0 %v5432
        %v6612 = vpop.f32.mrb[0].mxu0
        %v6613 = vadd.f32 %v6572, %v6612
        %v6614 = vpop.f32.mrb[0].mxu0
        %v6615 = vadd.f32 %v6574, %v6614
        %v6616 = vpop.f32.mrb[0].mxu0
        %v6617 = vpop.f32.mrb[0].mxu0
        %6618 = vdwg.mxu0
        %6619 = vmatprep.subr.bf16.mxu0 %v6111
        %6620 = vmatpush1.bf16.msra.mxu0 %v6110
        %6621 = vmatprep.subr.bf16.mxu0 %v6125
        %6622 = vmatpush1.bf16.msra.mxu0 %v6124
        %6623 = vmatprep.subr.bf16.mxu0 %v6139
        %6624 = vmatpush1.bf16.msra.mxu0 %v6138
        %6625 = vmatprep.subr.bf16.mxu0 %v6153
        %6626 = vmatpush1.bf16.msra.mxu0 %v6152
        %6627 = vmatprep.subr.bf16.mxu0 %v6167
        %6628 = vmatpush1.bf16.msra.mxu0 %v6166
        %6629 = vmatprep.subr.bf16.mxu0 %v6181
        %6630 = vmatpush1.bf16.msra.mxu0 %v6180
        %6631 = vmatprep.subr.bf16.mxu0 %v6195
        %6632 = vmatpush1.bf16.msra.mxu0 %v6194
        %6633 = vmatprep.subr.bf16.mxu0 %v6209
        %6634 = vmatpush1.bf16.msra.mxu0 %v6208
        %6635 = vmatprep.subr.bf16.mxu0 %v6223
        %6636 = vmatpush1.bf16.msra.mxu0 %v6222
        %6637 = vmatprep.subr.bf16.mxu0 %v6237
        %6638 = vmatpush1.bf16.msra.mxu0 %v6236
        %6639 = vmatprep.subr.bf16.mxu0 %v6251
        %6640 = vmatpush1.bf16.msra.mxu0 %v6250
        %6641 = vmatprep.subr.bf16.mxu0 %v6265
        %6642 = vmatpush1.bf16.msra.mxu0 %v6264
        %6643 = vmatprep.subr.bf16.mxu0 %v6279
        %6644 = vmatpush1.bf16.msra.mxu0 %v6278
        %6645 = vmatprep.subr.bf16.mxu0 %v6293
        %6646 = vmatpush1.bf16.msra.mxu0 %v6292
        %6647 = vmatprep.subr.bf16.mxu0 %v6307
        %6648 = vmatpush1.bf16.msra.mxu0 %v6306
        %6649 = vmatprep.subr.bf16.mxu0 %v6321
        %6650 = vmatpush1.bf16.msra.mxu0 %v6320
        %6651 = vmatprep.mubr.bf16.mxu0 %v5435
        %6652 = vmatmul.mubr.bf16.gmra.mrb[0].mxu0 %v5434
        %v6653 = vpop.f32.mrb[0].mxu0
        %v6654 = vadd.f32 %v6613, %v6653
        %v6655 = vpop.f32.mrb[0].mxu0
        %v6656 = vadd.f32 %v6615, %v6655
        %v6657 = vpop.f32.mrb[0].mxu0
        %v6658 = vpop.f32.mrb[0].mxu0
        %6659 = vdwg.mxu0
        %6660 = vmatprep.subr.bf16.mxu0 %v5441
        %6661 = vmatpush1.bf16.msra.mxu0 %v5440
        %6662 = vmatprep.subr.bf16.mxu0 %v5455
        %6663 = vmatpush1.bf16.msra.mxu0 %v5454
        %6664 = vmatprep.subr.bf16.mxu0 %v5469
        %6665 = vmatpush1.bf16.msra.mxu0 %v5468
        %6666 = vmatprep.subr.bf16.mxu0 %v5483
        %6667 = vmatpush1.bf16.msra.mxu0 %v5482
        %6668 = vmatprep.subr.bf16.mxu0 %v5497
        %6669 = vmatpush1.bf16.msra.mxu0 %v5496
        %6670 = vmatprep.subr.bf16.mxu0 %v5511
        %6671 = vmatpush1.bf16.msra.mxu0 %v5510
        %6672 = vmatprep.subr.bf16.mxu0 %v5525
        %6673 = vmatpush1.bf16.msra.mxu0 %v5524
        %6674 = vmatprep.subr.bf16.mxu0 %v5539
        %6675 = vmatpush1.bf16.msra.mxu0 %v5538
        %6676 = vmatprep.subr.bf16.mxu0 %v5553
        %6677 = vmatpush1.bf16.msra.mxu0 %v5552
        %6678 = vmatprep.subr.bf16.mxu0 %v5567
        %6679 = vmatpush1.bf16.msra.mxu0 %v5566
        %6680 = vmatprep.subr.bf16.mxu0 %v5581
        %6681 = vmatpush1.bf16.msra.mxu0 %v5580
        %6682 = vmatprep.subr.bf16.mxu0 %v5595
        %6683 = vmatpush1.bf16.msra.mxu0 %v5594
        %6684 = vmatprep.subr.bf16.mxu0 %v5609
        %6685 = vmatpush1.bf16.msra.mxu0 %v5608
        %6686 = vmatprep.subr.bf16.mxu0 %v5623
        %6687 = vmatpush1.bf16.msra.mxu0 %v5622
        %6688 = vmatprep.subr.bf16.mxu0 %v5637
        %6689 = vmatpush1.bf16.msra.mxu0 %v5636
        %6690 = vmatprep.subr.bf16.mxu0 %v5651
        %6691 = vmatpush1.bf16.msra.mxu0 %v5650
        %6692 = vmatprep.mubr.bf16.mxu0 %v5429
        %6693 = vmatmul.mubr.bf16.gmra.mrb[0].mxu0 %v5428
        %v6694 = vpop.f32.mrb[0].mxu0
        %v6695 = vadd.f32 0.0, %v6694
        %v6696 = vpop.f32.mrb[0].mxu0
        %v6697 = vadd.f32 0.0, %v6696
        %v6698 = vpop.f32.mrb[0].mxu0
        %v6699 = vpop.f32.mrb[0].mxu0
        %6700 = vdwg.mxu0
        %6701 = vmatprep.subr.bf16.mxu0 %v5665
        %6702 = vmatpush1.bf16.msra.mxu0 %v5664
        %6703 = vmatprep.subr.bf16.mxu0 %v5679
        %6704 = vmatpush1.bf16.msra.mxu0 %v5678
        %6705 = vmatprep.subr.bf16.mxu0 %v5693
        %6706 = vmatpush1.bf16.msra.mxu0 %v5692
        %6707 = vmatprep.subr.bf16.mxu0 %v5707
        %6708 = vmatpush1.bf16.msra.mxu0 %v5706
        %6709 = vmatprep.subr.bf16.mxu0 %v5721
        %6710 = vmatpush1.bf16.msra.mxu0 %v5720
        %6711 = vmatprep.subr.bf16.mxu0 %v5735
        %6712 = vmatpush1.bf16.msra.mxu0 %v5734
        %6713 = vmatprep.subr.bf16.mxu0 %v5749
        %6714 = vmatpush1.bf16.msra.mxu0 %v5748
        %6715 = vmatprep.subr.bf16.mxu0 %v5763
        %6716 = vmatpush1.bf16.msra.mxu0 %v5762
        %6717 = vmatprep.subr.bf16.mxu0 %v5777
        %6718 = vmatpush1.bf16.msra.mxu0 %v5776
        %6719 = vmatprep.subr.bf16.mxu0 %v5791
        %6720 = vmatpush1.bf16.msra.mxu0 %v5790
        %6721 = vmatprep.subr.bf16.mxu0 %v5805
        %6722 = vmatpush1.bf16.msra.mxu0 %v5804
        %6723 = vmatprep.subr.bf16.mxu0 %v5819
        %6724 = vmatpush1.bf16.msra.mxu0 %v5818
        %6725 = vmatprep.subr.bf16.mxu0 %v5833
        %6726 = vmatpush1.bf16.msra.mxu0 %v5832
        %6727 = vmatprep.subr.bf16.mxu0 %v5847
        %6728 = vmatpush1.bf16.msra.mxu0 %v5846
        %6729 = vmatprep.subr.bf16.mxu0 %v5861
        %6730 = vmatpush1.bf16.msra.mxu0 %v5860
        %6731 = vmatprep.subr.bf16.mxu0 %v5875
        %6732 = vmatpush1.bf16.msra.mxu0 %v5874
        %6733 = vmatprep.mubr.bf16.mxu0 %v5431
        %6734 = vmatmul.mubr.bf16.gmra.mrb[0].mxu0 %v5430
        %v6735 = vpop.f32.mrb[0].mxu0
        %v6736 = vadd.f32 %v6695, %v6735
        %v6737 = vpop.f32.mrb[0].mxu0
        %v6738 = vadd.f32 %v6697, %v6737
        %v6739 = vpop.f32.mrb[0].mxu0
        %v6740 = vpop.f32.mrb[0].mxu0
        %6741 = vdwg.mxu0
        %6742 = vmatprep.subr.bf16.mxu0 %v5889
        %6743 = vmatpush1.bf16.msra.mxu0 %v5888
        %6744 = vmatprep.subr.bf16.mxu0 %v5903
        %6745 = vmatpush1.bf16.msra.mxu0 %v5902
        %6746 = vmatprep.subr.bf16.mxu0 %v5917
        %6747 = vmatpush1.bf16.msra.mxu0 %v5916
        %6748 = vmatprep.subr.bf16.mxu0 %v5931
        %6749 = vmatpush1.bf16.msra.mxu0 %v5930
        %6750 = vmatprep.subr.bf16.mxu0 %v5945
        %6751 = vmatpush1.bf16.msra.mxu0 %v5944
        %6752 = vmatprep.subr.bf16.mxu0 %v5959
        %6753 = vmatpush1.bf16.msra.mxu0 %v5958
        %6754 = vmatprep.subr.bf16.mxu0 %v5973
        %6755 = vmatpush1.bf16.msra.mxu0 %v5972
        %6756 = vmatprep.subr.bf16.mxu0 %v5987
        %6757 = vmatpush1.bf16.msra.mxu0 %v5986
        %6758 = vmatprep.subr.bf16.mxu0 %v6001
        %6759 = vmatpush1.bf16.msra.mxu0 %v6000
        %6760 = vmatprep.subr.bf16.mxu0 %v6015
        %6761 = vmatpush1.bf16.msra.mxu0 %v6014
        %6762 = vmatprep.subr.bf16.mxu0 %v6029
        %6763 = vmatpush1.bf16.msra.mxu0 %v6028
        %6764 = vmatprep.subr.bf16.mxu0 %v6043
        %6765 = vmatpush1.bf16.msra.mxu0 %v6042
        %6766 = vmatprep.subr.bf16.mxu0 %v6057
        %6767 = vmatpush1.bf16.msra.mxu0 %v6056
        %6768 = vmatprep.subr.bf16.mxu0 %v6071
        %6769 = vmatpush1.bf16.msra.mxu0 %v6070
        %6770 = vmatprep.subr.bf16.mxu0 %v6085
        %6771 = vmatpush1.bf16.msra.mxu0 %v6084
        %6772 = vmatprep.subr.bf16.mxu0 %v6099
        %6773 = vmatpush1.bf16.msra.mxu0 %v6098
        %6774 = vmatprep.mubr.bf16.mxu0 %v5433
        %6775 = vmatmul.mubr.bf16.gmra.mrb[0].mxu0 %v5432
        %v6776 = vpop.f32.mrb[0].mxu0
        %v6777 = vadd.f32 %v6736, %v6776
        %v6778 = vpop.f32.mrb[0].mxu0
        %v6779 = vadd.f32 %v6738, %v6778
        %v6780 = vpop.f32.mrb[0].mxu0
        %v6781 = vpop.f32.mrb[0].mxu0
        %6782 = vdwg.mxu0
        %6783 = vmatprep.subr.bf16.mxu0 %v6113
        %6784 = vmatpush1.bf16.msra.mxu0 %v6112
        %6785 = vmatprep.subr.bf16.mxu0 %v6127
        %6786 = vmatpush1.bf16.msra.mxu0 %v6126
        %6787 = vmatprep.subr.bf16.mxu0 %v6141
        %6788 = vmatpush1.bf16.msra.mxu0 %v6140
        %6789 = vmatprep.subr.bf16.mxu0 %v6155
        %6790 = vmatpush1.bf16.msra.mxu0 %v6154
        %6791 = vmatprep.subr.bf16.mxu0 %v6169
        %6792 = vmatpush1.bf16.msra.mxu0 %v6168
        %6793 = vmatprep.subr.bf16.mxu0 %v6183
        %6794 = vmatpush1.bf16.msra.mxu0 %v6182
        %6795 = vmatprep.subr.bf16.mxu0 %v6197
        %6796 = vmatpush1.bf16.msra.mxu0 %v6196
        %6797 = vmatprep.subr.bf16.mxu0 %v6211
        %6798 = vmatpush1.bf16.msra.mxu0 %v6210
        %6799 = vmatprep.subr.bf16.mxu0 %v6225
        %6800 = vmatpush1.bf16.msra.mxu0 %v6224
        %6801 = vmatprep.subr.bf16.mxu0 %v6239
        %6802 = vmatpush1.bf16.msra.mxu0 %v6238
        %6803 = vmatprep.subr.bf16.mxu0 %v6253
        %6804 = vmatpush1.bf16.msra.mxu0 %v6252
        %6805 = vmatprep.subr.bf16.mxu0 %v6267
        %6806 = vmatpush1.bf16.msra.mxu0 %v6266
        %6807 = vmatprep.subr.bf16.mxu0 %v6281
        %6808 = vmatpush1.bf16.msra.mxu0 %v6280
        %6809 = vmatprep.subr.bf16.mxu0 %v6295
        %6810 = vmatpush1.bf16.msra.mxu0 %v6294
        %6811 = vmatprep.subr.bf16.mxu0 %v6309
        %6812 = vmatpush1.bf16.msra.mxu0 %v6308
        %6813 = vmatprep.subr.bf16.mxu0 %v6323
        %6814 = vmatpush1.bf16.msra.mxu0 %v6322
        %6815 = vmatprep.mubr.bf16.mxu0 %v5435
        %6816 = vmatmul.mubr.bf16.gmra.mrb[0].mxu0 %v5434
        %v6817 = vpop.f32.mrb[0].mxu0
        %v6818 = vadd.f32 %v6777, %v6817
        %v6819 = vpop.f32.mrb[0].mxu0
        %v6820 = vadd.f32 %v6779, %v6819
        %v6821 = vpop.f32.mrb[0].mxu0
        %v6822 = vpop.f32.mrb[0].mxu0
        %6823 = vdwg.mxu0
        %6824 = vmatprep.subr.bf16.mxu0 %v5443
        %6825 = vmatpush1.bf16.msra.mxu0 %v5442
        %6826 = vmatprep.subr.bf16.mxu0 %v5457
        %6827 = vmatpush1.bf16.msra.mxu0 %v5456
        %6828 = vmatprep.subr.bf16.mxu0 %v5471
        %6829 = vmatpush1.bf16.msra.mxu0 %v5470
        %6830 = vmatprep.subr.bf16.mxu0 %v5485
        %6831 = vmatpush1.bf16.msra.mxu0 %v5484
        %6832 = vmatprep.subr.bf16.mxu0 %v5499
        %6833 = vmatpush1.bf16.msra.mxu0 %v5498
        %6834 = vmatprep.subr.bf16.mxu0 %v5513
        %6835 = vmatpush1.bf16.msra.mxu0 %v5512
        %6836 = vmatprep.subr.bf16.mxu0 %v5527
        %6837 = vmatpush1.bf16.msra.mxu0 %v5526
        %6838 = vmatprep.subr.bf16.mxu0 %v5541
        %6839 = vmatpush1.bf16.msra.mxu0 %v5540
        %6840 = vmatprep.subr.bf16.mxu0 %v5555
        %6841 = vmatpush1.bf16.msra.mxu0 %v5554
        %6842 = vmatprep.subr.bf16.mxu0 %v5569
        %6843 = vmatpush1.bf16.msra.mxu0 %v5568
        %6844 = vmatprep.subr.bf16.mxu0 %v5583
        %6845 = vmatpush1.bf16.msra.mxu0 %v5582
        %6846 = vmatprep.subr.bf16.mxu0 %v5597
        %6847 = vmatpush1.bf16.msra.mxu0 %v5596
        %6848 = vmatprep.subr.bf16.mxu0 %v5611
        %6849 = vmatpush1.bf16.msra.mxu0 %v5610
        %6850 = vmatprep.subr.bf16.mxu0 %v5625
        %6851 = vmatpush1.bf16.msra.mxu0 %v5624
        %6852 = vmatprep.subr.bf16.mxu0 %v5639
        %6853 = vmatpush1.bf16.msra.mxu0 %v5638
        %6854 = vmatprep.subr.bf16.mxu0 %v5653
        %6855 = vmatpush1.bf16.msra.mxu0 %v5652
        %6856 = vmatprep.mubr.bf16.mxu0 %v5429
        %6857 = vmatmul.mubr.bf16.gmra.mrb[0].mxu0 %v5428
        %v6858 = vpop.f32.mrb[0].mxu0
        %v6859 = vadd.f32 0.0, %v6858
        %v6860 = vpop.f32.mrb[0].mxu0
        %v6861 = vadd.f32 0.0, %v6860
        %v6862 = vpop.f32.mrb[0].mxu0
        %v6863 = vpop.f32.mrb[0].mxu0
        %6864 = vdwg.mxu0
        %6865 = vmatprep.subr.bf16.mxu0 %v5667
        %6866 = vmatpush1.bf16.msra.mxu0 %v5666
        %6867 = vmatprep.subr.bf16.mxu0 %v5681
        %6868 = vmatpush1.bf16.msra.mxu0 %v5680
        %6869 = vmatprep.subr.bf16.mxu0 %v5695
        %6870 = vmatpush1.bf16.msra.mxu0 %v5694
        %6871 = vmatprep.subr.bf16.mxu0 %v5709
        %6872 = vmatpush1.bf16.msra.mxu0 %v5708
        %6873 = vmatprep.subr.bf16.mxu0 %v5723
        %6874 = vmatpush1.bf16.msra.mxu0 %v5722
        %6875 = vmatprep.subr.bf16.mxu0 %v5737
        %6876 = vmatpush1.bf16.msra.mxu0 %v5736
        %6877 = vmatprep.subr.bf16.mxu0 %v5751
        %6878 = vmatpush1.bf16.msra.mxu0 %v5750
        %6879 = vmatprep.subr.bf16.mxu0 %v5765
        %6880 = vmatpush1.bf16.msra.mxu0 %v5764
        %6881 = vmatprep.subr.bf16.mxu0 %v5779
        %6882 = vmatpush1.bf16.msra.mxu0 %v5778
        %6883 = vmatprep.subr.bf16.mxu0 %v5793
        %6884 = vmatpush1.bf16.msra.mxu0 %v5792
        %6885 = vmatprep.subr.bf16.mxu0 %v5807
        %6886 = vmatpush1.bf16.msra.mxu0 %v5806
        %6887 = vmatprep.subr.bf16.mxu0 %v5821
        %6888 = vmatpush1.bf16.msra.mxu0 %v5820
        %6889 = vmatprep.subr.bf16.mxu0 %v5835
        %6890 = vmatpush1.bf16.msra.mxu0 %v5834
        %6891 = vmatprep.subr.bf16.mxu0 %v5849
        %6892 = vmatpush1.bf16.msra.mxu0 %v5848
        %6893 = vmatprep.subr.bf16.mxu0 %v5863
        %6894 = vmatpush1.bf16.msra.mxu0 %v5862
        %6895 = vmatprep.subr.bf16.mxu0 %v5877
        %6896 = vmatpush1.bf16.msra.mxu0 %v5876
        %6897 = vmatprep.mubr.bf16.mxu0 %v5431
        %6898 = vmatmul.mubr.bf16.gmra.mrb[0].mxu0 %v5430
        %v6899 = vpop.f32.mrb[0].mxu0
        %v6900 = vadd.f32 %v6859, %v6899
        %v6901 = vpop.f32.mrb[0].mxu0
        %v6902 = vadd.f32 %v6861, %v6901
        %v6903 = vpop.f32.mrb[0].mxu0
        %v6904 = vpop.f32.mrb[0].mxu0
        %6905 = vdwg.mxu0
        %6906 = vmatprep.subr.bf16.mxu0 %v5891
        %6907 = vmatpush1.bf16.msra.mxu0 %v5890
        %6908 = vmatprep.subr.bf16.mxu0 %v5905
        %6909 = vmatpush1.bf16.msra.mxu0 %v5904
        %6910 = vmatprep.subr.bf16.mxu0 %v5919
        %6911 = vmatpush1.bf16.msra.mxu0 %v5918
        %6912 = vmatprep.subr.bf16.mxu0 %v5933
        %6913 = vmatpush1.bf16.msra.mxu0 %v5932
        %6914 = vmatprep.subr.bf16.mxu0 %v5947
        %6915 = vmatpush1.bf16.msra.mxu0 %v5946
        %6916 = vmatprep.subr.bf16.mxu0 %v5961
        %6917 = vmatpush1.bf16.msra.mxu0 %v5960
        %6918 = vmatprep.subr.bf16.mxu0 %v5975
        %6919 = vmatpush1.bf16.msra.mxu0 %v5974
        %6920 = vmatprep.subr.bf16.mxu0 %v5989
        %6921 = vmatpush1.bf16.msra.mxu0 %v5988
        %6922 = vmatprep.subr.bf16.mxu0 %v6003
        %6923 = vmatpush1.bf16.msra.mxu0 %v6002
        %6924 = vmatprep.subr.bf16.mxu0 %v6017
        %6925 = vmatpush1.bf16.msra.mxu0 %v6016
        %6926 = vmatprep.subr.bf16.mxu0 %v6031
        %6927 = vmatpush1.bf16.msra.mxu0 %v6030
        %6928 = vmatprep.subr.bf16.mxu0 %v6045
        %6929 = vmatpush1.bf16.msra.mxu0 %v6044
        %6930 = vmatprep.subr.bf16.mxu0 %v6059
        %6931 = vmatpush1.bf16.msra.mxu0 %v6058
        %6932 = vmatprep.subr.bf16.mxu0 %v6073
        %6933 = vmatpush1.bf16.msra.mxu0 %v6072
        %6934 = vmatprep.subr.bf16.mxu0 %v6087
        %6935 = vmatpush1.bf16.msra.mxu0 %v6086
        %6936 = vmatprep.subr.bf16.mxu0 %v6101
        %6937 = vmatpush1.bf16.msra.mxu0 %v6100
        %6938 = vmatprep.mubr.bf16.mxu0 %v5433
        %6939 = vmatmul.mubr.bf16.gmra.mrb[0].mxu0 %v5432
        %v6940 = vpop.f32.mrb[0].mxu0
        %v6941 = vadd.f32 %v6900, %v6940
        %v6942 = vpop.f32.mrb[0].mxu0
        %v6943 = vadd.f32 %v6902, %v6942
        %v6944 = vpop.f32.mrb[0].mxu0
        %v6945 = vpop.f32.mrb[0].mxu0
        %6946 = vdwg.mxu0
        %6947 = vmatprep.subr.bf16.mxu0 %v6115
        %6948 = vmatpush1.bf16.msra.mxu0 %v6114
        %6949 = vmatprep.subr.bf16.mxu0 %v6129
        %6950 = vmatpush1.bf16.msra.mxu0 %v6128
        %6951 = vmatprep.subr.bf16.mxu0 %v6143
        %6952 = vmatpush1.bf16.msra.mxu0 %v6142
        %6953 = vmatprep.subr.bf16.mxu0 %v6157
        %6954 = vmatpush1.bf16.msra.mxu0 %v6156
        %6955 = vmatprep.subr.bf16.mxu0 %v6171
        %6956 = vmatpush1.bf16.msra.mxu0 %v6170
        %6957 = vmatprep.subr.bf16.mxu0 %v6185
        %6958 = vmatpush1.bf16.msra.mxu0 %v6184
        %6959 = vmatprep.subr.bf16.mxu0 %v6199
        %6960 = vmatpush1.bf16.msra.mxu0 %v6198
        %6961 = vmatprep.subr.bf16.mxu0 %v6213
        %6962 = vmatpush1.bf16.msra.mxu0 %v6212
        %6963 = vmatprep.subr.bf16.mxu0 %v6227
        %6964 = vmatpush1.bf16.msra.mxu0 %v6226
        %6965 = vmatprep.subr.bf16.mxu0 %v6241
        %6966 = vmatpush1.bf16.msra.mxu0 %v6240
        %6967 = vmatprep.subr.bf16.mxu0 %v6255
        %6968 = vmatpush1.bf16.msra.mxu0 %v6254
        %6969 = vmatprep.subr.bf16.mxu0 %v6269
        %6970 = vmatpush1.bf16.msra.mxu0 %v6268
        %6971 = vmatprep.subr.bf16.mxu0 %v6283
        %6972 = vmatpush1.bf16.msra.mxu0 %v6282
        %6973 = vmatprep.subr.bf16.mxu0 %v6297
        %6974 = vmatpush1.bf16.msra.mxu0 %v6296
        %6975 = vmatprep.subr.bf16.mxu0 %v6311
        %6976 = vmatpush1.bf16.msra.mxu0 %v6310
        %6977 = vmatprep.subr.bf16.mxu0 %v6325
        %6978 = vmatpush1.bf16.msra.mxu0 %v6324
        %6979 = vmatprep.mubr.bf16.mxu0 %v5435
        %6980 = vmatmul.mubr.bf16.gmra.mrb[0].mxu0 %v5434
        %v6981 = vpop.f32.mrb[0].mxu0
        %v6982 = vadd.f32 %v6941, %v6981
        %v6983 = vpop.f32.mrb[0].mxu0
        %v6984 = vadd.f32 %v6943, %v6983
        %v6985 = vpop.f32.mrb[0].mxu0
        %v6986 = vpop.f32.mrb[0].mxu0
        %6987 = vdwg.mxu0
        %6988 = vmatprep.subr.bf16.mxu0 %v5445
        %6989 = vmatpush1.bf16.msra.mxu0 %v5444
        %6990 = vmatprep.subr.bf16.mxu0 %v5459
        %6991 = vmatpush1.bf16.msra.mxu0 %v5458
        %6992 = vmatprep.subr.bf16.mxu0 %v5473
        %6993 = vmatpush1.bf16.msra.mxu0 %v5472
        %6994 = vmatprep.subr.bf16.mxu0 %v5487
        %6995 = vmatpush1.bf16.msra.mxu0 %v5486
        %6996 = vmatprep.subr.bf16.mxu0 %v5501
        %6997 = vmatpush1.bf16.msra.mxu0 %v5500
        %6998 = vmatprep.subr.bf16.mxu0 %v5515
        %6999 = vmatpush1.bf16.msra.mxu0 %v5514
        %7000 = vmatprep.subr.bf16.mxu0 %v5529
        %7001 = vmatpush1.bf16.msra.mxu0 %v5528
        %7002 = vmatprep.subr.bf16.mxu0 %v5543
        %7003 = vmatpush1.bf16.msra.mxu0 %v5542
        %7004 = vmatprep.subr.bf16.mxu0 %v5557
        %7005 = vmatpush1.bf16.msra.mxu0 %v5556
        %7006 = vmatprep.subr.bf16.mxu0 %v5571
        %7007 = vmatpush1.bf16.msra.mxu0 %v5570
        %7008 = vmatprep.subr.bf16.mxu0 %v5585
        %7009 = vmatpush1.bf16.msra.mxu0 %v5584
        %7010 = vmatprep.subr.bf16.mxu0 %v5599
        %7011 = vmatpush1.bf16.msra.mxu0 %v5598
        %7012 = vmatprep.subr.bf16.mxu0 %v5613
        %7013 = vmatpush1.bf16.msra.mxu0 %v5612
        %7014 = vmatprep.subr.bf16.mxu0 %v5627
        %7015 = vmatpush1.bf16.msra.mxu0 %v5626
        %7016 = vmatprep.subr.bf16.mxu0 %v5641
        %7017 = vmatpush1.bf16.msra.mxu0 %v5640
        %7018 = vmatprep.subr.bf16.mxu0 %v5655
        %7019 = vmatpush1.bf16.msra.mxu0 %v5654
        %7020 = vmatprep.mubr.bf16.mxu0 %v5429
        %7021 = vmatmul.mubr.bf16.gmra.mrb[0].mxu0 %v5428
        %v7022 = vpop.f32.mrb[0].mxu0
        %v7023 = vadd.f32 0.0, %v7022
        %v7024 = vpop.f32.mrb[0].mxu0
        %v7025 = vadd.f32 0.0, %v7024
        %v7026 = vpop.f32.mrb[0].mxu0
        %v7027 = vpop.f32.mrb[0].mxu0
        %7028 = vdwg.mxu0
        %7029 = vmatprep.subr.bf16.mxu0 %v5669
        %7030 = vmatpush1.bf16.msra.mxu0 %v5668
        %7031 = vmatprep.subr.bf16.mxu0 %v5683
        %7032 = vmatpush1.bf16.msra.mxu0 %v5682
        %7033 = vmatprep.subr.bf16.mxu0 %v5697
        %7034 = vmatpush1.bf16.msra.mxu0 %v5696
        %7035 = vmatprep.subr.bf16.mxu0 %v5711
        %7036 = vmatpush1.bf16.msra.mxu0 %v5710
        %7037 = vmatprep.subr.bf16.mxu0 %v5725
        %7038 = vmatpush1.bf16.msra.mxu0 %v5724
        %7039 = vmatprep.subr.bf16.mxu0 %v5739
        %7040 = vmatpush1.bf16.msra.mxu0 %v5738
        %7041 = vmatprep.subr.bf16.mxu0 %v5753
        %7042 = vmatpush1.bf16.msra.mxu0 %v5752
        %7043 = vmatprep.subr.bf16.mxu0 %v5767
        %7044 = vmatpush1.bf16.msra.mxu0 %v5766
        %7045 = vmatprep.subr.bf16.mxu0 %v5781
        %7046 = vmatpush1.bf16.msra.mxu0 %v5780
        %7047 = vmatprep.subr.bf16.mxu0 %v5795
        %7048 = vmatpush1.bf16.msra.mxu0 %v5794
        %7049 = vmatprep.subr.bf16.mxu0 %v5809
        %7050 = vmatpush1.bf16.msra.mxu0 %v5808
        %7051 = vmatprep.subr.bf16.mxu0 %v5823
        %7052 = vmatpush1.bf16.msra.mxu0 %v5822
        %7053 = vmatprep.subr.bf16.mxu0 %v5837
        %7054 = vmatpush1.bf16.msra.mxu0 %v5836
        %7055 = vmatprep.subr.bf16.mxu0 %v5851
        %7056 = vmatpush1.bf16.msra.mxu0 %v5850
        %7057 = vmatprep.subr.bf16.mxu0 %v5865
        %7058 = vmatpush1.bf16.msra.mxu0 %v5864
        %7059 = vmatprep.subr.bf16.mxu0 %v5879
        %7060 = vmatpush1.bf16.msra.mxu0 %v5878
        %7061 = vmatprep.mubr.bf16.mxu0 %v5431
        %7062 = vmatmul.mubr.bf16.gmra.mrb[0].mxu0 %v5430
        %v7063 = vpop.f32.mrb[0].mxu0
        %v7064 = vadd.f32 %v7023, %v7063
        %v7065 = vpop.f32.mrb[0].mxu0
        %v7066 = vadd.f32 %v7025, %v7065
        %v7067 = vpop.f32.mrb[0].mxu0
        %v7068 = vpop.f32.mrb[0].mxu0
        %7069 = vdwg.mxu0
        %7070 = vmatprep.subr.bf16.mxu0 %v5893
        %7071 = vmatpush1.bf16.msra.mxu0 %v5892
        %7072 = vmatprep.subr.bf16.mxu0 %v5907
        %7073 = vmatpush1.bf16.msra.mxu0 %v5906
        %7074 = vmatprep.subr.bf16.mxu0 %v5921
        %7075 = vmatpush1.bf16.msra.mxu0 %v5920
        %7076 = vmatprep.subr.bf16.mxu0 %v5935
        %7077 = vmatpush1.bf16.msra.mxu0 %v5934
        %7078 = vmatprep.subr.bf16.mxu0 %v5949
        %7079 = vmatpush1.bf16.msra.mxu0 %v5948
        %7080 = vmatprep.subr.bf16.mxu0 %v5963
        %7081 = vmatpush1.bf16.msra.mxu0 %v5962
        %7082 = vmatprep.subr.bf16.mxu0 %v5977
        %7083 = vmatpush1.bf16.msra.mxu0 %v5976
        %7084 = vmatprep.subr.bf16.mxu0 %v5991
        %7085 = vmatpush1.bf16.msra.mxu0 %v5990
        %7086 = vmatprep.subr.bf16.mxu0 %v6005
        %7087 = vmatpush1.bf16.msra.mxu0 %v6004
        %7088 = vmatprep.subr.bf16.mxu0 %v6019
        %7089 = vmatpush1.bf16.msra.mxu0 %v6018
        %7090 = vmatprep.subr.bf16.mxu0 %v6033
        %7091 = vmatpush1.bf16.msra.mxu0 %v6032
        %7092 = vmatprep.subr.bf16.mxu0 %v6047
        %7093 = vmatpush1.bf16.msra.mxu0 %v6046
        %7094 = vmatprep.subr.bf16.mxu0 %v6061
        %7095 = vmatpush1.bf16.msra.mxu0 %v6060
        %7096 = vmatprep.subr.bf16.mxu0 %v6075
        %7097 = vmatpush1.bf16.msra.mxu0 %v6074
        %7098 = vmatprep.subr.bf16.mxu0 %v6089
        %7099 = vmatpush1.bf16.msra.mxu0 %v6088
        %7100 = vmatprep.subr.bf16.mxu0 %v6103
        %7101 = vmatpush1.bf16.msra.mxu0 %v6102
        %7102 = vmatprep.mubr.bf16.mxu0 %v5433
        %7103 = vmatmul.mubr.bf16.gmra.mrb[0].mxu0 %v5432
        %v7104 = vpop.f32.mrb[0].mxu0
        %v7105 = vadd.f32 %v7064, %v7104
        %v7106 = vpop.f32.mrb[0].mxu0
        %v7107 = vadd.f32 %v7066, %v7106
        %v7108 = vpop.f32.mrb[0].mxu0
        %v7109 = vpop.f32.mrb[0].mxu0
        %7110 = vdwg.mxu0
        %7111 = vmatprep.subr.bf16.mxu0 %v6117
        %7112 = vmatpush1.bf16.msra.mxu0 %v6116
        %7113 = vmatprep.subr.bf16.mxu0 %v6131
        %7114 = vmatpush1.bf16.msra.mxu0 %v6130
        %7115 = vmatprep.subr.bf16.mxu0 %v6145
        %7116 = vmatpush1.bf16.msra.mxu0 %v6144
        %7117 = vmatprep.subr.bf16.mxu0 %v6159
        %7118 = vmatpush1.bf16.msra.mxu0 %v6158
        %7119 = vmatprep.subr.bf16.mxu0 %v6173
        %7120 = vmatpush1.bf16.msra.mxu0 %v6172
        %7121 = vmatprep.subr.bf16.mxu0 %v6187
        %7122 = vmatpush1.bf16.msra.mxu0 %v6186
        %7123 = vmatprep.subr.bf16.mxu0 %v6201
        %7124 = vmatpush1.bf16.msra.mxu0 %v6200
        %7125 = vmatprep.subr.bf16.mxu0 %v6215
        %7126 = vmatpush1.bf16.msra.mxu0 %v6214
        %7127 = vmatprep.subr.bf16.mxu0 %v6229
        %7128 = vmatpush1.bf16.msra.mxu0 %v6228
        %7129 = vmatprep.subr.bf16.mxu0 %v6243
        %7130 = vmatpush1.bf16.msra.mxu0 %v6242
        %7131 = vmatprep.subr.bf16.mxu0 %v6257
        %7132 = vmatpush1.bf16.msra.mxu0 %v6256
        %7133 = vmatprep.subr.bf16.mxu0 %v6271
        %7134 = vmatpush1.bf16.msra.mxu0 %v6270
        %7135 = vmatprep.subr.bf16.mxu0 %v6285
        %7136 = vmatpush1.bf16.msra.mxu0 %v6284
        %7137 = vmatprep.subr.bf16.mxu0 %v6299
        %7138 = vmatpush1.bf16.msra.mxu0 %v6298
        %7139 = vmatprep.subr.bf16.mxu0 %v6313
        %7140 = vmatpush1.bf16.msra.mxu0 %v6312
        %7141 = vmatprep.subr.bf16.mxu0 %v6327
        %7142 = vmatpush1.bf16.msra.mxu0 %v6326
        %7143 = vmatprep.mubr.bf16.mxu0 %v5435
        %7144 = vmatmul.mubr.bf16.gmra.mrb[0].mxu0 %v5434
        %v7145 = vpop.f32.mrb[0].mxu0
        %v7146 = vadd.f32 %v7105, %v7145
        %v7147 = vpop.f32.mrb[0].mxu0
        %v7148 = vadd.f32 %v7107, %v7147
        %v7149 = vpop.f32.mrb[0].mxu0
        %v7150 = vpop.f32.mrb[0].mxu0
        %7151 = vdwg.mxu0
        %7152 = vmatprep.subr.bf16.mxu0 %v5447
        %7153 = vmatpush1.bf16.msra.mxu0 %v5446
        %7154 = vmatprep.subr.bf16.mxu0 %v5461
        %7155 = vmatpush1.bf16.msra.mxu0 %v5460
        %7156 = vmatprep.subr.bf16.mxu0 %v5475
        %7157 = vmatpush1.bf16.msra.mxu0 %v5474
        %7158 = vmatprep.subr.bf16.mxu0 %v5489
        %7159 = vmatpush1.bf16.msra.mxu0 %v5488
        %7160 = vmatprep.subr.bf16.mxu0 %v5503
        %7161 = vmatpush1.bf16.msra.mxu0 %v5502
        %7162 = vmatprep.subr.bf16.mxu0 %v5517
        %7163 = vmatpush1.bf16.msra.mxu0 %v5516
        %7164 = vmatprep.subr.bf16.mxu0 %v5531
        %7165 = vmatpush1.bf16.msra.mxu0 %v5530
        %7166 = vmatprep.subr.bf16.mxu0 %v5545
        %7167 = vmatpush1.bf16.msra.mxu0 %v5544
        %7168 = vmatprep.subr.bf16.mxu0 %v5559
        %7169 = vmatpush1.bf16.msra.mxu0 %v5558
        %7170 = vmatprep.subr.bf16.mxu0 %v5573
        %7171 = vmatpush1.bf16.msra.mxu0 %v5572
        %7172 = vmatprep.subr.bf16.mxu0 %v5587
        %7173 = vmatpush1.bf16.msra.mxu0 %v5586
        %7174 = vmatprep.subr.bf16.mxu0 %v5601
        %7175 = vmatpush1.bf16.msra.mxu0 %v5600
        %7176 = vmatprep.subr.bf16.mxu0 %v5615
        %7177 = vmatpush1.bf16.msra.mxu0 %v5614
        %7178 = vmatprep.subr.bf16.mxu0 %v5629
        %7179 = vmatpush1.bf16.msra.mxu0 %v5628
        %7180 = vmatprep.subr.bf16.mxu0 %v5643
        %7181 = vmatpush1.bf16.msra.mxu0 %v5642
        %7182 = vmatprep.subr.bf16.mxu0 %v5657
        %7183 = vmatpush1.bf16.msra.mxu0 %v5656
        %7184 = vmatprep.mubr.bf16.mxu0 %v5429
        %7185 = vmatmul.mubr.bf16.gmra.mrb[0].mxu0 %v5428
        %v7186 = vpop.f32.mrb[0].mxu0
        %v7187 = vadd.f32 0.0, %v7186
        %v7188 = vpop.f32.mrb[0].mxu0
        %v7189 = vadd.f32 0.0, %v7188
        %v7190 = vpop.f32.mrb[0].mxu0
        %v7191 = vpop.f32.mrb[0].mxu0
        %7192 = vdwg.mxu0
        %7193 = vmatprep.subr.bf16.mxu0 %v5671
        %7194 = vmatpush1.bf16.msra.mxu0 %v5670
        %7195 = vmatprep.subr.bf16.mxu0 %v5685
        %7196 = vmatpush1.bf16.msra.mxu0 %v5684
        %7197 = vmatprep.subr.bf16.mxu0 %v5699
        %7198 = vmatpush1.bf16.msra.mxu0 %v5698
        %7199 = vmatprep.subr.bf16.mxu0 %v5713
        %7200 = vmatpush1.bf16.msra.mxu0 %v5712
        %7201 = vmatprep.subr.bf16.mxu0 %v5727
        %7202 = vmatpush1.bf16.msra.mxu0 %v5726
        %7203 = vmatprep.subr.bf16.mxu0 %v5741
        %7204 = vmatpush1.bf16.msra.mxu0 %v5740
        %7205 = vmatprep.subr.bf16.mxu0 %v5755
        %7206 = vmatpush1.bf16.msra.mxu0 %v5754
        %7207 = vmatprep.subr.bf16.mxu0 %v5769
        %7208 = vmatpush1.bf16.msra.mxu0 %v5768
        %7209 = vmatprep.subr.bf16.mxu0 %v5783
        %7210 = vmatpush1.bf16.msra.mxu0 %v5782
        %7211 = vmatprep.subr.bf16.mxu0 %v5797
        %7212 = vmatpush1.bf16.msra.mxu0 %v5796
        %7213 = vmatprep.subr.bf16.mxu0 %v5811
        %7214 = vmatpush1.bf16.msra.mxu0 %v5810
        %7215 = vmatprep.subr.bf16.mxu0 %v5825
        %7216 = vmatpush1.bf16.msra.mxu0 %v5824
        %7217 = vmatprep.subr.bf16.mxu0 %v5839
        %7218 = vmatpush1.bf16.msra.mxu0 %v5838
        %7219 = vmatprep.subr.bf16.mxu0 %v5853
        %7220 = vmatpush1.bf16.msra.mxu0 %v5852
        %7221 = vmatprep.subr.bf16.mxu0 %v5867
        %7222 = vmatpush1.bf16.msra.mxu0 %v5866
        %7223 = vmatprep.subr.bf16.mxu0 %v5881
        %7224 = vmatpush1.bf16.msra.mxu0 %v5880
        %7225 = vmatprep.mubr.bf16.mxu0 %v5431
        %7226 = vmatmul.mubr.bf16.gmra.mrb[0].mxu0 %v5430
        %v7227 = vpop.f32.mrb[0].mxu0
        %v7228 = vadd.f32 %v7187, %v7227
        %v7229 = vpop.f32.mrb[0].mxu0
        %v7230 = vadd.f32 %v7189, %v7229
        %v7231 = vpop.f32.mrb[0].mxu0
        %v7232 = vpop.f32.mrb[0].mxu0
        %7233 = vdwg.mxu0
        %7234 = vmatprep.subr.bf16.mxu0 %v5895
        %7235 = vmatpush1.bf16.msra.mxu0 %v5894
        %7236 = vmatprep.subr.bf16.mxu0 %v5909
        %7237 = vmatpush1.bf16.msra.mxu0 %v5908
        %7238 = vmatprep.subr.bf16.mxu0 %v5923
        %7239 = vmatpush1.bf16.msra.mxu0 %v5922
        %7240 = vmatprep.subr.bf16.mxu0 %v5937
        %7241 = vmatpush1.bf16.msra.mxu0 %v5936
        %7242 = vmatprep.subr.bf16.mxu0 %v5951
        %7243 = vmatpush1.bf16.msra.mxu0 %v5950
        %7244 = vmatprep.subr.bf16.mxu0 %v5965
        %7245 = vmatpush1.bf16.msra.mxu0 %v5964
        %7246 = vmatprep.subr.bf16.mxu0 %v5979
        %7247 = vmatpush1.bf16.msra.mxu0 %v5978
        %7248 = vmatprep.subr.bf16.mxu0 %v5993
        %7249 = vmatpush1.bf16.msra.mxu0 %v5992
        %7250 = vmatprep.subr.bf16.mxu0 %v6007
        %7251 = vmatpush1.bf16.msra.mxu0 %v6006
        %7252 = vmatprep.subr.bf16.mxu0 %v6021
        %7253 = vmatpush1.bf16.msra.mxu0 %v6020
        %7254 = vmatprep.subr.bf16.mxu0 %v6035
        %7255 = vmatpush1.bf16.msra.mxu0 %v6034
        %7256 = vmatprep.subr.bf16.mxu0 %v6049
        %7257 = vmatpush1.bf16.msra.mxu0 %v6048
        %7258 = vmatprep.subr.bf16.mxu0 %v6063
        %7259 = vmatpush1.bf16.msra.mxu0 %v6062
        %7260 = vmatprep.subr.bf16.mxu0 %v6077
        %7261 = vmatpush1.bf16.msra.mxu0 %v6076
        %7262 = vmatprep.subr.bf16.mxu0 %v6091
        %7263 = vmatpush1.bf16.msra.mxu0 %v6090
        %7264 = vmatprep.subr.bf16.mxu0 %v6105
        %7265 = vmatpush1.bf16.msra.mxu0 %v6104
        %7266 = vmatprep.mubr.bf16.mxu0 %v5433
        %7267 = vmatmul.mubr.bf16.gmra.mrb[0].mxu0 %v5432
        %v7268 = vpop.f32.mrb[0].mxu0
        %v7269 = vadd.f32 %v7228, %v7268
        %v7270 = vpop.f32.mrb[0].mxu0
        %v7271 = vadd.f32 %v7230, %v7270
        %v7272 = vpop.f32.mrb[0].mxu0
        %v7273 = vpop.f32.mrb[0].mxu0
        %7274 = vdwg.mxu0
        %7275 = vmatprep.subr.bf16.mxu0 %v6119
        %7276 = vmatpush1.bf16.msra.mxu0 %v6118
        %7277 = vmatprep.subr.bf16.mxu0 %v6133
        %7278 = vmatpush1.bf16.msra.mxu0 %v6132
        %7279 = vmatprep.subr.bf16.mxu0 %v6147
        %7280 = vmatpush1.bf16.msra.mxu0 %v6146
        %7281 = vmatprep.subr.bf16.mxu0 %v6161
        %7282 = vmatpush1.bf16.msra.mxu0 %v6160
        %7283 = vmatprep.subr.bf16.mxu0 %v6175
        %7284 = vmatpush1.bf16.msra.mxu0 %v6174
        %7285 = vmatprep.subr.bf16.mxu0 %v6189
        %7286 = vmatpush1.bf16.msra.mxu0 %v6188
        %7287 = vmatprep.subr.bf16.mxu0 %v6203
        %7288 = vmatpush1.bf16.msra.mxu0 %v6202
        %7289 = vmatprep.subr.bf16.mxu0 %v6217
        %7290 = vmatpush1.bf16.msra.mxu0 %v6216
        %7291 = vmatprep.subr.bf16.mxu0 %v6231
        %7292 = vmatpush1.bf16.msra.mxu0 %v6230
        %7293 = vmatprep.subr.bf16.mxu0 %v6245
        %7294 = vmatpush1.bf16.msra.mxu0 %v6244
        %7295 = vmatprep.subr.bf16.mxu0 %v6259
        %7296 = vmatpush1.bf16.msra.mxu0 %v6258
        %7297 = vmatprep.subr.bf16.mxu0 %v6273
        %7298 = vmatpush1.bf16.msra.mxu0 %v6272
        %7299 = vmatprep.subr.bf16.mxu0 %v6287
        %7300 = vmatpush1.bf16.msra.mxu0 %v6286
        %7301 = vmatprep.subr.bf16.mxu0 %v6301
        %7302 = vmatpush1.bf16.msra.mxu0 %v6300
        %7303 = vmatprep.subr.bf16.mxu0 %v6315
        %7304 = vmatpush1.bf16.msra.mxu0 %v6314
        %7305 = vmatprep.subr.bf16.mxu0 %v6329
        %7306 = vmatpush1.bf16.msra.mxu0 %v6328
        %7307 = vmatprep.mubr.bf16.mxu0 %v5435
        %7308 = vmatmul.mubr.bf16.gmra.mrb[0].mxu0 %v5434
        %v7309 = vpop.f32.mrb[0].mxu0
        %v7310 = vadd.f32 %v7269, %v7309
        %v7311 = vpop.f32.mrb[0].mxu0
        %v7312 = vadd.f32 %v7271, %v7311
        %v7313 = vpop.f32.mrb[0].mxu0
        %v7314 = vpop.f32.mrb[0].mxu0
        %7315 = vdwg.mxu0
        %7316 = vmatprep.subr.bf16.mxu0 %v5449
        %7317 = vmatpush1.bf16.msra.mxu0 %v5448
        %7318 = vmatprep.subr.bf16.mxu0 %v5463
        %7319 = vmatpush1.bf16.msra.mxu0 %v5462
        %7320 = vmatprep.subr.bf16.mxu0 %v5477
        %7321 = vmatpush1.bf16.msra.mxu0 %v5476
        %7322 = vmatprep.subr.bf16.mxu0 %v5491
        %7323 = vmatpush1.bf16.msra.mxu0 %v5490
        %7324 = vmatprep.subr.bf16.mxu0 %v5505
        %7325 = vmatpush1.bf16.msra.mxu0 %v5504
        %7326 = vmatprep.subr.bf16.mxu0 %v5519
        %7327 = vmatpush1.bf16.msra.mxu0 %v5518
        %7328 = vmatprep.subr.bf16.mxu0 %v5533
        %7329 = vmatpush1.bf16.msra.mxu0 %v5532
        %7330 = vmatprep.subr.bf16.mxu0 %v5547
        %7331 = vmatpush1.bf16.msra.mxu0 %v5546
        %7332 = vmatprep.subr.bf16.mxu0 %v5561
        %7333 = vmatpush1.bf16.msra.mxu0 %v5560
        %7334 = vmatprep.subr.bf16.mxu0 %v5575
        %7335 = vmatpush1.bf16.msra.mxu0 %v5574
        %7336 = vmatprep.subr.bf16.mxu0 %v5589
        %7337 = vmatpush1.bf16.msra.mxu0 %v5588
        %7338 = vmatprep.subr.bf16.mxu0 %v5603
        %7339 = vmatpush1.bf16.msra.mxu0 %v5602
        %7340 = vmatprep.subr.bf16.mxu0 %v5617
        %7341 = vmatpush1.bf16.msra.mxu0 %v5616
        %7342 = vmatprep.subr.bf16.mxu0 %v5631
        %7343 = vmatpush1.bf16.msra.mxu0 %v5630
        %7344 = vmatprep.subr.bf16.mxu0 %v5645
        %7345 = vmatpush1.bf16.msra.mxu0 %v5644
        %7346 = vmatprep.subr.bf16.mxu0 %v5659
        %7347 = vmatpush1.bf16.msra.mxu0 %v5658
        %7348 = vmatprep.mubr.bf16.mxu0 %v5429
        %7349 = vmatmul.mubr.bf16.gmra.mrb[0].mxu0 %v5428
        %v7350 = vpop.f32.mrb[0].mxu0
        %v7351 = vadd.f32 0.0, %v7350
        %v7352 = vpop.f32.mrb[0].mxu0
        %v7353 = vadd.f32 0.0, %v7352
        %v7354 = vpop.f32.mrb[0].mxu0
        %v7355 = vpop.f32.mrb[0].mxu0
        %7356 = vdwg.mxu0
        %7357 = vmatprep.subr.bf16.mxu0 %v5673
        %7358 = vmatpush1.bf16.msra.mxu0 %v5672
        %7359 = vmatprep.subr.bf16.mxu0 %v5687
        %7360 = vmatpush1.bf16.msra.mxu0 %v5686
        %7361 = vmatprep.subr.bf16.mxu0 %v5701
        %7362 = vmatpush1.bf16.msra.mxu0 %v5700
        %7363 = vmatprep.subr.bf16.mxu0 %v5715
        %7364 = vmatpush1.bf16.msra.mxu0 %v5714
        %7365 = vmatprep.subr.bf16.mxu0 %v5729
        %7366 = vmatpush1.bf16.msra.mxu0 %v5728
        %7367 = vmatprep.subr.bf16.mxu0 %v5743
        %7368 = vmatpush1.bf16.msra.mxu0 %v5742
        %7369 = vmatprep.subr.bf16.mxu0 %v5757
        %7370 = vmatpush1.bf16.msra.mxu0 %v5756
        %7371 = vmatprep.subr.bf16.mxu0 %v5771
        %7372 = vmatpush1.bf16.msra.mxu0 %v5770
        %7373 = vmatprep.subr.bf16.mxu0 %v5785
        %7374 = vmatpush1.bf16.msra.mxu0 %v5784
        %7375 = vmatprep.subr.bf16.mxu0 %v5799
        %7376 = vmatpush1.bf16.msra.mxu0 %v5798
        %7377 = vmatprep.subr.bf16.mxu0 %v5813
        %7378 = vmatpush1.bf16.msra.mxu0 %v5812
        %7379 = vmatprep.subr.bf16.mxu0 %v5827
        %7380 = vmatpush1.bf16.msra.mxu0 %v5826
        %7381 = vmatprep.subr.bf16.mxu0 %v5841
        %7382 = vmatpush1.bf16.msra.mxu0 %v5840
        %7383 = vmatprep.subr.bf16.mxu0 %v5855
        %7384 = vmatpush1.bf16.msra.mxu0 %v5854
        %7385 = vmatprep.subr.bf16.mxu0 %v5869
        %7386 = vmatpush1.bf16.msra.mxu0 %v5868
        %7387 = vmatprep.subr.bf16.mxu0 %v5883
        %7388 = vmatpush1.bf16.msra.mxu0 %v5882
        %7389 = vmatprep.mubr.bf16.mxu0 %v5431
        %7390 = vmatmul.mubr.bf16.gmra.mrb[0].mxu0 %v5430
        %v7391 = vpop.f32.mrb[0].mxu0
        %v7392 = vadd.f32 %v7351, %v7391
        %v7393 = vpop.f32.mrb[0].mxu0
        %v7394 = vadd.f32 %v7353, %v7393
        %v7395 = vpop.f32.mrb[0].mxu0
        %v7396 = vpop.f32.mrb[0].mxu0
        %7397 = vdwg.mxu0
        %7398 = vmatprep.subr.bf16.mxu0 %v5897
        %7399 = vmatpush1.bf16.msra.mxu0 %v5896
        %7400 = vmatprep.subr.bf16.mxu0 %v5911
        %7401 = vmatpush1.bf16.msra.mxu0 %v5910
        %7402 = vmatprep.subr.bf16.mxu0 %v5925
        %7403 = vmatpush1.bf16.msra.mxu0 %v5924
        %7404 = vmatprep.subr.bf16.mxu0 %v5939
        %7405 = vmatpush1.bf16.msra.mxu0 %v5938
        %7406 = vmatprep.subr.bf16.mxu0 %v5953
        %7407 = vmatpush1.bf16.msra.mxu0 %v5952
        %7408 = vmatprep.subr.bf16.mxu0 %v5967
        %7409 = vmatpush1.bf16.msra.mxu0 %v5966
        %7410 = vmatprep.subr.bf16.mxu0 %v5981
        %7411 = vmatpush1.bf16.msra.mxu0 %v5980
        %7412 = vmatprep.subr.bf16.mxu0 %v5995
        %7413 = vmatpush1.bf16.msra.mxu0 %v5994
        %7414 = vmatprep.subr.bf16.mxu0 %v6009
        %7415 = vmatpush1.bf16.msra.mxu0 %v6008
        %7416 = vmatprep.subr.bf16.mxu0 %v6023
        %7417 = vmatpush1.bf16.msra.mxu0 %v6022
        %7418 = vmatprep.subr.bf16.mxu0 %v6037
        %7419 = vmatpush1.bf16.msra.mxu0 %v6036
        %7420 = vmatprep.subr.bf16.mxu0 %v6051
        %7421 = vmatpush1.bf16.msra.mxu0 %v6050
        %7422 = vmatprep.subr.bf16.mxu0 %v6065
        %7423 = vmatpush1.bf16.msra.mxu0 %v6064
        %7424 = vmatprep.subr.bf16.mxu0 %v6079
        %7425 = vmatpush1.bf16.msra.mxu0 %v6078
        %7426 = vmatprep.subr.bf16.mxu0 %v6093
        %7427 = vmatpush1.bf16.msra.mxu0 %v6092
        %7428 = vmatprep.subr.bf16.mxu0 %v6107
        %7429 = vmatpush1.bf16.msra.mxu0 %v6106
        %7430 = vmatprep.mubr.bf16.mxu0 %v5433
        %7431 = vmatmul.mubr.bf16.gmra.mrb[0].mxu0 %v5432
        %v7432 = vpop.f32.mrb[0].mxu0
        %v7433 = vadd.f32 %v7392, %v7432
        %v7434 = vpop.f32.mrb[0].mxu0
        %v7435 = vadd.f32 %v7394, %v7434
        %v7436 = vpop.f32.mrb[0].mxu0
        %v7437 = vpop.f32.mrb[0].mxu0
        %7438 = vdwg.mxu0
        %7439 = vmatprep.subr.bf16.mxu0 %v6121
        %7440 = vmatpush1.bf16.msra.mxu0 %v6120
        %7441 = vmatprep.subr.bf16.mxu0 %v6135
        %7442 = vmatpush1.bf16.msra.mxu0 %v6134
        %7443 = vmatprep.subr.bf16.mxu0 %v6149
        %7444 = vmatpush1.bf16.msra.mxu0 %v6148
        %7445 = vmatprep.subr.bf16.mxu0 %v6163
        %7446 = vmatpush1.bf16.msra.mxu0 %v6162
        %7447 = vmatprep.subr.bf16.mxu0 %v6177
        %7448 = vmatpush1.bf16.msra.mxu0 %v6176
        %7449 = vmatprep.subr.bf16.mxu0 %v6191
        %7450 = vmatpush1.bf16.msra.mxu0 %v6190
        %7451 = vmatprep.subr.bf16.mxu0 %v6205
        %7452 = vmatpush1.bf16.msra.mxu0 %v6204
        %7453 = vmatprep.subr.bf16.mxu0 %v6219
        %7454 = vmatpush1.bf16.msra.mxu0 %v6218
        %7455 = vmatprep.subr.bf16.mxu0 %v6233
        %7456 = vmatpush1.bf16.msra.mxu0 %v6232
        %7457 = vmatprep.subr.bf16.mxu0 %v6247
        %7458 = vmatpush1.bf16.msra.mxu0 %v6246
        %7459 = vmatprep.subr.bf16.mxu0 %v6261
        %7460 = vmatpush1.bf16.msra.mxu0 %v6260
        %7461 = vmatprep.subr.bf16.mxu0 %v6275
        %7462 = vmatpush1.bf16.msra.mxu0 %v6274
        %7463 = vmatprep.subr.bf16.mxu0 %v6289
        %7464 = vmatpush1.bf16.msra.mxu0 %v6288
        %7465 = vmatprep.subr.bf16.mxu0 %v6303
        %7466 = vmatpush1.bf16.msra.mxu0 %v6302
        %7467 = vmatprep.subr.bf16.mxu0 %v6317
        %7468 = vmatpush1.bf16.msra.mxu0 %v6316
        %7469 = vmatprep.subr.bf16.mxu0 %v6331
        %7470 = vmatpush1.bf16.msra.mxu0 %v6330
        %7471 = vmatprep.mubr.bf16.mxu0 %v5435
        %7472 = vmatmul.mubr.bf16.gmra.mrb[0].mxu0 %v5434
        %v7473 = vpop.f32.mrb[0].mxu0
        %v7474 = vadd.f32 %v7433, %v7473
        %v7475 = vpop.f32.mrb[0].mxu0
        %v7476 = vadd.f32 %v7435, %v7475
        %v7477 = vpop.f32.mrb[0].mxu0
        %v7478 = vpop.f32.mrb[0].mxu0
        %7479 = vdwg.mxu0
        %v7480 = vlaneseq
        %v7481 = vshrl.u32 %v7480, 7
        %v7482 = vsub.s32 3, %v7481
        %v7483 = vrot.slane %v461, %v7482
        %v7484 = vlaneseq
        %v7485 = vshrl.u32 %v7484, 7
        %v7486 = vsub.s32 3, %v7485
        %v7487 = vrot.slane %v462, %v7486
        %v7488 = vlaneseq
        %v7489 = vshrl.u32 %v7488, 7
        %v7490 = vsub.s32 3, %v7489
        %v7491 = vrot.slane %v463, %v7490
        %v7492 = vlaneseq
        %v7493 = vshrl.u32 %v7492, 7
        %v7494 = vsub.s32 3, %v7493
        %v7495 = vrot.slane %v464, %v7494
        %v7496 = vlaneseq
        %v7497 = vshrl.u32 %v7496, 7
        %v7498 = vsub.s32 3, %v7497
        %v7499 = vrot.slane %v465, %v7498
        %v7500 = vlaneseq
        %v7501 = vshrl.u32 %v7500, 7
        %v7502 = vsub.s32 3, %v7501
        %v7503 = vrot.slane %v466, %v7502
        %v7504 = vlaneseq
        %v7505 = vshrl.u32 %v7504, 7
        %v7506 = vsub.s32 3, %v7505
        %v7507 = vrot.slane %v467, %v7506
        %v7508 = vlaneseq
        %v7509 = vshrl.u32 %v7508, 7
        %v7510 = vsub.s32 3, %v7509
        %v7511 = vrot.slane %v468, %v7510
        %v7512 = vlaneseq
        %v7513 = vshrl.u32 %v7512, 7
        %v7514 = vsub.s32 3, %v7513
        %v7515 = vrot.slane %v469, %v7514
        %v7516 = vlaneseq
        %v7517 = vshrl.u32 %v7516, 7
        %v7518 = vsub.s32 3, %v7517
        %v7519 = vrot.slane %v470, %v7518
        %v7520 = vlaneseq
        %v7521 = vshrl.u32 %v7520, 7
        %v7522 = vsub.s32 3, %v7521
        %v7523 = vrot.slane %v471, %v7522
        %v7524 = vlaneseq
        %v7525 = vshrl.u32 %v7524, 7
        %v7526 = vsub.s32 3, %v7525
        %v7527 = vrot.slane %v472, %v7526
        %v7528 = vlaneseq
        %v7529 = vshrl.u32 %v7528, 7
        %v7530 = vsub.s32 3, %v7529
        %v7531 = vrot.slane %v473, %v7530
        %v7532 = vlaneseq
        %v7533 = vshrl.u32 %v7532, 7
        %v7534 = vsub.s32 3, %v7533
        %v7535 = vrot.slane %v474, %v7534
        %v7536 = vmul.f32 %v6490, %v7483
        %v7537 = vmul.f32 %v6492, %v7487
        %v7538 = vmul.f32 %v6654, %v7491
        %v7539 = vmul.f32 %v6656, %v7495
        %v7540 = vmul.f32 %v6818, %v7499
        %v7541 = vmul.f32 %v6820, %v7503
        %v7542 = vmul.f32 %v6982, %v7507
        %v7543 = vmul.f32 %v6984, %v7511
        %v7544 = vmul.f32 %v7146, %v7515
        %v7545 = vmul.f32 %v7148, %v7519
        %v7546 = vmul.f32 %v7310, %v7523
        %v7547 = vmul.f32 %v7312, %v7527
        %v7548 = vmul.f32 %v7474, %v7531
        %v7549 = vmul.f32 %v7476, %v7535
        %v7550 = vlaneseq
        %v7551 = vshrl.u32 %v7550, 7
        %v7552 = vsub.s32 7, %v7551
        %v7553 = vrot.slane %v461, %v7552
        %v7554 = vlaneseq
        %v7555 = vshrl.u32 %v7554, 7
        %v7556 = vsub.s32 7, %v7555
        %v7557 = vrot.slane %v462, %v7556
        %v7558 = vlaneseq
        %v7559 = vshrl.u32 %v7558, 7
        %v7560 = vsub.s32 7, %v7559
        %v7561 = vrot.slane %v463, %v7560
        %v7562 = vlaneseq
        %v7563 = vshrl.u32 %v7562, 7
        %v7564 = vsub.s32 7, %v7563
        %v7565 = vrot.slane %v464, %v7564
        %v7566 = vlaneseq
        %v7567 = vshrl.u32 %v7566, 7
        %v7568 = vsub.s32 7, %v7567
        %v7569 = vrot.slane %v465, %v7568
        %v7570 = vlaneseq
        %v7571 = vshrl.u32 %v7570, 7
        %v7572 = vsub.s32 7, %v7571
        %v7573 = vrot.slane %v466, %v7572
        %v7574 = vlaneseq
        %v7575 = vshrl.u32 %v7574, 7
        %v7576 = vsub.s32 7, %v7575
        %v7577 = vrot.slane %v467, %v7576
        %v7578 = vlaneseq
        %v7579 = vshrl.u32 %v7578, 7
        %v7580 = vsub.s32 7, %v7579
        %v7581 = vrot.slane %v468, %v7580
        %v7582 = vlaneseq
        %v7583 = vshrl.u32 %v7582, 7
        %v7584 = vsub.s32 7, %v7583
        %v7585 = vrot.slane %v469, %v7584
        %v7586 = vlaneseq
        %v7587 = vshrl.u32 %v7586, 7
        %v7588 = vsub.s32 7, %v7587
        %v7589 = vrot.slane %v470, %v7588
        %v7590 = vlaneseq
        %v7591 = vshrl.u32 %v7590, 7
        %v7592 = vsub.s32 7, %v7591
        %v7593 = vrot.slane %v471, %v7592
        %v7594 = vlaneseq
        %v7595 = vshrl.u32 %v7594, 7
        %v7596 = vsub.s32 7, %v7595
        %v7597 = vrot.slane %v472, %v7596
        %v7598 = vlaneseq
        %v7599 = vshrl.u32 %v7598, 7
        %v7600 = vsub.s32 7, %v7599
        %v7601 = vrot.slane %v473, %v7600
        %v7602 = vlaneseq
        %v7603 = vshrl.u32 %v7602, 7
        %v7604 = vsub.s32 7, %v7603
        %v7605 = vrot.slane %v474, %v7604
        %v7606 = vadd.f32 %v7536, %v7553
        %v7607 = vadd.f32 %v7537, %v7557
        %v7608 = vadd.f32 %v7538, %v7561
        %v7609 = vadd.f32 %v7539, %v7565
        %v7610 = vadd.f32 %v7540, %v7569
        %v7611 = vadd.f32 %v7541, %v7573
        %v7612 = vadd.f32 %v7542, %v7577
        %v7613 = vadd.f32 %v7543, %v7581
        %v7614 = vadd.f32 %v7544, %v7585
        %v7615 = vadd.f32 %v7545, %v7589
        %v7616 = vadd.f32 %v7546, %v7593
        %v7617 = vadd.f32 %v7547, %v7597
        %v7618 = vadd.f32 %v7548, %v7601
        %v7619 = vadd.f32 %v7549, %v7605
        %v7620 = vmax.f32 %v7606, -5.0
        %v7621 = vmax.f32 %v7607, -5.0
        %v7622 = vmax.f32 %v7608, -5.0
        %v7623 = vmax.f32 %v7609, -5.0
        %v7624 = vmax.f32 %v7610, -5.0
        %v7625 = vmax.f32 %v7611, -5.0
        %v7626 = vmax.f32 %v7612, -5.0
        %v7627 = vmax.f32 %v7613, -5.0
        %v7628 = vmax.f32 %v7614, -5.0
        %v7629 = vmax.f32 %v7615, -5.0
        %v7630 = vmax.f32 %v7616, -5.0
        %v7631 = vmax.f32 %v7617, -5.0
        %v7632 = vmax.f32 %v7618, -5.0
        %v7633 = vmax.f32 %v7619, -5.0
        %v7634 = vmin.f32 %v7620, 2.0
        %v7635 = vmin.f32 %v7621, 2.0
        %v7636 = vmin.f32 %v7622, 2.0
        %v7637 = vmin.f32 %v7623, 2.0
        %v7638 = vmin.f32 %v7624, 2.0
        %v7639 = vmin.f32 %v7625, 2.0
        %v7640 = vmin.f32 %v7626, 2.0
        %v7641 = vmin.f32 %v7627, 2.0
        %v7642 = vmin.f32 %v7628, 2.0
        %v7643 = vmin.f32 %v7629, 2.0
        %v7644 = vmin.f32 %v7630, 2.0
        %v7645 = vmin.f32 %v7631, 2.0
        %v7646 = vmin.f32 %v7632, 2.0
        %v7647 = vmin.f32 %v7633, 2.0
        %v7648 = vmul.f32 %v7641, 1.442695
        %v7649 = vpow.pop %v7648
        %v7650 = vmul.f32 %v7642, 1.442695
        %v7651 = vpow.pop %v7650
        %v7652 = vmul.f32 %v7643, 1.442695
        %v7653 = vpow.pop %v7652
        %v7654 = vmul.f32 %v7644, 1.442695
        %v7655 = vpow.pop %v7654
        %v7656 = vmul.f32 %v7645, 1.442695
        %v7657 = vpow.pop %v7656
        %v7658 = vmul.f32 %v7646, 1.442695
        %v7659 = vpow.pop %v7658
        %v7660 = vmul.f32 %v7647, 1.442695
        %v7661 = vpow.pop %v7660
        %v7669 = vcombine.low %v7649, %v7651
        %v7670 = vcombine.low %v7653, %v7655
        %v7672 = vunpack.c.l.s4 1983009808
        %v7673 = vunpack.c.0.s8 %v7672
        %v7674 = vlaneseq
        %v7675 = vshrl.u32 %v7674, 7
        %v7676 = vsub.s32 %v7673, %v7675
        %v7677 = vrot.slane %v7669, %v7676
        %v7679 = vunpack.c.l.s4 1983009808
        %v7680 = vunpack.c.0.s8 %v7679
        %v7681 = vlaneseq
        %v7682 = vshrl.u32 %v7681, 7
        %v7683 = vsub.s32 %v7680, %v7682
        %v7684 = vrot.slane %v7670, %v7683
        %v7685 = vcombine.low %v7677, %v7684
        %v7686 = vcombine.low %v7657, %v7659
        %v7688 = vunpack.c.l.s4 1983009808
        %v7689 = vunpack.c.0.s8 %v7688
        %v7690 = vlaneseq
        %v7691 = vshrl.u32 %v7690, 7
        %v7692 = vsub.s32 %v7689, %v7691
        %v7693 = vrot.slane %v7686, %v7692
        %v7695 = vunpack.c.l.s4 1983009808
        %v7696 = vunpack.c.0.s8 %v7695
        %v7697 = vlaneseq
        %v7698 = vshrl.u32 %v7697, 7
        %v7699 = vsub.s32 %v7696, %v7698
        %v7700 = vrot.slane %v7661, %v7699
        %v7701 = vcombine.low %v7693, %v7700
        %v7704 = vmul.f32 %v459, %v7685
        %v7705 = vmul.f32 %v460, %v7701
        %v7713 = vcombine.low %v7634, %v7635
        %v7714 = vcombine.low %v7636, %v7637
        %v7716 = vunpack.c.l.s4 1983009808
        %v7717 = vunpack.c.0.s8 %v7716
        %v7718 = vlaneseq
        %v7719 = vshrl.u32 %v7718, 7
        %v7720 = vsub.s32 %v7717, %v7719
        %v7721 = vrot.slane %v7713, %v7720
        %v7723 = vunpack.c.l.s4 1983009808
        %v7724 = vunpack.c.0.s8 %v7723
        %v7725 = vlaneseq
        %v7726 = vshrl.u32 %v7725, 7
        %v7727 = vsub.s32 %v7724, %v7726
        %v7728 = vrot.slane %v7714, %v7727
        %v7729 = vcombine.low %v7721, %v7728
        %v7730 = vcombine.low %v7638, %v7639
        %v7732 = vunpack.c.l.s4 1983009808
        %v7733 = vunpack.c.0.s8 %v7732
        %v7734 = vlaneseq
        %v7735 = vshrl.u32 %v7734, 7
        %v7736 = vsub.s32 %v7733, %v7735
        %v7737 = vrot.slane %v7730, %v7736
        %v7739 = vunpack.c.l.s4 1983009808
        %v7740 = vunpack.c.0.s8 %v7739
        %v7741 = vlaneseq
        %v7742 = vshrl.u32 %v7741, 7
        %v7743 = vsub.s32 %v7740, %v7742
        %v7744 = vrot.slane %v7640, %v7743
        %v7745 = vcombine.low %v7737, %v7744
        %v7748 = vadd.f32 %v7704, %v7729
        %v7749 = vadd.f32 %v7705, %v7745
        %7750 = vst [vmem:[#allocation13] sm:$0xff] %v7748
        %7751 = vst [vmem:[#allocation13 + $0x8] sm:$0x3f] %v7749
        %v7752 = vld [vmem:[%s7] sm:$0x3]
        %vm7753 = vcmask 1041408
        %v7754 = vsel %vm7753, %v7641, 0.0
        %v7755 = vsel %vm7753, %v7642, 0.0
        %v7756 = vadd.f32 %v7754, %v7755
        %v7757 = vsel %vm7753, %v7643, 0.0
        %v7758 = vadd.f32 %v7756, %v7757
        %v7759 = vsel %vm7753, %v7644, 0.0
        %v7760 = vadd.f32 %v7758, %v7759
        %v7761 = vsel %vm7753, %v7645, 0.0
        %v7762 = vadd.f32 %v7760, %v7761
        %v7763 = vsel %vm7753, %v7646, 0.0
        %v7764 = vadd.f32 %v7762, %v7763
        %v7765 = vsel %vm7753, %v7647, 0.0
        %v7766 = vadd.f32 %v7764, %v7765
        %7767 = vadd.xlane.f32.xlu0 %v7766
        %v7768 = vpop.xlane.xlu0 %7767
        %v7769 = vadd.f32 %v7752, %v7768
        %vm7770 = vcmask 1024
        %7771 = vst.msk [vmem:[%s7] sm:$0x3] %vm7770, %v7769
        %p7772 = scmp.eq.s32.totalorder %s30, 2
        // Predicated region
        $region73: #{tpu_custom_call.1} parent=43 // pred_check
          %p7773 = pneg %p7772
        $region74: #{tpu_custom_call.1} parent=43 // pred_check_branch
          %7775 = sbr.rel (%p7773) target = $region76
        $region75: #{tpu_custom_call.1} parent=43 // pred_region
          %v7776 = vld [vmem:[%s7] sm:$0x3]
          %v7777 = vmul.f32 %v7748, %v7748
          %v7778 = vmul.f32 %v7749, %v7749
          %v7781 = vcombine.high %v7777, %v7777
          %v7783 = vunpack.c.l.s4 1983009808
          %v7784 = vunpack.c.0.s8 %v7783
          %v7785 = vlaneseq
          %v7786 = vshrl.u32 %v7785, 7
          %v7787 = vsub.s32 %v7784, %v7786
          %v7788 = vrot.slane %v7777, %v7787
          %v7790 = vunpack.c.l.s4 1983009808
          %v7791 = vunpack.c.0.s8 %v7790
          %v7792 = vlaneseq
          %v7793 = vshrl.u32 %v7792, 7
          %v7794 = vsub.s32 %v7791, %v7793
          %v7795 = vrot.slane %v7781, %v7794
          %v7796 = vcombine.high %v7788, %v7788
          %v7797 = vcombine.high %v7795, %v7795
          %v7798 = vcombine.high %v7778, %v7778
          %v7800 = vunpack.c.l.s4 1983009808
          %v7801 = vunpack.c.0.s8 %v7800
          %v7802 = vlaneseq
          %v7803 = vshrl.u32 %v7802, 7
          %v7804 = vsub.s32 %v7801, %v7803
          %v7805 = vrot.slane %v7778, %v7804
          %v7807 = vunpack.c.l.s4 1983009808
          %v7808 = vunpack.c.0.s8 %v7807
          %v7809 = vlaneseq
          %v7810 = vshrl.u32 %v7809, 7
          %v7811 = vsub.s32 %v7808, %v7810
          %v7812 = vrot.slane %v7798, %v7811
          %v7813 = vcombine.high %v7805, %v7805
          %v7821 = vsel %vm7753, %v7788, 0.0
          %v7822 = vsel %vm7753, %v7796, 0.0
          %v7823 = vadd.f32 %v7821, %v7822
          %v7824 = vsel %vm7753, %v7795, 0.0
          %v7825 = vadd.f32 %v7823, %v7824
          %v7826 = vsel %vm7753, %v7797, 0.0
          %v7827 = vadd.f32 %v7825, %v7826
          %v7828 = vsel %vm7753, %v7805, 0.0
          %v7829 = vadd.f32 %v7827, %v7828
          %v7830 = vsel %vm7753, %v7813, 0.0
          %v7831 = vadd.f32 %v7829, %v7830
          %v7832 = vsel %vm7753, %v7812, 0.0
          %v7833 = vadd.f32 %v7831, %v7832
          %7834 = vadd.xlane.f32.xlu0 %v7833
          %v7835 = vpop.xlane.xlu0 %7834
          %v7836 = vmul.f32 %v7835, 0.5
          %v7837 = vsub.f32 %v7776, %v7836
          %v7838 = vsub.f32 %v7837, 720.4478
          %7839 = vst.msk [vmem:[%s7] sm:$0x3] %vm7770, %v7838
        $region76: #{tpu_custom_call.1} parent=43 // pred_fallthru
          _
        // Predicated region
        $region77: #{tpu_custom_call.1} parent=43 // pred_check
          %p7840 = pneg %p194
        $region78: #{tpu_custom_call.1} parent=43 // pred_check_branch
          %7842 = sbr.rel (%p7840) target = $region80
        $region79: #{tpu_custom_call.1} parent=43 // pred_region
          %s7844 = ssub.s32 224, 224
          %7845 = vsyncadd [#allocation4], %s7844
          %s7847 = sshll.u32 [#allocation13], 4
          %s7848 = int_to_ptr.vmem [resolvable:$true] %s7847
          %7850 = dma.vmem_to_hbm [thread:$0]  %s7848, 224, %s6, [#allocation4]
        $region80: #{tpu_custom_call.1} parent=43 // pred_fallthru
          _
        // Predicated region
        $region81: #{tpu_custom_call.1} parent=43 // pred_check
          %p7851 = pneg %p215
        $region82: #{tpu_custom_call.1} parent=43 // pred_check_branch
          %7853 = sbr.rel (%p7851) target = $region84
        $region83: #{tpu_custom_call.1} parent=43 // pred_region
          _
        $region84: #{tpu_custom_call.1} parent=43 // pred_fallthru
          _
        // Predicated region
        $region85: #{tpu_custom_call.1} parent=43 // pred_check
          %p7854 = pneg %p194
        $region86: #{tpu_custom_call.1} parent=43 // pred_check_branch
          %7856 = sbr.rel (%p7854) target = $region88
        $region87: #{tpu_custom_call.1} parent=43 // pred_region
          %7857 = dma.done [#allocation4], 224
        $region88: #{tpu_custom_call.1} parent=43 // pred_fallthru
          _
        // Predicated region
        $region89: #{tpu_custom_call.1} parent=43 // pred_check
          %p7858 = pneg %p215
        $region90: #{tpu_custom_call.1} parent=43 // pred_check_branch
          %7860 = sbr.rel (%p7858) target = $region92
        $region91: #{tpu_custom_call.1} parent=43 // pred_region
          _
        $region92: #{tpu_custom_call.1} parent=43 // pred_fallthru
          _
      $region44: #{tpu_custom_call.1} parent=5 // pred_fallthru
        _
      %p7861 = scmp.le.s32.totalorder 2, %s25
      // Predicated region
      $region93: #{tpu_custom_call.1} parent=5 // pred_check
        %p7862 = pneg %p7861
      $region94: #{tpu_custom_call.1} parent=5 // pred_check_branch
        %7864 = sbr.rel (%p7862) target = $region96
      $region95: #{tpu_custom_call.1} parent=5 // pred_region
        %s7865 = ssub.s32 %s25, 2
      $region96: #{tpu_custom_call.1} parent=5 // pred_fallthru
        _
    $region6: #{tpu_custom_call.1} parent=1 // loop_footer
      %s29 = sadd.s32 1, %s25
    $region7: #{tpu_custom_call.1} parent=1 // loop_footer_branch
      %24 = sbr.rel target = $region3
    $region8: #{tpu_custom_call.1} parent=1 // loop_exit
      _
    %7866 = vsyncpa [#allocation3], 1
    %s7867 = scalar_lea.sflag [#allocation3], 1
    %7868 = vsyncpa %s7867, 1
    %7869 = vsyncpa [#allocation6], 1
    %s7870 = scalar_lea.sflag [#allocation6], 1
    %7871 = vsyncpa %s7870, 1
    %7872 = vsyncpa [#allocation9], 1
    %s7873 = scalar_lea.sflag [#allocation9], 1
    %7874 = vsyncpa %s7873, 1
    %7875 = vsyncpa [#allocation12], 1
    %s7876 = scalar_lea.sflag [#allocation12], 1
    %7877 = vsyncpa %s7876, 1
    %7878 = vsyncpa [#allocation4], 1
    %s7879 = scalar_lea.sflag [#allocation4], 1
    %7880 = vsyncpa %s7879, 1

</llo_original>
